<compile_context>
chip_gen: v7x
topology: tpu7x:2x2x1
jax: 0.10.0
libtpu: 0.0.40
codegen_flags: <defaults>
</compile_context>

<pallas_src>
import math
import jax
import jax.numpy as jnp
from jax.experimental import pallas as pl
from jax.experimental.pallas import tpu as pltpu

_BF = jnp.bfloat16
_BN_EPS = 1e-5


# ----------------------------------------------------------------------------
# Pallas kernel: implicit-im2col conv == sum of shifted matmuls, with fused
# shift (+residual) (+ReLU) epilogue.  One grid step == one flattened image.
# ----------------------------------------------------------------------------
def _make_conv_kernel(taps, n_phase, relu, has_res):
    def kernel(*refs):
        o_ref = refs[-1]
        r_ref = refs[-2] if has_res else None
        phase_refs = refs[:n_phase]
        w_ref = refs[n_phase]          # [T, Cin, Cout] bf16 (BN scale folded)
        s_ref = refs[n_phase + 1]      # [1, Cout] f32 shift
        S_out, Cout = o_ref.shape[1], o_ref.shape[2]

        acc = jnp.zeros((S_out, Cout), jnp.float32)
        for t, (pid, off) in enumerate(taps):
            tap = phase_refs[pid][0, pl.ds(off, S_out), :]      # [S_out, Cin]
            acc = acc + jnp.dot(tap, w_ref[t],
                                preferred_element_type=jnp.float32)
        y = acc + s_ref[...]
        if has_res:
            y = y + r_ref[0].astype(jnp.float32)
        if relu:
            y = jnp.maximum(y, 0.0)
        o_ref[0] = y.astype(o_ref.dtype)
    return kernel


def _conv_pallas(phases, taps, w_taps, shift, residual, relu, S_out, Cout):
    """phases: list of [G, S_phase, Cin] bf16; taps: list of (phase_id, offset)."""
    G, _, Cin = phases[0].shape
    T = w_taps.shape[0]
    n_phase = len(phases)
    has_res = residual is not None

    args, in_specs = [], []
    for ph_arr in phases:
        S_ph = ph_arr.shape[1]
        args.append(ph_arr)
        in_specs.append(pl.BlockSpec((1, S_ph, Cin), lambda g: (g, 0, 0)))
    args.append(w_taps)
    in_specs.append(pl.BlockSpec((T, Cin, Cout), lambda g: (0, 0, 0)))
    args.append(shift)
    in_specs.append(pl.BlockSpec((1, Cout), lambda g: (0, 0)))
    if has_res:
        args.append(residual)
        in_specs.append(pl.BlockSpec((1, S_out, Cout), lambda g: (g, 0, 0)))

    return pl.pallas_call(
        _make_conv_kernel(taps, n_phase, relu, has_res),
        out_shape=jax.ShapeDtypeStruct((G, S_out, Cout), _BF),
        grid=(G,),
        in_specs=in_specs,
        out_specs=pl.BlockSpec((1, S_out, Cout), lambda g: (g, 0, 0)),
        compiler_params=pltpu.CompilerParams(
            dimension_semantics=("parallel",)),
    )(*args)


# ----------------------------------------------------------------------------
# Factorized conv wrappers (channels-last, implicit im2col, no duplication)
# ----------------------------------------------------------------------------
def spatial_conv(x_cl, w_taps, shift, kh, kw, stride, ph, pw, relu):
    """Conv3d (1,kh,kw), stride (1,s,s), pad (0,ph,pw) on x [N,D,H,W,Cin]."""
    T, Cin, Cout = w_taps.shape
    s = stride
    if kh == 1 and kw == 1 and s > 1:        # 1x1 strided == subsample + matmul
        x_cl = x_cl[:, :, ::s, ::s, :]
        s = 1
    N, D, H, W, _ = x_cl.shape
    Hout = (H + 2 * ph - kh) // s + 1
    Wout = (W + 2 * pw - kw) // s + 1
    Hp, Wp = H + 2 * ph, W + 2 * pw
    # Pad H/W; 2 extra zero rows at the bottom keep the flattened shifted reads
    # in-bounds for the (discarded) garbage columns w in [Wout, Wp).
    xp = jnp.pad(x_cl, ((0, 0), (0, 0), (ph, ph + 2), (pw, pw), (0, 0)))
    G = N * D
    flat = xp.reshape(G, (Hp + 2) * Wp, Cin).astype(_BF)
    S_out = Hout * Wp                         # output computed at full Wp width
    if s == 1:
        phases = [flat]
        taps = [(0, i * Wp + j) for i in range(kh) for j in range(kw)]
    else:
        assert s == 2
        if flat.shape[1] % 2:
            flat = jnp.pad(flat, ((0, 0), (0, 1), (0, 0)))
        phases = [flat[:, 0::2, :], flat[:, 1::2, :]]   # parity phases (exact)
        taps = [((i * Wp + j) % 2, (i * Wp + j) // 2)
                for i in range(kh) for j in range(kw)]
    out = _conv_pallas(phases, taps, w_taps, shift, None, relu, S_out, Cout)
    return out.reshape(N, D, Hout, Wp, Cout)[:, :, :, :Wout, :]


def temporal_conv(x_cl, w_taps, shift, kt, stride, pt, relu, residual=None):
    """Conv3d (kt,1,1), stride (s,1,1), pad (pt,0,0) on x [N,D,H,W,Cin]."""
    T, Cin, Cout = w_taps.shape
    s = stride
    if kt == 1 and s > 1:                    # 1x1x1 strided == subsample
        x_cl = x_cl[:, ::s, :, :, :]
        s = 1
    N, D, H, W, _ = x_cl.shape
    HW = H * W
    Dout = (D + 2 * pt - kt) // s + 1
    xp = jnp.pad(x_cl, ((0, 0), (pt, pt), (0, 0), (0, 0), (0, 0))).astype(_BF)
    if s == 1:
        phases = [xp.reshape(N, -1, Cin)]
        taps = [(0, k * HW) for k in range(kt)]
    else:
        assert s == 2
        phases = [xp[:, 0::2].reshape(N, -1, Cin),       # even / odd D phases
                  xp[:, 1::2].reshape(N, -1, Cin)]
        taps = [(k % 2, (k // 2) * HW) for k in range(kt)]
    S_out = Dout * HW
    res_flat = None
    if residual is not None:                 # residual is [N, Dout, H, W, Cout]
        res_flat = residual.reshape(N, S_out, Cout).astype(_BF)
    out = _conv_pallas(phases, taps, w_taps, shift, res_flat, relu,
                       S_out, Cout)
    return out.reshape(N, Dout, H, W, Cout)


# ----------------------------------------------------------------------------
# Parameter init (deterministic, synthetic) and BN / weight folding
# ----------------------------------------------------------------------------
def _triple(k):
    if isinstance(k, (tuple, list)):
        return tuple(k)
    return (k, k, k)


def init_bn(key, c):
    k1, k2, k3, k4 = jax.random.split(key, 4)
    return dict(
        gamma=1.0 + 0.1 * jax.random.normal(k1, (c,), jnp.float32),
        beta=0.1 * jax.random.normal(k2, (c,), jnp.float32),
        mean=0.1 * jax.random.normal(k3, (c,), jnp.float32),
        var=jax.random.uniform(k4, (c,), jnp.float32, 0.5, 1.5),
    )


def bn_fold(bn, eps=_BN_EPS):
    scale = bn['gamma'] / jnp.sqrt(bn['var'] + eps)
    shift = bn['beta'] - bn['mean'] * scale
    return scale, shift


def _fold_weight_spatial(w, scale):
    out_c, in_c, kh, kw = w.shape
    wt = jnp.transpose(w, (2, 3, 1, 0)).reshape(kh * kw, in_c, out_c)
    return (wt * scale[None, None, :]).astype(_BF)


def _fold_weight_temporal(w, scale):
    out_c, in_c, kt = w.shape
    wt = jnp.transpose(w, (2, 1, 0))                    # [kt, in_c, out_c]
    return (wt * scale[None, None, :]).astype(_BF)


def init_st_conv(key, in_c, out_c, kernel_size, stride=1, padding=0):
    kt, kh, kw = _triple(kernel_size)
    st, sh, sw = _triple(stride)
    pt, ph, pw = _triple(padding)
    intermed = int(math.floor((kt * kh * kw * in_c * out_c) /
                              (kh * kw * in_c + kt * out_c)))
    ks = jax.random.split(key, 5)
    return dict(
        spatial_w=0.1 * jax.random.normal(ks[0], (intermed, in_c, kh, kw),
                                          jnp.float32),
        spatial_b=0.1 * jax.random.normal(ks[1], (intermed,), jnp.float32),
        bn=init_bn(ks[2], intermed),
        temporal_w=0.1 * jax.random.normal(ks[3], (out_c, intermed, kt),
                                           jnp.float32),
        temporal_b=0.1 * jax.random.normal(ks[4], (out_c,), jnp.float32),
        spatial_stride=(sh, sw), spatial_pad=(ph, pw),
        temporal_stride=st, temporal_pad=pt,
    )


def init_block(key, in_c, out_c, kernel_size, downsample):
    padding = kernel_size // 2
    ks = jax.random.split(key, 6)
    p = dict(downsample=downsample)
    if downsample:
        p['dconv'] = init_st_conv(ks[4], in_c, out_c, 1, stride=2)
        p['dbn'] = init_bn(ks[5], out_c)
        p['conv1'] = init_st_conv(ks[0], in_c, out_c, kernel_size,
                                  padding=padding, stride=2)
    else:
        p['conv1'] = init_st_conv(ks[0], in_c, out_c, kernel_size,
                                  padding=padding)
    p['bn1'] = init_bn(ks[1], out_c)
    p['conv2'] = init_st_conv(ks[2], out_c, out_c, kernel_size,
                              padding=padding)
    p['bn2'] = init_bn(ks[3], out_c)
    return p


def init_layer(key, in_c, out_c, kernel_size, layer_size, downsample=False):
    ks = jax.random.split(key, layer_size)
    return dict(
        block1=init_block(ks[0], in_c, out_c, kernel_size, downsample),
        blocks=[init_block(ks[i], out_c, out_c, kernel_size, False)
                for i in range(1, layer_size)],
    )


# ----------------------------------------------------------------------------
# Forward pass (module semantics), channels-last bf16 internally
# ----------------------------------------------------------------------------
def st_conv_apply(x_cl, p, out_scale, out_shift, residual=None, relu=False):
    _, _, kh, kw = p['spatial_w'].shape
    kt = p['temporal_w'].shape[2]
    # spatial conv -> internal BN -> ReLU   (BN scale folded into the weights)
    s_scale = p['bn']['gamma'] / jnp.sqrt(p['bn']['var'] + _BN_EPS)
    s_shift = (p['bn']['beta'] - p['bn']['mean'] * s_scale
               + p['spatial_b'] * s_scale)
    w_sp = _fold_weight_spatial(p['spatial_w'], s_scale)
    sh, sw = p['spatial_stride']
    assert sh == sw
    ph, pw = p['spatial_pad']
    y = spatial_conv(x_cl, w_sp,
                     s_shift.reshape(1, -1).astype(jnp.float32),
                     kh, kw, sh, ph, pw, relu=True)
    # temporal conv -> (block-level) BN [-> +residual] [-> ReLU], all fused
    t_shift = (out_shift + p['temporal_b'] * out_scale).reshape(1, -1)
    w_t = _fold_weight_temporal(p['temporal_w'], out_scale)
    return temporal_conv(y, w_t, t_shift.astype(jnp.float32), kt,
                         p['temporal_stride'], p['temporal_pad'],
                         relu=relu, residual=residual)


def res_block_apply(x_cl, bp):
    bn1_s, bn1_b = bn_fold(bp['bn1'])
    res = st_conv_apply(x_cl, bp['conv1'], bn1_s, bn1_b, residual=None,
                        relu=True)
    if bp['downsample']:
        dbn_s, dbn_b = bn_fold(bp['dbn'])
        identity = st_conv_apply(x_cl, bp['dconv'], dbn_s, dbn_b,
                                 residual=None, relu=False)
    else:
        identity = x_cl
    bn2_s, bn2_b = bn_fold(bp['bn2'])
    return st_conv_apply(res, bp['conv2'], bn2_s, bn2_b,
                         residual=identity, relu=True)


def res_layer_apply(x, lp):
    # single NCDHW -> NDHWC transpose at entry, bf16 intermediates
    x_cl = jnp.transpose(x, (0, 2, 3, 4, 1)).astype(_BF)
    x_cl = res_block_apply(x_cl, lp['block1'])
    for bp in lp['blocks']:
        x_cl = res_block_apply(x_cl, bp)
    # single NDHWC -> NCDHW transpose at exit, back to f32
    return jnp.transpose(x_cl, (0, 4, 1, 2, 3)).astype(jnp.float32)


# ----------------------------------------------------------------------------
if __name__ == "__main__":
    key = jax.random.PRNGKey(0)
    k_params, k_x = jax.random.split(key)

    in_channels, out_channels, kernel_size, layer_size = 4, 8, 3, 2
    params = init_layer(k_params, in_channels, out_channels, kernel_size,
                        layer_size, downsample=True)

    # x: [N, C, D, H, W] (PyTorch NCDHW)
    x = jax.random.normal(k_x, (2, in_channels, 8, 16, 16), jnp.float32)

    fwd = jax.jit(lambda inp: res_layer_apply(inp, params))
    y = fwd(x)
    jax.block_until_ready(y)

    # downsample halves D, H, W and maps channels 4 -> 8
    assert y.shape == (2, out_channels, 4, 8, 8), y.shape
    assert bool(jnp.all(jnp.isfinite(y)))
    print("KERNEL_OK")
</pallas_src>

<mosaic_0001>
module attributes {stable_mosaic.version = 11 : i64} {
  func.func @kernel(%arg0: i32, %arg1: memref<1x80x4xbf16, #tpu.memory_space<vmem>>, %arg2: memref<1x4x2xbf16, #tpu.memory_space<vmem>>, %arg3: memref<1x2xf32, #tpu.memory_space<vmem>>, %arg4: memref<1x64x2xbf16, #tpu.memory_space<vmem>>) attributes {dimension_semantics = [#tpu.dimension_semantics<parallel>], iteration_bounds = array<i64: 16>, scalar_prefetch = 0 : i64, scratch_operands = 0 : i64, tpu.core_type = #tpu.core_type<tc>, window_params = [{transform_indices = @transform_0, window_bounds = array<i64: 1, 80, 4>}, {pipeline_mode = #tpu.pipeline_mode<synchronous>, transform_indices = @transform_1, window_bounds = array<i64: 1, 4, 2>}, {pipeline_mode = #tpu.pipeline_mode<synchronous>, transform_indices = @transform_2, window_bounds = array<i64: 1, 2>}, {transform_indices = @transform_3, window_bounds = array<i64: 1, 64, 2>}]} {
    %cst = arith.constant 0.000000e+00 : f32
    %0 = vector.broadcast %cst : f32 to vector<64x2xf32>
    %c0 = arith.constant 0 : index
    %c0_0 = arith.constant 0 : index
    %c0_1 = arith.constant 0 : index
    %1 = vector.load %arg1[%c0, %c0_0, %c0_1] : memref<1x80x4xbf16, #tpu.memory_space<vmem>>, vector<1x64x4xbf16>
    %2 = vector.shape_cast %1 : vector<1x64x4xbf16> to vector<64x4xbf16>
    %c0_2 = arith.constant 0 : index
    %c0_3 = arith.constant 0 : index
    %c0_4 = arith.constant 0 : index
    %3 = vector.load %arg2[%c0_2, %c0_3, %c0_4] : memref<1x4x2xbf16, #tpu.memory_space<vmem>>, vector<1x4x2xbf16>
    %4 = vector.shape_cast %3 : vector<1x4x2xbf16> to vector<4x2xbf16>
    %cst_5 = arith.constant dense<0.000000e+00> : vector<64x2xf32>
    %5 = tpu.matmul %2, %4, %cst_5 {dimension_numbers = #tpu.dot_dimension_numbers<[1], [0], [0], [1], [0, 0, 1, 1], [], []>} : vector<64x4xbf16>, vector<4x2xbf16>, vector<64x2xf32> -> vector<64x2xf32>
    %6 = arith.addf %0, %5 : vector<64x2xf32>
    %c0_6 = arith.constant 0 : index
    %c0_7 = arith.constant 0 : index
    %7 = vector.load %arg3[%c0_6, %c0_7] : memref<1x2xf32, #tpu.memory_space<vmem>>, vector<1x2xf32>
    %8 = vector.broadcast %7 : vector<1x2xf32> to vector<64x2xf32>
    %9 = arith.addf %6, %8 : vector<64x2xf32>
    %cst_8 = arith.constant 0.000000e+00 : f32
    %10 = vector.broadcast %cst_8 : f32 to vector<64x2xf32>
    %11 = arith.maximumf %9, %10 : vector<64x2xf32>
    %12 = arith.truncf %11 : vector<64x2xf32> to vector<64x2xbf16>
    %c0_9 = arith.constant 0 : index
    %c0_10 = arith.constant 0 : index
    %c0_11 = arith.constant 0 : index
    %13 = vector.load %arg4[%c0_9, %c0_10, %c0_11] : memref<1x64x2xbf16, #tpu.memory_space<vmem>>, vector<1x64x2xbf16>
    %14 = vector.shape_cast %13 : vector<1x64x2xbf16> to vector<64x2xbf16>
    %15 = vector.shape_cast %12 : vector<64x2xbf16> to vector<1x64x2xbf16>
    tpu.vector_store %arg4[%c0_9, %c0_10, %c0_11], %15 {strides = array<i32>} : memref<1x64x2xbf16, #tpu.memory_space<vmem>>, vector<1x64x2xbf16>,
    return
  }
  func.func @transform_0(%arg0: i32) -> (i32, i32, i32) {
    %c0_i32 = arith.constant 0 : i32
    %c0_i32_0 = arith.constant 0 : i32
    %c0_i32_1 = arith.constant 0 : i32
    return %arg0, %c0_i32, %c0_i32_0 : i32, i32, i32
  }
  func.func @transform_1(%arg0: i32) -> (i32, i32, i32) {
    %c0_i32 = arith.constant 0 : i32
    %c0_i32_0 = arith.constant 0 : i32
    %c0_i32_1 = arith.constant 0 : i32
    %c0_i32_2 = arith.constant 0 : i32
    return %c0_i32, %c0_i32_0, %c0_i32_1 : i32, i32, i32
  }
  func.func @transform_2(%arg0: i32) -> (i32, i32) {
    %c0_i32 = arith.constant 0 : i32
    %c0_i32_0 = arith.constant 0 : i32
    %c0_i32_1 = arith.constant 0 : i32
    return %c0_i32, %c0_i32_0 : i32, i32
  }
  func.func @transform_3(%arg0: i32) -> (i32, i32, i32) {
    %c0_i32 = arith.constant 0 : i32
    %c0_i32_0 = arith.constant 0 : i32
    %c0_i32_1 = arith.constant 0 : i32
    return %arg0, %c0_i32, %c0_i32_0 : i32, i32, i32
  }
}

module attributes {stable_mosaic.version = 11 : i64} {
  func.func @kernel(%arg0: i32, %arg1: memref<1x256x2xbf16, #tpu.memory_space<vmem>>, %arg2: memref<1x2x8xbf16, #tpu.memory_space<vmem>>, %arg3: memref<1x8xf32, #tpu.memory_space<vmem>>, %arg4: memref<1x256x8xbf16, #tpu.memory_space<vmem>>) attributes {dimension_semantics = [#tpu.dimension_semantics<parallel>], iteration_bounds = array<i64: 2>, scalar_prefetch = 0 : i64, scratch_operands = 0 : i64, tpu.core_type = #tpu.core_type<tc>, window_params = [{transform_indices = @transform_0, window_bounds = array<i64: 1, 256, 2>}, {pipeline_mode = #tpu.pipeline_mode<synchronous>, transform_indices = @transform_1, window_bounds = array<i64: 1, 2, 8>}, {pipeline_mode = #tpu.pipeline_mode<synchronous>, transform_indices = @transform_2, window_bounds = array<i64: 1, 8>}, {transform_indices = @transform_3, window_bounds = array<i64: 1, 256, 8>}]} {
    %cst = arith.constant 0.000000e+00 : f32
    %0 = vector.broadcast %cst : f32 to vector<256x8xf32>
    %c0 = arith.constant 0 : index
    %c0_0 = arith.constant 0 : index
    %c0_1 = arith.constant 0 : index
    %1 = vector.load %arg1[%c0, %c0_0, %c0_1] : memref<1x256x2xbf16, #tpu.memory_space<vmem>>, vector<1x256x2xbf16>
    %2 = vector.shape_cast %1 : vector<1x256x2xbf16> to vector<256x2xbf16>
    %c0_2 = arith.constant 0 : index
    %c0_3 = arith.constant 0 : index
    %c0_4 = arith.constant 0 : index
    %3 = vector.load %arg2[%c0_2, %c0_3, %c0_4] : memref<1x2x8xbf16, #tpu.memory_space<vmem>>, vector<1x2x8xbf16>
    %4 = vector.shape_cast %3 : vector<1x2x8xbf16> to vector<2x8xbf16>
    %cst_5 = arith.constant dense<0.000000e+00> : vector<256x8xf32>
    %5 = tpu.matmul %2, %4, %cst_5 {dimension_numbers = #tpu.dot_dimension_numbers<[1], [0], [0], [1], [0, 0, 1, 1], [], []>} : vector<256x2xbf16>, vector<2x8xbf16>, vector<256x8xf32> -> vector<256x8xf32>
    %6 = arith.addf %0, %5 : vector<256x8xf32>
    %c0_6 = arith.constant 0 : index
    %c0_7 = arith.constant 0 : index
    %7 = vector.load %arg3[%c0_6, %c0_7] : memref<1x8xf32, #tpu.memory_space<vmem>>, vector<1x8xf32>
    %8 = vector.broadcast %7 : vector<1x8xf32> to vector<256x8xf32>
    %9 = arith.addf %6, %8 : vector<256x8xf32>
    %10 = arith.truncf %9 : vector<256x8xf32> to vector<256x8xbf16>
    %c0_8 = arith.constant 0 : index
    %c0_9 = arith.constant 0 : index
    %c0_10 = arith.constant 0 : index
    %11 = vector.load %arg4[%c0_8, %c0_9, %c0_10] : memref<1x256x8xbf16, #tpu.memory_space<vmem>>, vector<1x256x8xbf16>
    %12 = vector.shape_cast %11 : vector<1x256x8xbf16> to vector<256x8xbf16>
    %13 = vector.shape_cast %10 : vector<256x8xbf16> to vector<1x256x8xbf16>
    tpu.vector_store %arg4[%c0_8, %c0_9, %c0_10], %13 {strides = array<i32>} : memref<1x256x8xbf16, #tpu.memory_space<vmem>>, vector<1x256x8xbf16>,
    return
  }
  func.func @transform_0(%arg0: i32) -> (i32, i32, i32) {
    %c0_i32 = arith.constant 0 : i32
    %c0_i32_0 = arith.constant 0 : i32
    %c0_i32_1 = arith.constant 0 : i32
    return %arg0, %c0_i32, %c0_i32_0 : i32, i32, i32
  }
  func.func @transform_1(%arg0: i32) -> (i32, i32, i32) {
    %c0_i32 = arith.constant 0 : i32
    %c0_i32_0 = arith.constant 0 : i32
    %c0_i32_1 = arith.constant 0 : i32
    %c0_i32_2 = arith.constant 0 : i32
    return %c0_i32, %c0_i32_0, %c0_i32_1 : i32, i32, i32
  }
  func.func @transform_2(%arg0: i32) -> (i32, i32) {
    %c0_i32 = arith.constant 0 : i32
    %c0_i32_0 = arith.constant 0 : i32
    %c0_i32_1 = arith.constant 0 : i32
    return %c0_i32, %c0_i32_0 : i32, i32
  }
  func.func @transform_3(%arg0: i32) -> (i32, i32, i32) {
    %c0_i32 = arith.constant 0 : i32
    %c0_i32_0 = arith.constant 0 : i32
    %c0_i32_1 = arith.constant 0 : i32
    return %arg0, %c0_i32, %c0_i32_0 : i32, i32, i32
  }
}

module attributes {stable_mosaic.version = 11 : i64} {
  func.func @kernel(%arg0: i32, %arg1: memref<1x180x4xbf16, #tpu.memory_space<vmem>>, %arg2: memref<1x180x4xbf16, #tpu.memory_space<vmem>>, %arg3: memref<9x4x14xbf16, #tpu.memory_space<vmem>>, %arg4: memref<1x14xf32, #tpu.memory_space<vmem>>, %arg5: memref<1x144x14xbf16, #tpu.memory_space<vmem>>) attributes {dimension_semantics = [#tpu.dimension_semantics<parallel>], iteration_bounds = array<i64: 16>, scalar_prefetch = 0 : i64, scratch_operands = 0 : i64, tpu.core_type = #tpu.core_type<tc>, window_params = [{transform_indices = @transform_0, window_bounds = array<i64: 1, 180, 4>}, {transform_indices = @transform_1, window_bounds = array<i64: 1, 180, 4>}, {pipeline_mode = #tpu.pipeline_mode<synchronous>, transform_indices = @transform_2, window_bounds = array<i64: 9, 4, 14>}, {pipeline_mode = #tpu.pipeline_mode<synchronous>, transform_indices = @transform_3, window_bounds = array<i64: 1, 14>}, {transform_indices = @transform_4, window_bounds = array<i64: 1, 144, 14>}]} {
    %cst = arith.constant 0.000000e+00 : f32
    %0 = vector.broadcast %cst : f32 to vector<144x14xf32>
    %c0 = arith.constant 0 : index
    %c0_0 = arith.constant 0 : index
    %c0_1 = arith.constant 0 : index
    %1 = vector.load %arg1[%c0, %c0_0, %c0_1] : memref<1x180x4xbf16, #tpu.memory_space<vmem>>, vector<1x144x4xbf16>
    %2 = vector.shape_cast %1 : vector<1x144x4xbf16> to vector<144x4xbf16>
    %c0_2 = arith.constant 0 : index
    %c0_3 = arith.constant 0 : index
    %c0_4 = arith.constant 0 : index
    %3 = vector.load %arg3[%c0_2, %c0_3, %c0_4] : memref<9x4x14xbf16, #tpu.memory_space<vmem>>, vector<1x4x14xbf16>
    %4 = vector.shape_cast %3 : vector<1x4x14xbf16> to vector<4x14xbf16>
    %cst_5 = arith.constant dense<0.000000e+00> : vector<144x14xf32>
    %5 = tpu.matmul %2, %4, %cst_5 {dimension_numbers = #tpu.dot_dimension_numbers<[1], [0], [0], [1], [0, 0, 1, 1], [], []>} : vector<144x4xbf16>, vector<4x14xbf16>, vector<144x14xf32> -> vector<144x14xf32>
    %6 = arith.addf %0, %5 : vector<144x14xf32>
    %c0_6 = arith.constant 0 : index
    %c0_7 = arith.constant 0 : index
    %c0_8 = arith.constant 0 : index
    %7 = vector.load %arg2[%c0_6, %c0_7, %c0_8] : memref<1x180x4xbf16, #tpu.memory_space<vmem>>, vector<1x144x4xbf16>
    %8 = vector.shape_cast %7 : vector<1x144x4xbf16> to vector<144x4xbf16>
    %c1 = arith.constant 1 : index
    %c0_9 = arith.constant 0 : index
    %c0_10 = arith.constant 0 : index
    %9 = vector.load %arg3[%c1, %c0_9, %c0_10] : memref<9x4x14xbf16, #tpu.memory_space<vmem>>, vector<1x4x14xbf16>
    %10 = vector.shape_cast %9 : vector<1x4x14xbf16> to vector<4x14xbf16>
    %cst_11 = arith.constant dense<0.000000e+00> : vector<144x14xf32>
    %11 = tpu.matmul %8, %10, %cst_11 {dimension_numbers = #tpu.dot_dimension_numbers<[1], [0], [0], [1], [0, 0, 1, 1], [], []>} : vector<144x4xbf16>, vector<4x14xbf16>, vector<144x14xf32> -> vector<144x14xf32>
    %12 = arith.addf %6, %11 : vector<144x14xf32>
    %c0_12 = arith.constant 0 : index
    %c1_13 = arith.constant 1 : index
    %c0_14 = arith.constant 0 : index
    %13 = vector.load %arg1[%c0_12, %c1_13, %c0_14] : memref<1x180x4xbf16, #tpu.memory_space<vmem>>, vector<1x144x4xbf16>
    %14 = vector.shape_cast %13 : vector<1x144x4xbf16> to vector<144x4xbf16>
    %c2 = arith.constant 2 : index
    %c0_15 = arith.constant 0 : index
    %c0_16 = arith.constant 0 : index
    %15 = vector.load %arg3[%c2, %c0_15, %c0_16] : memref<9x4x14xbf16, #tpu.memory_space<vmem>>, vector<1x4x14xbf16>
    %16 = vector.shape_cast %15 : vector<1x4x14xbf16> to vector<4x14xbf16>
    %cst_17 = arith.constant dense<0.000000e+00> : vector<144x14xf32>
    %17 = tpu.matmul %14, %16, %cst_17 {dimension_numbers = #tpu.dot_dimension_numbers<[1], [0], [0], [1], [0, 0, 1, 1], [], []>} : vector<144x4xbf16>, vector<4x14xbf16>, vector<144x14xf32> -> vector<144x14xf32>
    %18 = arith.addf %12, %17 : vector<144x14xf32>
    %c0_18 = arith.constant 0 : index
    %c9 = arith.constant 9 : index
    %c0_19 = arith.constant 0 : index
    %19 = vector.load %arg1[%c0_18, %c9, %c0_19] : memref<1x180x4xbf16, #tpu.memory_space<vmem>>, vector<1x144x4xbf16>
    %20 = vector.shape_cast %19 : vector<1x144x4xbf16> to vector<144x4xbf16>
    %c3 = arith.constant 3 : index
    %c0_20 = arith.constant 0 : index
    %c0_21 = arith.constant 0 : index
    %21 = vector.load %arg3[%c3, %c0_20, %c0_21] : memref<9x4x14xbf16, #tpu.memory_space<vmem>>, vector<1x4x14xbf16>
    %22 = vector.shape_cast %21 : vector<1x4x14xbf16> to vector<4x14xbf16>
    %cst_22 = arith.constant dense<0.000000e+00> : vector<144x14xf32>
    %23 = tpu.matmul %20, %22, %cst_22 {dimension_numbers = #tpu.dot_dimension_numbers<[1], [0], [0], [1], [0, 0, 1, 1], [], []>} : vector<144x4xbf16>, vector<4x14xbf16>, vector<144x14xf32> -> vector<144x14xf32>
    %24 = arith.addf %18, %23 : vector<144x14xf32>
    %c0_23 = arith.constant 0 : index
    %c9_24 = arith.constant 9 : index
    %c0_25 = arith.constant 0 : index
    %25 = vector.load %arg2[%c0_23, %c9_24, %c0_25] : memref<1x180x4xbf16, #tpu.memory_space<vmem>>, vector<1x144x4xbf16>
    %26 = vector.shape_cast %25 : vector<1x144x4xbf16> to vector<144x4xbf16>
    %c4 = arith.constant 4 : index
    %c0_26 = arith.constant 0 : index
    %c0_27 = arith.constant 0 : index
    %27 = vector.load %arg3[%c4, %c0_26, %c0_27] : memref<9x4x14xbf16, #tpu.memory_space<vmem>>, vector<1x4x14xbf16>
    %28 = vector.shape_cast %27 : vector<1x4x14xbf16> to vector<4x14xbf16>
    %cst_28 = arith.constant dense<0.000000e+00> : vector<144x14xf32>
    %29 = tpu.matmul %26, %28, %cst_28 {dimension_numbers = #tpu.dot_dimension_numbers<[1], [0], [0], [1], [0, 0, 1, 1], [], []>} : vector<144x4xbf16>, vector<4x14xbf16>, vector<144x14xf32> -> vector<144x14xf32>
    %30 = arith.addf %24, %29 : vector<144x14xf32>
    %c0_29 = arith.constant 0 : index
    %c10 = arith.constant 10 : index
    %c0_30 = arith.constant 0 : index
    %31 = vector.load %arg1[%c0_29, %c10, %c0_30] : memref<1x180x4xbf16, #tpu.memory_space<vmem>>, vector<1x144x4xbf16>
    %32 = vector.shape_cast %31 : vector<1x144x4xbf16> to vector<144x4xbf16>
    %c5 = arith.constant 5 : index
    %c0_31 = arith.constant 0 : index
    %c0_32 = arith.constant 0 : index
    %33 = vector.load %arg3[%c5, %c0_31, %c0_32] : memref<9x4x14xbf16, #tpu.memory_space<vmem>>, vector<1x4x14xbf16>
    %34 = vector.shape_cast %33 : vector<1x4x14xbf16> to vector<4x14xbf16>
    %cst_33 = arith.constant dense<0.000000e+00> : vector<144x14xf32>
    %35 = tpu.matmul %32, %34, %cst_33 {dimension_numbers = #tpu.dot_dimension_numbers<[1], [0], [0], [1], [0, 0, 1, 1], [], []>} : vector<144x4xbf16>, vector<4x14xbf16>, vector<144x14xf32> -> vector<144x14xf32>
    %36 = arith.addf %30, %35 : vector<144x14xf32>
    %c0_34 = arith.constant 0 : index
    %c18 = arith.constant 18 : index
    %c0_35 = arith.constant 0 : index
    %37 = vector.load %arg1[%c0_34, %c18, %c0_35] : memref<1x180x4xbf16, #tpu.memory_space<vmem>>, vector<1x144x4xbf16>
    %38 = vector.shape_cast %37 : vector<1x144x4xbf16> to vector<144x4xbf16>
    %c6 = arith.constant 6 : index
    %c0_36 = arith.constant 0 : index
    %c0_37 = arith.constant 0 : index
    %39 = vector.load %arg3[%c6, %c0_36, %c0_37] : memref<9x4x14xbf16, #tpu.memory_space<vmem>>, vector<1x4x14xbf16>
    %40 = vector.shape_cast %39 : vector<1x4x14xbf16> to vector<4x14xbf16>
    %cst_38 = arith.constant dense<0.000000e+00> : vector<144x14xf32>
    %41 = tpu.matmul %38, %40, %cst_38 {dimension_numbers = #tpu.dot_dimension_numbers<[1], [0], [0], [1], [0, 0, 1, 1], [], []>} : vector<144x4xbf16>, vector<4x14xbf16>, vector<144x14xf32> -> vector<144x14xf32>
    %42 = arith.addf %36, %41 : vector<144x14xf32>
    %c0_39 = arith.constant 0 : index
    %c18_40 = arith.constant 18 : index
    %c0_41 = arith.constant 0 : index
    %43 = vector.load %arg2[%c0_39, %c18_40, %c0_41] : memref<1x180x4xbf16, #tpu.memory_space<vmem>>, vector<1x144x4xbf16>
    %44 = vector.shape_cast %43 : vector<1x144x4xbf16> to vector<144x4xbf16>
    %c7 = arith.constant 7 : index
    %c0_42 = arith.constant 0 : index
    %c0_43 = arith.constant 0 : index
    %45 = vector.load %arg3[%c7, %c0_42, %c0_43] : memref<9x4x14xbf16, #tpu.memory_space<vmem>>, vector<1x4x14xbf16>
    %46 = vector.shape_cast %45 : vector<1x4x14xbf16> to vector<4x14xbf16>
    %cst_44 = arith.constant dense<0.000000e+00> : vector<144x14xf32>
    %47 = tpu.matmul %44, %46, %cst_44 {dimension_numbers = #tpu.dot_dimension_numbers<[1], [0], [0], [1], [0, 0, 1, 1], [], []>} : vector<144x4xbf16>, vector<4x14xbf16>, vector<144x14xf32> -> vector<144x14xf32>
    %48 = arith.addf %42, %47 : vector<144x14xf32>
    %c0_45 = arith.constant 0 : index
    %c19 = arith.constant 19 : index
    %c0_46 = arith.constant 0 : index
    %49 = vector.load %arg1[%c0_45, %c19, %c0_46] : memref<1x180x4xbf16, #tpu.memory_space<vmem>>, vector<1x144x4xbf16>
    %50 = vector.shape_cast %49 : vector<1x144x4xbf16> to vector<144x4xbf16>
    %c8 = arith.constant 8 : index
    %c0_47 = arith.constant 0 : index
    %c0_48 = arith.constant 0 : index
    %51 = vector.load %arg3[%c8, %c0_47, %c0_48] : memref<9x4x14xbf16, #tpu.memory_space<vmem>>, vector<1x4x14xbf16>
    %52 = vector.shape_cast %51 : vector<1x4x14xbf16> to vector<4x14xbf16>
    %cst_49 = arith.constant dense<0.000000e+00> : vector<144x14xf32>
    %53 = tpu.matmul %50, %52, %cst_49 {dimension_numbers = #tpu.dot_dimension_numbers<[1], [0], [0], [1], [0, 0, 1, 1], [], []>} : vector<144x4xbf16>, vector<4x14xbf16>, vector<144x14xf32> -> vector<144x14xf32>
    %54 = arith.addf %48, %53 : vector<144x14xf32>
    %c0_50 = arith.constant 0 : index
    %c0_51 = arith.constant 0 : index
    %55 = vector.load %arg4[%c0_50, %c0_51] : memref<1x14xf32, #tpu.memory_space<vmem>>, vector<1x14xf32>
    %56 = vector.broadcast %55 : vector<1x14xf32> to vector<144x14xf32>
    %57 = arith.addf %54, %56 : vector<144x14xf32>
    %cst_52 = arith.constant 0.000000e+00 : f32
    %58 = vector.broadcast %cst_52 : f32 to vector<144x14xf32>
    %59 = arith.maximumf %57, %58 : vector<144x14xf32>
    %60 = arith.truncf %59 : vector<144x14xf32> to vector<144x14xbf16>
    %c0_53 = arith.constant 0 : index
    %c0_54 = arith.constant 0 : index
    %c0_55 = arith.constant 0 : index
    %61 = vector.load %arg5[%c0_53, %c0_54, %c0_55] : memref<1x144x14xbf16, #tpu.memory_space<vmem>>, vector<1x144x14xbf16>
    %62 = vector.shape_cast %61 : vector<1x144x14xbf16> to vector<144x14xbf16>
    %63 = vector.shape_cast %60 : vector<144x14xbf16> to vector<1x144x14xbf16>
    tpu.vector_store %arg5[%c0_53, %c0_54, %c0_55], %63 {strides = array<i32>} : memref<1x144x14xbf16, #tpu.memory_space<vmem>>, vector<1x144x14xbf16>,
    return
  }
  func.func @transform_0(%arg0: i32) -> (i32, i32, i32) {
    %c0_i32 = arith.constant 0 : i32
    %c0_i32_0 = arith.constant 0 : i32
    %c0_i32_1 = arith.constant 0 : i32
    return %arg0, %c0_i32, %c0_i32_0 : i32, i32, i32
  }
  func.func @transform_1(%arg0: i32) -> (i32, i32, i32) {
    %c0_i32 = arith.constant 0 : i32
    %c0_i32_0 = arith.constant 0 : i32
    %c0_i32_1 = arith.constant 0 : i32
    return %arg0, %c0_i32, %c0_i32_0 : i32, i32, i32
  }
  func.func @transform_2(%arg0: i32) -> (i32, i32, i32) {
    %c0_i32 = arith.constant 0 : i32
    %c0_i32_0 = arith.constant 0 : i32
    %c0_i32_1 = arith.constant 0 : i32
    %c0_i32_2 = arith.constant 0 : i32
    return %c0_i32, %c0_i32_0, %c0_i32_1 : i32, i32, i32
  }
  func.func @transform_3(%arg0: i32) -> (i32, i32) {
    %c0_i32 = arith.constant 0 : i32
    %c0_i32_0 = arith.constant 0 : i32
    %c0_i32_1 = arith.constant 0 : i32
    return %c0_i32, %c0_i32_0 : i32, i32
  }
  func.func @transform_4(%arg0: i32) -> (i32, i32, i32) {
    %c0_i32 = arith.constant 0 : i32
    %c0_i32_0 = arith.constant 0 : i32
    %c0_i32_1 = arith.constant 0 : i32
    return %arg0, %c0_i32, %c0_i32_0 : i32, i32, i32
  }
}

module attributes {stable_mosaic.version = 11 : i64} {
  func.func @kernel(%arg0: i32, %arg1: memref<1x320x14xbf16, #tpu.memory_space<vmem>>, %arg2: memref<1x320x14xbf16, #tpu.memory_space<vmem>>, %arg3: memref<3x14x8xbf16, #tpu.memory_space<vmem>>, %arg4: memref<1x8xf32, #tpu.memory_space<vmem>>, %arg5: memref<1x256x8xbf16, #tpu.memory_space<vmem>>) attributes {dimension_semantics = [#tpu.dimension_semantics<parallel>], iteration_bounds = array<i64: 2>, scalar_prefetch = 0 : i64, scratch_operands = 0 : i64, tpu.core_type = #tpu.core_type<tc>, window_params = [{transform_indices = @transform_0, window_bounds = array<i64: 1, 320, 14>}, {transform_indices = @transform_1, window_bounds = array<i64: 1, 320, 14>}, {pipeline_mode = #tpu.pipeline_mode<synchronous>, transform_indices = @transform_2, window_bounds = array<i64: 3, 14, 8>}, {pipeline_mode = #tpu.pipeline_mode<synchronous>, transform_indices = @transform_3, window_bounds = array<i64: 1, 8>}, {transform_indices = @transform_4, window_bounds = array<i64: 1, 256, 8>}]} {
    %cst = arith.constant 0.000000e+00 : f32
    %0 = vector.broadcast %cst : f32 to vector<256x8xf32>
    %c0 = arith.constant 0 : index
    %c0_0 = arith.constant 0 : index
    %c0_1 = arith.constant 0 : index
    %1 = vector.load %arg1[%c0, %c0_0, %c0_1] : memref<1x320x14xbf16, #tpu.memory_space<vmem>>, vector<1x256x14xbf16>
    %2 = vector.shape_cast %1 : vector<1x256x14xbf16> to vector<256x14xbf16>
    %c0_2 = arith.constant 0 : index
    %c0_3 = arith.constant 0 : index
    %c0_4 = arith.constant 0 : index
    %3 = vector.load %arg3[%c0_2, %c0_3, %c0_4] : memref<3x14x8xbf16, #tpu.memory_space<vmem>>, vector<1x14x8xbf16>
    %4 = vector.shape_cast %3 : vector<1x14x8xbf16> to vector<14x8xbf16>
    %cst_5 = arith.constant dense<0.000000e+00> : vector<256x8xf32>
    %5 = tpu.matmul %2, %4, %cst_5 {dimension_numbers = #tpu.dot_dimension_numbers<[1], [0], [0], [1], [0, 0, 1, 1], [], []>} : vector<256x14xbf16>, vector<14x8xbf16>, vector<256x8xf32> -> vector<256x8xf32>
    %6 = arith.addf %0, %5 : vector<256x8xf32>
    %c0_6 = arith.constant 0 : index
    %c0_7 = arith.constant 0 : index
    %c0_8 = arith.constant 0 : index
    %7 = vector.load %arg2[%c0_6, %c0_7, %c0_8] : memref<1x320x14xbf16, #tpu.memory_space<vmem>>, vector<1x256x14xbf16>
    %8 = vector.shape_cast %7 : vector<1x256x14xbf16> to vector<256x14xbf16>
    %c1 = arith.constant 1 : index
    %c0_9 = arith.constant 0 : index
    %c0_10 = arith.constant 0 : index
    %9 = vector.load %arg3[%c1, %c0_9, %c0_10] : memref<3x14x8xbf16, #tpu.memory_space<vmem>>, vector<1x14x8xbf16>
    %10 = vector.shape_cast %9 : vector<1x14x8xbf16> to vector<14x8xbf16>
    %cst_11 = arith.constant dense<0.000000e+00> : vector<256x8xf32>
    %11 = tpu.matmul %8, %10, %cst_11 {dimension_numbers = #tpu.dot_dimension_numbers<[1], [0], [0], [1], [0, 0, 1, 1], [], []>} : vector<256x14xbf16>, vector<14x8xbf16>, vector<256x8xf32> -> vector<256x8xf32>
    %12 = arith.addf %6, %11 : vector<256x8xf32>
    %c0_12 = arith.constant 0 : index
    %c64 = arith.constant 64 : index
    %c0_13 = arith.constant 0 : index
    %13 = vector.load %arg1[%c0_12, %c64, %c0_13] : memref<1x320x14xbf16, #tpu.memory_space<vmem>>, vector<1x256x14xbf16>
    %14 = vector.shape_cast %13 : vector<1x256x14xbf16> to vector<256x14xbf16>
    %c2 = arith.constant 2 : index
    %c0_14 = arith.constant 0 : index
    %c0_15 = arith.constant 0 : index
    %15 = vector.load %arg3[%c2, %c0_14, %c0_15] : memref<3x14x8xbf16, #tpu.memory_space<vmem>>, vector<1x14x8xbf16>
    %16 = vector.shape_cast %15 : vector<1x14x8xbf16> to vector<14x8xbf16>
    %cst_16 = arith.constant dense<0.000000e+00> : vector<256x8xf32>
    %17 = tpu.matmul %14, %16, %cst_16 {dimension_numbers = #tpu.dot_dimension_numbers<[1], [0], [0], [1], [0, 0, 1, 1], [], []>} : vector<256x14xbf16>, vector<14x8xbf16>, vector<256x8xf32> -> vector<256x8xf32>
    %18 = arith.addf %12, %17 : vector<256x8xf32>
    %c0_17 = arith.constant 0 : index
    %c0_18 = arith.constant 0 : index
    %19 = vector.load %arg4[%c0_17, %c0_18] : memref<1x8xf32, #tpu.memory_space<vmem>>, vector<1x8xf32>
    %20 = vector.broadcast %19 : vector<1x8xf32> to vector<256x8xf32>
    %21 = arith.addf %18, %20 : vector<256x8xf32>
    %cst_19 = arith.constant 0.000000e+00 : f32
    %22 = vector.broadcast %cst_19 : f32 to vector<256x8xf32>
    %23 = arith.maximumf %21, %22 : vector<256x8xf32>
    %24 = arith.truncf %23 : vector<256x8xf32> to vector<256x8xbf16>
    %c0_20 = arith.constant 0 : index
    %c0_21 = arith.constant 0 : index
    %c0_22 = arith.constant 0 : index
    %25 = vector.load %arg5[%c0_20, %c0_21, %c0_22] : memref<1x256x8xbf16, #tpu.memory_space<vmem>>, vector<1x256x8xbf16>
    %26 = vector.shape_cast %25 : vector<1x256x8xbf16> to vector<256x8xbf16>
    %27 = vector.shape_cast %24 : vector<256x8xbf16> to vector<1x256x8xbf16>
    tpu.vector_store %arg5[%c0_20, %c0_21, %c0_22], %27 {strides = array<i32>} : memref<1x256x8xbf16, #tpu.memory_space<vmem>>, vector<1x256x8xbf16>,
    return
  }
  func.func @transform_0(%arg0: i32) -> (i32, i32, i32) {
    %c0_i32 = arith.constant 0 : i32
    %c0_i32_0 = arith.constant 0 : i32
    %c0_i32_1 = arith.constant 0 : i32
    return %arg0, %c0_i32, %c0_i32_0 : i32, i32, i32
  }
  func.func @transform_1(%arg0: i32) -> (i32, i32, i32) {
    %c0_i32 = arith.constant 0 : i32
    %c0_i32_0 = arith.constant 0 : i32
    %c0_i32_1 = arith.constant 0 : i32
    return %arg0, %c0_i32, %c0_i32_0 : i32, i32, i32
  }
  func.func @transform_2(%arg0: i32) -> (i32, i32, i32) {
    %c0_i32 = arith.constant 0 : i32
    %c0_i32_0 = arith.constant 0 : i32
    %c0_i32_1 = arith.constant 0 : i32
    %c0_i32_2 = arith.constant 0 : i32
    return %c0_i32, %c0_i32_0, %c0_i32_1 : i32, i32, i32
  }
  func.func @transform_3(%arg0: i32) -> (i32, i32) {
    %c0_i32 = arith.constant 0 : i32
    %c0_i32_0 = arith.constant 0 : i32
    %c0_i32_1 = arith.constant 0 : i32
    return %c0_i32, %c0_i32_0 : i32, i32
  }
  func.func @transform_4(%arg0: i32) -> (i32, i32, i32) {
    %c0_i32 = arith.constant 0 : i32
    %c0_i32_0 = arith.constant 0 : i32
    %c0_i32_1 = arith.constant 0 : i32
    return %arg0, %c0_i32, %c0_i32_0 : i32, i32, i32
  }
}

module attributes {stable_mosaic.version = 11 : i64} {
  func.func @kernel(%arg0: i32, %arg1: memref<1x120x8xbf16, #tpu.memory_space<vmem>>, %arg2: memref<9x8x18xbf16, #tpu.memory_space<vmem>>, %arg3: memref<1x18xf32, #tpu.memory_space<vmem>>, %arg4: memref<1x80x18xbf16, #tpu.memory_space<vmem>>) attributes {dimension_semantics = [#tpu.dimension_semantics<parallel>], iteration_bounds = array<i64: 8>, scalar_prefetch = 0 : i64, scratch_operands = 0 : i64, tpu.core_type = #tpu.core_type<tc>, window_params = [{transform_indices = @transform_0, window_bounds = array<i64: 1, 120, 8>}, {pipeline_mode = #tpu.pipeline_mode<synchronous>, transform_indices = @transform_1, window_bounds = array<i64: 9, 8, 18>}, {pipeline_mode = #tpu.pipeline_mode<synchronous>, transform_indices = @transform_2, window_bounds = array<i64: 1, 18>}, {transform_indices = @transform_3, window_bounds = array<i64: 1, 80, 18>}]} {
    %cst = arith.constant 0.000000e+00 : f32
    %0 = vector.broadcast %cst : f32 to vector<80x18xf32>
    %c0 = arith.constant 0 : index
    %c0_0 = arith.constant 0 : index
    %c0_1 = arith.constant 0 : index
    %1 = vector.load %arg1[%c0, %c0_0, %c0_1] : memref<1x120x8xbf16, #tpu.memory_space<vmem>>, vector<1x80x8xbf16>
    %2 = vector.shape_cast %1 : vector<1x80x8xbf16> to vector<80x8xbf16>
    %c0_2 = arith.constant 0 : index
    %c0_3 = arith.constant 0 : index
    %c0_4 = arith.constant 0 : index
    %3 = vector.load %arg2[%c0_2, %c0_3, %c0_4] : memref<9x8x18xbf16, #tpu.memory_space<vmem>>, vector<1x8x18xbf16>
    %4 = vector.shape_cast %3 : vector<1x8x18xbf16> to vector<8x18xbf16>
    %cst_5 = arith.constant dense<0.000000e+00> : vector<80x18xf32>
    %5 = tpu.matmul %2, %4, %cst_5 {dimension_numbers = #tpu.dot_dimension_numbers<[1], [0], [0], [1], [0, 0, 1, 1], [], []>} : vector<80x8xbf16>, vector<8x18xbf16>, vector<80x18xf32> -> vector<80x18xf32>
    %6 = arith.addf %0, %5 : vector<80x18xf32>
    %c0_6 = arith.constant 0 : index
    %c1 = arith.constant 1 : index
    %c0_7 = arith.constant 0 : index
    %7 = vector.load %arg1[%c0_6, %c1, %c0_7] : memref<1x120x8xbf16, #tpu.memory_space<vmem>>, vector<1x80x8xbf16>
    %8 = vector.shape_cast %7 : vector<1x80x8xbf16> to vector<80x8xbf16>
    %c1_8 = arith.constant 1 : index
    %c0_9 = arith.constant 0 : index
    %c0_10 = arith.constant 0 : index
    %9 = vector.load %arg2[%c1_8, %c0_9, %c0_10] : memref<9x8x18xbf16, #tpu.memory_space<vmem>>, vector<1x8x18xbf16>
    %10 = vector.shape_cast %9 : vector<1x8x18xbf16> to vector<8x18xbf16>
    %cst_11 = arith.constant dense<0.000000e+00> : vector<80x18xf32>
    %11 = tpu.matmul %8, %10, %cst_11 {dimension_numbers = #tpu.dot_dimension_numbers<[1], [0], [0], [1], [0, 0, 1, 1], [], []>} : vector<80x8xbf16>, vector<8x18xbf16>, vector<80x18xf32> -> vector<80x18xf32>
    %12 = arith.addf %6, %11 : vector<80x18xf32>
    %c0_12 = arith.constant 0 : index
    %c2 = arith.constant 2 : index
    %c0_13 = arith.constant 0 : index
    %13 = vector.load %arg1[%c0_12, %c2, %c0_13] : memref<1x120x8xbf16, #tpu.memory_space<vmem>>, vector<1x80x8xbf16>
    %14 = vector.shape_cast %13 : vector<1x80x8xbf16> to vector<80x8xbf16>
    %c2_14 = arith.constant 2 : index
    %c0_15 = arith.constant 0 : index
    %c0_16 = arith.constant 0 : index
    %15 = vector.load %arg2[%c2_14, %c0_15, %c0_16] : memref<9x8x18xbf16, #tpu.memory_space<vmem>>, vector<1x8x18xbf16>
    %16 = vector.shape_cast %15 : vector<1x8x18xbf16> to vector<8x18xbf16>
    %cst_17 = arith.constant dense<0.000000e+00> : vector<80x18xf32>
    %17 = tpu.matmul %14, %16, %cst_17 {dimension_numbers = #tpu.dot_dimension_numbers<[1], [0], [0], [1], [0, 0, 1, 1], [], []>} : vector<80x8xbf16>, vector<8x18xbf16>, vector<80x18xf32> -> vector<80x18xf32>
    %18 = arith.addf %12, %17 : vector<80x18xf32>
    %c0_18 = arith.constant 0 : index
    %c10 = arith.constant 10 : index
    %c0_19 = arith.constant 0 : index
    %19 = vector.load %arg1[%c0_18, %c10, %c0_19] : memref<1x120x8xbf16, #tpu.memory_space<vmem>>, vector<1x80x8xbf16>
    %20 = vector.shape_cast %19 : vector<1x80x8xbf16> to vector<80x8xbf16>
    %c3 = arith.constant 3 : index
    %c0_20 = arith.constant 0 : index
    %c0_21 = arith.constant 0 : index
    %21 = vector.load %arg2[%c3, %c0_20, %c0_21] : memref<9x8x18xbf16, #tpu.memory_space<vmem>>, vector<1x8x18xbf16>
    %22 = vector.shape_cast %21 : vector<1x8x18xbf16> to vector<8x18xbf16>
    %cst_22 = arith.constant dense<0.000000e+00> : vector<80x18xf32>
    %23 = tpu.matmul %20, %22, %cst_22 {dimension_numbers = #tpu.dot_dimension_numbers<[1], [0], [0], [1], [0, 0, 1, 1], [], []>} : vector<80x8xbf16>, vector<8x18xbf16>, vector<80x18xf32> -> vector<80x18xf32>
    %24 = arith.addf %18, %23 : vector<80x18xf32>
    %c0_23 = arith.constant 0 : index
    %c11 = arith.constant 11 : index
    %c0_24 = arith.constant 0 : index
    %25 = vector.load %arg1[%c0_23, %c11, %c0_24] : memref<1x120x8xbf16, #tpu.memory_space<vmem>>, vector<1x80x8xbf16>
    %26 = vector.shape_cast %25 : vector<1x80x8xbf16> to vector<80x8xbf16>
    %c4 = arith.constant 4 : index
    %c0_25 = arith.constant 0 : index
    %c0_26 = arith.constant 0 : index
    %27 = vector.load %arg2[%c4, %c0_25, %c0_26] : memref<9x8x18xbf16, #tpu.memory_space<vmem>>, vector<1x8x18xbf16>
    %28 = vector.shape_cast %27 : vector<1x8x18xbf16> to vector<8x18xbf16>
    %cst_27 = arith.constant dense<0.000000e+00> : vector<80x18xf32>
    %29 = tpu.matmul %26, %28, %cst_27 {dimension_numbers = #tpu.dot_dimension_numbers<[1], [0], [0], [1], [0, 0, 1, 1], [], []>} : vector<80x8xbf16>, vector<8x18xbf16>, vector<80x18xf32> -> vector<80x18xf32>
    %30 = arith.addf %24, %29 : vector<80x18xf32>
    %c0_28 = arith.constant 0 : index
    %c12 = arith.constant 12 : index
    %c0_29 = arith.constant 0 : index
    %31 = vector.load %arg1[%c0_28, %c12, %c0_29] : memref<1x120x8xbf16, #tpu.memory_space<vmem>>, vector<1x80x8xbf16>
    %32 = vector.shape_cast %31 : vector<1x80x8xbf16> to vector<80x8xbf16>
    %c5 = arith.constant 5 : index
    %c0_30 = arith.constant 0 : index
    %c0_31 = arith.constant 0 : index
    %33 = vector.load %arg2[%c5, %c0_30, %c0_31] : memref<9x8x18xbf16, #tpu.memory_space<vmem>>, vector<1x8x18xbf16>
    %34 = vector.shape_cast %33 : vector<1x8x18xbf16> to vector<8x18xbf16>
    %cst_32 = arith.constant dense<0.000000e+00> : vector<80x18xf32>
    %35 = tpu.matmul %32, %34, %cst_32 {dimension_numbers = #tpu.dot_dimension_numbers<[1], [0], [0], [1], [0, 0, 1, 1], [], []>} : vector<80x8xbf16>, vector<8x18xbf16>, vector<80x18xf32> -> vector<80x18xf32>
    %36 = arith.addf %30, %35 : vector<80x18xf32>
    %c0_33 = arith.constant 0 : index
    %c20 = arith.constant 20 : index
    %c0_34 = arith.constant 0 : index
    %37 = vector.load %arg1[%c0_33, %c20, %c0_34] : memref<1x120x8xbf16, #tpu.memory_space<vmem>>, vector<1x80x8xbf16>
    %38 = vector.shape_cast %37 : vector<1x80x8xbf16> to vector<80x8xbf16>
    %c6 = arith.constant 6 : index
    %c0_35 = arith.constant 0 : index
    %c0_36 = arith.constant 0 : index
    %39 = vector.load %arg2[%c6, %c0_35, %c0_36] : memref<9x8x18xbf16, #tpu.memory_space<vmem>>, vector<1x8x18xbf16>
    %40 = vector.shape_cast %39 : vector<1x8x18xbf16> to vector<8x18xbf16>
    %cst_37 = arith.constant dense<0.000000e+00> : vector<80x18xf32>
    %41 = tpu.matmul %38, %40, %cst_37 {dimension_numbers = #tpu.dot_dimension_numbers<[1], [0], [0], [1], [0, 0, 1, 1], [], []>} : vector<80x8xbf16>, vector<8x18xbf16>, vector<80x18xf32> -> vector<80x18xf32>
    %42 = arith.addf %36, %41 : vector<80x18xf32>
    %c0_38 = arith.constant 0 : index
    %c21 = arith.constant 21 : index
    %c0_39 = arith.constant 0 : index
    %43 = vector.load %arg1[%c0_38, %c21, %c0_39] : memref<1x120x8xbf16, #tpu.memory_space<vmem>>, vector<1x80x8xbf16>
    %44 = vector.shape_cast %43 : vector<1x80x8xbf16> to vector<80x8xbf16>
    %c7 = arith.constant 7 : index
    %c0_40 = arith.constant 0 : index
    %c0_41 = arith.constant 0 : index
    %45 = vector.load %arg2[%c7, %c0_40, %c0_41] : memref<9x8x18xbf16, #tpu.memory_space<vmem>>, vector<1x8x18xbf16>
    %46 = vector.shape_cast %45 : vector<1x8x18xbf16> to vector<8x18xbf16>
    %cst_42 = arith.constant dense<0.000000e+00> : vector<80x18xf32>
    %47 = tpu.matmul %44, %46, %cst_42 {dimension_numbers = #tpu.dot_dimension_numbers<[1], [0], [0], [1], [0, 0, 1, 1], [], []>} : vector<80x8xbf16>, vector<8x18xbf16>, vector<80x18xf32> -> vector<80x18xf32>
    %48 = arith.addf %42, %47 : vector<80x18xf32>
    %c0_43 = arith.constant 0 : index
    %c22 = arith.constant 22 : index
    %c0_44 = arith.constant 0 : index
    %49 = vector.load %arg1[%c0_43, %c22, %c0_44] : memref<1x120x8xbf16, #tpu.memory_space<vmem>>, vector<1x80x8xbf16>
    %50 = vector.shape_cast %49 : vector<1x80x8xbf16> to vector<80x8xbf16>
    %c8 = arith.constant 8 : index
    %c0_45 = arith.constant 0 : index
    %c0_46 = arith.constant 0 : index
    %51 = vector.load %arg2[%c8, %c0_45, %c0_46] : memref<9x8x18xbf16, #tpu.memory_space<vmem>>, vector<1x8x18xbf16>
    %52 = vector.shape_cast %51 : vector<1x8x18xbf16> to vector<8x18xbf16>
    %cst_47 = arith.constant dense<0.000000e+00> : vector<80x18xf32>
    %53 = tpu.matmul %50, %52, %cst_47 {dimension_numbers = #tpu.dot_dimension_numbers<[1], [0], [0], [1], [0, 0, 1, 1], [], []>} : vector<80x8xbf16>, vector<8x18xbf16>, vector<80x18xf32> -> vector<80x18xf32>
    %54 = arith.addf %48, %53 : vector<80x18xf32>
    %c0_48 = arith.constant 0 : index
    %c0_49 = arith.constant 0 : index
    %55 = vector.load %arg3[%c0_48, %c0_49] : memref<1x18xf32, #tpu.memory_space<vmem>>, vector<1x18xf32>
    %56 = vector.broadcast %55 : vector<1x18xf32> to vector<80x18xf32>
    %57 = arith.addf %54, %56 : vector<80x18xf32>
    %cst_50 = arith.constant 0.000000e+00 : f32
    %58 = vector.broadcast %cst_50 : f32 to vector<80x18xf32>
    %59 = arith.maximumf %57, %58 : vector<80x18xf32>
    %60 = arith.truncf %59 : vector<80x18xf32> to vector<80x18xbf16>
    %c0_51 = arith.constant 0 : index
    %c0_52 = arith.constant 0 : index
    %c0_53 = arith.constant 0 : index
    %61 = vector.load %arg4[%c0_51, %c0_52, %c0_53] : memref<1x80x18xbf16, #tpu.memory_space<vmem>>, vector<1x80x18xbf16>
    %62 = vector.shape_cast %61 : vector<1x80x18xbf16> to vector<80x18xbf16>
    %63 = vector.shape_cast %60 : vector<80x18xbf16> to vector<1x80x18xbf16>
    tpu.vector_store %arg4[%c0_51, %c0_52, %c0_53], %63 {strides = array<i32>} : memref<1x80x18xbf16, #tpu.memory_space<vmem>>, vector<1x80x18xbf16>,
    return
  }
  func.func @transform_0(%arg0: i32) -> (i32, i32, i32) {
    %c0_i32 = arith.constant 0 : i32
    %c0_i32_0 = arith.constant 0 : i32
    %c0_i32_1 = arith.constant 0 : i32
    return %arg0, %c0_i32, %c0_i32_0 : i32, i32, i32
  }
  func.func @transform_1(%arg0: i32) -> (i32, i32, i32) {
    %c0_i32 = arith.constant 0 : i32
    %c0_i32_0 = arith.constant 0 : i32
    %c0_i32_1 = arith.constant 0 : i32
    %c0_i32_2 = arith.constant 0 : i32
    return %c0_i32, %c0_i32_0, %c0_i32_1 : i32, i32, i32
  }
  func.func @transform_2(%arg0: i32) -> (i32, i32) {
    %c0_i32 = arith.constant 0 : i32
    %c0_i32_0 = arith.constant 0 : i32
    %c0_i32_1 = arith.constant 0 : i32
    return %c0_i32, %c0_i32_0 : i32, i32
  }
  func.func @transform_3(%arg0: i32) -> (i32, i32, i32) {
    %c0_i32 = arith.constant 0 : i32
    %c0_i32_0 = arith.constant 0 : i32
    %c0_i32_1 = arith.constant 0 : i32
    return %arg0, %c0_i32, %c0_i32_0 : i32, i32, i32
  }
}

module attributes {stable_mosaic.version = 11 : i64} {
  func.func @kernel(%arg0: i32, %arg1: memref<1x384x18xbf16, #tpu.memory_space<vmem>>, %arg2: memref<3x18x8xbf16, #tpu.memory_space<vmem>>, %arg3: memref<1x8xf32, #tpu.memory_space<vmem>>, %arg4: memref<1x256x8xbf16, #tpu.memory_space<vmem>>) attributes {dimension_semantics = [#tpu.dimension_semantics<parallel>], iteration_bounds = array<i64: 2>, scalar_prefetch = 0 : i64, scratch_operands = 0 : i64, tpu.core_type = #tpu.core_type<tc>, window_params = [{transform_indices = @transform_0, window_bounds = array<i64: 1, 384, 18>}, {pipeline_mode = #tpu.pipeline_mode<synchronous>, transform_indices = @transform_1, window_bounds = array<i64: 3, 18, 8>}, {pipeline_mode = #tpu.pipeline_mode<synchronous>, transform_indices = @transform_2, window_bounds = array<i64: 1, 8>}, {transform_indices = @transform_3, window_bounds = array<i64: 1, 256, 8>}]} {
    %cst = arith.constant 0.000000e+00 : f32
    %0 = vector.broadcast %cst : f32 to vector<256x8xf32>
    %c0 = arith.constant 0 : index
    %c0_0 = arith.constant 0 : index
    %c0_1 = arith.constant 0 : index
    %1 = vector.load %arg1[%c0, %c0_0, %c0_1] : memref<1x384x18xbf16, #tpu.memory_space<vmem>>, vector<1x256x18xbf16>
    %2 = vector.shape_cast %1 : vector<1x256x18xbf16> to vector<256x18xbf16>
    %c0_2 = arith.constant 0 : index
    %c0_3 = arith.constant 0 : index
    %c0_4 = arith.constant 0 : index
    %3 = vector.load %arg2[%c0_2, %c0_3, %c0_4] : memref<3x18x8xbf16, #tpu.memory_space<vmem>>, vector<1x18x8xbf16>
    %4 = vector.shape_cast %3 : vector<1x18x8xbf16> to vector<18x8xbf16>
    %cst_5 = arith.constant dense<0.000000e+00> : vector<256x8xf32>
    %5 = tpu.matmul %2, %4, %cst_5 {dimension_numbers = #tpu.dot_dimension_numbers<[1], [0], [0], [1], [0, 0, 1, 1], [], []>} : vector<256x18xbf16>, vector<18x8xbf16>, vector<256x8xf32> -> vector<256x8xf32>
    %6 = arith.addf %0, %5 : vector<256x8xf32>
    %c0_6 = arith.constant 0 : index
    %c64 = arith.constant 64 : index
    %c0_7 = arith.constant 0 : index
    %7 = vector.load %arg1[%c0_6, %c64, %c0_7] : memref<1x384x18xbf16, #tpu.memory_space<vmem>>, vector<1x256x18xbf16>
    %8 = vector.shape_cast %7 : vector<1x256x18xbf16> to vector<256x18xbf16>
    %c1 = arith.constant 1 : index
    %c0_8 = arith.constant 0 : index
    %c0_9 = arith.constant 0 : index
    %9 = vector.load %arg2[%c1, %c0_8, %c0_9] : memref<3x18x8xbf16, #tpu.memory_space<vmem>>, vector<1x18x8xbf16>
    %10 = vector.shape_cast %9 : vector<1x18x8xbf16> to vector<18x8xbf16>
    %cst_10 = arith.constant dense<0.000000e+00> : vector<256x8xf32>
    %11 = tpu.matmul %8, %10, %cst_10 {dimension_numbers = #tpu.dot_dimension_numbers<[1], [0], [0], [1], [0, 0, 1, 1], [], []>} : vector<256x18xbf16>, vector<18x8xbf16>, vector<256x8xf32> -> vector<256x8xf32>
    %12 = arith.addf %6, %11 : vector<256x8xf32>
    %c0_11 = arith.constant 0 : index
    %c128 = arith.constant 128 : index
    %c0_12 = arith.constant 0 : index
    %13 = vector.load %arg1[%c0_11, %c128, %c0_12] : memref<1x384x18xbf16, #tpu.memory_space<vmem>>, vector<1x256x18xbf16>
    %14 = vector.shape_cast %13 : vector<1x256x18xbf16> to vector<256x18xbf16>
    %c2 = arith.constant 2 : index
    %c0_13 = arith.constant 0 : index
    %c0_14 = arith.constant 0 : index
    %15 = vector.load %arg2[%c2, %c0_13, %c0_14] : memref<3x18x8xbf16, #tpu.memory_space<vmem>>, vector<1x18x8xbf16>
    %16 = vector.shape_cast %15 : vector<1x18x8xbf16> to vector<18x8xbf16>
    %cst_15 = arith.constant dense<0.000000e+00> : vector<256x8xf32>
    %17 = tpu.matmul %14, %16, %cst_15 {dimension_numbers = #tpu.dot_dimension_numbers<[1], [0], [0], [1], [0, 0, 1, 1], [], []>} : vector<256x18xbf16>, vector<18x8xbf16>, vector<256x8xf32> -> vector<256x8xf32>
    %18 = arith.addf %12, %17 : vector<256x8xf32>
    %c0_16 = arith.constant 0 : index
    %c0_17 = arith.constant 0 : index
    %19 = vector.load %arg3[%c0_16, %c0_17] : memref<1x8xf32, #tpu.memory_space<vmem>>, vector<1x8xf32>
    %20 = vector.broadcast %19 : vector<1x8xf32> to vector<256x8xf32>
    %21 = arith.addf %18, %20 : vector<256x8xf32>
    %cst_18 = arith.constant 0.000000e+00 : f32
    %22 = vector.broadcast %cst_18 : f32 to vector<256x8xf32>
    %23 = arith.maximumf %21, %22 : vector<256x8xf32>
    %24 = arith.truncf %23 : vector<256x8xf32> to vector<256x8xbf16>
    %c0_19 = arith.constant 0 : index
    %c0_20 = arith.constant 0 : index
    %c0_21 = arith.constant 0 : index
    %25 = vector.load %arg4[%c0_19, %c0_20, %c0_21] : memref<1x256x8xbf16, #tpu.memory_space<vmem>>, vector<1x256x8xbf16>
    %26 = vector.shape_cast %25 : vector<1x256x8xbf16> to vector<256x8xbf16>
    %27 = vector.shape_cast %24 : vector<256x8xbf16> to vector<1x256x8xbf16>
    tpu.vector_store %arg4[%c0_19, %c0_20, %c0_21], %27 {strides = array<i32>} : memref<1x256x8xbf16, #tpu.memory_space<vmem>>, vector<1x256x8xbf16>,
    return
  }
  func.func @transform_0(%arg0: i32) -> (i32, i32, i32) {
    %c0_i32 = arith.constant 0 : i32
    %c0_i32_0 = arith.constant 0 : i32
    %c0_i32_1 = arith.constant 0 : i32
    return %arg0, %c0_i32, %c0_i32_0 : i32, i32, i32
  }
  func.func @transform_1(%arg0: i32) -> (i32, i32, i32) {
    %c0_i32 = arith.constant 0 : i32
    %c0_i32_0 = arith.constant 0 : i32
    %c0_i32_1 = arith.constant 0 : i32
    %c0_i32_2 = arith.constant 0 : i32
    return %c0_i32, %c0_i32_0, %c0_i32_1 : i32, i32, i32
  }
  func.func @transform_2(%arg0: i32) -> (i32, i32) {
    %c0_i32 = arith.constant 0 : i32
    %c0_i32_0 = arith.constant 0 : i32
    %c0_i32_1 = arith.constant 0 : i32
    return %c0_i32, %c0_i32_0 : i32, i32
  }
  func.func @transform_3(%arg0: i32) -> (i32, i32, i32) {
    %c0_i32 = arith.constant 0 : i32
    %c0_i32_0 = arith.constant 0 : i32
    %c0_i32_1 = arith.constant 0 : i32
    return %arg0, %c0_i32, %c0_i32_0 : i32, i32, i32
  }
}

module attributes {stable_mosaic.version = 11 : i64} {
  func.func @kernel(%arg0: i32, %arg1: memref<1x384x18xbf16, #tpu.memory_space<vmem>>, %arg2: memref<3x18x8xbf16, #tpu.memory_space<vmem>>, %arg3: memref<1x8xf32, #tpu.memory_space<vmem>>, %arg4: memref<1x256x8xbf16, #tpu.memory_space<vmem>>, %arg5: memref<1x256x8xbf16, #tpu.memory_space<vmem>>) attributes {dimension_semantics = [#tpu.dimension_semantics<parallel>], iteration_bounds = array<i64: 2>, scalar_prefetch = 0 : i64, scratch_operands = 0 : i64, tpu.core_type = #tpu.core_type<tc>, window_params = [{transform_indices = @transform_0, window_bounds = array<i64: 1, 384, 18>}, {pipeline_mode = #tpu.pipeline_mode<synchronous>, transform_indices = @transform_1, window_bounds = array<i64: 3, 18, 8>}, {pipeline_mode = #tpu.pipeline_mode<synchronous>, transform_indices = @transform_2, window_bounds = array<i64: 1, 8>}, {transform_indices = @transform_3, window_bounds = array<i64: 1, 256, 8>}, {transform_indices = @transform_4, window_bounds = array<i64: 1, 256, 8>}]} {
    %cst = arith.constant 0.000000e+00 : f32
    %0 = vector.broadcast %cst : f32 to vector<256x8xf32>
    %c0 = arith.constant 0 : index
    %c0_0 = arith.constant 0 : index
    %c0_1 = arith.constant 0 : index
    %1 = vector.load %arg1[%c0, %c0_0, %c0_1] : memref<1x384x18xbf16, #tpu.memory_space<vmem>>, vector<1x256x18xbf16>
    %2 = vector.shape_cast %1 : vector<1x256x18xbf16> to vector<256x18xbf16>
    %c0_2 = arith.constant 0 : index
    %c0_3 = arith.constant 0 : index
    %c0_4 = arith.constant 0 : index
    %3 = vector.load %arg2[%c0_2, %c0_3, %c0_4] : memref<3x18x8xbf16, #tpu.memory_space<vmem>>, vector<1x18x8xbf16>
    %4 = vector.shape_cast %3 : vector<1x18x8xbf16> to vector<18x8xbf16>
    %cst_5 = arith.constant dense<0.000000e+00> : vector<256x8xf32>
    %5 = tpu.matmul %2, %4, %cst_5 {dimension_numbers = #tpu.dot_dimension_numbers<[1], [0], [0], [1], [0, 0, 1, 1], [], []>} : vector<256x18xbf16>, vector<18x8xbf16>, vector<256x8xf32> -> vector<256x8xf32>
    %6 = arith.addf %0, %5 : vector<256x8xf32>
    %c0_6 = arith.constant 0 : index
    %c64 = arith.constant 64 : index
    %c0_7 = arith.constant 0 : index
    %7 = vector.load %arg1[%c0_6, %c64, %c0_7] : memref<1x384x18xbf16, #tpu.memory_space<vmem>>, vector<1x256x18xbf16>
    %8 = vector.shape_cast %7 : vector<1x256x18xbf16> to vector<256x18xbf16>
    %c1 = arith.constant 1 : index
    %c0_8 = arith.constant 0 : index
    %c0_9 = arith.constant 0 : index
    %9 = vector.load %arg2[%c1, %c0_8, %c0_9] : memref<3x18x8xbf16, #tpu.memory_space<vmem>>, vector<1x18x8xbf16>
    %10 = vector.shape_cast %9 : vector<1x18x8xbf16> to vector<18x8xbf16>
    %cst_10 = arith.constant dense<0.000000e+00> : vector<256x8xf32>
    %11 = tpu.matmul %8, %10, %cst_10 {dimension_numbers = #tpu.dot_dimension_numbers<[1], [0], [0], [1], [0, 0, 1, 1], [], []>} : vector<256x18xbf16>, vector<18x8xbf16>, vector<256x8xf32> -> vector<256x8xf32>
    %12 = arith.addf %6, %11 : vector<256x8xf32>
    %c0_11 = arith.constant 0 : index
    %c128 = arith.constant 128 : index
    %c0_12 = arith.constant 0 : index
    %13 = vector.load %arg1[%c0_11, %c128, %c0_12] : memref<1x384x18xbf16, #tpu.memory_space<vmem>>, vector<1x256x18xbf16>
    %14 = vector.shape_cast %13 : vector<1x256x18xbf16> to vector<256x18xbf16>
    %c2 = arith.constant 2 : index
    %c0_13 = arith.constant 0 : index
    %c0_14 = arith.constant 0 : index
    %15 = vector.load %arg2[%c2, %c0_13, %c0_14] : memref<3x18x8xbf16, #tpu.memory_space<vmem>>, vector<1x18x8xbf16>
    %16 = vector.shape_cast %15 : vector<1x18x8xbf16> to vector<18x8xbf16>
    %cst_15 = arith.constant dense<0.000000e+00> : vector<256x8xf32>
    %17 = tpu.matmul %14, %16, %cst_15 {dimension_numbers = #tpu.dot_dimension_numbers<[1], [0], [0], [1], [0, 0, 1, 1], [], []>} : vector<256x18xbf16>, vector<18x8xbf16>, vector<256x8xf32> -> vector<256x8xf32>
    %18 = arith.addf %12, %17 : vector<256x8xf32>
    %c0_16 = arith.constant 0 : index
    %c0_17 = arith.constant 0 : index
    %19 = vector.load %arg3[%c0_16, %c0_17] : memref<1x8xf32, #tpu.memory_space<vmem>>, vector<1x8xf32>
    %20 = vector.broadcast %19 : vector<1x8xf32> to vector<256x8xf32>
    %21 = arith.addf %18, %20 : vector<256x8xf32>
    %c0_18 = arith.constant 0 : index
    %c0_19 = arith.constant 0 : index
    %c0_20 = arith.constant 0 : index
    %22 = vector.load %arg4[%c0_18, %c0_19, %c0_20] : memref<1x256x8xbf16, #tpu.memory_space<vmem>>, vector<1x256x8xbf16>
    %23 = vector.shape_cast %22 : vector<1x256x8xbf16> to vector<256x8xbf16>
    %24 = arith.extf %23 : vector<256x8xbf16> to vector<256x8xf32>
    %25 = arith.addf %21, %24 : vector<256x8xf32>
    %cst_21 = arith.constant 0.000000e+00 : f32
    %26 = vector.broadcast %cst_21 : f32 to vector<256x8xf32>
    %27 = arith.maximumf %25, %26 : vector<256x8xf32>
    %28 = arith.truncf %27 : vector<256x8xf32> to vector<256x8xbf16>
    %c0_22 = arith.constant 0 : index
    %c0_23 = arith.constant 0 : index
    %c0_24 = arith.constant 0 : index
    %29 = vector.load %arg5[%c0_22, %c0_23, %c0_24] : memref<1x256x8xbf16, #tpu.memory_space<vmem>>, vector<1x256x8xbf16>
    %30 = vector.shape_cast %29 : vector<1x256x8xbf16> to vector<256x8xbf16>
    %31 = vector.shape_cast %28 : vector<256x8xbf16> to vector<1x256x8xbf16>
    tpu.vector_store %arg5[%c0_22, %c0_23, %c0_24], %31 {strides = array<i32>} : memref<1x256x8xbf16, #tpu.memory_space<vmem>>, vector<1x256x8xbf16>,
    return
  }
  func.func @transform_0(%arg0: i32) -> (i32, i32, i32) {
    %c0_i32 = arith.constant 0 : i32
    %c0_i32_0 = arith.constant 0 : i32
    %c0_i32_1 = arith.constant 0 : i32
    return %arg0, %c0_i32, %c0_i32_0 : i32, i32, i32
  }
  func.func @transform_1(%arg0: i32) -> (i32, i32, i32) {
    %c0_i32 = arith.constant 0 : i32
    %c0_i32_0 = arith.constant 0 : i32
    %c0_i32_1 = arith.constant 0 : i32
    %c0_i32_2 = arith.constant 0 : i32
    return %c0_i32, %c0_i32_0, %c0_i32_1 : i32, i32, i32
  }
  func.func @transform_2(%arg0: i32) -> (i32, i32) {
    %c0_i32 = arith.constant 0 : i32
    %c0_i32_0 = arith.constant 0 : i32
    %c0_i32_1 = arith.constant 0 : i32
    return %c0_i32, %c0_i32_0 : i32, i32
  }
  func.func @transform_3(%arg0: i32) -> (i32, i32, i32) {
    %c0_i32 = arith.constant 0 : i32
    %c0_i32_0 = arith.constant 0 : i32
    %c0_i32_1 = arith.constant 0 : i32
    return %arg0, %c0_i32, %c0_i32_0 : i32, i32, i32
  }
  func.func @transform_4(%arg0: i32) -> (i32, i32, i32) {
    %c0_i32 = arith.constant 0 : i32
    %c0_i32_0 = arith.constant 0 : i32
    %c0_i32_1 = arith.constant 0 : i32
    return %arg0, %c0_i32, %c0_i32_0 : i32, i32, i32
  }
}

</mosaic_0001>

<llo_original>
// kernel: _lambda_.12
$region0: #{_lambda_.12}
  #allocation0 [shape = 'u32[]', space=smem, size = 0x4, offset = 0x4, fixed_abs, tag = 'smem constant byte address 0x4 - core index']
  #allocation1 [shape = 'u32[144,128]{1,0:T(1,128)}', space=vmem, size = 0x12000, scoped, tag = 'internal scratch']
  %s0 = inlined_call_operand.vmem [shape: bf16[16,80,4], index: 0, kind: input, shape index: {}]
  %s1 = inlined_call_operand.vmem [shape: bf16[1,4,2], index: 1, kind: input, shape index: {}]
  %s2 = inlined_call_operand.vmem [shape: f32[1,2], index: 2, kind: input, shape index: {}]
  %s3 = inlined_call_operand.vmem [shape: bf16[16,64,2], index: 3, kind: output, shape index: {}]
  %s4 = sld [smem:[#allocation0]]
  $region45: #{_lambda_.12} parent=0
    _
  %s6 = ssub.s32 1, %s4
  %s7 = scalar_select 0, %s6, %s4
  loop: start=0, step=1, limit=18
  $region2: #{_lambda_.12} parent=0 // loop_pre_header
    _
  $region3: #{_lambda_.12} parent=0 // loop_header
    %s9 = sphi 0, %s13
    %p10 = scmp.ge.s32.totalorder %s9, 18
    %s19 = sphi 0, %s21
    %s22 = sphi 0, %s19
    %s23 = sphi 0, %s22
    %s39 = sphi 0, %s23
    %s43 = sphi 0, %s43
    %s45 = sphi 0, %s43
    %s46 = sphi 0, %s45
    %s60 = sphi 0, %s46
    %s64 = sphi 0, %s64
    %s66 = sphi 0, %s64
    %s67 = sphi 0, %s66
    %s81 = sphi 0, %s67
    %s87 = sphi 0, %s89
    %s90 = sphi 0, %s87
    %s91 = sphi 0, %s90
    %s107 = sphi 0, %s91
  $region4: #{_lambda_.12} parent=0 // loop_header_branch
    %12 = sbr.rel (%p10) target = $region8
  $region5: #{_lambda_.12} parent=0 // loop_body
    %s14 = ssub.s32 %s9, 1
    %s15 = ssub.s32 %s9, 2
    %s16 = sadd.s32 %s9, 1
    %s17 = ssub.s32 %s9, %s16
    %p18 = scmp.eq.s32.totalorder %s17, 0
    %s20 = sadd.s32 %s19, 1
    %s21 = scalar_select %p18, %s19, %s20
    %p24 = pneg %p18
    %p25 = scmp.eq.s32.totalorder %s9, 15
    %p26 = por %p24, %p25
    %p27 = scmp.ne.s32.totalorder %s19, %s22
    %p28 = scmp.eq.s32.totalorder %s9, 0
    %p29 = por %p27, %p28
    %p30 = scmp.ne.s32.totalorder %s19, %s22
    %p31 = scmp.eq.s32.totalorder %s14, 15
    %p32 = por %p30, %p31
    %p33 = scmp.ne.s32.totalorder %s22, %s23
    %p34 = scmp.eq.s32.totalorder %s14, 0
    %p35 = por %p33, %p34
    %p36 = scmp.ne.s32.totalorder %s22, %s23
    %p37 = scmp.eq.s32.totalorder %s15, 15
    %p38 = por %p36, %p37
    %p40 = scmp.ne.s32.totalorder %s23, %s39
    %p41 = scmp.eq.s32.totalorder %s15, 0
    %p42 = por %p40, %p41
    %s44 = sadd.s32 %s43, 1
    %p47 = scmp.eq.s32.totalorder %s9, 15
    %p48 = scmp.ne.s32.totalorder %s43, %s45
    %p49 = scmp.eq.s32.totalorder %s9, 0
    %p50 = por %p48, %p49
    %p51 = scmp.ne.s32.totalorder %s43, %s45
    %p52 = scmp.eq.s32.totalorder %s14, 15
    %p53 = por %p51, %p52
    %p54 = scmp.ne.s32.totalorder %s45, %s46
    %p55 = scmp.eq.s32.totalorder %s14, 0
    %p56 = por %p54, %p55
    %p57 = scmp.ne.s32.totalorder %s45, %s46
    %p58 = scmp.eq.s32.totalorder %s15, 15
    %p59 = por %p57, %p58
    %p61 = scmp.ne.s32.totalorder %s46, %s60
    %p62 = scmp.eq.s32.totalorder %s15, 0
    %p63 = por %p61, %p62
    %s65 = sadd.s32 %s64, 1
    %p68 = scmp.eq.s32.totalorder %s9, 15
    %p69 = scmp.ne.s32.totalorder %s64, %s66
    %p70 = scmp.eq.s32.totalorder %s9, 0
    %p71 = por %p69, %p70
    %p72 = scmp.ne.s32.totalorder %s64, %s66
    %p73 = scmp.eq.s32.totalorder %s14, 15
    %p74 = por %p72, %p73
    %p75 = scmp.ne.s32.totalorder %s66, %s67
    %p76 = scmp.eq.s32.totalorder %s14, 0
    %p77 = por %p75, %p76
    %p78 = scmp.ne.s32.totalorder %s66, %s67
    %p79 = scmp.eq.s32.totalorder %s15, 15
    %p80 = por %p78, %p79
    %p82 = scmp.ne.s32.totalorder %s67, %s81
    %p83 = scmp.eq.s32.totalorder %s15, 0
    %p84 = por %p82, %p83
    %s85 = ssub.s32 %s9, %s16
    %p86 = scmp.eq.s32.totalorder %s85, 0
    %s88 = sadd.s32 %s87, 1
    %s89 = scalar_select %p86, %s87, %s88
    %p92 = pneg %p86
    %p93 = scmp.eq.s32.totalorder %s9, 15
    %p94 = por %p92, %p93
    %p95 = scmp.ne.s32.totalorder %s87, %s90
    %p96 = scmp.eq.s32.totalorder %s9, 0
    %p97 = por %p95, %p96
    %p98 = scmp.ne.s32.totalorder %s87, %s90
    %p99 = scmp.eq.s32.totalorder %s14, 15
    %p100 = por %p98, %p99
    %p101 = scmp.ne.s32.totalorder %s90, %s91
    %p102 = scmp.eq.s32.totalorder %s14, 0
    %p103 = por %p101, %p102
    %p104 = scmp.ne.s32.totalorder %s90, %s91
    %p105 = scmp.eq.s32.totalorder %s15, 15
    %p106 = por %p104, %p105
    %p108 = scmp.ne.s32.totalorder %s91, %s107
    %p109 = scmp.eq.s32.totalorder %s15, 0
    %p110 = por %p108, %p109
    %p111 = scmp.le.s32.totalorder 1, %s9
    %p112 = scmp.lt.s32.totalorder %s9, 17
    %p113 = pnand %p111, %p112
    %p114 = pneg %p113
    // Predicated region
    $region9: #{_lambda_.12} parent=5 // pred_check
      _
    $region10: #{_lambda_.12} parent=5 // pred_check_branch
      %116 = sbr.rel (%p113) target = $region12
    $region11: #{_lambda_.12} parent=5 // pred_region
      %s117 = ssub.s32 %s9, 1
      // Predicated region
      $region13: #{_lambda_.12} parent=11 // pred_check
        %p118 = pneg %p56
      $region14: #{_lambda_.12} parent=11 // pred_check_branch
        %120 = sbr.rel (%p118) target = $region16
      $region15: #{_lambda_.12} parent=11 // pred_region
        _
      $region16: #{_lambda_.12} parent=11 // pred_fallthru
        _
      // Predicated region
      $region17: #{_lambda_.12} parent=11 // pred_check
        %p121 = pneg %p77
      $region18: #{_lambda_.12} parent=11 // pred_check_branch
        %123 = sbr.rel (%p121) target = $region20
      $region19: #{_lambda_.12} parent=11 // pred_region
        _
      $region20: #{_lambda_.12} parent=11 // pred_fallthru
        _
    $region12: #{_lambda_.12} parent=5 // pred_fallthru
      _
    %p124 = scmp.lt.s32.totalorder %s9, 16
    // Predicated region
    $region21: #{_lambda_.12} parent=5 // pred_check
      %p125 = pneg %p124
    $region22: #{_lambda_.12} parent=5 // pred_check_branch
      %127 = sbr.rel (%p125) target = $region24
    $region23: #{_lambda_.12} parent=5 // pred_region
      // Predicated region
      $region25: #{_lambda_.12} parent=23 // pred_check
        %p128 = pneg %p29
      $region26: #{_lambda_.12} parent=23 // pred_check_branch
        %130 = sbr.rel (%p128) target = $region28
      $region27: #{_lambda_.12} parent=23 // pred_region
        %p131 = scmp.lt.s32.totalorder %s9, 15
        %s132 = scalar_select %p131, %s9, 15
        %s133 = smul.addr %s132, 10
        %s134 = smul.addr %s133, 4
        %s135 = scalar_lea.vmem %s0, %s134
      $region28: #{_lambda_.12} parent=23 // pred_fallthru
        _
    $region24: #{_lambda_.12} parent=5 // pred_fallthru
      _
    %p136 = scmp.le.s32.totalorder 1, %s9
    %p137 = scmp.lt.s32.totalorder %s9, 17
    %p138 = pnand %p136, %p137
    %p139 = pneg %p138
    // Predicated region
    $region29: #{_lambda_.12} parent=5 // pred_check
      _
    $region30: #{_lambda_.12} parent=5 // pred_check_branch
      %141 = sbr.rel (%p138) target = $region32
    $region31: #{_lambda_.12} parent=5 // pred_region
      %s142 = ssub.s32 %s9, 1
      %p143 = scmp.lt.s32.totalorder %s14, 15
      %s144 = scalar_select %p143, %s14, 15
      %s145 = smul.addr %s144, 10
      %s146 = smul.addr %s145, 4
      %s147 = scalar_lea.vmem %s0, %s146
      %p148 = pneg %p35
      %p149 = pneg %p32
      %p150 = pneg %p56
      %p151 = pneg %p53
      %p152 = pneg %p77
      %p153 = pneg %p74
      %p154 = pneg %p103
      %p155 = pneg %p100
      %p156 = scmp.lt.s32.totalorder %s14, 15
      %s157 = scalar_select %p156, %s14, 15
      %s158 = smul.addr %s157, 8
      %s159 = smul.addr %s158, 4
      %s160 = scalar_lea.vmem %s3, %s159
      %p161 = scmp.lt.s32.totalorder %s14, 15
      %s162 = scalar_select %p161, %s14, 15
      %s163 = smul.addr %s162, 10
      %s164 = smul.addr %s163, 4
      %s165 = scalar_lea.vmem %s0, %s164
      %p166 = scmp.lt.s32.totalorder %s14, 15
      %s167 = scalar_select %p166, %s14, 15
      %s168 = smul.addr %s167, 8
      %s169 = smul.addr %s168, 4
      %s170 = scalar_lea.vmem %s3, %s169
      %v172 = vld [vmem:[%s165] sm:$0xf]
      %v173 = vld [vmem:[%s165 + $0x4] sm:$0xf]
      %v174 = vld [vmem:[%s165 + $0x8] sm:$0xf]
      %v175 = vld [vmem:[%s165 + $0xc] sm:$0xf]
      %v176 = vld [vmem:[%s165 + $0x10] sm:$0xf]
      %v177 = vld [vmem:[%s165 + $0x14] sm:$0xf]
      %v178 = vld [vmem:[%s165 + $0x18] sm:$0xf]
      %v179 = vld [vmem:[%s165 + $0x1c] sm:$0xf]
      %v180 = vld [vmem:[%s1] sm:$0x3]
      %v181 = vld [vmem:[%s2] sm:$0x1]
      %v183 = vlaneseq
      %v184 = vshrl.u32 %v183, 7
      %v185 = vsub.s32 0, %v184
      %v186 = vrot.slane %v181, %v185
      %v196 = vunpack.c.l.b16 %v172
      %v197 = vunpack.c.l.b16 %v173
      %v198 = vunpack.c.l.b16 %v174
      %v199 = vunpack.c.l.b16 %v175
      %v200 = vunpack.c.l.b16 %v176
      %v201 = vunpack.c.l.b16 %v177
      %v202 = vunpack.c.l.b16 %v178
      %v203 = vunpack.c.l.b16 %v179
      %v204 = vpack.c.b16 %v197, %v196
      %v205 = vpack.c.b16 %v199, %v198
      %v206 = vpack.c.b16 %v201, %v200
      %v207 = vpack.c.b16 %v203, %v202
      %vm208 = vcmask 31744
      %v210 = vsel %vm208, %v204, 0
      %v213 = vsel %vm208, %v205, 0
      %v216 = vsel %vm208, %v206, 0
      %v219 = vsel %vm208, %v207, 0
      %vm221 = vcmask 1041408
      %v223 = vsel %vm221, %v180, 0
      %225 = vmatprep.subr.bf16.mxu0 0
      %226 = vmatpush1.bf16.msra.mxu0 %v223
      %227 = vmatprep.subr.bf16.mxu0 0
      %228 = vmatpush1.bf16.msra.mxu0 0
      %229 = vmatprep.subr.bf16.mxu0 0
      %230 = vmatpush1.bf16.msra.mxu0 0
      %231 = vmatprep.subr.bf16.mxu0 0
      %232 = vmatpush1.bf16.msra.mxu0 0
      %233 = vmatprep.subr.bf16.mxu0 0
      %234 = vmatpush1.bf16.msra.mxu0 0
      %235 = vmatprep.subr.bf16.mxu0 0
      %236 = vmatpush1.bf16.msra.mxu0 0
      %237 = vmatprep.subr.bf16.mxu0 0
      %238 = vmatpush1.bf16.msra.mxu0 0
      %239 = vmatprep.subr.bf16.mxu0 0
      %240 = vmatpush1.bf16.msra.mxu0 0
      %241 = vmatprep.subr.bf16.mxu0 0
      %242 = vmatpush1.bf16.msra.mxu0 0
      %243 = vmatprep.subr.bf16.mxu0 0
      %244 = vmatpush1.bf16.msra.mxu0 0
      %245 = vmatprep.subr.bf16.mxu0 0
      %246 = vmatpush1.bf16.msra.mxu0 0
      %247 = vmatprep.subr.bf16.mxu0 0
      %248 = vmatpush1.bf16.msra.mxu0 0
      %249 = vmatprep.subr.bf16.mxu0 0
      %250 = vmatpush1.bf16.msra.mxu0 0
      %251 = vmatprep.subr.bf16.mxu0 0
      %252 = vmatpush1.bf16.msra.mxu0 0
      %253 = vmatprep.subr.bf16.mxu0 0
      %254 = vmatpush1.bf16.msra.mxu0 0
      %255 = vmatprep.subr.bf16.mxu0 0
      %256 = vmatpush1.bf16.msra.mxu0 0
      %257 = vmatprep.mubr.bf16.mxu0 0
      %258 = vmatmul.mubr.bf16.gmra.mrb[0].mxu0 %v210
      %v259 = vpop.f32.mrb[0].mxu0
      %v260 = vadd.f32 %v186, %v259
      %v261 = vpop.f32.mrb[0].mxu0
      %v262 = vpop.f32.mrb[0].mxu0
      %v263 = vadd.f32 %v186, %v262
      %v264 = vpop.f32.mrb[0].mxu0
      %265 = vmatprep.mubr.bf16.mxu0 0
      %266 = vmatmul.mubr.bf16.gmra.mrb[0].mxu0 %v213
      %v267 = vpop.f32.mrb[0].mxu0
      %v268 = vadd.f32 %v186, %v267
      %v269 = vpop.f32.mrb[0].mxu0
      %v270 = vpop.f32.mrb[0].mxu0
      %v271 = vadd.f32 %v186, %v270
      %v272 = vpop.f32.mrb[0].mxu0
      %273 = vmatprep.mubr.bf16.mxu0 0
      %274 = vmatmul.mubr.bf16.gmra.mrb[0].mxu0 %v216
      %v275 = vpop.f32.mrb[0].mxu0
      %v276 = vadd.f32 %v186, %v275
      %v277 = vpop.f32.mrb[0].mxu0
      %v278 = vpop.f32.mrb[0].mxu0
      %v279 = vadd.f32 %v186, %v278
      %v280 = vpop.f32.mrb[0].mxu0
      %281 = vmatprep.mubr.bf16.mxu0 0
      %282 = vmatmul.mubr.bf16.gmra.mrb[0].mxu0 %v219
      %v283 = vpop.f32.mrb[0].mxu0
      %v284 = vadd.f32 %v186, %v283
      %v285 = vpop.f32.mrb[0].mxu0
      %v286 = vpop.f32.mrb[0].mxu0
      %v287 = vadd.f32 %v186, %v286
      %v288 = vpop.f32.mrb[0].mxu0
      %289 = vdwg.mxu0
      %v290 = vmax.f32 %v260, 0.0
      %v291 = vmax.f32 %v263, 0.0
      %v292 = vmax.f32 %v268, 0.0
      %v293 = vmax.f32 %v271, 0.0
      %v294 = vmax.f32 %v276, 0.0
      %v295 = vmax.f32 %v279, 0.0
      %v296 = vmax.f32 %v284, 0.0
      %v297 = vmax.f32 %v287, 0.0
      %v298 = vpack.c.bf16 %v291, %v290
      %v299 = vpack.c.bf16 %v293, %v292
      %v300 = vpack.c.bf16 %v295, %v294
      %v301 = vpack.c.bf16 %v297, %v296
      %v306 = vunpack.c.l.b16 %v298
      %v307 = vunpack.c.h.b16 %v298
      %v308 = vunpack.c.l.b16 %v299
      %v309 = vunpack.c.h.b16 %v299
      %v310 = vunpack.c.l.b16 %v300
      %v311 = vunpack.c.h.b16 %v300
      %v312 = vunpack.c.l.b16 %v301
      %v313 = vunpack.c.h.b16 %v301
      %v314 = vpack.c.b16 %v306, %v306
      %v315 = vpack.c.b16 %v307, %v307
      %v316 = vpack.c.b16 %v308, %v308
      %v317 = vpack.c.b16 %v309, %v309
      %v318 = vpack.c.b16 %v310, %v310
      %v319 = vpack.c.b16 %v311, %v311
      %v320 = vpack.c.b16 %v312, %v312
      %v321 = vpack.c.b16 %v313, %v313
      %vm330 = vcmask 11264
      %331 = vst.msk [vmem:[%s170] sm:$0xf] %vm330, %v314
      %332 = vst.msk [vmem:[%s170 + $0x4] sm:$0xf] %vm330, %v315
      %333 = vst.msk [vmem:[%s170 + $0x8] sm:$0xf] %vm330, %v316
      %334 = vst.msk [vmem:[%s170 + $0xc] sm:$0xf] %vm330, %v317
      %335 = vst.msk [vmem:[%s170 + $0x10] sm:$0xf] %vm330, %v318
      %336 = vst.msk [vmem:[%s170 + $0x14] sm:$0xf] %vm330, %v319
      %337 = vst.msk [vmem:[%s170 + $0x18] sm:$0xf] %vm330, %v320
      %338 = vst.msk [vmem:[%s170 + $0x1c] sm:$0xf] %vm330, %v321
      %p339 = scmp.lt.s32.totalorder %s14, 15
      %s340 = scalar_select %p339, %s14, 15
      %s341 = smul.addr %s340, 8
      %s342 = smul.addr %s341, 4
      %s343 = scalar_lea.vmem %s3, %s342
      // Predicated region
      $region33: #{_lambda_.12} parent=31 // pred_check
        %p344 = pneg %p100
      $region34: #{_lambda_.12} parent=31 // pred_check_branch
        %346 = sbr.rel (%p344) target = $region36
      $region35: #{_lambda_.12} parent=31 // pred_region
        _
      $region36: #{_lambda_.12} parent=31 // pred_fallthru
        _
    $region32: #{_lambda_.12} parent=5 // pred_fallthru
      _
    %p347 = scmp.le.s32.totalorder 2, %s9
    // Predicated region
    $region37: #{_lambda_.12} parent=5 // pred_check
      %p348 = pneg %p347
    $region38: #{_lambda_.12} parent=5 // pred_check_branch
      %350 = sbr.rel (%p348) target = $region40
    $region39: #{_lambda_.12} parent=5 // pred_region
      %s351 = ssub.s32 %s9, 2
      // Predicated region
      $region41: #{_lambda_.12} parent=39 // pred_check
        %p352 = pneg %p106
      $region42: #{_lambda_.12} parent=39 // pred_check_branch
        %354 = sbr.rel (%p352) target = $region44
      $region43: #{_lambda_.12} parent=39 // pred_region
        %p355 = scmp.lt.s32.totalorder %s15, 15
        %s356 = scalar_select %p355, %s15, 15
        %s357 = smul.addr %s356, 8
        %s358 = smul.addr %s357, 4
        %s359 = scalar_lea.vmem %s3, %s358
      $region44: #{_lambda_.12} parent=39 // pred_fallthru
        _
    $region40: #{_lambda_.12} parent=5 // pred_fallthru
      _
  $region6: #{_lambda_.12} parent=0 // loop_footer
    %s13 = sadd.s32 1, %s9
  $region7: #{_lambda_.12} parent=0 // loop_footer_branch
    %8 = sbr.rel target = $region3
  $region8: #{_lambda_.12} parent=0 // loop_exit
    _

// kernel: _lambda_.13
$region0: #{_lambda_.13}
  #allocation0 [shape = 'u32[]', space=smem, size = 0x4, offset = 0x4, fixed_abs, tag = 'smem constant byte address 0x4 - core index']
  #allocation1 [shape = 'u32[144,128]{1,0:T(1,128)}', space=vmem, size = 0x12000, scoped, tag = 'internal scratch']
  %s0 = inlined_call_operand.vmem [shape: bf16[2,256,2], index: 0, kind: input, shape index: {}]
  %s1 = inlined_call_operand.vmem [shape: bf16[1,2,8], index: 1, kind: input, shape index: {}]
  %s2 = inlined_call_operand.vmem [shape: f32[1,8], index: 2, kind: input, shape index: {}]
  %s3 = inlined_call_operand.vmem [shape: bf16[2,256,8], index: 3, kind: output, shape index: {}]
  %s4 = sld [smem:[#allocation0]]
  $region45: #{_lambda_.13} parent=0
    _
  %s6 = ssub.s32 1, %s4
  %s7 = scalar_select 0, %s6, %s4
  loop: start=0, step=1, limit=4
  $region2: #{_lambda_.13} parent=0 // loop_pre_header
    _
  $region3: #{_lambda_.13} parent=0 // loop_header
    %s9 = sphi 0, %s13
    %p10 = scmp.ge.s32.totalorder %s9, 4
    %s19 = sphi 0, %s21
    %s22 = sphi 0, %s19
    %s23 = sphi 0, %s22
    %s39 = sphi 0, %s23
    %s43 = sphi 0, %s43
    %s45 = sphi 0, %s43
    %s46 = sphi 0, %s45
    %s60 = sphi 0, %s46
    %s64 = sphi 0, %s64
    %s66 = sphi 0, %s64
    %s67 = sphi 0, %s66
    %s81 = sphi 0, %s67
    %s87 = sphi 0, %s89
    %s90 = sphi 0, %s87
    %s91 = sphi 0, %s90
    %s107 = sphi 0, %s91
  $region4: #{_lambda_.13} parent=0 // loop_header_branch
    %12 = sbr.rel (%p10) target = $region8
  $region5: #{_lambda_.13} parent=0 // loop_body
    %s14 = ssub.s32 %s9, 1
    %s15 = ssub.s32 %s9, 2
    %s16 = sadd.s32 %s9, 1
    %s17 = ssub.s32 %s9, %s16
    %p18 = scmp.eq.s32.totalorder %s17, 0
    %s20 = sadd.s32 %s19, 1
    %s21 = scalar_select %p18, %s19, %s20
    %p24 = pneg %p18
    %p25 = scmp.eq.s32.totalorder %s9, 1
    %p26 = por %p24, %p25
    %p27 = scmp.ne.s32.totalorder %s19, %s22
    %p28 = scmp.eq.s32.totalorder %s9, 0
    %p29 = por %p27, %p28
    %p30 = scmp.ne.s32.totalorder %s19, %s22
    %p31 = scmp.eq.s32.totalorder %s14, 1
    %p32 = por %p30, %p31
    %p33 = scmp.ne.s32.totalorder %s22, %s23
    %p34 = scmp.eq.s32.totalorder %s14, 0
    %p35 = por %p33, %p34
    %p36 = scmp.ne.s32.totalorder %s22, %s23
    %p37 = scmp.eq.s32.totalorder %s15, 1
    %p38 = por %p36, %p37
    %p40 = scmp.ne.s32.totalorder %s23, %s39
    %p41 = scmp.eq.s32.totalorder %s15, 0
    %p42 = por %p40, %p41
    %s44 = sadd.s32 %s43, 1
    %p47 = scmp.eq.s32.totalorder %s9, 1
    %p48 = scmp.ne.s32.totalorder %s43, %s45
    %p49 = scmp.eq.s32.totalorder %s9, 0
    %p50 = por %p48, %p49
    %p51 = scmp.ne.s32.totalorder %s43, %s45
    %p52 = scmp.eq.s32.totalorder %s14, 1
    %p53 = por %p51, %p52
    %p54 = scmp.ne.s32.totalorder %s45, %s46
    %p55 = scmp.eq.s32.totalorder %s14, 0
    %p56 = por %p54, %p55
    %p57 = scmp.ne.s32.totalorder %s45, %s46
    %p58 = scmp.eq.s32.totalorder %s15, 1
    %p59 = por %p57, %p58
    %p61 = scmp.ne.s32.totalorder %s46, %s60
    %p62 = scmp.eq.s32.totalorder %s15, 0
    %p63 = por %p61, %p62
    %s65 = sadd.s32 %s64, 1
    %p68 = scmp.eq.s32.totalorder %s9, 1
    %p69 = scmp.ne.s32.totalorder %s64, %s66
    %p70 = scmp.eq.s32.totalorder %s9, 0
    %p71 = por %p69, %p70
    %p72 = scmp.ne.s32.totalorder %s64, %s66
    %p73 = scmp.eq.s32.totalorder %s14, 1
    %p74 = por %p72, %p73
    %p75 = scmp.ne.s32.totalorder %s66, %s67
    %p76 = scmp.eq.s32.totalorder %s14, 0
    %p77 = por %p75, %p76
    %p78 = scmp.ne.s32.totalorder %s66, %s67
    %p79 = scmp.eq.s32.totalorder %s15, 1
    %p80 = por %p78, %p79
    %p82 = scmp.ne.s32.totalorder %s67, %s81
    %p83 = scmp.eq.s32.totalorder %s15, 0
    %p84 = por %p82, %p83
    %s85 = ssub.s32 %s9, %s16
    %p86 = scmp.eq.s32.totalorder %s85, 0
    %s88 = sadd.s32 %s87, 1
    %s89 = scalar_select %p86, %s87, %s88
    %p92 = pneg %p86
    %p93 = scmp.eq.s32.totalorder %s9, 1
    %p94 = por %p92, %p93
    %p95 = scmp.ne.s32.totalorder %s87, %s90
    %p96 = scmp.eq.s32.totalorder %s9, 0
    %p97 = por %p95, %p96
    %p98 = scmp.ne.s32.totalorder %s87, %s90
    %p99 = scmp.eq.s32.totalorder %s14, 1
    %p100 = por %p98, %p99
    %p101 = scmp.ne.s32.totalorder %s90, %s91
    %p102 = scmp.eq.s32.totalorder %s14, 0
    %p103 = por %p101, %p102
    %p104 = scmp.ne.s32.totalorder %s90, %s91
    %p105 = scmp.eq.s32.totalorder %s15, 1
    %p106 = por %p104, %p105
    %p108 = scmp.ne.s32.totalorder %s91, %s107
    %p109 = scmp.eq.s32.totalorder %s15, 0
    %p110 = por %p108, %p109
    %p111 = scmp.le.s32.totalorder 1, %s9
    %p112 = scmp.lt.s32.totalorder %s9, 3
    %p113 = pnand %p111, %p112
    %p114 = pneg %p113
    // Predicated region
    $region9: #{_lambda_.13} parent=5 // pred_check
      _
    $region10: #{_lambda_.13} parent=5 // pred_check_branch
      %116 = sbr.rel (%p113) target = $region12
    $region11: #{_lambda_.13} parent=5 // pred_region
      %s117 = ssub.s32 %s9, 1
      // Predicated region
      $region13: #{_lambda_.13} parent=11 // pred_check
        %p118 = pneg %p56
      $region14: #{_lambda_.13} parent=11 // pred_check_branch
        %120 = sbr.rel (%p118) target = $region16
      $region15: #{_lambda_.13} parent=11 // pred_region
        _
      $region16: #{_lambda_.13} parent=11 // pred_fallthru
        _
      // Predicated region
      $region17: #{_lambda_.13} parent=11 // pred_check
        %p121 = pneg %p77
      $region18: #{_lambda_.13} parent=11 // pred_check_branch
        %123 = sbr.rel (%p121) target = $region20
      $region19: #{_lambda_.13} parent=11 // pred_region
        _
      $region20: #{_lambda_.13} parent=11 // pred_fallthru
        _
    $region12: #{_lambda_.13} parent=5 // pred_fallthru
      _
    %p124 = scmp.lt.s32.totalorder %s9, 2
    // Predicated region
    $region21: #{_lambda_.13} parent=5 // pred_check
      %p125 = pneg %p124
    $region22: #{_lambda_.13} parent=5 // pred_check_branch
      %127 = sbr.rel (%p125) target = $region24
    $region23: #{_lambda_.13} parent=5 // pred_region
      // Predicated region
      $region25: #{_lambda_.13} parent=23 // pred_check
        %p128 = pneg %p29
      $region26: #{_lambda_.13} parent=23 // pred_check_branch
        %130 = sbr.rel (%p128) target = $region28
      $region27: #{_lambda_.13} parent=23 // pred_region
        %p131 = scmp.lt.s32.totalorder %s9, 1
        %s132 = scalar_select %p131, %s9, 1
        %s133 = smul.addr %s132, 32
        %s134 = smul.addr %s133, 4
        %s135 = scalar_lea.vmem %s0, %s134
      $region28: #{_lambda_.13} parent=23 // pred_fallthru
        _
    $region24: #{_lambda_.13} parent=5 // pred_fallthru
      _
    %p136 = scmp.le.s32.totalorder 1, %s9
    %p137 = scmp.lt.s32.totalorder %s9, 3
    %p138 = pnand %p136, %p137
    %p139 = pneg %p138
    // Predicated region
    $region29: #{_lambda_.13} parent=5 // pred_check
      _
    $region30: #{_lambda_.13} parent=5 // pred_check_branch
      %141 = sbr.rel (%p138) target = $region32
    $region31: #{_lambda_.13} parent=5 // pred_region
      %s142 = ssub.s32 %s9, 1
      %p143 = scmp.lt.s32.totalorder %s14, 1
      %s144 = scalar_select %p143, %s14, 1
      %s145 = smul.addr %s144, 32
      %s146 = smul.addr %s145, 4
      %s147 = scalar_lea.vmem %s0, %s146
      %p148 = pneg %p35
      %p149 = pneg %p32
      %p150 = pneg %p56
      %p151 = pneg %p53
      %p152 = pneg %p77
      %p153 = pneg %p74
      %p154 = pneg %p103
      %p155 = pneg %p100
      %p156 = scmp.lt.s32.totalorder %s14, 1
      %s157 = scalar_select %p156, %s14, 1
      %s158 = smul.addr %s157, 32
      %s159 = smul.addr %s158, 4
      %s160 = scalar_lea.vmem %s3, %s159
      %p161 = scmp.lt.s32.totalorder %s14, 1
      %s162 = scalar_select %p161, %s14, 1
      %s163 = smul.addr %s162, 32
      %s164 = smul.addr %s163, 4
      %s165 = scalar_lea.vmem %s0, %s164
      %p166 = scmp.lt.s32.totalorder %s14, 1
      %s167 = scalar_select %p166, %s14, 1
      %s168 = smul.addr %s167, 32
      %s169 = smul.addr %s168, 4
      %s170 = scalar_lea.vmem %s3, %s169
      %v172 = vld [vmem:[%s165] sm:$0xf]
      %v173 = vld [vmem:[%s165 + $0x4] sm:$0xf]
      %v174 = vld [vmem:[%s165 + $0x8] sm:$0xf]
      %v175 = vld [vmem:[%s165 + $0xc] sm:$0xf]
      %v176 = vld [vmem:[%s165 + $0x10] sm:$0xf]
      %v177 = vld [vmem:[%s165 + $0x14] sm:$0xf]
      %v178 = vld [vmem:[%s165 + $0x18] sm:$0xf]
      %v179 = vld [vmem:[%s165 + $0x1c] sm:$0xf]
      %v180 = vld [vmem:[%s165 + $0x20] sm:$0xf]
      %v181 = vld [vmem:[%s165 + $0x24] sm:$0xf]
      %v182 = vld [vmem:[%s165 + $0x28] sm:$0xf]
      %v183 = vld [vmem:[%s165 + $0x2c] sm:$0xf]
      %v184 = vld [vmem:[%s165 + $0x30] sm:$0xf]
      %v185 = vld [vmem:[%s165 + $0x34] sm:$0xf]
      %v186 = vld [vmem:[%s165 + $0x38] sm:$0xf]
      %v187 = vld [vmem:[%s165 + $0x3c] sm:$0xf]
      %v188 = vld [vmem:[%s165 + $0x40] sm:$0xf]
      %v189 = vld [vmem:[%s165 + $0x44] sm:$0xf]
      %v190 = vld [vmem:[%s165 + $0x48] sm:$0xf]
      %v191 = vld [vmem:[%s165 + $0x4c] sm:$0xf]
      %v192 = vld [vmem:[%s165 + $0x50] sm:$0xf]
      %v193 = vld [vmem:[%s165 + $0x54] sm:$0xf]
      %v194 = vld [vmem:[%s165 + $0x58] sm:$0xf]
      %v195 = vld [vmem:[%s165 + $0x5c] sm:$0xf]
      %v196 = vld [vmem:[%s165 + $0x60] sm:$0xf]
      %v197 = vld [vmem:[%s165 + $0x64] sm:$0xf]
      %v198 = vld [vmem:[%s165 + $0x68] sm:$0xf]
      %v199 = vld [vmem:[%s165 + $0x6c] sm:$0xf]
      %v200 = vld [vmem:[%s165 + $0x70] sm:$0xf]
      %v201 = vld [vmem:[%s165 + $0x74] sm:$0xf]
      %v202 = vld [vmem:[%s165 + $0x78] sm:$0xf]
      %v203 = vld [vmem:[%s165 + $0x7c] sm:$0xf]
      %v204 = vld [vmem:[%s1] sm:$0x1]
      %v205 = vld [vmem:[%s2] sm:$0x1]
      %v207 = vlaneseq
      %v208 = vshrl.u32 %v207, 7
      %v209 = vsub.s32 0, %v208
      %v210 = vrot.slane %v205, %v209
      %v244 = vunpack.c.l.b16 %v172
      %v245 = vunpack.c.l.b16 %v173
      %v246 = vunpack.c.l.b16 %v174
      %v247 = vunpack.c.l.b16 %v175
      %v248 = vunpack.c.l.b16 %v176
      %v249 = vunpack.c.l.b16 %v177
      %v250 = vunpack.c.l.b16 %v178
      %v251 = vunpack.c.l.b16 %v179
      %v252 = vunpack.c.l.b16 %v180
      %v253 = vunpack.c.l.b16 %v181
      %v254 = vunpack.c.l.b16 %v182
      %v255 = vunpack.c.l.b16 %v183
      %v256 = vunpack.c.l.b16 %v184
      %v257 = vunpack.c.l.b16 %v185
      %v258 = vunpack.c.l.b16 %v186
      %v259 = vunpack.c.l.b16 %v187
      %v260 = vunpack.c.l.b16 %v188
      %v261 = vunpack.c.l.b16 %v189
      %v262 = vunpack.c.l.b16 %v190
      %v263 = vunpack.c.l.b16 %v191
      %v264 = vunpack.c.l.b16 %v192
      %v265 = vunpack.c.l.b16 %v193
      %v266 = vunpack.c.l.b16 %v194
      %v267 = vunpack.c.l.b16 %v195
      %v268 = vunpack.c.l.b16 %v196
      %v269 = vunpack.c.l.b16 %v197
      %v270 = vunpack.c.l.b16 %v198
      %v271 = vunpack.c.l.b16 %v199
      %v272 = vunpack.c.l.b16 %v200
      %v273 = vunpack.c.l.b16 %v201
      %v274 = vunpack.c.l.b16 %v202
      %v275 = vunpack.c.l.b16 %v203
      %v276 = vpack.c.b16 %v245, %v244
      %v277 = vpack.c.b16 %v247, %v246
      %v278 = vpack.c.b16 %v249, %v248
      %v279 = vpack.c.b16 %v251, %v250
      %v280 = vpack.c.b16 %v253, %v252
      %v281 = vpack.c.b16 %v255, %v254
      %v282 = vpack.c.b16 %v257, %v256
      %v283 = vpack.c.b16 %v259, %v258
      %v284 = vpack.c.b16 %v261, %v260
      %v285 = vpack.c.b16 %v263, %v262
      %v286 = vpack.c.b16 %v265, %v264
      %v287 = vpack.c.b16 %v267, %v266
      %v288 = vpack.c.b16 %v269, %v268
      %v289 = vpack.c.b16 %v271, %v270
      %v290 = vpack.c.b16 %v273, %v272
      %v291 = vpack.c.b16 %v275, %v274
      %vm292 = vcmask 15360
      %v294 = vsel %vm292, %v276, 0
      %v297 = vsel %vm292, %v277, 0
      %v300 = vsel %vm292, %v278, 0
      %v303 = vsel %vm292, %v279, 0
      %v306 = vsel %vm292, %v280, 0
      %v309 = vsel %vm292, %v281, 0
      %v312 = vsel %vm292, %v282, 0
      %v315 = vsel %vm292, %v283, 0
      %v318 = vsel %vm292, %v284, 0
      %v321 = vsel %vm292, %v285, 0
      %v324 = vsel %vm292, %v286, 0
      %v327 = vsel %vm292, %v287, 0
      %v330 = vsel %vm292, %v288, 0
      %v333 = vsel %vm292, %v289, 0
      %v336 = vsel %vm292, %v290, 0
      %v339 = vsel %vm292, %v291, 0
      %vm341 = vcmask 1040384
      %v343 = vsel %vm341, %v204, 0
      %345 = vmatprep.subr.bf16.mxu0 0
      %346 = vmatpush1.bf16.msra.mxu0 %v343
      %347 = vmatprep.subr.bf16.mxu0 0
      %348 = vmatpush1.bf16.msra.mxu0 0
      %349 = vmatprep.subr.bf16.mxu0 0
      %350 = vmatpush1.bf16.msra.mxu0 0
      %351 = vmatprep.subr.bf16.mxu0 0
      %352 = vmatpush1.bf16.msra.mxu0 0
      %353 = vmatprep.subr.bf16.mxu0 0
      %354 = vmatpush1.bf16.msra.mxu0 0
      %355 = vmatprep.subr.bf16.mxu0 0
      %356 = vmatpush1.bf16.msra.mxu0 0
      %357 = vmatprep.subr.bf16.mxu0 0
      %358 = vmatpush1.bf16.msra.mxu0 0
      %359 = vmatprep.subr.bf16.mxu0 0
      %360 = vmatpush1.bf16.msra.mxu0 0
      %361 = vmatprep.subr.bf16.mxu0 0
      %362 = vmatpush1.bf16.msra.mxu0 0
      %363 = vmatprep.subr.bf16.mxu0 0
      %364 = vmatpush1.bf16.msra.mxu0 0
      %365 = vmatprep.subr.bf16.mxu0 0
      %366 = vmatpush1.bf16.msra.mxu0 0
      %367 = vmatprep.subr.bf16.mxu0 0
      %368 = vmatpush1.bf16.msra.mxu0 0
      %369 = vmatprep.subr.bf16.mxu0 0
      %370 = vmatpush1.bf16.msra.mxu0 0
      %371 = vmatprep.subr.bf16.mxu0 0
      %372 = vmatpush1.bf16.msra.mxu0 0
      %373 = vmatprep.subr.bf16.mxu0 0
      %374 = vmatpush1.bf16.msra.mxu0 0
      %375 = vmatprep.subr.bf16.mxu0 0
      %376 = vmatpush1.bf16.msra.mxu0 0
      %377 = vmatprep.mubr.bf16.mxu0 0
      %378 = vmatmul.mubr.bf16.gmra.mrb[0].mxu0 %v294
      %v379 = vpop.f32.mrb[0].mxu0
      %v380 = vadd.f32 %v210, %v379
      %v381 = vpop.f32.mrb[0].mxu0
      %v382 = vpop.f32.mrb[0].mxu0
      %v383 = vadd.f32 %v210, %v382
      %v384 = vpop.f32.mrb[0].mxu0
      %385 = vmatprep.mubr.bf16.mxu0 0
      %386 = vmatmul.mubr.bf16.gmra.mrb[0].mxu0 %v297
      %v387 = vpop.f32.mrb[0].mxu0
      %v388 = vadd.f32 %v210, %v387
      %v389 = vpop.f32.mrb[0].mxu0
      %v390 = vpop.f32.mrb[0].mxu0
      %v391 = vadd.f32 %v210, %v390
      %v392 = vpop.f32.mrb[0].mxu0
      %393 = vmatprep.mubr.bf16.mxu0 0
      %394 = vmatmul.mubr.bf16.gmra.mrb[0].mxu0 %v300
      %v395 = vpop.f32.mrb[0].mxu0
      %v396 = vadd.f32 %v210, %v395
      %v397 = vpop.f32.mrb[0].mxu0
      %v398 = vpop.f32.mrb[0].mxu0
      %v399 = vadd.f32 %v210, %v398
      %v400 = vpop.f32.mrb[0].mxu0
      %401 = vmatprep.mubr.bf16.mxu0 0
      %402 = vmatmul.mubr.bf16.gmra.mrb[0].mxu0 %v303
      %v403 = vpop.f32.mrb[0].mxu0
      %v404 = vadd.f32 %v210, %v403
      %v405 = vpop.f32.mrb[0].mxu0
      %v406 = vpop.f32.mrb[0].mxu0
      %v407 = vadd.f32 %v210, %v406
      %v408 = vpop.f32.mrb[0].mxu0
      %409 = vmatprep.mubr.bf16.mxu0 0
      %410 = vmatmul.mubr.bf16.gmra.mrb[0].mxu0 %v306
      %v411 = vpop.f32.mrb[0].mxu0
      %v412 = vadd.f32 %v210, %v411
      %v413 = vpop.f32.mrb[0].mxu0
      %v414 = vpop.f32.mrb[0].mxu0
      %v415 = vadd.f32 %v210, %v414
      %v416 = vpop.f32.mrb[0].mxu0
      %417 = vmatprep.mubr.bf16.mxu0 0
      %418 = vmatmul.mubr.bf16.gmra.mrb[0].mxu0 %v309
      %v419 = vpop.f32.mrb[0].mxu0
      %v420 = vadd.f32 %v210, %v419
      %v421 = vpop.f32.mrb[0].mxu0
      %v422 = vpop.f32.mrb[0].mxu0
      %v423 = vadd.f32 %v210, %v422
      %v424 = vpop.f32.mrb[0].mxu0
      %425 = vmatprep.mubr.bf16.mxu0 0
      %426 = vmatmul.mubr.bf16.gmra.mrb[0].mxu0 %v312
      %v427 = vpop.f32.mrb[0].mxu0
      %v428 = vadd.f32 %v210, %v427
      %v429 = vpop.f32.mrb[0].mxu0
      %v430 = vpop.f32.mrb[0].mxu0
      %v431 = vadd.f32 %v210, %v430
      %v432 = vpop.f32.mrb[0].mxu0
      %433 = vmatprep.mubr.bf16.mxu0 0
      %434 = vmatmul.mubr.bf16.gmra.mrb[0].mxu0 %v315
      %v435 = vpop.f32.mrb[0].mxu0
      %v436 = vadd.f32 %v210, %v435
      %v437 = vpop.f32.mrb[0].mxu0
      %v438 = vpop.f32.mrb[0].mxu0
      %v439 = vadd.f32 %v210, %v438
      %v440 = vpop.f32.mrb[0].mxu0
      %441 = vmatprep.mubr.bf16.mxu0 0
      %442 = vmatmul.mubr.bf16.gmra.mrb[0].mxu0 %v318
      %v443 = vpop.f32.mrb[0].mxu0
      %v444 = vadd.f32 %v210, %v443
      %v445 = vpop.f32.mrb[0].mxu0
      %v446 = vpop.f32.mrb[0].mxu0
      %v447 = vadd.f32 %v210, %v446
      %v448 = vpop.f32.mrb[0].mxu0
      %449 = vmatprep.mubr.bf16.mxu0 0
      %450 = vmatmul.mubr.bf16.gmra.mrb[0].mxu0 %v321
      %v451 = vpop.f32.mrb[0].mxu0
      %v452 = vadd.f32 %v210, %v451
      %v453 = vpop.f32.mrb[0].mxu0
      %v454 = vpop.f32.mrb[0].mxu0
      %v455 = vadd.f32 %v210, %v454
      %v456 = vpop.f32.mrb[0].mxu0
      %457 = vmatprep.mubr.bf16.mxu0 0
      %458 = vmatmul.mubr.bf16.gmra.mrb[0].mxu0 %v324
      %v459 = vpop.f32.mrb[0].mxu0
      %v460 = vadd.f32 %v210, %v459
      %v461 = vpop.f32.mrb[0].mxu0
      %v462 = vpop.f32.mrb[0].mxu0
      %v463 = vadd.f32 %v210, %v462
      %v464 = vpop.f32.mrb[0].mxu0
      %465 = vmatprep.mubr.bf16.mxu0 0
      %466 = vmatmul.mubr.bf16.gmra.mrb[0].mxu0 %v327
      %v467 = vpop.f32.mrb[0].mxu0
      %v468 = vadd.f32 %v210, %v467
      %v469 = vpop.f32.mrb[0].mxu0
      %v470 = vpop.f32.mrb[0].mxu0
      %v471 = vadd.f32 %v210, %v470
      %v472 = vpop.f32.mrb[0].mxu0
      %473 = vmatprep.mubr.bf16.mxu0 0
      %474 = vmatmul.mubr.bf16.gmra.mrb[0].mxu0 %v330
      %v475 = vpop.f32.mrb[0].mxu0
      %v476 = vadd.f32 %v210, %v475
      %v477 = vpop.f32.mrb[0].mxu0
      %v478 = vpop.f32.mrb[0].mxu0
      %v479 = vadd.f32 %v210, %v478
      %v480 = vpop.f32.mrb[0].mxu0
      %481 = vmatprep.mubr.bf16.mxu0 0
      %482 = vmatmul.mubr.bf16.gmra.mrb[0].mxu0 %v333
      %v483 = vpop.f32.mrb[0].mxu0
      %v484 = vadd.f32 %v210, %v483
      %v485 = vpop.f32.mrb[0].mxu0
      %v486 = vpop.f32.mrb[0].mxu0
      %v487 = vadd.f32 %v210, %v486
      %v488 = vpop.f32.mrb[0].mxu0
      %489 = vmatprep.mubr.bf16.mxu0 0
      %490 = vmatmul.mubr.bf16.gmra.mrb[0].mxu0 %v336
      %v491 = vpop.f32.mrb[0].mxu0
      %v492 = vadd.f32 %v210, %v491
      %v493 = vpop.f32.mrb[0].mxu0
      %v494 = vpop.f32.mrb[0].mxu0
      %v495 = vadd.f32 %v210, %v494
      %v496 = vpop.f32.mrb[0].mxu0
      %497 = vmatprep.mubr.bf16.mxu0 0
      %498 = vmatmul.mubr.bf16.gmra.mrb[0].mxu0 %v339
      %v499 = vpop.f32.mrb[0].mxu0
      %v500 = vadd.f32 %v210, %v499
      %v501 = vpop.f32.mrb[0].mxu0
      %v502 = vpop.f32.mrb[0].mxu0
      %v503 = vadd.f32 %v210, %v502
      %v504 = vpop.f32.mrb[0].mxu0
      %505 = vdwg.mxu0
      %v506 = vpack.c.bf16 %v383, %v380
      %v507 = vpack.c.bf16 %v391, %v388
      %v508 = vpack.c.bf16 %v399, %v396
      %v509 = vpack.c.bf16 %v407, %v404
      %v510 = vpack.c.bf16 %v415, %v412
      %v511 = vpack.c.bf16 %v423, %v420
      %v512 = vpack.c.bf16 %v431, %v428
      %v513 = vpack.c.bf16 %v439, %v436
      %v514 = vpack.c.bf16 %v447, %v444
      %v515 = vpack.c.bf16 %v455, %v452
      %v516 = vpack.c.bf16 %v463, %v460
      %v517 = vpack.c.bf16 %v471, %v468
      %v518 = vpack.c.bf16 %v479, %v476
      %v519 = vpack.c.bf16 %v487, %v484
      %v520 = vpack.c.bf16 %v495, %v492
      %v521 = vpack.c.bf16 %v503, %v500
      %v538 = vunpack.c.l.b16 %v506
      %v539 = vunpack.c.h.b16 %v506
      %v540 = vunpack.c.l.b16 %v507
      %v541 = vunpack.c.h.b16 %v507
      %v542 = vunpack.c.l.b16 %v508
      %v543 = vunpack.c.h.b16 %v508
      %v544 = vunpack.c.l.b16 %v509
      %v545 = vunpack.c.h.b16 %v509
      %v546 = vunpack.c.l.b16 %v510
      %v547 = vunpack.c.h.b16 %v510
      %v548 = vunpack.c.l.b16 %v511
      %v549 = vunpack.c.h.b16 %v511
      %v550 = vunpack.c.l.b16 %v512
      %v551 = vunpack.c.h.b16 %v512
      %v552 = vunpack.c.l.b16 %v513
      %v553 = vunpack.c.h.b16 %v513
      %v554 = vunpack.c.l.b16 %v514
      %v555 = vunpack.c.h.b16 %v514
      %v556 = vunpack.c.l.b16 %v515
      %v557 = vunpack.c.h.b16 %v515
      %v558 = vunpack.c.l.b16 %v516
      %v559 = vunpack.c.h.b16 %v516
      %v560 = vunpack.c.l.b16 %v517
      %v561 = vunpack.c.h.b16 %v517
      %v562 = vunpack.c.l.b16 %v518
      %v563 = vunpack.c.h.b16 %v518
      %v564 = vunpack.c.l.b16 %v519
      %v565 = vunpack.c.h.b16 %v519
      %v566 = vunpack.c.l.b16 %v520
      %v567 = vunpack.c.h.b16 %v520
      %v568 = vunpack.c.l.b16 %v521
      %v569 = vunpack.c.h.b16 %v521
      %v570 = vpack.c.b16 %v538, %v538
      %v571 = vpack.c.b16 %v539, %v539
      %v572 = vpack.c.b16 %v540, %v540
      %v573 = vpack.c.b16 %v541, %v541
      %v574 = vpack.c.b16 %v542, %v542
      %v575 = vpack.c.b16 %v543, %v543
      %v576 = vpack.c.b16 %v544, %v544
      %v577 = vpack.c.b16 %v545, %v545
      %v578 = vpack.c.b16 %v546, %v546
      %v579 = vpack.c.b16 %v547, %v547
      %v580 = vpack.c.b16 %v548, %v548
      %v581 = vpack.c.b16 %v549, %v549
      %v582 = vpack.c.b16 %v550, %v550
      %v583 = vpack.c.b16 %v551, %v551
      %v584 = vpack.c.b16 %v552, %v552
      %v585 = vpack.c.b16 %v553, %v553
      %v586 = vpack.c.b16 %v554, %v554
      %v587 = vpack.c.b16 %v555, %v555
      %v588 = vpack.c.b16 %v556, %v556
      %v589 = vpack.c.b16 %v557, %v557
      %v590 = vpack.c.b16 %v558, %v558
      %v591 = vpack.c.b16 %v559, %v559
      %v592 = vpack.c.b16 %v560, %v560
      %v593 = vpack.c.b16 %v561, %v561
      %v594 = vpack.c.b16 %v562, %v562
      %v595 = vpack.c.b16 %v563, %v563
      %v596 = vpack.c.b16 %v564, %v564
      %v597 = vpack.c.b16 %v565, %v565
      %v598 = vpack.c.b16 %v566, %v566
      %v599 = vpack.c.b16 %v567, %v567
      %v600 = vpack.c.b16 %v568, %v568
      %v601 = vpack.c.b16 %v569, %v569
      %vm634 = vcmask 60416
      %635 = vst.msk [vmem:[%s170] sm:$0xf] %vm634, %v570
      %636 = vst.msk [vmem:[%s170 + $0x4] sm:$0xf] %vm634, %v571
      %637 = vst.msk [vmem:[%s170 + $0x8] sm:$0xf] %vm634, %v572
      %638 = vst.msk [vmem:[%s170 + $0xc] sm:$0xf] %vm634, %v573
      %639 = vst.msk [vmem:[%s170 + $0x10] sm:$0xf] %vm634, %v574
      %640 = vst.msk [vmem:[%s170 + $0x14] sm:$0xf] %vm634, %v575
      %641 = vst.msk [vmem:[%s170 + $0x18] sm:$0xf] %vm634, %v576
      %642 = vst.msk [vmem:[%s170 + $0x1c] sm:$0xf] %vm634, %v577
      %643 = vst.msk [vmem:[%s170 + $0x20] sm:$0xf] %vm634, %v578
      %644 = vst.msk [vmem:[%s170 + $0x24] sm:$0xf] %vm634, %v579
      %645 = vst.msk [vmem:[%s170 + $0x28] sm:$0xf] %vm634, %v580
      %646 = vst.msk [vmem:[%s170 + $0x2c] sm:$0xf] %vm634, %v581
      %647 = vst.msk [vmem:[%s170 + $0x30] sm:$0xf] %vm634, %v582
      %648 = vst.msk [vmem:[%s170 + $0x34] sm:$0xf] %vm634, %v583
      %649 = vst.msk [vmem:[%s170 + $0x38] sm:$0xf] %vm634, %v584
      %650 = vst.msk [vmem:[%s170 + $0x3c] sm:$0xf] %vm634, %v585
      %651 = vst.msk [vmem:[%s170 + $0x40] sm:$0xf] %vm634, %v586
      %652 = vst.msk [vmem:[%s170 + $0x44] sm:$0xf] %vm634, %v587
      %653 = vst.msk [vmem:[%s170 + $0x48] sm:$0xf] %vm634, %v588
      %654 = vst.msk [vmem:[%s170 + $0x4c] sm:$0xf] %vm634, %v589
      %655 = vst.msk [vmem:[%s170 + $0x50] sm:$0xf] %vm634, %v590
      %656 = vst.msk [vmem:[%s170 + $0x54] sm:$0xf] %vm634, %v591
      %657 = vst.msk [vmem:[%s170 + $0x58] sm:$0xf] %vm634, %v592
      %658 = vst.msk [vmem:[%s170 + $0x5c] sm:$0xf] %vm634, %v593
      %659 = vst.msk [vmem:[%s170 + $0x60] sm:$0xf] %vm634, %v594
      %660 = vst.msk [vmem:[%s170 + $0x64] sm:$0xf] %vm634, %v595
      %661 = vst.msk [vmem:[%s170 + $0x68] sm:$0xf] %vm634, %v596
      %662 = vst.msk [vmem:[%s170 + $0x6c] sm:$0xf] %vm634, %v597
      %663 = vst.msk [vmem:[%s170 + $0x70] sm:$0xf] %vm634, %v598
      %664 = vst.msk [vmem:[%s170 + $0x74] sm:$0xf] %vm634, %v599
      %665 = vst.msk [vmem:[%s170 + $0x78] sm:$0xf] %vm634, %v600
      %666 = vst.msk [vmem:[%s170 + $0x7c] sm:$0xf] %vm634, %v601
      %p667 = scmp.lt.s32.totalorder %s14, 1
      %s668 = scalar_select %p667, %s14, 1
      %s669 = smul.addr %s668, 32
      %s670 = smul.addr %s669, 4
      %s671 = scalar_lea.vmem %s3, %s670
      // Predicated region
      $region33: #{_lambda_.13} parent=31 // pred_check
        %p672 = pneg %p100
      $region34: #{_lambda_.13} parent=31 // pred_check_branch
        %674 = sbr.rel (%p672) target = $region36
      $region35: #{_lambda_.13} parent=31 // pred_region
        _
      $region36: #{_lambda_.13} parent=31 // pred_fallthru
        _
    $region32: #{_lambda_.13} parent=5 // pred_fallthru
      _
    %p675 = scmp.le.s32.totalorder 2, %s9
    // Predicated region
    $region37: #{_lambda_.13} parent=5 // pred_check
      %p676 = pneg %p675
    $region38: #{_lambda_.13} parent=5 // pred_check_branch
      %678 = sbr.rel (%p676) target = $region40
    $region39: #{_lambda_.13} parent=5 // pred_region
      %s679 = ssub.s32 %s9, 2
      // Predicated region
      $region41: #{_lambda_.13} parent=39 // pred_check
        %p680 = pneg %p106
      $region42: #{_lambda_.13} parent=39 // pred_check_branch
        %682 = sbr.rel (%p680) target = $region44
      $region43: #{_lambda_.13} parent=39 // pred_region
        %p683 = scmp.lt.s32.totalorder %s15, 1
        %s684 = scalar_select %p683, %s15, 1
        %s685 = smul.addr %s684, 32
        %s686 = smul.addr %s685, 4
        %s687 = scalar_lea.vmem %s3, %s686
      $region44: #{_lambda_.13} parent=39 // pred_fallthru
        _
    $region40: #{_lambda_.13} parent=5 // pred_fallthru
      _
  $region6: #{_lambda_.13} parent=0 // loop_footer
    %s13 = sadd.s32 1, %s9
  $region7: #{_lambda_.13} parent=0 // loop_footer_branch
    %8 = sbr.rel target = $region3
  $region8: #{_lambda_.13} parent=0 // loop_exit
    _

// kernel: _lambda_.10
$region0: #{_lambda_.10}
  #allocation0 [shape = 'u32[]', space=smem, size = 0x4, offset = 0x4, fixed_abs, tag = 'smem constant byte address 0x4 - core index']
  #allocation1 [shape = 'u32[144,128]{1,0:T(1,128)}', space=vmem, size = 0x12000, scoped, tag = 'internal scratch']
  %s0 = inlined_call_operand.vmem [shape: bf16[16,180,4], index: 0, kind: input, shape index: {}]
  %s1 = inlined_call_operand.vmem [shape: bf16[16,180,4], index: 1, kind: input, shape index: {}]
  %s2 = inlined_call_operand.vmem [shape: bf16[9,4,14], index: 2, kind: input, shape index: {}]
  %s3 = inlined_call_operand.vmem [shape: f32[1,14], index: 3, kind: input, shape index: {}]
  %s4 = inlined_call_operand.vmem [shape: bf16[16,144,14], index: 4, kind: output, shape index: {}]
  %s5 = sld [smem:[#allocation0]]
  $region49: #{_lambda_.10} parent=0
    _
  %s7 = ssub.s32 1, %s5
  %s8 = scalar_select 0, %s7, %s5
  loop: start=0, step=1, limit=18
  $region2: #{_lambda_.10} parent=0 // loop_pre_header
    _
  $region3: #{_lambda_.10} parent=0 // loop_header
    %s10 = sphi 0, %s14
    %p11 = scmp.ge.s32.totalorder %s10, 18
    %s20 = sphi 0, %s22
    %s23 = sphi 0, %s20
    %s24 = sphi 0, %s23
    %s40 = sphi 0, %s24
    %s46 = sphi 0, %s48
    %s49 = sphi 0, %s46
    %s50 = sphi 0, %s49
    %s66 = sphi 0, %s50
    %s70 = sphi 0, %s70
    %s72 = sphi 0, %s70
    %s73 = sphi 0, %s72
    %s87 = sphi 0, %s73
    %s91 = sphi 0, %s91
    %s93 = sphi 0, %s91
    %s94 = sphi 0, %s93
    %s108 = sphi 0, %s94
    %s114 = sphi 0, %s116
    %s117 = sphi 0, %s114
    %s118 = sphi 0, %s117
    %s134 = sphi 0, %s118
  $region4: #{_lambda_.10} parent=0 // loop_header_branch
    %13 = sbr.rel (%p11) target = $region8
  $region5: #{_lambda_.10} parent=0 // loop_body
    %s15 = ssub.s32 %s10, 1
    %s16 = ssub.s32 %s10, 2
    %s17 = sadd.s32 %s10, 1
    %s18 = ssub.s32 %s10, %s17
    %p19 = scmp.eq.s32.totalorder %s18, 0
    %s21 = sadd.s32 %s20, 1
    %s22 = scalar_select %p19, %s20, %s21
    %p25 = pneg %p19
    %p26 = scmp.eq.s32.totalorder %s10, 15
    %p27 = por %p25, %p26
    %p28 = scmp.ne.s32.totalorder %s20, %s23
    %p29 = scmp.eq.s32.totalorder %s10, 0
    %p30 = por %p28, %p29
    %p31 = scmp.ne.s32.totalorder %s20, %s23
    %p32 = scmp.eq.s32.totalorder %s15, 15
    %p33 = por %p31, %p32
    %p34 = scmp.ne.s32.totalorder %s23, %s24
    %p35 = scmp.eq.s32.totalorder %s15, 0
    %p36 = por %p34, %p35
    %p37 = scmp.ne.s32.totalorder %s23, %s24
    %p38 = scmp.eq.s32.totalorder %s16, 15
    %p39 = por %p37, %p38
    %p41 = scmp.ne.s32.totalorder %s24, %s40
    %p42 = scmp.eq.s32.totalorder %s16, 0
    %p43 = por %p41, %p42
    %s44 = ssub.s32 %s10, %s17
    %p45 = scmp.eq.s32.totalorder %s44, 0
    %s47 = sadd.s32 %s46, 1
    %s48 = scalar_select %p45, %s46, %s47
    %p51 = pneg %p45
    %p52 = scmp.eq.s32.totalorder %s10, 15
    %p53 = por %p51, %p52
    %p54 = scmp.ne.s32.totalorder %s46, %s49
    %p55 = scmp.eq.s32.totalorder %s10, 0
    %p56 = por %p54, %p55
    %p57 = scmp.ne.s32.totalorder %s46, %s49
    %p58 = scmp.eq.s32.totalorder %s15, 15
    %p59 = por %p57, %p58
    %p60 = scmp.ne.s32.totalorder %s49, %s50
    %p61 = scmp.eq.s32.totalorder %s15, 0
    %p62 = por %p60, %p61
    %p63 = scmp.ne.s32.totalorder %s49, %s50
    %p64 = scmp.eq.s32.totalorder %s16, 15
    %p65 = por %p63, %p64
    %p67 = scmp.ne.s32.totalorder %s50, %s66
    %p68 = scmp.eq.s32.totalorder %s16, 0
    %p69 = por %p67, %p68
    %s71 = sadd.s32 %s70, 1
    %p74 = scmp.eq.s32.totalorder %s10, 15
    %p75 = scmp.ne.s32.totalorder %s70, %s72
    %p76 = scmp.eq.s32.totalorder %s10, 0
    %p77 = por %p75, %p76
    %p78 = scmp.ne.s32.totalorder %s70, %s72
    %p79 = scmp.eq.s32.totalorder %s15, 15
    %p80 = por %p78, %p79
    %p81 = scmp.ne.s32.totalorder %s72, %s73
    %p82 = scmp.eq.s32.totalorder %s15, 0
    %p83 = por %p81, %p82
    %p84 = scmp.ne.s32.totalorder %s72, %s73
    %p85 = scmp.eq.s32.totalorder %s16, 15
    %p86 = por %p84, %p85
    %p88 = scmp.ne.s32.totalorder %s73, %s87
    %p89 = scmp.eq.s32.totalorder %s16, 0
    %p90 = por %p88, %p89
    %s92 = sadd.s32 %s91, 1
    %p95 = scmp.eq.s32.totalorder %s10, 15
    %p96 = scmp.ne.s32.totalorder %s91, %s93
    %p97 = scmp.eq.s32.totalorder %s10, 0
    %p98 = por %p96, %p97
    %p99 = scmp.ne.s32.totalorder %s91, %s93
    %p100 = scmp.eq.s32.totalorder %s15, 15
    %p101 = por %p99, %p100
    %p102 = scmp.ne.s32.totalorder %s93, %s94
    %p103 = scmp.eq.s32.totalorder %s15, 0
    %p104 = por %p102, %p103
    %p105 = scmp.ne.s32.totalorder %s93, %s94
    %p106 = scmp.eq.s32.totalorder %s16, 15
    %p107 = por %p105, %p106
    %p109 = scmp.ne.s32.totalorder %s94, %s108
    %p110 = scmp.eq.s32.totalorder %s16, 0
    %p111 = por %p109, %p110
    %s112 = ssub.s32 %s10, %s17
    %p113 = scmp.eq.s32.totalorder %s112, 0
    %s115 = sadd.s32 %s114, 1
    %s116 = scalar_select %p113, %s114, %s115
    %p119 = pneg %p113
    %p120 = scmp.eq.s32.totalorder %s10, 15
    %p121 = por %p119, %p120
    %p122 = scmp.ne.s32.totalorder %s114, %s117
    %p123 = scmp.eq.s32.totalorder %s10, 0
    %p124 = por %p122, %p123
    %p125 = scmp.ne.s32.totalorder %s114, %s117
    %p126 = scmp.eq.s32.totalorder %s15, 15
    %p127 = por %p125, %p126
    %p128 = scmp.ne.s32.totalorder %s117, %s118
    %p129 = scmp.eq.s32.totalorder %s15, 0
    %p130 = por %p128, %p129
    %p131 = scmp.ne.s32.totalorder %s117, %s118
    %p132 = scmp.eq.s32.totalorder %s16, 15
    %p133 = por %p131, %p132
    %p135 = scmp.ne.s32.totalorder %s118, %s134
    %p136 = scmp.eq.s32.totalorder %s16, 0
    %p137 = por %p135, %p136
    %p138 = scmp.le.s32.totalorder 1, %s10
    %p139 = scmp.lt.s32.totalorder %s10, 17
    %p140 = pnand %p138, %p139
    %p141 = pneg %p140
    // Predicated region
    $region9: #{_lambda_.10} parent=5 // pred_check
      _
    $region10: #{_lambda_.10} parent=5 // pred_check_branch
      %143 = sbr.rel (%p140) target = $region12
    $region11: #{_lambda_.10} parent=5 // pred_region
      %s144 = ssub.s32 %s10, 1
      // Predicated region
      $region13: #{_lambda_.10} parent=11 // pred_check
        %p145 = pneg %p83
      $region14: #{_lambda_.10} parent=11 // pred_check_branch
        %147 = sbr.rel (%p145) target = $region16
      $region15: #{_lambda_.10} parent=11 // pred_region
        _
      $region16: #{_lambda_.10} parent=11 // pred_fallthru
        _
      // Predicated region
      $region17: #{_lambda_.10} parent=11 // pred_check
        %p148 = pneg %p104
      $region18: #{_lambda_.10} parent=11 // pred_check_branch
        %150 = sbr.rel (%p148) target = $region20
      $region19: #{_lambda_.10} parent=11 // pred_region
        _
      $region20: #{_lambda_.10} parent=11 // pred_fallthru
        _
    $region12: #{_lambda_.10} parent=5 // pred_fallthru
      _
    %p151 = scmp.lt.s32.totalorder %s10, 16
    // Predicated region
    $region21: #{_lambda_.10} parent=5 // pred_check
      %p152 = pneg %p151
    $region22: #{_lambda_.10} parent=5 // pred_check_branch
      %154 = sbr.rel (%p152) target = $region24
    $region23: #{_lambda_.10} parent=5 // pred_region
      // Predicated region
      $region25: #{_lambda_.10} parent=23 // pred_check
        %p155 = pneg %p30
      $region26: #{_lambda_.10} parent=23 // pred_check_branch
        %157 = sbr.rel (%p155) target = $region28
      $region27: #{_lambda_.10} parent=23 // pred_region
        %p158 = scmp.lt.s32.totalorder %s10, 15
        %s159 = scalar_select %p158, %s10, 15
        %s160 = smul.addr %s159, 23
        %s161 = smul.addr %s160, 4
        %s162 = scalar_lea.vmem %s0, %s161
      $region28: #{_lambda_.10} parent=23 // pred_fallthru
        _
      // Predicated region
      $region29: #{_lambda_.10} parent=23 // pred_check
        %p163 = pneg %p56
      $region30: #{_lambda_.10} parent=23 // pred_check_branch
        %165 = sbr.rel (%p163) target = $region32
      $region31: #{_lambda_.10} parent=23 // pred_region
        %p166 = scmp.lt.s32.totalorder %s10, 15
        %s167 = scalar_select %p166, %s10, 15
        %s168 = smul.addr %s167, 23
        %s169 = smul.addr %s168, 4
        %s170 = scalar_lea.vmem %s1, %s169
      $region32: #{_lambda_.10} parent=23 // pred_fallthru
        _
    $region24: #{_lambda_.10} parent=5 // pred_fallthru
      _
    %p171 = scmp.le.s32.totalorder 1, %s10
    %p172 = scmp.lt.s32.totalorder %s10, 17
    %p173 = pnand %p171, %p172
    %p174 = pneg %p173
    // Predicated region
    $region33: #{_lambda_.10} parent=5 // pred_check
      _
    $region34: #{_lambda_.10} parent=5 // pred_check_branch
      %176 = sbr.rel (%p173) target = $region36
    $region35: #{_lambda_.10} parent=5 // pred_region
      %s177 = ssub.s32 %s10, 1
      %p178 = scmp.lt.s32.totalorder %s15, 15
      %s179 = scalar_select %p178, %s15, 15
      %s180 = smul.addr %s179, 23
      %s181 = smul.addr %s180, 4
      %s182 = scalar_lea.vmem %s0, %s181
      %p183 = pneg %p36
      %p184 = pneg %p33
      %p185 = scmp.lt.s32.totalorder %s15, 15
      %s186 = scalar_select %p185, %s15, 15
      %s187 = smul.addr %s186, 23
      %s188 = smul.addr %s187, 4
      %s189 = scalar_lea.vmem %s1, %s188
      %p190 = pneg %p62
      %p191 = pneg %p59
      %p192 = pneg %p83
      %p193 = pneg %p80
      %p194 = pneg %p104
      %p195 = pneg %p101
      %p196 = pneg %p130
      %p197 = pneg %p127
      %p198 = scmp.lt.s32.totalorder %s15, 15
      %s199 = scalar_select %p198, %s15, 15
      %s200 = smul.addr %s199, 18
      %s201 = smul.addr %s200, 4
      %s202 = scalar_lea.vmem %s4, %s201
      %p203 = scmp.lt.s32.totalorder %s15, 15
      %s204 = scalar_select %p203, %s15, 15
      %s205 = smul.addr %s204, 23
      %s206 = smul.addr %s205, 4
      %s207 = scalar_lea.vmem %s0, %s206
      %p208 = scmp.lt.s32.totalorder %s15, 15
      %s209 = scalar_select %p208, %s15, 15
      %s210 = smul.addr %s209, 23
      %s211 = smul.addr %s210, 4
      %s212 = scalar_lea.vmem %s1, %s211
      %p213 = scmp.lt.s32.totalorder %s15, 15
      %s214 = scalar_select %p213, %s15, 15
      %s215 = smul.addr %s214, 18
      %s216 = smul.addr %s215, 4
      %s217 = scalar_lea.vmem %s4, %s216
      %v219 = vld [vmem:[%s207] sm:$0xf]
      %v220 = vld [vmem:[%s207 + $0x4] sm:$0xf]
      %v221 = vld [vmem:[%s207 + $0x8] sm:$0xf]
      %v222 = vld [vmem:[%s207 + $0xc] sm:$0xf]
      %v223 = vld [vmem:[%s207 + $0x10] sm:$0xf]
      %v224 = vld [vmem:[%s207 + $0x14] sm:$0xf]
      %v225 = vld [vmem:[%s207 + $0x18] sm:$0xf]
      %v226 = vld [vmem:[%s207 + $0x1c] sm:$0xf]
      %v227 = vld [vmem:[%s207 + $0x20] sm:$0xf]
      %v228 = vld [vmem:[%s207 + $0x24] sm:$0xf]
      %v229 = vld [vmem:[%s207 + $0x28] sm:$0xf]
      %v230 = vld [vmem:[%s207 + $0x2c] sm:$0xf]
      %v231 = vld [vmem:[%s207 + $0x30] sm:$0xf]
      %v232 = vld [vmem:[%s207 + $0x34] sm:$0xf]
      %v233 = vld [vmem:[%s207 + $0x38] sm:$0xf]
      %v234 = vld [vmem:[%s207 + $0x3c] sm:$0xf]
      %v235 = vld [vmem:[%s207 + $0x40] sm:$0xf]
      %v236 = vld [vmem:[%s207 + $0x44] sm:$0xf]
      %v237 = vld [vmem:[%s2] sm:$0x3]
      %v238 = vld [vmem:[%s212] sm:$0xf]
      %v239 = vld [vmem:[%s212 + $0x4] sm:$0xf]
      %v240 = vld [vmem:[%s212 + $0x8] sm:$0xf]
      %v241 = vld [vmem:[%s212 + $0xc] sm:$0xf]
      %v242 = vld [vmem:[%s212 + $0x10] sm:$0xf]
      %v243 = vld [vmem:[%s212 + $0x14] sm:$0xf]
      %v244 = vld [vmem:[%s212 + $0x18] sm:$0xf]
      %v245 = vld [vmem:[%s212 + $0x1c] sm:$0xf]
      %v246 = vld [vmem:[%s212 + $0x20] sm:$0xf]
      %v247 = vld [vmem:[%s212 + $0x24] sm:$0xf]
      %v248 = vld [vmem:[%s212 + $0x28] sm:$0xf]
      %v249 = vld [vmem:[%s212 + $0x2c] sm:$0xf]
      %v250 = vld [vmem:[%s212 + $0x30] sm:$0xf]
      %v251 = vld [vmem:[%s212 + $0x34] sm:$0xf]
      %v252 = vld [vmem:[%s212 + $0x38] sm:$0xf]
      %v253 = vld [vmem:[%s212 + $0x3c] sm:$0xf]
      %v254 = vld [vmem:[%s212 + $0x40] sm:$0xf]
      %v255 = vld [vmem:[%s212 + $0x44] sm:$0xf]
      %s256 = scalar_lea.vmem %s2, 2
      %v257 = vld [vmem:[%s256] sm:$0x3]
      %v276 = vunpack.c.l.b16 %v238
      %v277 = vunpack.c.l.b16 %v239
      %v278 = vunpack.c.l.b16 %v240
      %v279 = vunpack.c.l.b16 %v241
      %v280 = vunpack.c.l.b16 %v242
      %v281 = vunpack.c.l.b16 %v243
      %v282 = vunpack.c.l.b16 %v244
      %v283 = vunpack.c.l.b16 %v245
      %v284 = vunpack.c.l.b16 %v246
      %v285 = vunpack.c.l.b16 %v247
      %v286 = vunpack.c.l.b16 %v248
      %v287 = vunpack.c.l.b16 %v249
      %v288 = vunpack.c.l.b16 %v250
      %v289 = vunpack.c.l.b16 %v251
      %v290 = vunpack.c.l.b16 %v252
      %v291 = vunpack.c.l.b16 %v253
      %v292 = vunpack.c.l.b16 %v254
      %v293 = vunpack.c.l.b16 %v255
      %v294 = vpack.c.b16 %v277, %v276
      %v295 = vpack.c.b16 %v279, %v278
      %v296 = vpack.c.b16 %v281, %v280
      %v297 = vpack.c.b16 %v283, %v282
      %v298 = vpack.c.b16 %v285, %v284
      %v299 = vpack.c.b16 %v287, %v286
      %v300 = vpack.c.b16 %v289, %v288
      %v301 = vpack.c.b16 %v291, %v290
      %v302 = vpack.c.b16 %v293, %v292
      %vm303 = vcmask 31744
      %v305 = vsel %vm303, %v294, 0
      %v308 = vsel %vm303, %v295, 0
      %v311 = vsel %vm303, %v296, 0
      %v314 = vsel %vm303, %v297, 0
      %v317 = vsel %vm303, %v298, 0
      %v320 = vsel %vm303, %v299, 0
      %v323 = vsel %vm303, %v300, 0
      %v326 = vsel %vm303, %v301, 0
      %v329 = vsel %vm303, %v302, 0
      %vm331 = vcmask 1041408
      %v333 = vsel %vm331, %v257, 0
      %335 = vmatprep.subr.bf16.mxu0 0
      %336 = vmatpush1.bf16.msra.mxu0 %v333
      %337 = vmatprep.subr.bf16.mxu0 0
      %338 = vmatpush1.bf16.msra.mxu0 0
      %339 = vmatprep.subr.bf16.mxu0 0
      %340 = vmatpush1.bf16.msra.mxu0 0
      %341 = vmatprep.subr.bf16.mxu0 0
      %342 = vmatpush1.bf16.msra.mxu0 0
      %343 = vmatprep.subr.bf16.mxu0 0
      %344 = vmatpush1.bf16.msra.mxu0 0
      %345 = vmatprep.subr.bf16.mxu0 0
      %346 = vmatpush1.bf16.msra.mxu0 0
      %347 = vmatprep.subr.bf16.mxu0 0
      %348 = vmatpush1.bf16.msra.mxu0 0
      %349 = vmatprep.subr.bf16.mxu0 0
      %350 = vmatpush1.bf16.msra.mxu0 0
      %351 = vmatprep.subr.bf16.mxu0 0
      %352 = vmatpush1.bf16.msra.mxu0 0
      %353 = vmatprep.subr.bf16.mxu0 0
      %354 = vmatpush1.bf16.msra.mxu0 0
      %355 = vmatprep.subr.bf16.mxu0 0
      %356 = vmatpush1.bf16.msra.mxu0 0
      %357 = vmatprep.subr.bf16.mxu0 0
      %358 = vmatpush1.bf16.msra.mxu0 0
      %359 = vmatprep.subr.bf16.mxu0 0
      %360 = vmatpush1.bf16.msra.mxu0 0
      %361 = vmatprep.subr.bf16.mxu0 0
      %362 = vmatpush1.bf16.msra.mxu0 0
      %363 = vmatprep.subr.bf16.mxu0 0
      %364 = vmatpush1.bf16.msra.mxu0 0
      %365 = vmatprep.subr.bf16.mxu0 0
      %366 = vmatpush1.bf16.msra.mxu0 0
      %367 = vmatprep.mubr.bf16.mxu0 0
      %368 = vmatmul.mubr.bf16.gmra.mrb[0].mxu0 %v305
      %v369 = vpop.f32.mrb[0].mxu0
      %v370 = vadd.f32 0.0, %v369
      %v371 = vpop.f32.mrb[0].mxu0
      %v372 = vpop.f32.mrb[0].mxu0
      %v373 = vadd.f32 0.0, %v372
      %v374 = vpop.f32.mrb[0].mxu0
      %375 = vmatprep.mubr.bf16.mxu0 0
      %376 = vmatmul.mubr.bf16.gmra.mrb[0].mxu0 %v308
      %v377 = vpop.f32.mrb[0].mxu0
      %v378 = vadd.f32 0.0, %v377
      %v379 = vpop.f32.mrb[0].mxu0
      %v380 = vpop.f32.mrb[0].mxu0
      %v381 = vadd.f32 0.0, %v380
      %v382 = vpop.f32.mrb[0].mxu0
      %383 = vmatprep.mubr.bf16.mxu0 0
      %384 = vmatmul.mubr.bf16.gmra.mrb[0].mxu0 %v311
      %v385 = vpop.f32.mrb[0].mxu0
      %v386 = vadd.f32 0.0, %v385
      %v387 = vpop.f32.mrb[0].mxu0
      %v388 = vpop.f32.mrb[0].mxu0
      %v389 = vadd.f32 0.0, %v388
      %v390 = vpop.f32.mrb[0].mxu0
      %391 = vmatprep.mubr.bf16.mxu0 0
      %392 = vmatmul.mubr.bf16.gmra.mrb[0].mxu0 %v314
      %v393 = vpop.f32.mrb[0].mxu0
      %v394 = vadd.f32 0.0, %v393
      %v395 = vpop.f32.mrb[0].mxu0
      %v396 = vpop.f32.mrb[0].mxu0
      %v397 = vadd.f32 0.0, %v396
      %v398 = vpop.f32.mrb[0].mxu0
      %399 = vmatprep.mubr.bf16.mxu0 0
      %400 = vmatmul.mubr.bf16.gmra.mrb[0].mxu0 %v317
      %v401 = vpop.f32.mrb[0].mxu0
      %v402 = vadd.f32 0.0, %v401
      %v403 = vpop.f32.mrb[0].mxu0
      %v404 = vpop.f32.mrb[0].mxu0
      %v405 = vadd.f32 0.0, %v404
      %v406 = vpop.f32.mrb[0].mxu0
      %407 = vmatprep.mubr.bf16.mxu0 0
      %408 = vmatmul.mubr.bf16.gmra.mrb[0].mxu0 %v320
      %v409 = vpop.f32.mrb[0].mxu0
      %v410 = vadd.f32 0.0, %v409
      %v411 = vpop.f32.mrb[0].mxu0
      %v412 = vpop.f32.mrb[0].mxu0
      %v413 = vadd.f32 0.0, %v412
      %v414 = vpop.f32.mrb[0].mxu0
      %415 = vmatprep.mubr.bf16.mxu0 0
      %416 = vmatmul.mubr.bf16.gmra.mrb[0].mxu0 %v323
      %v417 = vpop.f32.mrb[0].mxu0
      %v418 = vadd.f32 0.0, %v417
      %v419 = vpop.f32.mrb[0].mxu0
      %v420 = vpop.f32.mrb[0].mxu0
      %v421 = vadd.f32 0.0, %v420
      %v422 = vpop.f32.mrb[0].mxu0
      %423 = vmatprep.mubr.bf16.mxu0 0
      %424 = vmatmul.mubr.bf16.gmra.mrb[0].mxu0 %v326
      %v425 = vpop.f32.mrb[0].mxu0
      %v426 = vadd.f32 0.0, %v425
      %v427 = vpop.f32.mrb[0].mxu0
      %v428 = vpop.f32.mrb[0].mxu0
      %v429 = vadd.f32 0.0, %v428
      %v430 = vpop.f32.mrb[0].mxu0
      %431 = vmatprep.mubr.bf16.mxu0 0
      %432 = vmatmul.mubr.bf16.gmra.mrb[0].mxu0 %v329
      %v433 = vpop.f32.mrb[0].mxu0
      %v434 = vadd.f32 0.0, %v433
      %v435 = vpop.f32.mrb[0].mxu0
      %v436 = vpop.f32.mrb[0].mxu0
      %v437 = vadd.f32 0.0, %v436
      %v438 = vpop.f32.mrb[0].mxu0
      %439 = vdwg.mxu0
      %v458 = vunpack.c.l.b16 %v219
      %v459 = vunpack.c.l.b16 %v220
      %v460 = vunpack.c.l.b16 %v221
      %v461 = vunpack.c.l.b16 %v222
      %v462 = vunpack.c.l.b16 %v223
      %v463 = vunpack.c.l.b16 %v224
      %v464 = vunpack.c.l.b16 %v225
      %v465 = vunpack.c.l.b16 %v226
      %v466 = vunpack.c.l.b16 %v227
      %v467 = vunpack.c.l.b16 %v228
      %v468 = vunpack.c.l.b16 %v229
      %v469 = vunpack.c.l.b16 %v230
      %v470 = vunpack.c.l.b16 %v231
      %v471 = vunpack.c.l.b16 %v232
      %v472 = vunpack.c.l.b16 %v233
      %v473 = vunpack.c.l.b16 %v234
      %v474 = vunpack.c.l.b16 %v235
      %v475 = vunpack.c.l.b16 %v236
      %v476 = vpack.c.b16 %v459, %v458
      %v477 = vpack.c.b16 %v461, %v460
      %v478 = vpack.c.b16 %v463, %v462
      %v479 = vpack.c.b16 %v465, %v464
      %v480 = vpack.c.b16 %v467, %v466
      %v481 = vpack.c.b16 %v469, %v468
      %v482 = vpack.c.b16 %v471, %v470
      %v483 = vpack.c.b16 %v473, %v472
      %v484 = vpack.c.b16 %v475, %v474
      %v486 = vsel %vm303, %v476, 0
      %v489 = vsel %vm303, %v477, 0
      %v492 = vsel %vm303, %v478, 0
      %v495 = vsel %vm303, %v479, 0
      %v498 = vsel %vm303, %v480, 0
      %v501 = vsel %vm303, %v481, 0
      %v504 = vsel %vm303, %v482, 0
      %v507 = vsel %vm303, %v483, 0
      %v510 = vsel %vm303, %v484, 0
      %v513 = vsel %vm331, %v237, 0
      %515 = vmatprep.subr.bf16.mxu0 0
      %516 = vmatpush1.bf16.msra.mxu0 %v513
      %517 = vmatprep.subr.bf16.mxu0 0
      %518 = vmatpush1.bf16.msra.mxu0 0
      %519 = vmatprep.subr.bf16.mxu0 0
      %520 = vmatpush1.bf16.msra.mxu0 0
      %521 = vmatprep.subr.bf16.mxu0 0
      %522 = vmatpush1.bf16.msra.mxu0 0
      %523 = vmatprep.subr.bf16.mxu0 0
      %524 = vmatpush1.bf16.msra.mxu0 0
      %525 = vmatprep.subr.bf16.mxu0 0
      %526 = vmatpush1.bf16.msra.mxu0 0
      %527 = vmatprep.subr.bf16.mxu0 0
      %528 = vmatpush1.bf16.msra.mxu0 0
      %529 = vmatprep.subr.bf16.mxu0 0
      %530 = vmatpush1.bf16.msra.mxu0 0
      %531 = vmatprep.subr.bf16.mxu0 0
      %532 = vmatpush1.bf16.msra.mxu0 0
      %533 = vmatprep.subr.bf16.mxu0 0
      %534 = vmatpush1.bf16.msra.mxu0 0
      %535 = vmatprep.subr.bf16.mxu0 0
      %536 = vmatpush1.bf16.msra.mxu0 0
      %537 = vmatprep.subr.bf16.mxu0 0
      %538 = vmatpush1.bf16.msra.mxu0 0
      %539 = vmatprep.subr.bf16.mxu0 0
      %540 = vmatpush1.bf16.msra.mxu0 0
      %541 = vmatprep.subr.bf16.mxu0 0
      %542 = vmatpush1.bf16.msra.mxu0 0
      %543 = vmatprep.subr.bf16.mxu0 0
      %544 = vmatpush1.bf16.msra.mxu0 0
      %545 = vmatprep.subr.bf16.mxu0 0
      %546 = vmatpush1.bf16.msra.mxu0 0
      %547 = vmatprep.mubr.bf16.mxu0 0
      %548 = vmatmul.mubr.bf16.gmra.mrb[0].mxu0 %v486
      %v549 = vpop.f32.mrb[0].mxu0
      %v550 = vadd.f32 %v370, %v549
      %v551 = vpop.f32.mrb[0].mxu0
      %v552 = vpop.f32.mrb[0].mxu0
      %v553 = vadd.f32 %v373, %v552
      %v554 = vpop.f32.mrb[0].mxu0
      %555 = vmatprep.mubr.bf16.mxu0 0
      %556 = vmatmul.mubr.bf16.gmra.mrb[0].mxu0 %v489
      %v557 = vpop.f32.mrb[0].mxu0
      %v558 = vadd.f32 %v378, %v557
      %v559 = vpop.f32.mrb[0].mxu0
      %v560 = vpop.f32.mrb[0].mxu0
      %v561 = vadd.f32 %v381, %v560
      %v562 = vpop.f32.mrb[0].mxu0
      %563 = vmatprep.mubr.bf16.mxu0 0
      %564 = vmatmul.mubr.bf16.gmra.mrb[0].mxu0 %v492
      %v565 = vpop.f32.mrb[0].mxu0
      %v566 = vadd.f32 %v386, %v565
      %v567 = vpop.f32.mrb[0].mxu0
      %v568 = vpop.f32.mrb[0].mxu0
      %v569 = vadd.f32 %v389, %v568
      %v570 = vpop.f32.mrb[0].mxu0
      %571 = vmatprep.mubr.bf16.mxu0 0
      %572 = vmatmul.mubr.bf16.gmra.mrb[0].mxu0 %v495
      %v573 = vpop.f32.mrb[0].mxu0
      %v574 = vadd.f32 %v394, %v573
      %v575 = vpop.f32.mrb[0].mxu0
      %v576 = vpop.f32.mrb[0].mxu0
      %v577 = vadd.f32 %v397, %v576
      %v578 = vpop.f32.mrb[0].mxu0
      %579 = vmatprep.mubr.bf16.mxu0 0
      %580 = vmatmul.mubr.bf16.gmra.mrb[0].mxu0 %v498
      %v581 = vpop.f32.mrb[0].mxu0
      %v582 = vadd.f32 %v402, %v581
      %v583 = vpop.f32.mrb[0].mxu0
      %v584 = vpop.f32.mrb[0].mxu0
      %v585 = vadd.f32 %v405, %v584
      %v586 = vpop.f32.mrb[0].mxu0
      %587 = vmatprep.mubr.bf16.mxu0 0
      %588 = vmatmul.mubr.bf16.gmra.mrb[0].mxu0 %v501
      %v589 = vpop.f32.mrb[0].mxu0
      %v590 = vadd.f32 %v410, %v589
      %v591 = vpop.f32.mrb[0].mxu0
      %v592 = vpop.f32.mrb[0].mxu0
      %v593 = vadd.f32 %v413, %v592
      %v594 = vpop.f32.mrb[0].mxu0
      %595 = vmatprep.mubr.bf16.mxu0 0
      %596 = vmatmul.mubr.bf16.gmra.mrb[0].mxu0 %v504
      %v597 = vpop.f32.mrb[0].mxu0
      %v598 = vadd.f32 %v418, %v597
      %v599 = vpop.f32.mrb[0].mxu0
      %v600 = vpop.f32.mrb[0].mxu0
      %v601 = vadd.f32 %v421, %v600
      %v602 = vpop.f32.mrb[0].mxu0
      %603 = vmatprep.mubr.bf16.mxu0 0
      %604 = vmatmul.mubr.bf16.gmra.mrb[0].mxu0 %v507
      %v605 = vpop.f32.mrb[0].mxu0
      %v606 = vadd.f32 %v426, %v605
      %v607 = vpop.f32.mrb[0].mxu0
      %v608 = vpop.f32.mrb[0].mxu0
      %v609 = vadd.f32 %v429, %v608
      %v610 = vpop.f32.mrb[0].mxu0
      %611 = vmatprep.mubr.bf16.mxu0 0
      %612 = vmatmul.mubr.bf16.gmra.mrb[0].mxu0 %v510
      %v613 = vpop.f32.mrb[0].mxu0
      %v614 = vadd.f32 %v434, %v613
      %v615 = vpop.f32.mrb[0].mxu0
      %v616 = vpop.f32.mrb[0].mxu0
      %v617 = vadd.f32 %v437, %v616
      %v618 = vpop.f32.mrb[0].mxu0
      %619 = vdwg.mxu0
      %v620 = vld [vmem:[%s207] sm:$0xf]
      %v621 = vld [vmem:[%s207 + $0x4] sm:$0xf]
      %v622 = vld [vmem:[%s207 + $0x8] sm:$0xf]
      %v623 = vld [vmem:[%s207 + $0xc] sm:$0xf]
      %v624 = vld [vmem:[%s207 + $0x10] sm:$0xf]
      %v625 = vld [vmem:[%s207 + $0x14] sm:$0xf]
      %v626 = vld [vmem:[%s207 + $0x18] sm:$0xf]
      %v627 = vld [vmem:[%s207 + $0x1c] sm:$0xf]
      %v628 = vld [vmem:[%s207 + $0x20] sm:$0xf]
      %v629 = vld [vmem:[%s207 + $0x24] sm:$0xf]
      %v630 = vld [vmem:[%s207 + $0x28] sm:$0xf]
      %v631 = vld [vmem:[%s207 + $0x2c] sm:$0xf]
      %v632 = vld [vmem:[%s207 + $0x30] sm:$0xf]
      %v633 = vld [vmem:[%s207 + $0x34] sm:$0xf]
      %v634 = vld [vmem:[%s207 + $0x38] sm:$0xf]
      %v635 = vld [vmem:[%s207 + $0x3c] sm:$0xf]
      %v636 = vld [vmem:[%s207 + $0x40] sm:$0xf]
      %v637 = vld [vmem:[%s207 + $0x44] sm:$0xf]
      %v638 = vld [vmem:[%s207 + $0x48] sm:$0x1]
      %s639 = scalar_lea.vmem %s2, 4
      %v640 = vld [vmem:[%s639] sm:$0x3]
      %v660 = vunpack.c.l.b16 %v620
      %v661 = vunpack.c.l.b16 %v621
      %v662 = vunpack.c.l.b16 %v622
      %v663 = vunpack.c.l.b16 %v623
      %v664 = vunpack.c.l.b16 %v624
      %v665 = vunpack.c.l.b16 %v625
      %v666 = vunpack.c.l.b16 %v626
      %v667 = vunpack.c.l.b16 %v627
      %v668 = vunpack.c.l.b16 %v628
      %v669 = vunpack.c.l.b16 %v629
      %v670 = vunpack.c.l.b16 %v630
      %v671 = vunpack.c.l.b16 %v631
      %v672 = vunpack.c.l.b16 %v632
      %v673 = vunpack.c.l.b16 %v633
      %v674 = vunpack.c.l.b16 %v634
      %v675 = vunpack.c.l.b16 %v635
      %v676 = vunpack.c.l.b16 %v636
      %v677 = vunpack.c.l.b16 %v637
      %v678 = vunpack.c.l.b16 %v638
      %v679 = vpack.c.b16 %v661, %v660
      %v680 = vpack.c.b16 %v663, %v662
      %v681 = vpack.c.b16 %v665, %v664
      %v682 = vpack.c.b16 %v667, %v666
      %v683 = vpack.c.b16 %v669, %v668
      %v684 = vpack.c.b16 %v671, %v670
      %v685 = vpack.c.b16 %v673, %v672
      %v686 = vpack.c.b16 %v675, %v674
      %v687 = vpack.c.b16 %v677, %v676
      %v688 = vpack.c.b16 %v678, %v678
      %vm689 = vsmask.f32 7424
      %v691 = vshrl.u32 %v679, 16
      %v693 = vshll.u32 %v679, 16
      %v695 = vrot.slane %v693, 1
      %v696 = vor.u32 %v691, %v695
      %v698 = vshll.u32 %v680, 16
      %v700 = vrot.slane %v698, 1
      %v701 = vsel %vm689, %v696, %v700
      %v702 = vshrl.u32 %v680, 16
      %v704 = vor.u32 %v702, %v700
      %v706 = vshll.u32 %v681, 16
      %v708 = vrot.slane %v706, 1
      %v709 = vsel %vm689, %v704, %v708
      %v710 = vshrl.u32 %v681, 16
      %v712 = vor.u32 %v710, %v708
      %v714 = vshll.u32 %v682, 16
      %v716 = vrot.slane %v714, 1
      %v717 = vsel %vm689, %v712, %v716
      %v718 = vshrl.u32 %v682, 16
      %v720 = vor.u32 %v718, %v716
      %v722 = vshll.u32 %v683, 16
      %v724 = vrot.slane %v722, 1
      %v725 = vsel %vm689, %v720, %v724
      %v726 = vshrl.u32 %v683, 16
      %v728 = vor.u32 %v726, %v724
      %v730 = vshll.u32 %v684, 16
      %v732 = vrot.slane %v730, 1
      %v733 = vsel %vm689, %v728, %v732
      %v734 = vshrl.u32 %v684, 16
      %v736 = vor.u32 %v734, %v732
      %v738 = vshll.u32 %v685, 16
      %v740 = vrot.slane %v738, 1
      %v741 = vsel %vm689, %v736, %v740
      %v742 = vshrl.u32 %v685, 16
      %v744 = vor.u32 %v742, %v740
      %v746 = vshll.u32 %v686, 16
      %v748 = vrot.slane %v746, 1
      %v749 = vsel %vm689, %v744, %v748
      %v750 = vshrl.u32 %v686, 16
      %v752 = vor.u32 %v750, %v748
      %v754 = vshll.u32 %v687, 16
      %v756 = vrot.slane %v754, 1
      %v757 = vsel %vm689, %v752, %v756
      %v758 = vshrl.u32 %v687, 16
      %v760 = vor.u32 %v758, %v756
      %v762 = vshll.u32 %v688, 16
      %v764 = vrot.slane %v762, 1
      %v765 = vsel %vm689, %v760, %v764
      %v767 = vsel %vm303, %v701, 0
      %v770 = vsel %vm303, %v709, 0
      %v773 = vsel %vm303, %v717, 0
      %v776 = vsel %vm303, %v725, 0
      %v779 = vsel %vm303, %v733, 0
      %v782 = vsel %vm303, %v741, 0
      %v785 = vsel %vm303, %v749, 0
      %v788 = vsel %vm303, %v757, 0
      %v791 = vsel %vm303, %v765, 0
      %v794 = vsel %vm331, %v640, 0
      %796 = vmatprep.subr.bf16.mxu0 0
      %797 = vmatpush1.bf16.msra.mxu0 %v794
      %798 = vmatprep.subr.bf16.mxu0 0
      %799 = vmatpush1.bf16.msra.mxu0 0
      %800 = vmatprep.subr.bf16.mxu0 0
      %801 = vmatpush1.bf16.msra.mxu0 0
      %802 = vmatprep.subr.bf16.mxu0 0
      %803 = vmatpush1.bf16.msra.mxu0 0
      %804 = vmatprep.subr.bf16.mxu0 0
      %805 = vmatpush1.bf16.msra.mxu0 0
      %806 = vmatprep.subr.bf16.mxu0 0
      %807 = vmatpush1.bf16.msra.mxu0 0
      %808 = vmatprep.subr.bf16.mxu0 0
      %809 = vmatpush1.bf16.msra.mxu0 0
      %810 = vmatprep.subr.bf16.mxu0 0
      %811 = vmatpush1.bf16.msra.mxu0 0
      %812 = vmatprep.subr.bf16.mxu0 0
      %813 = vmatpush1.bf16.msra.mxu0 0
      %814 = vmatprep.subr.bf16.mxu0 0
      %815 = vmatpush1.bf16.msra.mxu0 0
      %816 = vmatprep.subr.bf16.mxu0 0
      %817 = vmatpush1.bf16.msra.mxu0 0
      %818 = vmatprep.subr.bf16.mxu0 0
      %819 = vmatpush1.bf16.msra.mxu0 0
      %820 = vmatprep.subr.bf16.mxu0 0
      %821 = vmatpush1.bf16.msra.mxu0 0
      %822 = vmatprep.subr.bf16.mxu0 0
      %823 = vmatpush1.bf16.msra.mxu0 0
      %824 = vmatprep.subr.bf16.mxu0 0
      %825 = vmatpush1.bf16.msra.mxu0 0
      %826 = vmatprep.subr.bf16.mxu0 0
      %827 = vmatpush1.bf16.msra.mxu0 0
      %828 = vmatprep.mubr.bf16.mxu0 0
      %829 = vmatmul.mubr.bf16.gmra.mrb[0].mxu0 %v767
      %v830 = vpop.f32.mrb[0].mxu0
      %v831 = vadd.f32 0.0, %v830
      %v832 = vpop.f32.mrb[0].mxu0
      %v833 = vpop.f32.mrb[0].mxu0
      %v834 = vadd.f32 0.0, %v833
      %v835 = vpop.f32.mrb[0].mxu0
      %836 = vmatprep.mubr.bf16.mxu0 0
      %837 = vmatmul.mubr.bf16.gmra.mrb[0].mxu0 %v770
      %v838 = vpop.f32.mrb[0].mxu0
      %v839 = vadd.f32 0.0, %v838
      %v840 = vpop.f32.mrb[0].mxu0
      %v841 = vpop.f32.mrb[0].mxu0
      %v842 = vadd.f32 0.0, %v841
      %v843 = vpop.f32.mrb[0].mxu0
      %844 = vmatprep.mubr.bf16.mxu0 0
      %845 = vmatmul.mubr.bf16.gmra.mrb[0].mxu0 %v773
      %v846 = vpop.f32.mrb[0].mxu0
      %v847 = vadd.f32 0.0, %v846
      %v848 = vpop.f32.mrb[0].mxu0
      %v849 = vpop.f32.mrb[0].mxu0
      %v850 = vadd.f32 0.0, %v849
      %v851 = vpop.f32.mrb[0].mxu0
      %852 = vmatprep.mubr.bf16.mxu0 0
      %853 = vmatmul.mubr.bf16.gmra.mrb[0].mxu0 %v776
      %v854 = vpop.f32.mrb[0].mxu0
      %v855 = vadd.f32 0.0, %v854
      %v856 = vpop.f32.mrb[0].mxu0
      %v857 = vpop.f32.mrb[0].mxu0
      %v858 = vadd.f32 0.0, %v857
      %v859 = vpop.f32.mrb[0].mxu0
      %860 = vmatprep.mubr.bf16.mxu0 0
      %861 = vmatmul.mubr.bf16.gmra.mrb[0].mxu0 %v779
      %v862 = vpop.f32.mrb[0].mxu0
      %v863 = vadd.f32 0.0, %v862
      %v864 = vpop.f32.mrb[0].mxu0
      %v865 = vpop.f32.mrb[0].mxu0
      %v866 = vadd.f32 0.0, %v865
      %v867 = vpop.f32.mrb[0].mxu0
      %868 = vmatprep.mubr.bf16.mxu0 0
      %869 = vmatmul.mubr.bf16.gmra.mrb[0].mxu0 %v782
      %v870 = vpop.f32.mrb[0].mxu0
      %v871 = vadd.f32 0.0, %v870
      %v872 = vpop.f32.mrb[0].mxu0
      %v873 = vpop.f32.mrb[0].mxu0
      %v874 = vadd.f32 0.0, %v873
      %v875 = vpop.f32.mrb[0].mxu0
      %876 = vmatprep.mubr.bf16.mxu0 0
      %877 = vmatmul.mubr.bf16.gmra.mrb[0].mxu0 %v785
      %v878 = vpop.f32.mrb[0].mxu0
      %v879 = vadd.f32 0.0, %v878
      %v880 = vpop.f32.mrb[0].mxu0
      %v881 = vpop.f32.mrb[0].mxu0
      %v882 = vadd.f32 0.0, %v881
      %v883 = vpop.f32.mrb[0].mxu0
      %884 = vmatprep.mubr.bf16.mxu0 0
      %885 = vmatmul.mubr.bf16.gmra.mrb[0].mxu0 %v788
      %v886 = vpop.f32.mrb[0].mxu0
      %v887 = vadd.f32 0.0, %v886
      %v888 = vpop.f32.mrb[0].mxu0
      %v889 = vpop.f32.mrb[0].mxu0
      %v890 = vadd.f32 0.0, %v889
      %v891 = vpop.f32.mrb[0].mxu0
      %892 = vmatprep.mubr.bf16.mxu0 0
      %893 = vmatmul.mubr.bf16.gmra.mrb[0].mxu0 %v791
      %v894 = vpop.f32.mrb[0].mxu0
      %v895 = vadd.f32 0.0, %v894
      %v896 = vpop.f32.mrb[0].mxu0
      %v897 = vpop.f32.mrb[0].mxu0
      %v898 = vadd.f32 0.0, %v897
      %v899 = vpop.f32.mrb[0].mxu0
      %900 = vdwg.mxu0
      %v901 = vadd.f32 %v550, %v831
      %v902 = vadd.f32 %v553, %v834
      %v903 = vadd.f32 %v558, %v839
      %v904 = vadd.f32 %v561, %v842
      %v905 = vadd.f32 %v566, %v847
      %v906 = vadd.f32 %v569, %v850
      %v907 = vadd.f32 %v574, %v855
      %v908 = vadd.f32 %v577, %v858
      %v909 = vadd.f32 %v582, %v863
      %v910 = vadd.f32 %v585, %v866
      %v911 = vadd.f32 %v590, %v871
      %v912 = vadd.f32 %v593, %v874
      %v913 = vadd.f32 %v598, %v879
      %v914 = vadd.f32 %v601, %v882
      %v915 = vadd.f32 %v606, %v887
      %v916 = vadd.f32 %v609, %v890
      %v917 = vadd.f32 %v614, %v895
      %v918 = vadd.f32 %v617, %v898
      %v919 = vld [vmem:[%s207 + $0x4] sm:$0xf]
      %v920 = vld [vmem:[%s207 + $0x8] sm:$0xf]
      %v921 = vld [vmem:[%s207 + $0xc] sm:$0xf]
      %v922 = vld [vmem:[%s207 + $0x10] sm:$0xf]
      %v923 = vld [vmem:[%s207 + $0x14] sm:$0xf]
      %v924 = vld [vmem:[%s207 + $0x18] sm:$0xf]
      %v925 = vld [vmem:[%s207 + $0x1c] sm:$0xf]
      %v926 = vld [vmem:[%s207 + $0x20] sm:$0xf]
      %v927 = vld [vmem:[%s207 + $0x24] sm:$0xf]
      %v928 = vld [vmem:[%s207 + $0x28] sm:$0xf]
      %v929 = vld [vmem:[%s207 + $0x2c] sm:$0xf]
      %v930 = vld [vmem:[%s207 + $0x30] sm:$0xf]
      %v931 = vld [vmem:[%s207 + $0x34] sm:$0xf]
      %v932 = vld [vmem:[%s207 + $0x38] sm:$0xf]
      %v933 = vld [vmem:[%s207 + $0x3c] sm:$0xf]
      %v934 = vld [vmem:[%s207 + $0x40] sm:$0xf]
      %v935 = vld [vmem:[%s207 + $0x44] sm:$0xf]
      %v936 = vld [vmem:[%s207 + $0x48] sm:$0xf]
      %v937 = vld [vmem:[%s207 + $0x4c] sm:$0x1]
      %s938 = scalar_lea.vmem %s2, 6
      %v939 = vld [vmem:[%s938] sm:$0x3]
      %v959 = vunpack.c.l.b16 %v919
      %v960 = vunpack.c.l.b16 %v920
      %v961 = vunpack.c.l.b16 %v921
      %v962 = vunpack.c.l.b16 %v922
      %v963 = vunpack.c.l.b16 %v923
      %v964 = vunpack.c.l.b16 %v924
      %v965 = vunpack.c.l.b16 %v925
      %v966 = vunpack.c.l.b16 %v926
      %v967 = vunpack.c.l.b16 %v927
      %v968 = vunpack.c.l.b16 %v928
      %v969 = vunpack.c.l.b16 %v929
      %v970 = vunpack.c.l.b16 %v930
      %v971 = vunpack.c.l.b16 %v931
      %v972 = vunpack.c.l.b16 %v932
      %v973 = vunpack.c.l.b16 %v933
      %v974 = vunpack.c.l.b16 %v934
      %v975 = vunpack.c.l.b16 %v935
      %v976 = vunpack.c.l.b16 %v936
      %v977 = vunpack.c.l.b16 %v937
      %v978 = vpack.c.b16 %v960, %v959
      %v979 = vpack.c.b16 %v962, %v961
      %v980 = vpack.c.b16 %v964, %v963
      %v981 = vpack.c.b16 %v966, %v965
      %v982 = vpack.c.b16 %v968, %v967
      %v983 = vpack.c.b16 %v970, %v969
      %v984 = vpack.c.b16 %v972, %v971
      %v985 = vpack.c.b16 %v974, %v973
      %v986 = vpack.c.b16 %v976, %v975
      %v987 = vpack.c.b16 %v977, %v977
      %v989 = vshrl.u32 %v978, 16
      %v991 = vshll.u32 %v978, 16
      %v993 = vrot.slane %v991, 1
      %v994 = vor.u32 %v989, %v993
      %v996 = vshll.u32 %v979, 16
      %v998 = vrot.slane %v996, 1
      %v999 = vsel %vm689, %v994, %v998
      %v1000 = vshrl.u32 %v979, 16
      %v1002 = vor.u32 %v1000, %v998
      %v1004 = vshll.u32 %v980, 16
      %v1006 = vrot.slane %v1004, 1
      %v1007 = vsel %vm689, %v1002, %v1006
      %v1008 = vshrl.u32 %v980, 16
      %v1010 = vor.u32 %v1008, %v1006
      %v1012 = vshll.u32 %v981, 16
      %v1014 = vrot.slane %v1012, 1
      %v1015 = vsel %vm689, %v1010, %v1014
      %v1016 = vshrl.u32 %v981, 16
      %v1018 = vor.u32 %v1016, %v1014
      %v1020 = vshll.u32 %v982, 16
      %v1022 = vrot.slane %v1020, 1
      %v1023 = vsel %vm689, %v1018, %v1022
      %v1024 = vshrl.u32 %v982, 16
      %v1026 = vor.u32 %v1024, %v1022
      %v1028 = vshll.u32 %v983, 16
      %v1030 = vrot.slane %v1028, 1
      %v1031 = vsel %vm689, %v1026, %v1030
      %v1032 = vshrl.u32 %v983, 16
      %v1034 = vor.u32 %v1032, %v1030
      %v1036 = vshll.u32 %v984, 16
      %v1038 = vrot.slane %v1036, 1
      %v1039 = vsel %vm689, %v1034, %v1038
      %v1040 = vshrl.u32 %v984, 16
      %v1042 = vor.u32 %v1040, %v1038
      %v1044 = vshll.u32 %v985, 16
      %v1046 = vrot.slane %v1044, 1
      %v1047 = vsel %vm689, %v1042, %v1046
      %v1048 = vshrl.u32 %v985, 16
      %v1050 = vor.u32 %v1048, %v1046
      %v1052 = vshll.u32 %v986, 16
      %v1054 = vrot.slane %v1052, 1
      %v1055 = vsel %vm689, %v1050, %v1054
      %v1056 = vshrl.u32 %v986, 16
      %v1058 = vor.u32 %v1056, %v1054
      %v1060 = vshll.u32 %v987, 16
      %v1062 = vrot.slane %v1060, 1
      %v1063 = vsel %vm689, %v1058, %v1062
      %v1065 = vsel %vm303, %v999, 0
      %v1068 = vsel %vm303, %v1007, 0
      %v1071 = vsel %vm303, %v1015, 0
      %v1074 = vsel %vm303, %v1023, 0
      %v1077 = vsel %vm303, %v1031, 0
      %v1080 = vsel %vm303, %v1039, 0
      %v1083 = vsel %vm303, %v1047, 0
      %v1086 = vsel %vm303, %v1055, 0
      %v1089 = vsel %vm303, %v1063, 0
      %v1092 = vsel %vm331, %v939, 0
      %1094 = vmatprep.subr.bf16.mxu0 0
      %1095 = vmatpush1.bf16.msra.mxu0 %v1092
      %1096 = vmatprep.subr.bf16.mxu0 0
      %1097 = vmatpush1.bf16.msra.mxu0 0
      %1098 = vmatprep.subr.bf16.mxu0 0
      %1099 = vmatpush1.bf16.msra.mxu0 0
      %1100 = vmatprep.subr.bf16.mxu0 0
      %1101 = vmatpush1.bf16.msra.mxu0 0
      %1102 = vmatprep.subr.bf16.mxu0 0
      %1103 = vmatpush1.bf16.msra.mxu0 0
      %1104 = vmatprep.subr.bf16.mxu0 0
      %1105 = vmatpush1.bf16.msra.mxu0 0
      %1106 = vmatprep.subr.bf16.mxu0 0
      %1107 = vmatpush1.bf16.msra.mxu0 0
      %1108 = vmatprep.subr.bf16.mxu0 0
      %1109 = vmatpush1.bf16.msra.mxu0 0
      %1110 = vmatprep.subr.bf16.mxu0 0
      %1111 = vmatpush1.bf16.msra.mxu0 0
      %1112 = vmatprep.subr.bf16.mxu0 0
      %1113 = vmatpush1.bf16.msra.mxu0 0
      %1114 = vmatprep.subr.bf16.mxu0 0
      %1115 = vmatpush1.bf16.msra.mxu0 0
      %1116 = vmatprep.subr.bf16.mxu0 0
      %1117 = vmatpush1.bf16.msra.mxu0 0
      %1118 = vmatprep.subr.bf16.mxu0 0
      %1119 = vmatpush1.bf16.msra.mxu0 0
      %1120 = vmatprep.subr.bf16.mxu0 0
      %1121 = vmatpush1.bf16.msra.mxu0 0
      %1122 = vmatprep.subr.bf16.mxu0 0
      %1123 = vmatpush1.bf16.msra.mxu0 0
      %1124 = vmatprep.subr.bf16.mxu0 0
      %1125 = vmatpush1.bf16.msra.mxu0 0
      %1126 = vmatprep.mubr.bf16.mxu0 0
      %1127 = vmatmul.mubr.bf16.gmra.mrb[0].mxu0 %v1065
      %v1128 = vpop.f32.mrb[0].mxu0
      %v1129 = vadd.f32 0.0, %v1128
      %v1130 = vpop.f32.mrb[0].mxu0
      %v1131 = vpop.f32.mrb[0].mxu0
      %v1132 = vadd.f32 0.0, %v1131
      %v1133 = vpop.f32.mrb[0].mxu0
      %1134 = vmatprep.mubr.bf16.mxu0 0
      %1135 = vmatmul.mubr.bf16.gmra.mrb[0].mxu0 %v1068
      %v1136 = vpop.f32.mrb[0].mxu0
      %v1137 = vadd.f32 0.0, %v1136
      %v1138 = vpop.f32.mrb[0].mxu0
      %v1139 = vpop.f32.mrb[0].mxu0
      %v1140 = vadd.f32 0.0, %v1139
      %v1141 = vpop.f32.mrb[0].mxu0
      %1142 = vmatprep.mubr.bf16.mxu0 0
      %1143 = vmatmul.mubr.bf16.gmra.mrb[0].mxu0 %v1071
      %v1144 = vpop.f32.mrb[0].mxu0
      %v1145 = vadd.f32 0.0, %v1144
      %v1146 = vpop.f32.mrb[0].mxu0
      %v1147 = vpop.f32.mrb[0].mxu0
      %v1148 = vadd.f32 0.0, %v1147
      %v1149 = vpop.f32.mrb[0].mxu0
      %1150 = vmatprep.mubr.bf16.mxu0 0
      %1151 = vmatmul.mubr.bf16.gmra.mrb[0].mxu0 %v1074
      %v1152 = vpop.f32.mrb[0].mxu0
      %v1153 = vadd.f32 0.0, %v1152
      %v1154 = vpop.f32.mrb[0].mxu0
      %v1155 = vpop.f32.mrb[0].mxu0
      %v1156 = vadd.f32 0.0, %v1155
      %v1157 = vpop.f32.mrb[0].mxu0
      %1158 = vmatprep.mubr.bf16.mxu0 0
      %1159 = vmatmul.mubr.bf16.gmra.mrb[0].mxu0 %v1077
      %v1160 = vpop.f32.mrb[0].mxu0
      %v1161 = vadd.f32 0.0, %v1160
      %v1162 = vpop.f32.mrb[0].mxu0
      %v1163 = vpop.f32.mrb[0].mxu0
      %v1164 = vadd.f32 0.0, %v1163
      %v1165 = vpop.f32.mrb[0].mxu0
      %1166 = vmatprep.mubr.bf16.mxu0 0
      %1167 = vmatmul.mubr.bf16.gmra.mrb[0].mxu0 %v1080
      %v1168 = vpop.f32.mrb[0].mxu0
      %v1169 = vadd.f32 0.0, %v1168
      %v1170 = vpop.f32.mrb[0].mxu0
      %v1171 = vpop.f32.mrb[0].mxu0
      %v1172 = vadd.f32 0.0, %v1171
      %v1173 = vpop.f32.mrb[0].mxu0
      %1174 = vmatprep.mubr.bf16.mxu0 0
      %1175 = vmatmul.mubr.bf16.gmra.mrb[0].mxu0 %v1083
      %v1176 = vpop.f32.mrb[0].mxu0
      %v1177 = vadd.f32 0.0, %v1176
      %v1178 = vpop.f32.mrb[0].mxu0
      %v1179 = vpop.f32.mrb[0].mxu0
      %v1180 = vadd.f32 0.0, %v1179
      %v1181 = vpop.f32.mrb[0].mxu0
      %1182 = vmatprep.mubr.bf16.mxu0 0
      %1183 = vmatmul.mubr.bf16.gmra.mrb[0].mxu0 %v1086
      %v1184 = vpop.f32.mrb[0].mxu0
      %v1185 = vadd.f32 0.0, %v1184
      %v1186 = vpop.f32.mrb[0].mxu0
      %v1187 = vpop.f32.mrb[0].mxu0
      %v1188 = vadd.f32 0.0, %v1187
      %v1189 = vpop.f32.mrb[0].mxu0
      %1190 = vmatprep.mubr.bf16.mxu0 0
      %1191 = vmatmul.mubr.bf16.gmra.mrb[0].mxu0 %v1089
      %v1192 = vpop.f32.mrb[0].mxu0
      %v1193 = vadd.f32 0.0, %v1192
      %v1194 = vpop.f32.mrb[0].mxu0
      %v1195 = vpop.f32.mrb[0].mxu0
      %v1196 = vadd.f32 0.0, %v1195
      %v1197 = vpop.f32.mrb[0].mxu0
      %1198 = vdwg.mxu0
      %v1199 = vadd.f32 %v901, %v1129
      %v1200 = vadd.f32 %v902, %v1132
      %v1201 = vadd.f32 %v903, %v1137
      %v1202 = vadd.f32 %v904, %v1140
      %v1203 = vadd.f32 %v905, %v1145
      %v1204 = vadd.f32 %v906, %v1148
      %v1205 = vadd.f32 %v907, %v1153
      %v1206 = vadd.f32 %v908, %v1156
      %v1207 = vadd.f32 %v909, %v1161
      %v1208 = vadd.f32 %v910, %v1164
      %v1209 = vadd.f32 %v911, %v1169
      %v1210 = vadd.f32 %v912, %v1172
      %v1211 = vadd.f32 %v913, %v1177
      %v1212 = vadd.f32 %v914, %v1180
      %v1213 = vadd.f32 %v915, %v1185
      %v1214 = vadd.f32 %v916, %v1188
      %v1215 = vadd.f32 %v917, %v1193
      %v1216 = vadd.f32 %v918, %v1196
      %v1217 = vld [vmem:[%s212 + $0x4] sm:$0xf]
      %v1218 = vld [vmem:[%s212 + $0x8] sm:$0xf]
      %v1219 = vld [vmem:[%s212 + $0xc] sm:$0xf]
      %v1220 = vld [vmem:[%s212 + $0x10] sm:$0xf]
      %v1221 = vld [vmem:[%s212 + $0x14] sm:$0xf]
      %v1222 = vld [vmem:[%s212 + $0x18] sm:$0xf]
      %v1223 = vld [vmem:[%s212 + $0x1c] sm:$0xf]
      %v1224 = vld [vmem:[%s212 + $0x20] sm:$0xf]
      %v1225 = vld [vmem:[%s212 + $0x24] sm:$0xf]
      %v1226 = vld [vmem:[%s212 + $0x28] sm:$0xf]
      %v1227 = vld [vmem:[%s212 + $0x2c] sm:$0xf]
      %v1228 = vld [vmem:[%s212 + $0x30] sm:$0xf]
      %v1229 = vld [vmem:[%s212 + $0x34] sm:$0xf]
      %v1230 = vld [vmem:[%s212 + $0x38] sm:$0xf]
      %v1231 = vld [vmem:[%s212 + $0x3c] sm:$0xf]
      %v1232 = vld [vmem:[%s212 + $0x40] sm:$0xf]
      %v1233 = vld [vmem:[%s212 + $0x44] sm:$0xf]
      %v1234 = vld [vmem:[%s212 + $0x48] sm:$0xf]
      %v1235 = vld [vmem:[%s212 + $0x4c] sm:$0x1]
      %s1236 = scalar_lea.vmem %s2, 8
      %v1237 = vld [vmem:[%s1236] sm:$0x3]
      %v1257 = vunpack.c.l.b16 %v1217
      %v1258 = vunpack.c.l.b16 %v1218
      %v1259 = vunpack.c.l.b16 %v1219
      %v1260 = vunpack.c.l.b16 %v1220
      %v1261 = vunpack.c.l.b16 %v1221
      %v1262 = vunpack.c.l.b16 %v1222
      %v1263 = vunpack.c.l.b16 %v1223
      %v1264 = vunpack.c.l.b16 %v1224
      %v1265 = vunpack.c.l.b16 %v1225
      %v1266 = vunpack.c.l.b16 %v1226
      %v1267 = vunpack.c.l.b16 %v1227
      %v1268 = vunpack.c.l.b16 %v1228
      %v1269 = vunpack.c.l.b16 %v1229
      %v1270 = vunpack.c.l.b16 %v1230
      %v1271 = vunpack.c.l.b16 %v1231
      %v1272 = vunpack.c.l.b16 %v1232
      %v1273 = vunpack.c.l.b16 %v1233
      %v1274 = vunpack.c.l.b16 %v1234
      %v1275 = vunpack.c.l.b16 %v1235
      %v1276 = vpack.c.b16 %v1258, %v1257
      %v1277 = vpack.c.b16 %v1260, %v1259
      %v1278 = vpack.c.b16 %v1262, %v1261
      %v1279 = vpack.c.b16 %v1264, %v1263
      %v1280 = vpack.c.b16 %v1266, %v1265
      %v1281 = vpack.c.b16 %v1268, %v1267
      %v1282 = vpack.c.b16 %v1270, %v1269
      %v1283 = vpack.c.b16 %v1272, %v1271
      %v1284 = vpack.c.b16 %v1274, %v1273
      %v1285 = vpack.c.b16 %v1275, %v1275
      %v1287 = vshrl.u32 %v1276, 16
      %v1289 = vshll.u32 %v1276, 16
      %v1291 = vrot.slane %v1289, 1
      %v1292 = vor.u32 %v1287, %v1291
      %v1294 = vshll.u32 %v1277, 16
      %v1296 = vrot.slane %v1294, 1
      %v1297 = vsel %vm689, %v1292, %v1296
      %v1298 = vshrl.u32 %v1277, 16
      %v1300 = vor.u32 %v1298, %v1296
      %v1302 = vshll.u32 %v1278, 16
      %v1304 = vrot.slane %v1302, 1
      %v1305 = vsel %vm689, %v1300, %v1304
      %v1306 = vshrl.u32 %v1278, 16
      %v1308 = vor.u32 %v1306, %v1304
      %v1310 = vshll.u32 %v1279, 16
      %v1312 = vrot.slane %v1310, 1
      %v1313 = vsel %vm689, %v1308, %v1312
      %v1314 = vshrl.u32 %v1279, 16
      %v1316 = vor.u32 %v1314, %v1312
      %v1318 = vshll.u32 %v1280, 16
      %v1320 = vrot.slane %v1318, 1
      %v1321 = vsel %vm689, %v1316, %v1320
      %v1322 = vshrl.u32 %v1280, 16
      %v1324 = vor.u32 %v1322, %v1320
      %v1326 = vshll.u32 %v1281, 16
      %v1328 = vrot.slane %v1326, 1
      %v1329 = vsel %vm689, %v1324, %v1328
      %v1330 = vshrl.u32 %v1281, 16
      %v1332 = vor.u32 %v1330, %v1328
      %v1334 = vshll.u32 %v1282, 16
      %v1336 = vrot.slane %v1334, 1
      %v1337 = vsel %vm689, %v1332, %v1336
      %v1338 = vshrl.u32 %v1282, 16
      %v1340 = vor.u32 %v1338, %v1336
      %v1342 = vshll.u32 %v1283, 16
      %v1344 = vrot.slane %v1342, 1
      %v1345 = vsel %vm689, %v1340, %v1344
      %v1346 = vshrl.u32 %v1283, 16
      %v1348 = vor.u32 %v1346, %v1344
      %v1350 = vshll.u32 %v1284, 16
      %v1352 = vrot.slane %v1350, 1
      %v1353 = vsel %vm689, %v1348, %v1352
      %v1354 = vshrl.u32 %v1284, 16
      %v1356 = vor.u32 %v1354, %v1352
      %v1358 = vshll.u32 %v1285, 16
      %v1360 = vrot.slane %v1358, 1
      %v1361 = vsel %vm689, %v1356, %v1360
      %v1363 = vsel %vm303, %v1297, 0
      %v1366 = vsel %vm303, %v1305, 0
      %v1369 = vsel %vm303, %v1313, 0
      %v1372 = vsel %vm303, %v1321, 0
      %v1375 = vsel %vm303, %v1329, 0
      %v1378 = vsel %vm303, %v1337, 0
      %v1381 = vsel %vm303, %v1345, 0
      %v1384 = vsel %vm303, %v1353, 0
      %v1387 = vsel %vm303, %v1361, 0
      %v1390 = vsel %vm331, %v1237, 0
      %1392 = vmatprep.subr.bf16.mxu0 0
      %1393 = vmatpush1.bf16.msra.mxu0 %v1390
      %1394 = vmatprep.subr.bf16.mxu0 0
      %1395 = vmatpush1.bf16.msra.mxu0 0
      %1396 = vmatprep.subr.bf16.mxu0 0
      %1397 = vmatpush1.bf16.msra.mxu0 0
      %1398 = vmatprep.subr.bf16.mxu0 0
      %1399 = vmatpush1.bf16.msra.mxu0 0
      %1400 = vmatprep.subr.bf16.mxu0 0
      %1401 = vmatpush1.bf16.msra.mxu0 0
      %1402 = vmatprep.subr.bf16.mxu0 0
      %1403 = vmatpush1.bf16.msra.mxu0 0
      %1404 = vmatprep.subr.bf16.mxu0 0
      %1405 = vmatpush1.bf16.msra.mxu0 0
      %1406 = vmatprep.subr.bf16.mxu0 0
      %1407 = vmatpush1.bf16.msra.mxu0 0
      %1408 = vmatprep.subr.bf16.mxu0 0
      %1409 = vmatpush1.bf16.msra.mxu0 0
      %1410 = vmatprep.subr.bf16.mxu0 0
      %1411 = vmatpush1.bf16.msra.mxu0 0
      %1412 = vmatprep.subr.bf16.mxu0 0
      %1413 = vmatpush1.bf16.msra.mxu0 0
      %1414 = vmatprep.subr.bf16.mxu0 0
      %1415 = vmatpush1.bf16.msra.mxu0 0
      %1416 = vmatprep.subr.bf16.mxu0 0
      %1417 = vmatpush1.bf16.msra.mxu0 0
      %1418 = vmatprep.subr.bf16.mxu0 0
      %1419 = vmatpush1.bf16.msra.mxu0 0
      %1420 = vmatprep.subr.bf16.mxu0 0
      %1421 = vmatpush1.bf16.msra.mxu0 0
      %1422 = vmatprep.subr.bf16.mxu0 0
      %1423 = vmatpush1.bf16.msra.mxu0 0
      %1424 = vmatprep.mubr.bf16.mxu0 0
      %1425 = vmatmul.mubr.bf16.gmra.mrb[0].mxu0 %v1363
      %v1426 = vpop.f32.mrb[0].mxu0
      %v1427 = vadd.f32 0.0, %v1426
      %v1428 = vpop.f32.mrb[0].mxu0
      %v1429 = vpop.f32.mrb[0].mxu0
      %v1430 = vadd.f32 0.0, %v1429
      %v1431 = vpop.f32.mrb[0].mxu0
      %1432 = vmatprep.mubr.bf16.mxu0 0
      %1433 = vmatmul.mubr.bf16.gmra.mrb[0].mxu0 %v1366
      %v1434 = vpop.f32.mrb[0].mxu0
      %v1435 = vadd.f32 0.0, %v1434
      %v1436 = vpop.f32.mrb[0].mxu0
      %v1437 = vpop.f32.mrb[0].mxu0
      %v1438 = vadd.f32 0.0, %v1437
      %v1439 = vpop.f32.mrb[0].mxu0
      %1440 = vmatprep.mubr.bf16.mxu0 0
      %1441 = vmatmul.mubr.bf16.gmra.mrb[0].mxu0 %v1369
      %v1442 = vpop.f32.mrb[0].mxu0
      %v1443 = vadd.f32 0.0, %v1442
      %v1444 = vpop.f32.mrb[0].mxu0
      %v1445 = vpop.f32.mrb[0].mxu0
      %v1446 = vadd.f32 0.0, %v1445
      %v1447 = vpop.f32.mrb[0].mxu0
      %1448 = vmatprep.mubr.bf16.mxu0 0
      %1449 = vmatmul.mubr.bf16.gmra.mrb[0].mxu0 %v1372
      %v1450 = vpop.f32.mrb[0].mxu0
      %v1451 = vadd.f32 0.0, %v1450
      %v1452 = vpop.f32.mrb[0].mxu0
      %v1453 = vpop.f32.mrb[0].mxu0
      %v1454 = vadd.f32 0.0, %v1453
      %v1455 = vpop.f32.mrb[0].mxu0
      %1456 = vmatprep.mubr.bf16.mxu0 0
      %1457 = vmatmul.mubr.bf16.gmra.mrb[0].mxu0 %v1375
      %v1458 = vpop.f32.mrb[0].mxu0
      %v1459 = vadd.f32 0.0, %v1458
      %v1460 = vpop.f32.mrb[0].mxu0
      %v1461 = vpop.f32.mrb[0].mxu0
      %v1462 = vadd.f32 0.0, %v1461
      %v1463 = vpop.f32.mrb[0].mxu0
      %1464 = vmatprep.mubr.bf16.mxu0 0
      %1465 = vmatmul.mubr.bf16.gmra.mrb[0].mxu0 %v1378
      %v1466 = vpop.f32.mrb[0].mxu0
      %v1467 = vadd.f32 0.0, %v1466
      %v1468 = vpop.f32.mrb[0].mxu0
      %v1469 = vpop.f32.mrb[0].mxu0
      %v1470 = vadd.f32 0.0, %v1469
      %v1471 = vpop.f32.mrb[0].mxu0
      %1472 = vmatprep.mubr.bf16.mxu0 0
      %1473 = vmatmul.mubr.bf16.gmra.mrb[0].mxu0 %v1381
      %v1474 = vpop.f32.mrb[0].mxu0
      %v1475 = vadd.f32 0.0, %v1474
      %v1476 = vpop.f32.mrb[0].mxu0
      %v1477 = vpop.f32.mrb[0].mxu0
      %v1478 = vadd.f32 0.0, %v1477
      %v1479 = vpop.f32.mrb[0].mxu0
      %1480 = vmatprep.mubr.bf16.mxu0 0
      %1481 = vmatmul.mubr.bf16.gmra.mrb[0].mxu0 %v1384
      %v1482 = vpop.f32.mrb[0].mxu0
      %v1483 = vadd.f32 0.0, %v1482
      %v1484 = vpop.f32.mrb[0].mxu0
      %v1485 = vpop.f32.mrb[0].mxu0
      %v1486 = vadd.f32 0.0, %v1485
      %v1487 = vpop.f32.mrb[0].mxu0
      %1488 = vmatprep.mubr.bf16.mxu0 0
      %1489 = vmatmul.mubr.bf16.gmra.mrb[0].mxu0 %v1387
      %v1490 = vpop.f32.mrb[0].mxu0
      %v1491 = vadd.f32 0.0, %v1490
      %v1492 = vpop.f32.mrb[0].mxu0
      %v1493 = vpop.f32.mrb[0].mxu0
      %v1494 = vadd.f32 0.0, %v1493
      %v1495 = vpop.f32.mrb[0].mxu0
      %1496 = vdwg.mxu0
      %v1497 = vadd.f32 %v1199, %v1427
      %v1498 = vadd.f32 %v1200, %v1430
      %v1499 = vadd.f32 %v1201, %v1435
      %v1500 = vadd.f32 %v1202, %v1438
      %v1501 = vadd.f32 %v1203, %v1443
      %v1502 = vadd.f32 %v1204, %v1446
      %v1503 = vadd.f32 %v1205, %v1451
      %v1504 = vadd.f32 %v1206, %v1454
      %v1505 = vadd.f32 %v1207, %v1459
      %v1506 = vadd.f32 %v1208, %v1462
      %v1507 = vadd.f32 %v1209, %v1467
      %v1508 = vadd.f32 %v1210, %v1470
      %v1509 = vadd.f32 %v1211, %v1475
      %v1510 = vadd.f32 %v1212, %v1478
      %v1511 = vadd.f32 %v1213, %v1483
      %v1512 = vadd.f32 %v1214, %v1486
      %v1513 = vadd.f32 %v1215, %v1491
      %v1514 = vadd.f32 %v1216, %v1494
      %v1515 = vld [vmem:[%s207 + $0x4] sm:$0xe]
      %s1516 = scalar_lea.vmem %s2, 10
      %v1517 = vld [vmem:[%s1516] sm:$0x3]
      %v1519 = vunpack.c.l.b16 %v1515
      %v1520 = vpack.c.b16 %v960, %v1519
      %vm1521 = vcmask 1046528
      %v1522 = vrot.slane %v1520, 1
      %v1523 = vrot.slane %v979, 1
      %v1524 = vsel %vm1521, %v1522, %v1523
      %v1525 = vrot.slane %v980, 1
      %v1526 = vsel %vm1521, %v1523, %v1525
      %v1527 = vrot.slane %v981, 1
      %v1528 = vsel %vm1521, %v1525, %v1527
      %v1529 = vrot.slane %v982, 1
      %v1530 = vsel %vm1521, %v1527, %v1529
      %v1531 = vrot.slane %v983, 1
      %v1532 = vsel %vm1521, %v1529, %v1531
      %v1533 = vrot.slane %v984, 1
      %v1534 = vsel %vm1521, %v1531, %v1533
      %v1535 = vrot.slane %v985, 1
      %v1536 = vsel %vm1521, %v1533, %v1535
      %v1537 = vrot.slane %v986, 1
      %v1538 = vsel %vm1521, %v1535, %v1537
      %v1539 = vrot.slane %v987, 1
      %v1540 = vsel %vm1521, %v1537, %v1539
      %v1542 = vsel %vm303, %v1524, 0
      %v1545 = vsel %vm303, %v1526, 0
      %v1548 = vsel %vm303, %v1528, 0
      %v1551 = vsel %vm303, %v1530, 0
      %v1554 = vsel %vm303, %v1532, 0
      %v1557 = vsel %vm303, %v1534, 0
      %v1560 = vsel %vm303, %v1536, 0
      %v1563 = vsel %vm303, %v1538, 0
      %v1566 = vsel %vm303, %v1540, 0
      %v1569 = vsel %vm331, %v1517, 0
      %1571 = vmatprep.subr.bf16.mxu0 0
      %1572 = vmatpush1.bf16.msra.mxu0 %v1569
      %1573 = vmatprep.subr.bf16.mxu0 0
      %1574 = vmatpush1.bf16.msra.mxu0 0
      %1575 = vmatprep.subr.bf16.mxu0 0
      %1576 = vmatpush1.bf16.msra.mxu0 0
      %1577 = vmatprep.subr.bf16.mxu0 0
      %1578 = vmatpush1.bf16.msra.mxu0 0
      %1579 = vmatprep.subr.bf16.mxu0 0
      %1580 = vmatpush1.bf16.msra.mxu0 0
      %1581 = vmatprep.subr.bf16.mxu0 0
      %1582 = vmatpush1.bf16.msra.mxu0 0
      %1583 = vmatprep.subr.bf16.mxu0 0
      %1584 = vmatpush1.bf16.msra.mxu0 0
      %1585 = vmatprep.subr.bf16.mxu0 0
      %1586 = vmatpush1.bf16.msra.mxu0 0
      %1587 = vmatprep.subr.bf16.mxu0 0
      %1588 = vmatpush1.bf16.msra.mxu0 0
      %1589 = vmatprep.subr.bf16.mxu0 0
      %1590 = vmatpush1.bf16.msra.mxu0 0
      %1591 = vmatprep.subr.bf16.mxu0 0
      %1592 = vmatpush1.bf16.msra.mxu0 0
      %1593 = vmatprep.subr.bf16.mxu0 0
      %1594 = vmatpush1.bf16.msra.mxu0 0
      %1595 = vmatprep.subr.bf16.mxu0 0
      %1596 = vmatpush1.bf16.msra.mxu0 0
      %1597 = vmatprep.subr.bf16.mxu0 0
      %1598 = vmatpush1.bf16.msra.mxu0 0
      %1599 = vmatprep.subr.bf16.mxu0 0
      %1600 = vmatpush1.bf16.msra.mxu0 0
      %1601 = vmatprep.subr.bf16.mxu0 0
      %1602 = vmatpush1.bf16.msra.mxu0 0
      %1603 = vmatprep.mubr.bf16.mxu0 0
      %1604 = vmatmul.mubr.bf16.gmra.mrb[0].mxu0 %v1542
      %v1605 = vpop.f32.mrb[0].mxu0
      %v1606 = vadd.f32 0.0, %v1605
      %v1607 = vpop.f32.mrb[0].mxu0
      %v1608 = vpop.f32.mrb[0].mxu0
      %v1609 = vadd.f32 0.0, %v1608
      %v1610 = vpop.f32.mrb[0].mxu0
      %1611 = vmatprep.mubr.bf16.mxu0 0
      %1612 = vmatmul.mubr.bf16.gmra.mrb[0].mxu0 %v1545
      %v1613 = vpop.f32.mrb[0].mxu0
      %v1614 = vadd.f32 0.0, %v1613
      %v1615 = vpop.f32.mrb[0].mxu0
      %v1616 = vpop.f32.mrb[0].mxu0
      %v1617 = vadd.f32 0.0, %v1616
      %v1618 = vpop.f32.mrb[0].mxu0
      %1619 = vmatprep.mubr.bf16.mxu0 0
      %1620 = vmatmul.mubr.bf16.gmra.mrb[0].mxu0 %v1548
      %v1621 = vpop.f32.mrb[0].mxu0
      %v1622 = vadd.f32 0.0, %v1621
      %v1623 = vpop.f32.mrb[0].mxu0
      %v1624 = vpop.f32.mrb[0].mxu0
      %v1625 = vadd.f32 0.0, %v1624
      %v1626 = vpop.f32.mrb[0].mxu0
      %1627 = vmatprep.mubr.bf16.mxu0 0
      %1628 = vmatmul.mubr.bf16.gmra.mrb[0].mxu0 %v1551
      %v1629 = vpop.f32.mrb[0].mxu0
      %v1630 = vadd.f32 0.0, %v1629
      %v1631 = vpop.f32.mrb[0].mxu0
      %v1632 = vpop.f32.mrb[0].mxu0
      %v1633 = vadd.f32 0.0, %v1632
      %v1634 = vpop.f32.mrb[0].mxu0
      %1635 = vmatprep.mubr.bf16.mxu0 0
      %1636 = vmatmul.mubr.bf16.gmra.mrb[0].mxu0 %v1554
      %v1637 = vpop.f32.mrb[0].mxu0
      %v1638 = vadd.f32 0.0, %v1637
      %v1639 = vpop.f32.mrb[0].mxu0
      %v1640 = vpop.f32.mrb[0].mxu0
      %v1641 = vadd.f32 0.0, %v1640
      %v1642 = vpop.f32.mrb[0].mxu0
      %1643 = vmatprep.mubr.bf16.mxu0 0
      %1644 = vmatmul.mubr.bf16.gmra.mrb[0].mxu0 %v1557
      %v1645 = vpop.f32.mrb[0].mxu0
      %v1646 = vadd.f32 0.0, %v1645
      %v1647 = vpop.f32.mrb[0].mxu0
      %v1648 = vpop.f32.mrb[0].mxu0
      %v1649 = vadd.f32 0.0, %v1648
      %v1650 = vpop.f32.mrb[0].mxu0
      %1651 = vmatprep.mubr.bf16.mxu0 0
      %1652 = vmatmul.mubr.bf16.gmra.mrb[0].mxu0 %v1560
      %v1653 = vpop.f32.mrb[0].mxu0
      %v1654 = vadd.f32 0.0, %v1653
      %v1655 = vpop.f32.mrb[0].mxu0
      %v1656 = vpop.f32.mrb[0].mxu0
      %v1657 = vadd.f32 0.0, %v1656
      %v1658 = vpop.f32.mrb[0].mxu0
      %1659 = vmatprep.mubr.bf16.mxu0 0
      %1660 = vmatmul.mubr.bf16.gmra.mrb[0].mxu0 %v1563
      %v1661 = vpop.f32.mrb[0].mxu0
      %v1662 = vadd.f32 0.0, %v1661
      %v1663 = vpop.f32.mrb[0].mxu0
      %v1664 = vpop.f32.mrb[0].mxu0
      %v1665 = vadd.f32 0.0, %v1664
      %v1666 = vpop.f32.mrb[0].mxu0
      %1667 = vmatprep.mubr.bf16.mxu0 0
      %1668 = vmatmul.mubr.bf16.gmra.mrb[0].mxu0 %v1566
      %v1669 = vpop.f32.mrb[0].mxu0
      %v1670 = vadd.f32 0.0, %v1669
      %v1671 = vpop.f32.mrb[0].mxu0
      %v1672 = vpop.f32.mrb[0].mxu0
      %v1673 = vadd.f32 0.0, %v1672
      %v1674 = vpop.f32.mrb[0].mxu0
      %1675 = vdwg.mxu0
      %v1676 = vadd.f32 %v1497, %v1606
      %v1677 = vadd.f32 %v1498, %v1609
      %v1678 = vadd.f32 %v1499, %v1614
      %v1679 = vadd.f32 %v1500, %v1617
      %v1680 = vadd.f32 %v1501, %v1622
      %v1681 = vadd.f32 %v1502, %v1625
      %v1682 = vadd.f32 %v1503, %v1630
      %v1683 = vadd.f32 %v1504, %v1633
      %v1684 = vadd.f32 %v1505, %v1638
      %v1685 = vadd.f32 %v1506, %v1641
      %v1686 = vadd.f32 %v1507, %v1646
      %v1687 = vadd.f32 %v1508, %v1649
      %v1688 = vadd.f32 %v1509, %v1654
      %v1689 = vadd.f32 %v1510, %v1657
      %v1690 = vadd.f32 %v1511, %v1662
      %v1691 = vadd.f32 %v1512, %v1665
      %v1692 = vadd.f32 %v1513, %v1670
      %v1693 = vadd.f32 %v1514, %v1673
      %v1694 = vld [vmem:[%s207 + $0x8] sm:$0xe]
      %v1695 = vld [vmem:[%s207 + $0xc] sm:$0xf]
      %v1696 = vld [vmem:[%s207 + $0x10] sm:$0xf]
      %v1697 = vld [vmem:[%s207 + $0x14] sm:$0xf]
      %v1698 = vld [vmem:[%s207 + $0x18] sm:$0xf]
      %v1699 = vld [vmem:[%s207 + $0x1c] sm:$0xf]
      %v1700 = vld [vmem:[%s207 + $0x20] sm:$0xf]
      %v1701 = vld [vmem:[%s207 + $0x24] sm:$0xf]
      %v1702 = vld [vmem:[%s207 + $0x28] sm:$0xf]
      %v1703 = vld [vmem:[%s207 + $0x2c] sm:$0xf]
      %v1704 = vld [vmem:[%s207 + $0x30] sm:$0xf]
      %v1705 = vld [vmem:[%s207 + $0x34] sm:$0xf]
      %v1706 = vld [vmem:[%s207 + $0x38] sm:$0xf]
      %v1707 = vld [vmem:[%s207 + $0x3c] sm:$0xf]
      %v1708 = vld [vmem:[%s207 + $0x40] sm:$0xf]
      %v1709 = vld [vmem:[%s207 + $0x44] sm:$0xf]
      %v1710 = vld [vmem:[%s207 + $0x48] sm:$0xf]
      %v1711 = vld [vmem:[%s207 + $0x4c] sm:$0xf]
      %v1712 = vld [vmem:[%s207 + $0x50] sm:$0x1]
      %s1713 = scalar_lea.vmem %s2, 12
      %v1714 = vld [vmem:[%s1713] sm:$0x3]
      %v1734 = vunpack.c.l.b16 %v1694
      %v1735 = vunpack.c.l.b16 %v1695
      %v1736 = vunpack.c.l.b16 %v1696
      %v1737 = vunpack.c.l.b16 %v1697
      %v1738 = vunpack.c.l.b16 %v1698
      %v1739 = vunpack.c.l.b16 %v1699
      %v1740 = vunpack.c.l.b16 %v1700
      %v1741 = vunpack.c.l.b16 %v1701
      %v1742 = vunpack.c.l.b16 %v1702
      %v1743 = vunpack.c.l.b16 %v1703
      %v1744 = vunpack.c.l.b16 %v1704
      %v1745 = vunpack.c.l.b16 %v1705
      %v1746 = vunpack.c.l.b16 %v1706
      %v1747 = vunpack.c.l.b16 %v1707
      %v1748 = vunpack.c.l.b16 %v1708
      %v1749 = vunpack.c.l.b16 %v1709
      %v1750 = vunpack.c.l.b16 %v1710
      %v1751 = vunpack.c.l.b16 %v1711
      %v1752 = vunpack.c.l.b16 %v1712
      %v1753 = vpack.c.b16 %v1735, %v1734
      %v1754 = vpack.c.b16 %v1737, %v1736
      %v1755 = vpack.c.b16 %v1739, %v1738
      %v1756 = vpack.c.b16 %v1741, %v1740
      %v1757 = vpack.c.b16 %v1743, %v1742
      %v1758 = vpack.c.b16 %v1745, %v1744
      %v1759 = vpack.c.b16 %v1747, %v1746
      %v1760 = vpack.c.b16 %v1749, %v1748
      %v1761 = vpack.c.b16 %v1751, %v1750
      %v1762 = vpack.c.b16 %v1752, %v1752
      %v1763 = vrot.slane %v1753, 1
      %v1764 = vrot.slane %v1754, 1
      %v1765 = vsel %vm1521, %v1763, %v1764
      %v1766 = vrot.slane %v1755, 1
      %v1767 = vsel %vm1521, %v1764, %v1766
      %v1768 = vrot.slane %v1756, 1
      %v1769 = vsel %vm1521, %v1766, %v1768
      %v1770 = vrot.slane %v1757, 1
      %v1771 = vsel %vm1521, %v1768, %v1770
      %v1772 = vrot.slane %v1758, 1
      %v1773 = vsel %vm1521, %v1770, %v1772
      %v1774 = vrot.slane %v1759, 1
      %v1775 = vsel %vm1521, %v1772, %v1774
      %v1776 = vrot.slane %v1760, 1
      %v1777 = vsel %vm1521, %v1774, %v1776
      %v1778 = vrot.slane %v1761, 1
      %v1779 = vsel %vm1521, %v1776, %v1778
      %v1780 = vrot.slane %v1762, 1
      %v1781 = vsel %vm1521, %v1778, %v1780
      %v1783 = vsel %vm303, %v1765, 0
      %v1786 = vsel %vm303, %v1767, 0
      %v1789 = vsel %vm303, %v1769, 0
      %v1792 = vsel %vm303, %v1771, 0
      %v1795 = vsel %vm303, %v1773, 0
      %v1798 = vsel %vm303, %v1775, 0
      %v1801 = vsel %vm303, %v1777, 0
      %v1804 = vsel %vm303, %v1779, 0
      %v1807 = vsel %vm303, %v1781, 0
      %v1810 = vsel %vm331, %v1714, 0
      %1812 = vmatprep.subr.bf16.mxu0 0
      %1813 = vmatpush1.bf16.msra.mxu0 %v1810
      %1814 = vmatprep.subr.bf16.mxu0 0
      %1815 = vmatpush1.bf16.msra.mxu0 0
      %1816 = vmatprep.subr.bf16.mxu0 0
      %1817 = vmatpush1.bf16.msra.mxu0 0
      %1818 = vmatprep.subr.bf16.mxu0 0
      %1819 = vmatpush1.bf16.msra.mxu0 0
      %1820 = vmatprep.subr.bf16.mxu0 0
      %1821 = vmatpush1.bf16.msra.mxu0 0
      %1822 = vmatprep.subr.bf16.mxu0 0
      %1823 = vmatpush1.bf16.msra.mxu0 0
      %1824 = vmatprep.subr.bf16.mxu0 0
      %1825 = vmatpush1.bf16.msra.mxu0 0
      %1826 = vmatprep.subr.bf16.mxu0 0
      %1827 = vmatpush1.bf16.msra.mxu0 0
      %1828 = vmatprep.subr.bf16.mxu0 0
      %1829 = vmatpush1.bf16.msra.mxu0 0
      %1830 = vmatprep.subr.bf16.mxu0 0
      %1831 = vmatpush1.bf16.msra.mxu0 0
      %1832 = vmatprep.subr.bf16.mxu0 0
      %1833 = vmatpush1.bf16.msra.mxu0 0
      %1834 = vmatprep.subr.bf16.mxu0 0
      %1835 = vmatpush1.bf16.msra.mxu0 0
      %1836 = vmatprep.subr.bf16.mxu0 0
      %1837 = vmatpush1.bf16.msra.mxu0 0
      %1838 = vmatprep.subr.bf16.mxu0 0
      %1839 = vmatpush1.bf16.msra.mxu0 0
      %1840 = vmatprep.subr.bf16.mxu0 0
      %1841 = vmatpush1.bf16.msra.mxu0 0
      %1842 = vmatprep.subr.bf16.mxu0 0
      %1843 = vmatpush1.bf16.msra.mxu0 0
      %1844 = vmatprep.mubr.bf16.mxu0 0
      %1845 = vmatmul.mubr.bf16.gmra.mrb[0].mxu0 %v1783
      %v1846 = vpop.f32.mrb[0].mxu0
      %v1847 = vadd.f32 0.0, %v1846
      %v1848 = vpop.f32.mrb[0].mxu0
      %v1849 = vpop.f32.mrb[0].mxu0
      %v1850 = vadd.f32 0.0, %v1849
      %v1851 = vpop.f32.mrb[0].mxu0
      %1852 = vmatprep.mubr.bf16.mxu0 0
      %1853 = vmatmul.mubr.bf16.gmra.mrb[0].mxu0 %v1786
      %v1854 = vpop.f32.mrb[0].mxu0
      %v1855 = vadd.f32 0.0, %v1854
      %v1856 = vpop.f32.mrb[0].mxu0
      %v1857 = vpop.f32.mrb[0].mxu0
      %v1858 = vadd.f32 0.0, %v1857
      %v1859 = vpop.f32.mrb[0].mxu0
      %1860 = vmatprep.mubr.bf16.mxu0 0
      %1861 = vmatmul.mubr.bf16.gmra.mrb[0].mxu0 %v1789
      %v1862 = vpop.f32.mrb[0].mxu0
      %v1863 = vadd.f32 0.0, %v1862
      %v1864 = vpop.f32.mrb[0].mxu0
      %v1865 = vpop.f32.mrb[0].mxu0
      %v1866 = vadd.f32 0.0, %v1865
      %v1867 = vpop.f32.mrb[0].mxu0
      %1868 = vmatprep.mubr.bf16.mxu0 0
      %1869 = vmatmul.mubr.bf16.gmra.mrb[0].mxu0 %v1792
      %v1870 = vpop.f32.mrb[0].mxu0
      %v1871 = vadd.f32 0.0, %v1870
      %v1872 = vpop.f32.mrb[0].mxu0
      %v1873 = vpop.f32.mrb[0].mxu0
      %v1874 = vadd.f32 0.0, %v1873
      %v1875 = vpop.f32.mrb[0].mxu0
      %1876 = vmatprep.mubr.bf16.mxu0 0
      %1877 = vmatmul.mubr.bf16.gmra.mrb[0].mxu0 %v1795
      %v1878 = vpop.f32.mrb[0].mxu0
      %v1879 = vadd.f32 0.0, %v1878
      %v1880 = vpop.f32.mrb[0].mxu0
      %v1881 = vpop.f32.mrb[0].mxu0
      %v1882 = vadd.f32 0.0, %v1881
      %v1883 = vpop.f32.mrb[0].mxu0
      %1884 = vmatprep.mubr.bf16.mxu0 0
      %1885 = vmatmul.mubr.bf16.gmra.mrb[0].mxu0 %v1798
      %v1886 = vpop.f32.mrb[0].mxu0
      %v1887 = vadd.f32 0.0, %v1886
      %v1888 = vpop.f32.mrb[0].mxu0
      %v1889 = vpop.f32.mrb[0].mxu0
      %v1890 = vadd.f32 0.0, %v1889
      %v1891 = vpop.f32.mrb[0].mxu0
      %1892 = vmatprep.mubr.bf16.mxu0 0
      %1893 = vmatmul.mubr.bf16.gmra.mrb[0].mxu0 %v1801
      %v1894 = vpop.f32.mrb[0].mxu0
      %v1895 = vadd.f32 0.0, %v1894
      %v1896 = vpop.f32.mrb[0].mxu0
      %v1897 = vpop.f32.mrb[0].mxu0
      %v1898 = vadd.f32 0.0, %v1897
      %v1899 = vpop.f32.mrb[0].mxu0
      %1900 = vmatprep.mubr.bf16.mxu0 0
      %1901 = vmatmul.mubr.bf16.gmra.mrb[0].mxu0 %v1804
      %v1902 = vpop.f32.mrb[0].mxu0
      %v1903 = vadd.f32 0.0, %v1902
      %v1904 = vpop.f32.mrb[0].mxu0
      %v1905 = vpop.f32.mrb[0].mxu0
      %v1906 = vadd.f32 0.0, %v1905
      %v1907 = vpop.f32.mrb[0].mxu0
      %1908 = vmatprep.mubr.bf16.mxu0 0
      %1909 = vmatmul.mubr.bf16.gmra.mrb[0].mxu0 %v1807
      %v1910 = vpop.f32.mrb[0].mxu0
      %v1911 = vadd.f32 0.0, %v1910
      %v1912 = vpop.f32.mrb[0].mxu0
      %v1913 = vpop.f32.mrb[0].mxu0
      %v1914 = vadd.f32 0.0, %v1913
      %v1915 = vpop.f32.mrb[0].mxu0
      %1916 = vdwg.mxu0
      %v1917 = vadd.f32 %v1676, %v1847
      %v1918 = vadd.f32 %v1677, %v1850
      %v1919 = vadd.f32 %v1678, %v1855
      %v1920 = vadd.f32 %v1679, %v1858
      %v1921 = vadd.f32 %v1680, %v1863
      %v1922 = vadd.f32 %v1681, %v1866
      %v1923 = vadd.f32 %v1682, %v1871
      %v1924 = vadd.f32 %v1683, %v1874
      %v1925 = vadd.f32 %v1684, %v1879
      %v1926 = vadd.f32 %v1685, %v1882
      %v1927 = vadd.f32 %v1686, %v1887
      %v1928 = vadd.f32 %v1687, %v1890
      %v1929 = vadd.f32 %v1688, %v1895
      %v1930 = vadd.f32 %v1689, %v1898
      %v1931 = vadd.f32 %v1690, %v1903
      %v1932 = vadd.f32 %v1691, %v1906
      %v1933 = vadd.f32 %v1692, %v1911
      %v1934 = vadd.f32 %v1693, %v1914
      %v1935 = vld [vmem:[%s212 + $0x8] sm:$0xe]
      %v1936 = vld [vmem:[%s212 + $0xc] sm:$0xf]
      %v1937 = vld [vmem:[%s212 + $0x10] sm:$0xf]
      %v1938 = vld [vmem:[%s212 + $0x14] sm:$0xf]
      %v1939 = vld [vmem:[%s212 + $0x18] sm:$0xf]
      %v1940 = vld [vmem:[%s212 + $0x1c] sm:$0xf]
      %v1941 = vld [vmem:[%s212 + $0x20] sm:$0xf]
      %v1942 = vld [vmem:[%s212 + $0x24] sm:$0xf]
      %v1943 = vld [vmem:[%s212 + $0x28] sm:$0xf]
      %v1944 = vld [vmem:[%s212 + $0x2c] sm:$0xf]
      %v1945 = vld [vmem:[%s212 + $0x30] sm:$0xf]
      %v1946 = vld [vmem:[%s212 + $0x34] sm:$0xf]
      %v1947 = vld [vmem:[%s212 + $0x38] sm:$0xf]
      %v1948 = vld [vmem:[%s212 + $0x3c] sm:$0xf]
      %v1949 = vld [vmem:[%s212 + $0x40] sm:$0xf]
      %v1950 = vld [vmem:[%s212 + $0x44] sm:$0xf]
      %v1951 = vld [vmem:[%s212 + $0x48] sm:$0xf]
      %v1952 = vld [vmem:[%s212 + $0x4c] sm:$0xf]
      %v1953 = vld [vmem:[%s212 + $0x50] sm:$0x1]
      %s1954 = scalar_lea.vmem %s2, 14
      %v1955 = vld [vmem:[%s1954] sm:$0x3]
      %v1975 = vunpack.c.l.b16 %v1935
      %v1976 = vunpack.c.l.b16 %v1936
      %v1977 = vunpack.c.l.b16 %v1937
      %v1978 = vunpack.c.l.b16 %v1938
      %v1979 = vunpack.c.l.b16 %v1939
      %v1980 = vunpack.c.l.b16 %v1940
      %v1981 = vunpack.c.l.b16 %v1941
      %v1982 = vunpack.c.l.b16 %v1942
      %v1983 = vunpack.c.l.b16 %v1943
      %v1984 = vunpack.c.l.b16 %v1944
      %v1985 = vunpack.c.l.b16 %v1945
      %v1986 = vunpack.c.l.b16 %v1946
      %v1987 = vunpack.c.l.b16 %v1947
      %v1988 = vunpack.c.l.b16 %v1948
      %v1989 = vunpack.c.l.b16 %v1949
      %v1990 = vunpack.c.l.b16 %v1950
      %v1991 = vunpack.c.l.b16 %v1951
      %v1992 = vunpack.c.l.b16 %v1952
      %v1993 = vunpack.c.l.b16 %v1953
      %v1994 = vpack.c.b16 %v1976, %v1975
      %v1995 = vpack.c.b16 %v1978, %v1977
      %v1996 = vpack.c.b16 %v1980, %v1979
      %v1997 = vpack.c.b16 %v1982, %v1981
      %v1998 = vpack.c.b16 %v1984, %v1983
      %v1999 = vpack.c.b16 %v1986, %v1985
      %v2000 = vpack.c.b16 %v1988, %v1987
      %v2001 = vpack.c.b16 %v1990, %v1989
      %v2002 = vpack.c.b16 %v1992, %v1991
      %v2003 = vpack.c.b16 %v1993, %v1993
      %v2004 = vrot.slane %v1994, 1
      %v2005 = vrot.slane %v1995, 1
      %v2006 = vsel %vm1521, %v2004, %v2005
      %v2007 = vrot.slane %v1996, 1
      %v2008 = vsel %vm1521, %v2005, %v2007
      %v2009 = vrot.slane %v1997, 1
      %v2010 = vsel %vm1521, %v2007, %v2009
      %v2011 = vrot.slane %v1998, 1
      %v2012 = vsel %vm1521, %v2009, %v2011
      %v2013 = vrot.slane %v1999, 1
      %v2014 = vsel %vm1521, %v2011, %v2013
      %v2015 = vrot.slane %v2000, 1
      %v2016 = vsel %vm1521, %v2013, %v2015
      %v2017 = vrot.slane %v2001, 1
      %v2018 = vsel %vm1521, %v2015, %v2017
      %v2019 = vrot.slane %v2002, 1
      %v2020 = vsel %vm1521, %v2017, %v2019
      %v2021 = vrot.slane %v2003, 1
      %v2022 = vsel %vm1521, %v2019, %v2021
      %v2024 = vsel %vm303, %v2006, 0
      %v2027 = vsel %vm303, %v2008, 0
      %v2030 = vsel %vm303, %v2010, 0
      %v2033 = vsel %vm303, %v2012, 0
      %v2036 = vsel %vm303, %v2014, 0
      %v2039 = vsel %vm303, %v2016, 0
      %v2042 = vsel %vm303, %v2018, 0
      %v2045 = vsel %vm303, %v2020, 0
      %v2048 = vsel %vm303, %v2022, 0
      %v2051 = vsel %vm331, %v1955, 0
      %2053 = vmatprep.subr.bf16.mxu0 0
      %2054 = vmatpush1.bf16.msra.mxu0 %v2051
      %2055 = vmatprep.subr.bf16.mxu0 0
      %2056 = vmatpush1.bf16.msra.mxu0 0
      %2057 = vmatprep.subr.bf16.mxu0 0
      %2058 = vmatpush1.bf16.msra.mxu0 0
      %2059 = vmatprep.subr.bf16.mxu0 0
      %2060 = vmatpush1.bf16.msra.mxu0 0
      %2061 = vmatprep.subr.bf16.mxu0 0
      %2062 = vmatpush1.bf16.msra.mxu0 0
      %2063 = vmatprep.subr.bf16.mxu0 0
      %2064 = vmatpush1.bf16.msra.mxu0 0
      %2065 = vmatprep.subr.bf16.mxu0 0
      %2066 = vmatpush1.bf16.msra.mxu0 0
      %2067 = vmatprep.subr.bf16.mxu0 0
      %2068 = vmatpush1.bf16.msra.mxu0 0
      %2069 = vmatprep.subr.bf16.mxu0 0
      %2070 = vmatpush1.bf16.msra.mxu0 0
      %2071 = vmatprep.subr.bf16.mxu0 0
      %2072 = vmatpush1.bf16.msra.mxu0 0
      %2073 = vmatprep.subr.bf16.mxu0 0
      %2074 = vmatpush1.bf16.msra.mxu0 0
      %2075 = vmatprep.subr.bf16.mxu0 0
      %2076 = vmatpush1.bf16.msra.mxu0 0
      %2077 = vmatprep.subr.bf16.mxu0 0
      %2078 = vmatpush1.bf16.msra.mxu0 0
      %2079 = vmatprep.subr.bf16.mxu0 0
      %2080 = vmatpush1.bf16.msra.mxu0 0
      %2081 = vmatprep.subr.bf16.mxu0 0
      %2082 = vmatpush1.bf16.msra.mxu0 0
      %2083 = vmatprep.subr.bf16.mxu0 0
      %2084 = vmatpush1.bf16.msra.mxu0 0
      %2085 = vmatprep.mubr.bf16.mxu0 0
      %2086 = vmatmul.mubr.bf16.gmra.mrb[0].mxu0 %v2024
      %v2087 = vpop.f32.mrb[0].mxu0
      %v2088 = vadd.f32 0.0, %v2087
      %v2089 = vpop.f32.mrb[0].mxu0
      %v2090 = vpop.f32.mrb[0].mxu0
      %v2091 = vadd.f32 0.0, %v2090
      %v2092 = vpop.f32.mrb[0].mxu0
      %2093 = vmatprep.mubr.bf16.mxu0 0
      %2094 = vmatmul.mubr.bf16.gmra.mrb[0].mxu0 %v2027
      %v2095 = vpop.f32.mrb[0].mxu0
      %v2096 = vadd.f32 0.0, %v2095
      %v2097 = vpop.f32.mrb[0].mxu0
      %v2098 = vpop.f32.mrb[0].mxu0
      %v2099 = vadd.f32 0.0, %v2098
      %v2100 = vpop.f32.mrb[0].mxu0
      %2101 = vmatprep.mubr.bf16.mxu0 0
      %2102 = vmatmul.mubr.bf16.gmra.mrb[0].mxu0 %v2030
      %v2103 = vpop.f32.mrb[0].mxu0
      %v2104 = vadd.f32 0.0, %v2103
      %v2105 = vpop.f32.mrb[0].mxu0
      %v2106 = vpop.f32.mrb[0].mxu0
      %v2107 = vadd.f32 0.0, %v2106
      %v2108 = vpop.f32.mrb[0].mxu0
      %2109 = vmatprep.mubr.bf16.mxu0 0
      %2110 = vmatmul.mubr.bf16.gmra.mrb[0].mxu0 %v2033
      %v2111 = vpop.f32.mrb[0].mxu0
      %v2112 = vadd.f32 0.0, %v2111
      %v2113 = vpop.f32.mrb[0].mxu0
      %v2114 = vpop.f32.mrb[0].mxu0
      %v2115 = vadd.f32 0.0, %v2114
      %v2116 = vpop.f32.mrb[0].mxu0
      %2117 = vmatprep.mubr.bf16.mxu0 0
      %2118 = vmatmul.mubr.bf16.gmra.mrb[0].mxu0 %v2036
      %v2119 = vpop.f32.mrb[0].mxu0
      %v2120 = vadd.f32 0.0, %v2119
      %v2121 = vpop.f32.mrb[0].mxu0
      %v2122 = vpop.f32.mrb[0].mxu0
      %v2123 = vadd.f32 0.0, %v2122
      %v2124 = vpop.f32.mrb[0].mxu0
      %2125 = vmatprep.mubr.bf16.mxu0 0
      %2126 = vmatmul.mubr.bf16.gmra.mrb[0].mxu0 %v2039
      %v2127 = vpop.f32.mrb[0].mxu0
      %v2128 = vadd.f32 0.0, %v2127
      %v2129 = vpop.f32.mrb[0].mxu0
      %v2130 = vpop.f32.mrb[0].mxu0
      %v2131 = vadd.f32 0.0, %v2130
      %v2132 = vpop.f32.mrb[0].mxu0
      %2133 = vmatprep.mubr.bf16.mxu0 0
      %2134 = vmatmul.mubr.bf16.gmra.mrb[0].mxu0 %v2042
      %v2135 = vpop.f32.mrb[0].mxu0
      %v2136 = vadd.f32 0.0, %v2135
      %v2137 = vpop.f32.mrb[0].mxu0
      %v2138 = vpop.f32.mrb[0].mxu0
      %v2139 = vadd.f32 0.0, %v2138
      %v2140 = vpop.f32.mrb[0].mxu0
      %2141 = vmatprep.mubr.bf16.mxu0 0
      %2142 = vmatmul.mubr.bf16.gmra.mrb[0].mxu0 %v2045
      %v2143 = vpop.f32.mrb[0].mxu0
      %v2144 = vadd.f32 0.0, %v2143
      %v2145 = vpop.f32.mrb[0].mxu0
      %v2146 = vpop.f32.mrb[0].mxu0
      %v2147 = vadd.f32 0.0, %v2146
      %v2148 = vpop.f32.mrb[0].mxu0
      %2149 = vmatprep.mubr.bf16.mxu0 0
      %2150 = vmatmul.mubr.bf16.gmra.mrb[0].mxu0 %v2048
      %v2151 = vpop.f32.mrb[0].mxu0
      %v2152 = vadd.f32 0.0, %v2151
      %v2153 = vpop.f32.mrb[0].mxu0
      %v2154 = vpop.f32.mrb[0].mxu0
      %v2155 = vadd.f32 0.0, %v2154
      %v2156 = vpop.f32.mrb[0].mxu0
      %2157 = vdwg.mxu0
      %v2158 = vadd.f32 %v1917, %v2088
      %v2159 = vadd.f32 %v1918, %v2091
      %v2160 = vadd.f32 %v1919, %v2096
      %v2161 = vadd.f32 %v1920, %v2099
      %v2162 = vadd.f32 %v1921, %v2104
      %v2163 = vadd.f32 %v1922, %v2107
      %v2164 = vadd.f32 %v1923, %v2112
      %v2165 = vadd.f32 %v1924, %v2115
      %v2166 = vadd.f32 %v1925, %v2120
      %v2167 = vadd.f32 %v1926, %v2123
      %v2168 = vadd.f32 %v1927, %v2128
      %v2169 = vadd.f32 %v1928, %v2131
      %v2170 = vadd.f32 %v1929, %v2136
      %v2171 = vadd.f32 %v1930, %v2139
      %v2172 = vadd.f32 %v1931, %v2144
      %v2173 = vadd.f32 %v1932, %v2147
      %v2174 = vadd.f32 %v1933, %v2152
      %v2175 = vadd.f32 %v1934, %v2155
      %v2176 = vld [vmem:[%s207 + $0x50] sm:$0x3]
      %s2177 = scalar_lea.vmem %s2, 16
      %v2178 = vld [vmem:[%s2177] sm:$0x3]
      %v2180 = vunpack.c.l.b16 %v2176
      %v2181 = vpack.c.b16 %v2180, %v2180
      %vm2182 = vsmask.f32 6400
      %v2184 = vshrl.u32 %v1753, 16
      %v2186 = vrot.slane %v2184, 1
      %v2187 = vshll.u32 %v1753, 16
      %v2189 = vrot.slane %v2187, 2
      %v2190 = vor.u32 %v2186, %v2189
      %v2192 = vshrl.u32 %v1754, 16
      %v2194 = vrot.slane %v2192, 1
      %v2195 = vshll.u32 %v1754, 16
      %v2197 = vrot.slane %v2195, 2
      %v2198 = vor.u32 %v2194, %v2197
      %v2199 = vsel %vm2182, %v2190, %v2198
      %v2201 = vshrl.u32 %v1755, 16
      %v2203 = vrot.slane %v2201, 1
      %v2204 = vshll.u32 %v1755, 16
      %v2206 = vrot.slane %v2204, 2
      %v2207 = vor.u32 %v2203, %v2206
      %v2208 = vsel %vm2182, %v2198, %v2207
      %v2210 = vshrl.u32 %v1756, 16
      %v2212 = vrot.slane %v2210, 1
      %v2213 = vshll.u32 %v1756, 16
      %v2215 = vrot.slane %v2213, 2
      %v2216 = vor.u32 %v2212, %v2215
      %v2217 = vsel %vm2182, %v2207, %v2216
      %v2219 = vshrl.u32 %v1757, 16
      %v2221 = vrot.slane %v2219, 1
      %v2222 = vshll.u32 %v1757, 16
      %v2224 = vrot.slane %v2222, 2
      %v2225 = vor.u32 %v2221, %v2224
      %v2226 = vsel %vm2182, %v2216, %v2225
      %v2228 = vshrl.u32 %v1758, 16
      %v2230 = vrot.slane %v2228, 1
      %v2231 = vshll.u32 %v1758, 16
      %v2233 = vrot.slane %v2231, 2
      %v2234 = vor.u32 %v2230, %v2233
      %v2235 = vsel %vm2182, %v2225, %v2234
      %v2237 = vshrl.u32 %v1759, 16
      %v2239 = vrot.slane %v2237, 1
      %v2240 = vshll.u32 %v1759, 16
      %v2242 = vrot.slane %v2240, 2
      %v2243 = vor.u32 %v2239, %v2242
      %v2244 = vsel %vm2182, %v2234, %v2243
      %v2246 = vshrl.u32 %v1760, 16
      %v2248 = vrot.slane %v2246, 1
      %v2249 = vshll.u32 %v1760, 16
      %v2251 = vrot.slane %v2249, 2
      %v2252 = vor.u32 %v2248, %v2251
      %v2253 = vsel %vm2182, %v2243, %v2252
      %v2255 = vshrl.u32 %v1761, 16
      %v2257 = vrot.slane %v2255, 1
      %v2258 = vshll.u32 %v1761, 16
      %v2260 = vrot.slane %v2258, 2
      %v2261 = vor.u32 %v2257, %v2260
      %v2262 = vsel %vm2182, %v2252, %v2261
      %v2264 = vshrl.u32 %v2181, 16
      %v2266 = vrot.slane %v2264, 1
      %v2267 = vshll.u32 %v2181, 16
      %v2269 = vrot.slane %v2267, 2
      %v2270 = vor.u32 %v2266, %v2269
      %v2271 = vsel %vm2182, %v2261, %v2270
      %v2273 = vsel %vm303, %v2199, 0
      %v2276 = vsel %vm303, %v2208, 0
      %v2279 = vsel %vm303, %v2217, 0
      %v2282 = vsel %vm303, %v2226, 0
      %v2285 = vsel %vm303, %v2235, 0
      %v2288 = vsel %vm303, %v2244, 0
      %v2291 = vsel %vm303, %v2253, 0
      %v2294 = vsel %vm303, %v2262, 0
      %v2297 = vsel %vm303, %v2271, 0
      %v2300 = vsel %vm331, %v2178, 0
      %2302 = vmatprep.subr.bf16.mxu0 0
      %2303 = vmatpush1.bf16.msra.mxu0 %v2300
      %2304 = vmatprep.subr.bf16.mxu0 0
      %2305 = vmatpush1.bf16.msra.mxu0 0
      %2306 = vmatprep.subr.bf16.mxu0 0
      %2307 = vmatpush1.bf16.msra.mxu0 0
      %2308 = vmatprep.subr.bf16.mxu0 0
      %2309 = vmatpush1.bf16.msra.mxu0 0
      %2310 = vmatprep.subr.bf16.mxu0 0
      %2311 = vmatpush1.bf16.msra.mxu0 0
      %2312 = vmatprep.subr.bf16.mxu0 0
      %2313 = vmatpush1.bf16.msra.mxu0 0
      %2314 = vmatprep.subr.bf16.mxu0 0
      %2315 = vmatpush1.bf16.msra.mxu0 0
      %2316 = vmatprep.subr.bf16.mxu0 0
      %2317 = vmatpush1.bf16.msra.mxu0 0
      %2318 = vmatprep.subr.bf16.mxu0 0
      %2319 = vmatpush1.bf16.msra.mxu0 0
      %2320 = vmatprep.subr.bf16.mxu0 0
      %2321 = vmatpush1.bf16.msra.mxu0 0
      %2322 = vmatprep.subr.bf16.mxu0 0
      %2323 = vmatpush1.bf16.msra.mxu0 0
      %2324 = vmatprep.subr.bf16.mxu0 0
      %2325 = vmatpush1.bf16.msra.mxu0 0
      %2326 = vmatprep.subr.bf16.mxu0 0
      %2327 = vmatpush1.bf16.msra.mxu0 0
      %2328 = vmatprep.subr.bf16.mxu0 0
      %2329 = vmatpush1.bf16.msra.mxu0 0
      %2330 = vmatprep.subr.bf16.mxu0 0
      %2331 = vmatpush1.bf16.msra.mxu0 0
      %2332 = vmatprep.subr.bf16.mxu0 0
      %2333 = vmatpush1.bf16.msra.mxu0 0
      %2334 = vmatprep.mubr.bf16.mxu0 0
      %2335 = vmatmul.mubr.bf16.gmra.mrb[0].mxu0 %v2273
      %v2336 = vpop.f32.mrb[0].mxu0
      %v2337 = vadd.f32 0.0, %v2336
      %v2338 = vpop.f32.mrb[0].mxu0
      %v2339 = vpop.f32.mrb[0].mxu0
      %v2340 = vadd.f32 0.0, %v2339
      %v2341 = vpop.f32.mrb[0].mxu0
      %2342 = vmatprep.mubr.bf16.mxu0 0
      %2343 = vmatmul.mubr.bf16.gmra.mrb[0].mxu0 %v2276
      %v2344 = vpop.f32.mrb[0].mxu0
      %v2345 = vadd.f32 0.0, %v2344
      %v2346 = vpop.f32.mrb[0].mxu0
      %v2347 = vpop.f32.mrb[0].mxu0
      %v2348 = vadd.f32 0.0, %v2347
      %v2349 = vpop.f32.mrb[0].mxu0
      %2350 = vmatprep.mubr.bf16.mxu0 0
      %2351 = vmatmul.mubr.bf16.gmra.mrb[0].mxu0 %v2279
      %v2352 = vpop.f32.mrb[0].mxu0
      %v2353 = vadd.f32 0.0, %v2352
      %v2354 = vpop.f32.mrb[0].mxu0
      %v2355 = vpop.f32.mrb[0].mxu0
      %v2356 = vadd.f32 0.0, %v2355
      %v2357 = vpop.f32.mrb[0].mxu0
      %2358 = vmatprep.mubr.bf16.mxu0 0
      %2359 = vmatmul.mubr.bf16.gmra.mrb[0].mxu0 %v2282
      %v2360 = vpop.f32.mrb[0].mxu0
      %v2361 = vadd.f32 0.0, %v2360
      %v2362 = vpop.f32.mrb[0].mxu0
      %v2363 = vpop.f32.mrb[0].mxu0
      %v2364 = vadd.f32 0.0, %v2363
      %v2365 = vpop.f32.mrb[0].mxu0
      %2366 = vmatprep.mubr.bf16.mxu0 0
      %2367 = vmatmul.mubr.bf16.gmra.mrb[0].mxu0 %v2285
      %v2368 = vpop.f32.mrb[0].mxu0
      %v2369 = vadd.f32 0.0, %v2368
      %v2370 = vpop.f32.mrb[0].mxu0
      %v2371 = vpop.f32.mrb[0].mxu0
      %v2372 = vadd.f32 0.0, %v2371
      %v2373 = vpop.f32.mrb[0].mxu0
      %2374 = vmatprep.mubr.bf16.mxu0 0
      %2375 = vmatmul.mubr.bf16.gmra.mrb[0].mxu0 %v2288
      %v2376 = vpop.f32.mrb[0].mxu0
      %v2377 = vadd.f32 0.0, %v2376
      %v2378 = vpop.f32.mrb[0].mxu0
      %v2379 = vpop.f32.mrb[0].mxu0
      %v2380 = vadd.f32 0.0, %v2379
      %v2381 = vpop.f32.mrb[0].mxu0
      %2382 = vmatprep.mubr.bf16.mxu0 0
      %2383 = vmatmul.mubr.bf16.gmra.mrb[0].mxu0 %v2291
      %v2384 = vpop.f32.mrb[0].mxu0
      %v2385 = vadd.f32 0.0, %v2384
      %v2386 = vpop.f32.mrb[0].mxu0
      %v2387 = vpop.f32.mrb[0].mxu0
      %v2388 = vadd.f32 0.0, %v2387
      %v2389 = vpop.f32.mrb[0].mxu0
      %2390 = vmatprep.mubr.bf16.mxu0 0
      %2391 = vmatmul.mubr.bf16.gmra.mrb[0].mxu0 %v2294
      %v2392 = vpop.f32.mrb[0].mxu0
      %v2393 = vadd.f32 0.0, %v2392
      %v2394 = vpop.f32.mrb[0].mxu0
      %v2395 = vpop.f32.mrb[0].mxu0
      %v2396 = vadd.f32 0.0, %v2395
      %v2397 = vpop.f32.mrb[0].mxu0
      %2398 = vmatprep.mubr.bf16.mxu0 0
      %2399 = vmatmul.mubr.bf16.gmra.mrb[0].mxu0 %v2297
      %v2400 = vpop.f32.mrb[0].mxu0
      %v2401 = vadd.f32 0.0, %v2400
      %v2402 = vpop.f32.mrb[0].mxu0
      %v2403 = vpop.f32.mrb[0].mxu0
      %v2404 = vadd.f32 0.0, %v2403
      %v2405 = vpop.f32.mrb[0].mxu0
      %2406 = vdwg.mxu0
      %v2407 = vadd.f32 %v2158, %v2337
      %v2408 = vadd.f32 %v2159, %v2340
      %v2409 = vadd.f32 %v2160, %v2345
      %v2410 = vadd.f32 %v2161, %v2348
      %v2411 = vadd.f32 %v2162, %v2353
      %v2412 = vadd.f32 %v2163, %v2356
      %v2413 = vadd.f32 %v2164, %v2361
      %v2414 = vadd.f32 %v2165, %v2364
      %v2415 = vadd.f32 %v2166, %v2369
      %v2416 = vadd.f32 %v2167, %v2372
      %v2417 = vadd.f32 %v2168, %v2377
      %v2418 = vadd.f32 %v2169, %v2380
      %v2419 = vadd.f32 %v2170, %v2385
      %v2420 = vadd.f32 %v2171, %v2388
      %v2421 = vadd.f32 %v2172, %v2393
      %v2422 = vadd.f32 %v2173, %v2396
      %v2423 = vadd.f32 %v2174, %v2401
      %v2424 = vadd.f32 %v2175, %v2404
      %v2425 = vld [vmem:[%s3] sm:$0x1]
      %v2427 = vlaneseq
      %v2428 = vshrl.u32 %v2427, 7
      %v2429 = vsub.s32 0, %v2428
      %v2430 = vrot.slane %v2425, %v2429
      %v2432 = vadd.f32 %v2407, %v2430
      %v2433 = vadd.f32 %v2408, %v2430
      %v2434 = vadd.f32 %v2409, %v2430
      %v2435 = vadd.f32 %v2410, %v2430
      %v2436 = vadd.f32 %v2411, %v2430
      %v2437 = vadd.f32 %v2412, %v2430
      %v2438 = vadd.f32 %v2413, %v2430
      %v2439 = vadd.f32 %v2414, %v2430
      %v2440 = vadd.f32 %v2415, %v2430
      %v2441 = vadd.f32 %v2416, %v2430
      %v2442 = vadd.f32 %v2417, %v2430
      %v2443 = vadd.f32 %v2418, %v2430
      %v2444 = vadd.f32 %v2419, %v2430
      %v2445 = vadd.f32 %v2420, %v2430
      %v2446 = vadd.f32 %v2421, %v2430
      %v2447 = vadd.f32 %v2422, %v2430
      %v2448 = vadd.f32 %v2423, %v2430
      %v2449 = vadd.f32 %v2424, %v2430
      %v2450 = vmax.f32 %v2432, 0.0
      %v2451 = vmax.f32 %v2433, 0.0
      %v2452 = vmax.f32 %v2434, 0.0
      %v2453 = vmax.f32 %v2435, 0.0
      %v2454 = vmax.f32 %v2436, 0.0
      %v2455 = vmax.f32 %v2437, 0.0
      %v2456 = vmax.f32 %v2438, 0.0
      %v2457 = vmax.f32 %v2439, 0.0
      %v2458 = vmax.f32 %v2440, 0.0
      %v2459 = vmax.f32 %v2441, 0.0
      %v2460 = vmax.f32 %v2442, 0.0
      %v2461 = vmax.f32 %v2443, 0.0
      %v2462 = vmax.f32 %v2444, 0.0
      %v2463 = vmax.f32 %v2445, 0.0
      %v2464 = vmax.f32 %v2446, 0.0
      %v2465 = vmax.f32 %v2447, 0.0
      %v2466 = vmax.f32 %v2448, 0.0
      %v2467 = vmax.f32 %v2449, 0.0
      %v2468 = vpack.c.bf16 %v2451, %v2450
      %v2469 = vpack.c.bf16 %v2453, %v2452
      %v2470 = vpack.c.bf16 %v2455, %v2454
      %v2471 = vpack.c.bf16 %v2457, %v2456
      %v2472 = vpack.c.bf16 %v2459, %v2458
      %v2473 = vpack.c.bf16 %v2461, %v2460
      %v2474 = vpack.c.bf16 %v2463, %v2462
      %v2475 = vpack.c.bf16 %v2465, %v2464
      %v2476 = vpack.c.bf16 %v2467, %v2466
      %v2486 = vunpack.c.l.b16 %v2468
      %v2487 = vunpack.c.h.b16 %v2468
      %v2488 = vunpack.c.l.b16 %v2469
      %v2489 = vunpack.c.h.b16 %v2469
      %v2490 = vunpack.c.l.b16 %v2470
      %v2491 = vunpack.c.h.b16 %v2470
      %v2492 = vunpack.c.l.b16 %v2471
      %v2493 = vunpack.c.h.b16 %v2471
      %v2494 = vunpack.c.l.b16 %v2472
      %v2495 = vunpack.c.h.b16 %v2472
      %v2496 = vunpack.c.l.b16 %v2473
      %v2497 = vunpack.c.h.b16 %v2473
      %v2498 = vunpack.c.l.b16 %v2474
      %v2499 = vunpack.c.h.b16 %v2474
      %v2500 = vunpack.c.l.b16 %v2475
      %v2501 = vunpack.c.h.b16 %v2475
      %v2502 = vunpack.c.l.b16 %v2476
      %v2503 = vunpack.c.h.b16 %v2476
      %v2504 = vpack.c.b16 %v2486, %v2486
      %v2505 = vpack.c.b16 %v2487, %v2487
      %v2506 = vpack.c.b16 %v2488, %v2488
      %v2507 = vpack.c.b16 %v2489, %v2489
      %v2508 = vpack.c.b16 %v2490, %v2490
      %v2509 = vpack.c.b16 %v2491, %v2491
      %v2510 = vpack.c.b16 %v2492, %v2492
      %v2511 = vpack.c.b16 %v2493, %v2493
      %v2512 = vpack.c.b16 %v2494, %v2494
      %v2513 = vpack.c.b16 %v2495, %v2495
      %v2514 = vpack.c.b16 %v2496, %v2496
      %v2515 = vpack.c.b16 %v2497, %v2497
      %v2516 = vpack.c.b16 %v2498, %v2498
      %v2517 = vpack.c.b16 %v2499, %v2499
      %v2518 = vpack.c.b16 %v2500, %v2500
      %v2519 = vpack.c.b16 %v2501, %v2501
      %v2520 = vpack.c.b16 %v2502, %v2502
      %v2521 = vpack.c.b16 %v2503, %v2503
      %vm2540 = vcmask 109568
      %2541 = vst.msk [vmem:[%s217] sm:$0xf] %vm2540, %v2504
      %2542 = vst.msk [vmem:[%s217 + $0x4] sm:$0xf] %vm2540, %v2505
      %2543 = vst.msk [vmem:[%s217 + $0x8] sm:$0xf] %vm2540, %v2506
      %2544 = vst.msk [vmem:[%s217 + $0xc] sm:$0xf] %vm2540, %v2507
      %2545 = vst.msk [vmem:[%s217 + $0x10] sm:$0xf] %vm2540, %v2508
      %2546 = vst.msk [vmem:[%s217 + $0x14] sm:$0xf] %vm2540, %v2509
      %2547 = vst.msk [vmem:[%s217 + $0x18] sm:$0xf] %vm2540, %v2510
      %2548 = vst.msk [vmem:[%s217 + $0x1c] sm:$0xf] %vm2540, %v2511
      %2549 = vst.msk [vmem:[%s217 + $0x20] sm:$0xf] %vm2540, %v2512
      %2550 = vst.msk [vmem:[%s217 + $0x24] sm:$0xf] %vm2540, %v2513
      %2551 = vst.msk [vmem:[%s217 + $0x28] sm:$0xf] %vm2540, %v2514
      %2552 = vst.msk [vmem:[%s217 + $0x2c] sm:$0xf] %vm2540, %v2515
      %2553 = vst.msk [vmem:[%s217 + $0x30] sm:$0xf] %vm2540, %v2516
      %2554 = vst.msk [vmem:[%s217 + $0x34] sm:$0xf] %vm2540, %v2517
      %2555 = vst.msk [vmem:[%s217 + $0x38] sm:$0xf] %vm2540, %v2518
      %2556 = vst.msk [vmem:[%s217 + $0x3c] sm:$0xf] %vm2540, %v2519
      %2557 = vst.msk [vmem:[%s217 + $0x40] sm:$0xf] %vm2540, %v2520
      %2558 = vst.msk [vmem:[%s217 + $0x44] sm:$0xf] %vm2540, %v2521
      %p2559 = scmp.lt.s32.totalorder %s15, 15
      %s2560 = scalar_select %p2559, %s15, 15
      %s2561 = smul.addr %s2560, 18
      %s2562 = smul.addr %s2561, 4
      %s2563 = scalar_lea.vmem %s4, %s2562
      // Predicated region
      $region37: #{_lambda_.10} parent=35 // pred_check
        %p2564 = pneg %p127
      $region38: #{_lambda_.10} parent=35 // pred_check_branch
        %2566 = sbr.rel (%p2564) target = $region40
      $region39: #{_lambda_.10} parent=35 // pred_region
        _
      $region40: #{_lambda_.10} parent=35 // pred_fallthru
        _
    $region36: #{_lambda_.10} parent=5 // pred_fallthru
      _
    %p2567 = scmp.le.s32.totalorder 2, %s10
    // Predicated region
    $region41: #{_lambda_.10} parent=5 // pred_check
      %p2568 = pneg %p2567
    $region42: #{_lambda_.10} parent=5 // pred_check_branch
      %2570 = sbr.rel (%p2568) target = $region44
    $region43: #{_lambda_.10} parent=5 // pred_region
      %s2571 = ssub.s32 %s10, 2
      // Predicated region
      $region45: #{_lambda_.10} parent=43 // pred_check
        %p2572 = pneg %p133
      $region46: #{_lambda_.10} parent=43 // pred_check_branch
        %2574 = sbr.rel (%p2572) target = $region48
      $region47: #{_lambda_.10} parent=43 // pred_region
        %p2575 = scmp.lt.s32.totalorder %s16, 15
        %s2576 = scalar_select %p2575, %s16, 15
        %s2577 = smul.addr %s2576, 18
        %s2578 = smul.addr %s2577, 4
        %s2579 = scalar_lea.vmem %s4, %s2578
      $region48: #{_lambda_.10} parent=43 // pred_fallthru
        _
    $region44: #{_lambda_.10} parent=5 // pred_fallthru
      _
  $region6: #{_lambda_.10} parent=0 // loop_footer
    %s14 = sadd.s32 1, %s10
  $region7: #{_lambda_.10} parent=0 // loop_footer_branch
    %9 = sbr.rel target = $region3
  $region8: #{_lambda_.10} parent=0 // loop_exit
    _

// kernel: _lambda_.11
$region0: #{_lambda_.11}
  #allocation0 [shape = 'u32[]', space=smem, size = 0x4, offset = 0x4, fixed_abs, tag = 'smem constant byte address 0x4 - core index']
  #allocation1 [shape = 'u32[144,128]{1,0:T(1,128)}', space=vmem, size = 0x12000, scoped, tag = 'internal scratch']
  %s0 = inlined_call_operand.vmem [shape: bf16[2,320,14], index: 0, kind: input, shape index: {}]
  %s1 = inlined_call_operand.vmem [shape: bf16[2,320,14], index: 1, kind: input, shape index: {}]
  %s2 = inlined_call_operand.vmem [shape: bf16[3,14,8], index: 2, kind: input, shape index: {}]
  %s3 = inlined_call_operand.vmem [shape: f32[1,8], index: 3, kind: input, shape index: {}]
  %s4 = inlined_call_operand.vmem [shape: bf16[2,256,8], index: 4, kind: output, shape index: {}]
  %s5 = sld [smem:[#allocation0]]
  $region49: #{_lambda_.11} parent=0
    _
  %s7 = ssub.s32 1, %s5
  %s8 = scalar_select 0, %s7, %s5
  loop: start=0, step=1, limit=4
  $region2: #{_lambda_.11} parent=0 // loop_pre_header
    _
  $region3: #{_lambda_.11} parent=0 // loop_header
    %s10 = sphi 0, %s14
    %p11 = scmp.ge.s32.totalorder %s10, 4
    %s20 = sphi 0, %s22
    %s23 = sphi 0, %s20
    %s24 = sphi 0, %s23
    %s40 = sphi 0, %s24
    %s46 = sphi 0, %s48
    %s49 = sphi 0, %s46
    %s50 = sphi 0, %s49
    %s66 = sphi 0, %s50
    %s70 = sphi 0, %s70
    %s72 = sphi 0, %s70
    %s73 = sphi 0, %s72
    %s87 = sphi 0, %s73
    %s91 = sphi 0, %s91
    %s93 = sphi 0, %s91
    %s94 = sphi 0, %s93
    %s108 = sphi 0, %s94
    %s114 = sphi 0, %s116
    %s117 = sphi 0, %s114
    %s118 = sphi 0, %s117
    %s134 = sphi 0, %s118
  $region4: #{_lambda_.11} parent=0 // loop_header_branch
    %13 = sbr.rel (%p11) target = $region8
  $region5: #{_lambda_.11} parent=0 // loop_body
    %s15 = ssub.s32 %s10, 1
    %s16 = ssub.s32 %s10, 2
    %s17 = sadd.s32 %s10, 1
    %s18 = ssub.s32 %s10, %s17
    %p19 = scmp.eq.s32.totalorder %s18, 0
    %s21 = sadd.s32 %s20, 1
    %s22 = scalar_select %p19, %s20, %s21
    %p25 = pneg %p19
    %p26 = scmp.eq.s32.totalorder %s10, 1
    %p27 = por %p25, %p26
    %p28 = scmp.ne.s32.totalorder %s20, %s23
    %p29 = scmp.eq.s32.totalorder %s10, 0
    %p30 = por %p28, %p29
    %p31 = scmp.ne.s32.totalorder %s20, %s23
    %p32 = scmp.eq.s32.totalorder %s15, 1
    %p33 = por %p31, %p32
    %p34 = scmp.ne.s32.totalorder %s23, %s24
    %p35 = scmp.eq.s32.totalorder %s15, 0
    %p36 = por %p34, %p35
    %p37 = scmp.ne.s32.totalorder %s23, %s24
    %p38 = scmp.eq.s32.totalorder %s16, 1
    %p39 = por %p37, %p38
    %p41 = scmp.ne.s32.totalorder %s24, %s40
    %p42 = scmp.eq.s32.totalorder %s16, 0
    %p43 = por %p41, %p42
    %s44 = ssub.s32 %s10, %s17
    %p45 = scmp.eq.s32.totalorder %s44, 0
    %s47 = sadd.s32 %s46, 1
    %s48 = scalar_select %p45, %s46, %s47
    %p51 = pneg %p45
    %p52 = scmp.eq.s32.totalorder %s10, 1
    %p53 = por %p51, %p52
    %p54 = scmp.ne.s32.totalorder %s46, %s49
    %p55 = scmp.eq.s32.totalorder %s10, 0
    %p56 = por %p54, %p55
    %p57 = scmp.ne.s32.totalorder %s46, %s49
    %p58 = scmp.eq.s32.totalorder %s15, 1
    %p59 = por %p57, %p58
    %p60 = scmp.ne.s32.totalorder %s49, %s50
    %p61 = scmp.eq.s32.totalorder %s15, 0
    %p62 = por %p60, %p61
    %p63 = scmp.ne.s32.totalorder %s49, %s50
    %p64 = scmp.eq.s32.totalorder %s16, 1
    %p65 = por %p63, %p64
    %p67 = scmp.ne.s32.totalorder %s50, %s66
    %p68 = scmp.eq.s32.totalorder %s16, 0
    %p69 = por %p67, %p68
    %s71 = sadd.s32 %s70, 1
    %p74 = scmp.eq.s32.totalorder %s10, 1
    %p75 = scmp.ne.s32.totalorder %s70, %s72
    %p76 = scmp.eq.s32.totalorder %s10, 0
    %p77 = por %p75, %p76
    %p78 = scmp.ne.s32.totalorder %s70, %s72
    %p79 = scmp.eq.s32.totalorder %s15, 1
    %p80 = por %p78, %p79
    %p81 = scmp.ne.s32.totalorder %s72, %s73
    %p82 = scmp.eq.s32.totalorder %s15, 0
    %p83 = por %p81, %p82
    %p84 = scmp.ne.s32.totalorder %s72, %s73
    %p85 = scmp.eq.s32.totalorder %s16, 1
    %p86 = por %p84, %p85
    %p88 = scmp.ne.s32.totalorder %s73, %s87
    %p89 = scmp.eq.s32.totalorder %s16, 0
    %p90 = por %p88, %p89
    %s92 = sadd.s32 %s91, 1
    %p95 = scmp.eq.s32.totalorder %s10, 1
    %p96 = scmp.ne.s32.totalorder %s91, %s93
    %p97 = scmp.eq.s32.totalorder %s10, 0
    %p98 = por %p96, %p97
    %p99 = scmp.ne.s32.totalorder %s91, %s93
    %p100 = scmp.eq.s32.totalorder %s15, 1
    %p101 = por %p99, %p100
    %p102 = scmp.ne.s32.totalorder %s93, %s94
    %p103 = scmp.eq.s32.totalorder %s15, 0
    %p104 = por %p102, %p103
    %p105 = scmp.ne.s32.totalorder %s93, %s94
    %p106 = scmp.eq.s32.totalorder %s16, 1
    %p107 = por %p105, %p106
    %p109 = scmp.ne.s32.totalorder %s94, %s108
    %p110 = scmp.eq.s32.totalorder %s16, 0
    %p111 = por %p109, %p110
    %s112 = ssub.s32 %s10, %s17
    %p113 = scmp.eq.s32.totalorder %s112, 0
    %s115 = sadd.s32 %s114, 1
    %s116 = scalar_select %p113, %s114, %s115
    %p119 = pneg %p113
    %p120 = scmp.eq.s32.totalorder %s10, 1
    %p121 = por %p119, %p120
    %p122 = scmp.ne.s32.totalorder %s114, %s117
    %p123 = scmp.eq.s32.totalorder %s10, 0
    %p124 = por %p122, %p123
    %p125 = scmp.ne.s32.totalorder %s114, %s117
    %p126 = scmp.eq.s32.totalorder %s15, 1
    %p127 = por %p125, %p126
    %p128 = scmp.ne.s32.totalorder %s117, %s118
    %p129 = scmp.eq.s32.totalorder %s15, 0
    %p130 = por %p128, %p129
    %p131 = scmp.ne.s32.totalorder %s117, %s118
    %p132 = scmp.eq.s32.totalorder %s16, 1
    %p133 = por %p131, %p132
    %p135 = scmp.ne.s32.totalorder %s118, %s134
    %p136 = scmp.eq.s32.totalorder %s16, 0
    %p137 = por %p135, %p136
    %p138 = scmp.le.s32.totalorder 1, %s10
    %p139 = scmp.lt.s32.totalorder %s10, 3
    %p140 = pnand %p138, %p139
    %p141 = pneg %p140
    // Predicated region
    $region9: #{_lambda_.11} parent=5 // pred_check
      _
    $region10: #{_lambda_.11} parent=5 // pred_check_branch
      %143 = sbr.rel (%p140) target = $region12
    $region11: #{_lambda_.11} parent=5 // pred_region
      %s144 = ssub.s32 %s10, 1
      // Predicated region
      $region13: #{_lambda_.11} parent=11 // pred_check
        %p145 = pneg %p83
      $region14: #{_lambda_.11} parent=11 // pred_check_branch
        %147 = sbr.rel (%p145) target = $region16
      $region15: #{_lambda_.11} parent=11 // pred_region
        _
      $region16: #{_lambda_.11} parent=11 // pred_fallthru
        _
      // Predicated region
      $region17: #{_lambda_.11} parent=11 // pred_check
        %p148 = pneg %p104
      $region18: #{_lambda_.11} parent=11 // pred_check_branch
        %150 = sbr.rel (%p148) target = $region20
      $region19: #{_lambda_.11} parent=11 // pred_region
        _
      $region20: #{_lambda_.11} parent=11 // pred_fallthru
        _
    $region12: #{_lambda_.11} parent=5 // pred_fallthru
      _
    %p151 = scmp.lt.s32.totalorder %s10, 2
    // Predicated region
    $region21: #{_lambda_.11} parent=5 // pred_check
      %p152 = pneg %p151
    $region22: #{_lambda_.11} parent=5 // pred_check_branch
      %154 = sbr.rel (%p152) target = $region24
    $region23: #{_lambda_.11} parent=5 // pred_region
      // Predicated region
      $region25: #{_lambda_.11} parent=23 // pred_check
        %p155 = pneg %p30
      $region26: #{_lambda_.11} parent=23 // pred_check_branch
        %157 = sbr.rel (%p155) target = $region28
      $region27: #{_lambda_.11} parent=23 // pred_region
        %p158 = scmp.lt.s32.totalorder %s10, 1
        %s159 = scalar_select %p158, %s10, 1
        %s160 = smul.addr %s159, 40
        %s161 = smul.addr %s160, 4
        %s162 = scalar_lea.vmem %s0, %s161
      $region28: #{_lambda_.11} parent=23 // pred_fallthru
        _
      // Predicated region
      $region29: #{_lambda_.11} parent=23 // pred_check
        %p163 = pneg %p56
      $region30: #{_lambda_.11} parent=23 // pred_check_branch
        %165 = sbr.rel (%p163) target = $region32
      $region31: #{_lambda_.11} parent=23 // pred_region
        %p166 = scmp.lt.s32.totalorder %s10, 1
        %s167 = scalar_select %p166, %s10, 1
        %s168 = smul.addr %s167, 40
        %s169 = smul.addr %s168, 4
        %s170 = scalar_lea.vmem %s1, %s169
      $region32: #{_lambda_.11} parent=23 // pred_fallthru
        _
    $region24: #{_lambda_.11} parent=5 // pred_fallthru
      _
    %p171 = scmp.le.s32.totalorder 1, %s10
    %p172 = scmp.lt.s32.totalorder %s10, 3
    %p173 = pnand %p171, %p172
    %p174 = pneg %p173
    // Predicated region
    $region33: #{_lambda_.11} parent=5 // pred_check
      _
    $region34: #{_lambda_.11} parent=5 // pred_check_branch
      %176 = sbr.rel (%p173) target = $region36
    $region35: #{_lambda_.11} parent=5 // pred_region
      %s177 = ssub.s32 %s10, 1
      %p178 = scmp.lt.s32.totalorder %s15, 1
      %s179 = scalar_select %p178, %s15, 1
      %s180 = smul.addr %s179, 40
      %s181 = smul.addr %s180, 4
      %s182 = scalar_lea.vmem %s0, %s181
      %p183 = pneg %p36
      %p184 = pneg %p33
      %p185 = scmp.lt.s32.totalorder %s15, 1
      %s186 = scalar_select %p185, %s15, 1
      %s187 = smul.addr %s186, 40
      %s188 = smul.addr %s187, 4
      %s189 = scalar_lea.vmem %s1, %s188
      %p190 = pneg %p62
      %p191 = pneg %p59
      %p192 = pneg %p83
      %p193 = pneg %p80
      %p194 = pneg %p104
      %p195 = pneg %p101
      %p196 = pneg %p130
      %p197 = pneg %p127
      %p198 = scmp.lt.s32.totalorder %s15, 1
      %s199 = scalar_select %p198, %s15, 1
      %s200 = smul.addr %s199, 32
      %s201 = smul.addr %s200, 4
      %s202 = scalar_lea.vmem %s4, %s201
      %p203 = scmp.lt.s32.totalorder %s15, 1
      %s204 = scalar_select %p203, %s15, 1
      %s205 = smul.addr %s204, 40
      %s206 = smul.addr %s205, 4
      %s207 = scalar_lea.vmem %s0, %s206
      %p208 = scmp.lt.s32.totalorder %s15, 1
      %s209 = scalar_select %p208, %s15, 1
      %s210 = smul.addr %s209, 40
      %s211 = smul.addr %s210, 4
      %s212 = scalar_lea.vmem %s1, %s211
      %p213 = scmp.lt.s32.totalorder %s15, 1
      %s214 = scalar_select %p213, %s15, 1
      %s215 = smul.addr %s214, 32
      %s216 = smul.addr %s215, 4
      %s217 = scalar_lea.vmem %s4, %s216
      %v219 = vld [vmem:[%s207] sm:$0xf]
      %v220 = vld [vmem:[%s207 + $0x4] sm:$0xf]
      %v221 = vld [vmem:[%s207 + $0x8] sm:$0xf]
      %v222 = vld [vmem:[%s207 + $0xc] sm:$0xf]
      %v223 = vld [vmem:[%s207 + $0x10] sm:$0xf]
      %v224 = vld [vmem:[%s207 + $0x14] sm:$0xf]
      %v225 = vld [vmem:[%s207 + $0x18] sm:$0xf]
      %v226 = vld [vmem:[%s207 + $0x1c] sm:$0xf]
      %v227 = vld [vmem:[%s207 + $0x20] sm:$0xf]
      %v228 = vld [vmem:[%s207 + $0x24] sm:$0xf]
      %v229 = vld [vmem:[%s207 + $0x28] sm:$0xf]
      %v230 = vld [vmem:[%s207 + $0x2c] sm:$0xf]
      %v231 = vld [vmem:[%s207 + $0x30] sm:$0xf]
      %v232 = vld [vmem:[%s207 + $0x34] sm:$0xf]
      %v233 = vld [vmem:[%s207 + $0x38] sm:$0xf]
      %v234 = vld [vmem:[%s207 + $0x3c] sm:$0xf]
      %v235 = vld [vmem:[%s207 + $0x40] sm:$0xf]
      %v236 = vld [vmem:[%s207 + $0x44] sm:$0xf]
      %v237 = vld [vmem:[%s207 + $0x48] sm:$0xf]
      %v238 = vld [vmem:[%s207 + $0x4c] sm:$0xf]
      %v239 = vld [vmem:[%s207 + $0x50] sm:$0xf]
      %v240 = vld [vmem:[%s207 + $0x54] sm:$0xf]
      %v241 = vld [vmem:[%s207 + $0x58] sm:$0xf]
      %v242 = vld [vmem:[%s207 + $0x5c] sm:$0xf]
      %v243 = vld [vmem:[%s207 + $0x60] sm:$0xf]
      %v244 = vld [vmem:[%s207 + $0x64] sm:$0xf]
      %v245 = vld [vmem:[%s207 + $0x68] sm:$0xf]
      %v246 = vld [vmem:[%s207 + $0x6c] sm:$0xf]
      %v247 = vld [vmem:[%s207 + $0x70] sm:$0xf]
      %v248 = vld [vmem:[%s207 + $0x74] sm:$0xf]
      %v249 = vld [vmem:[%s207 + $0x78] sm:$0xf]
      %v250 = vld [vmem:[%s207 + $0x7c] sm:$0xf]
      %v251 = vld [vmem:[%s2] sm:$0xf]
      %v252 = vld [vmem:[%s2 + $0x4] sm:$0x7]
      %v253 = vld [vmem:[%s212] sm:$0xf]
      %v254 = vld [vmem:[%s212 + $0x4] sm:$0xf]
      %v255 = vld [vmem:[%s212 + $0x8] sm:$0xf]
      %v256 = vld [vmem:[%s212 + $0xc] sm:$0xf]
      %v257 = vld [vmem:[%s212 + $0x10] sm:$0xf]
      %v258 = vld [vmem:[%s212 + $0x14] sm:$0xf]
      %v259 = vld [vmem:[%s212 + $0x18] sm:$0xf]
      %v260 = vld [vmem:[%s212 + $0x1c] sm:$0xf]
      %v261 = vld [vmem:[%s212 + $0x20] sm:$0xf]
      %v262 = vld [vmem:[%s212 + $0x24] sm:$0xf]
      %v263 = vld [vmem:[%s212 + $0x28] sm:$0xf]
      %v264 = vld [vmem:[%s212 + $0x2c] sm:$0xf]
      %v265 = vld [vmem:[%s212 + $0x30] sm:$0xf]
      %v266 = vld [vmem:[%s212 + $0x34] sm:$0xf]
      %v267 = vld [vmem:[%s212 + $0x38] sm:$0xf]
      %v268 = vld [vmem:[%s212 + $0x3c] sm:$0xf]
      %v269 = vld [vmem:[%s212 + $0x40] sm:$0xf]
      %v270 = vld [vmem:[%s212 + $0x44] sm:$0xf]
      %v271 = vld [vmem:[%s212 + $0x48] sm:$0xf]
      %v272 = vld [vmem:[%s212 + $0x4c] sm:$0xf]
      %v273 = vld [vmem:[%s212 + $0x50] sm:$0xf]
      %v274 = vld [vmem:[%s212 + $0x54] sm:$0xf]
      %v275 = vld [vmem:[%s212 + $0x58] sm:$0xf]
      %v276 = vld [vmem:[%s212 + $0x5c] sm:$0xf]
      %v277 = vld [vmem:[%s212 + $0x60] sm:$0xf]
      %v278 = vld [vmem:[%s212 + $0x64] sm:$0xf]
      %v279 = vld [vmem:[%s212 + $0x68] sm:$0xf]
      %v280 = vld [vmem:[%s212 + $0x6c] sm:$0xf]
      %v281 = vld [vmem:[%s212 + $0x70] sm:$0xf]
      %v282 = vld [vmem:[%s212 + $0x74] sm:$0xf]
      %v283 = vld [vmem:[%s212 + $0x78] sm:$0xf]
      %v284 = vld [vmem:[%s212 + $0x7c] sm:$0xf]
      %s285 = scalar_lea.vmem %s2, 8
      %v286 = vld [vmem:[%s285] sm:$0xf]
      %v287 = vld [vmem:[%s285 + $0x4] sm:$0x7]
      %v320 = vunpack.c.l.b16 %v253
      %v321 = vunpack.c.l.b16 %v254
      %v322 = vunpack.c.l.b16 %v255
      %v323 = vunpack.c.l.b16 %v256
      %v324 = vunpack.c.l.b16 %v257
      %v325 = vunpack.c.l.b16 %v258
      %v326 = vunpack.c.l.b16 %v259
      %v327 = vunpack.c.l.b16 %v260
      %v328 = vunpack.c.l.b16 %v261
      %v329 = vunpack.c.l.b16 %v262
      %v330 = vunpack.c.l.b16 %v263
      %v331 = vunpack.c.l.b16 %v264
      %v332 = vunpack.c.l.b16 %v265
      %v333 = vunpack.c.l.b16 %v266
      %v334 = vunpack.c.l.b16 %v267
      %v335 = vunpack.c.l.b16 %v268
      %v336 = vunpack.c.l.b16 %v269
      %v337 = vunpack.c.l.b16 %v270
      %v338 = vunpack.c.l.b16 %v271
      %v339 = vunpack.c.l.b16 %v272
      %v340 = vunpack.c.l.b16 %v273
      %v341 = vunpack.c.l.b16 %v274
      %v342 = vunpack.c.l.b16 %v275
      %v343 = vunpack.c.l.b16 %v276
      %v344 = vunpack.c.l.b16 %v277
      %v345 = vunpack.c.l.b16 %v278
      %v346 = vunpack.c.l.b16 %v279
      %v347 = vunpack.c.l.b16 %v280
      %v348 = vunpack.c.l.b16 %v281
      %v349 = vunpack.c.l.b16 %v282
      %v350 = vunpack.c.l.b16 %v283
      %v351 = vunpack.c.l.b16 %v284
      %v352 = vpack.c.b16 %v321, %v320
      %v353 = vpack.c.b16 %v323, %v322
      %v354 = vpack.c.b16 %v325, %v324
      %v355 = vpack.c.b16 %v327, %v326
      %v356 = vpack.c.b16 %v329, %v328
      %v357 = vpack.c.b16 %v331, %v330
      %v358 = vpack.c.b16 %v333, %v332
      %v359 = vpack.c.b16 %v335, %v334
      %v360 = vpack.c.b16 %v337, %v336
      %v361 = vpack.c.b16 %v339, %v338
      %v362 = vpack.c.b16 %v341, %v340
      %v363 = vpack.c.b16 %v343, %v342
      %v364 = vpack.c.b16 %v345, %v344
      %v365 = vpack.c.b16 %v347, %v346
      %v366 = vpack.c.b16 %v349, %v348
      %v367 = vpack.c.b16 %v351, %v350
      %v370 = vunpack.c.l.b16 %v286
      %v371 = vunpack.c.l.b16 %v287
      %v372 = vpack.c.b16 %v371, %v370
      %vm373 = vcmask 113664
      %v375 = vsel %vm373, %v352, 0
      %v378 = vsel %vm373, %v353, 0
      %v381 = vsel %vm373, %v354, 0
      %v384 = vsel %vm373, %v355, 0
      %v387 = vsel %vm373, %v356, 0
      %v390 = vsel %vm373, %v357, 0
      %v393 = vsel %vm373, %v358, 0
      %v396 = vsel %vm373, %v359, 0
      %v399 = vsel %vm373, %v360, 0
      %v402 = vsel %vm373, %v361, 0
      %v405 = vsel %vm373, %v362, 0
      %v408 = vsel %vm373, %v363, 0
      %v411 = vsel %vm373, %v364, 0
      %v414 = vsel %vm373, %v365, 0
      %v417 = vsel %vm373, %v366, 0
      %v420 = vsel %vm373, %v367, 0
      %vm422 = vcmask 1046528
      %v424 = vsel %vm422, %v372, 0
      %426 = vmatprep.subr.bf16.mxu0 0
      %427 = vmatpush1.bf16.msra.mxu0 %v424
      %428 = vmatprep.subr.bf16.mxu0 0
      %429 = vmatpush1.bf16.msra.mxu0 0
      %430 = vmatprep.subr.bf16.mxu0 0
      %431 = vmatpush1.bf16.msra.mxu0 0
      %432 = vmatprep.subr.bf16.mxu0 0
      %433 = vmatpush1.bf16.msra.mxu0 0
      %434 = vmatprep.subr.bf16.mxu0 0
      %435 = vmatpush1.bf16.msra.mxu0 0
      %436 = vmatprep.subr.bf16.mxu0 0
      %437 = vmatpush1.bf16.msra.mxu0 0
      %438 = vmatprep.subr.bf16.mxu0 0
      %439 = vmatpush1.bf16.msra.mxu0 0
      %440 = vmatprep.subr.bf16.mxu0 0
      %441 = vmatpush1.bf16.msra.mxu0 0
      %442 = vmatprep.subr.bf16.mxu0 0
      %443 = vmatpush1.bf16.msra.mxu0 0
      %444 = vmatprep.subr.bf16.mxu0 0
      %445 = vmatpush1.bf16.msra.mxu0 0
      %446 = vmatprep.subr.bf16.mxu0 0
      %447 = vmatpush1.bf16.msra.mxu0 0
      %448 = vmatprep.subr.bf16.mxu0 0
      %449 = vmatpush1.bf16.msra.mxu0 0
      %450 = vmatprep.subr.bf16.mxu0 0
      %451 = vmatpush1.bf16.msra.mxu0 0
      %452 = vmatprep.subr.bf16.mxu0 0
      %453 = vmatpush1.bf16.msra.mxu0 0
      %454 = vmatprep.subr.bf16.mxu0 0
      %455 = vmatpush1.bf16.msra.mxu0 0
      %456 = vmatprep.subr.bf16.mxu0 0
      %457 = vmatpush1.bf16.msra.mxu0 0
      %458 = vmatprep.mubr.bf16.mxu0 0
      %459 = vmatmul.mubr.bf16.gmra.mrb[0].mxu0 %v375
      %v460 = vpop.f32.mrb[0].mxu0
      %v461 = vadd.f32 0.0, %v460
      %v462 = vpop.f32.mrb[0].mxu0
      %v463 = vpop.f32.mrb[0].mxu0
      %v464 = vadd.f32 0.0, %v463
      %v465 = vpop.f32.mrb[0].mxu0
      %466 = vmatprep.mubr.bf16.mxu0 0
      %467 = vmatmul.mubr.bf16.gmra.mrb[0].mxu0 %v378
      %v468 = vpop.f32.mrb[0].mxu0
      %v469 = vadd.f32 0.0, %v468
      %v470 = vpop.f32.mrb[0].mxu0
      %v471 = vpop.f32.mrb[0].mxu0
      %v472 = vadd.f32 0.0, %v471
      %v473 = vpop.f32.mrb[0].mxu0
      %474 = vmatprep.mubr.bf16.mxu0 0
      %475 = vmatmul.mubr.bf16.gmra.mrb[0].mxu0 %v381
      %v476 = vpop.f32.mrb[0].mxu0
      %v477 = vadd.f32 0.0, %v476
      %v478 = vpop.f32.mrb[0].mxu0
      %v479 = vpop.f32.mrb[0].mxu0
      %v480 = vadd.f32 0.0, %v479
      %v481 = vpop.f32.mrb[0].mxu0
      %482 = vmatprep.mubr.bf16.mxu0 0
      %483 = vmatmul.mubr.bf16.gmra.mrb[0].mxu0 %v384
      %v484 = vpop.f32.mrb[0].mxu0
      %v485 = vadd.f32 0.0, %v484
      %v486 = vpop.f32.mrb[0].mxu0
      %v487 = vpop.f32.mrb[0].mxu0
      %v488 = vadd.f32 0.0, %v487
      %v489 = vpop.f32.mrb[0].mxu0
      %490 = vmatprep.mubr.bf16.mxu0 0
      %491 = vmatmul.mubr.bf16.gmra.mrb[0].mxu0 %v387
      %v492 = vpop.f32.mrb[0].mxu0
      %v493 = vadd.f32 0.0, %v492
      %v494 = vpop.f32.mrb[0].mxu0
      %v495 = vpop.f32.mrb[0].mxu0
      %v496 = vadd.f32 0.0, %v495
      %v497 = vpop.f32.mrb[0].mxu0
      %498 = vmatprep.mubr.bf16.mxu0 0
      %499 = vmatmul.mubr.bf16.gmra.mrb[0].mxu0 %v390
      %v500 = vpop.f32.mrb[0].mxu0
      %v501 = vadd.f32 0.0, %v500
      %v502 = vpop.f32.mrb[0].mxu0
      %v503 = vpop.f32.mrb[0].mxu0
      %v504 = vadd.f32 0.0, %v503
      %v505 = vpop.f32.mrb[0].mxu0
      %506 = vmatprep.mubr.bf16.mxu0 0
      %507 = vmatmul.mubr.bf16.gmra.mrb[0].mxu0 %v393
      %v508 = vpop.f32.mrb[0].mxu0
      %v509 = vadd.f32 0.0, %v508
      %v510 = vpop.f32.mrb[0].mxu0
      %v511 = vpop.f32.mrb[0].mxu0
      %v512 = vadd.f32 0.0, %v511
      %v513 = vpop.f32.mrb[0].mxu0
      %514 = vmatprep.mubr.bf16.mxu0 0
      %515 = vmatmul.mubr.bf16.gmra.mrb[0].mxu0 %v396
      %v516 = vpop.f32.mrb[0].mxu0
      %v517 = vadd.f32 0.0, %v516
      %v518 = vpop.f32.mrb[0].mxu0
      %v519 = vpop.f32.mrb[0].mxu0
      %v520 = vadd.f32 0.0, %v519
      %v521 = vpop.f32.mrb[0].mxu0
      %522 = vmatprep.mubr.bf16.mxu0 0
      %523 = vmatmul.mubr.bf16.gmra.mrb[0].mxu0 %v399
      %v524 = vpop.f32.mrb[0].mxu0
      %v525 = vadd.f32 0.0, %v524
      %v526 = vpop.f32.mrb[0].mxu0
      %v527 = vpop.f32.mrb[0].mxu0
      %v528 = vadd.f32 0.0, %v527
      %v529 = vpop.f32.mrb[0].mxu0
      %530 = vmatprep.mubr.bf16.mxu0 0
      %531 = vmatmul.mubr.bf16.gmra.mrb[0].mxu0 %v402
      %v532 = vpop.f32.mrb[0].mxu0
      %v533 = vadd.f32 0.0, %v532
      %v534 = vpop.f32.mrb[0].mxu0
      %v535 = vpop.f32.mrb[0].mxu0
      %v536 = vadd.f32 0.0, %v535
      %v537 = vpop.f32.mrb[0].mxu0
      %538 = vmatprep.mubr.bf16.mxu0 0
      %539 = vmatmul.mubr.bf16.gmra.mrb[0].mxu0 %v405
      %v540 = vpop.f32.mrb[0].mxu0
      %v541 = vadd.f32 0.0, %v540
      %v542 = vpop.f32.mrb[0].mxu0
      %v543 = vpop.f32.mrb[0].mxu0
      %v544 = vadd.f32 0.0, %v543
      %v545 = vpop.f32.mrb[0].mxu0
      %546 = vmatprep.mubr.bf16.mxu0 0
      %547 = vmatmul.mubr.bf16.gmra.mrb[0].mxu0 %v408
      %v548 = vpop.f32.mrb[0].mxu0
      %v549 = vadd.f32 0.0, %v548
      %v550 = vpop.f32.mrb[0].mxu0
      %v551 = vpop.f32.mrb[0].mxu0
      %v552 = vadd.f32 0.0, %v551
      %v553 = vpop.f32.mrb[0].mxu0
      %554 = vmatprep.mubr.bf16.mxu0 0
      %555 = vmatmul.mubr.bf16.gmra.mrb[0].mxu0 %v411
      %v556 = vpop.f32.mrb[0].mxu0
      %v557 = vadd.f32 0.0, %v556
      %v558 = vpop.f32.mrb[0].mxu0
      %v559 = vpop.f32.mrb[0].mxu0
      %v560 = vadd.f32 0.0, %v559
      %v561 = vpop.f32.mrb[0].mxu0
      %562 = vmatprep.mubr.bf16.mxu0 0
      %563 = vmatmul.mubr.bf16.gmra.mrb[0].mxu0 %v414
      %v564 = vpop.f32.mrb[0].mxu0
      %v565 = vadd.f32 0.0, %v564
      %v566 = vpop.f32.mrb[0].mxu0
      %v567 = vpop.f32.mrb[0].mxu0
      %v568 = vadd.f32 0.0, %v567
      %v569 = vpop.f32.mrb[0].mxu0
      %570 = vmatprep.mubr.bf16.mxu0 0
      %571 = vmatmul.mubr.bf16.gmra.mrb[0].mxu0 %v417
      %v572 = vpop.f32.mrb[0].mxu0
      %v573 = vadd.f32 0.0, %v572
      %v574 = vpop.f32.mrb[0].mxu0
      %v575 = vpop.f32.mrb[0].mxu0
      %v576 = vadd.f32 0.0, %v575
      %v577 = vpop.f32.mrb[0].mxu0
      %578 = vmatprep.mubr.bf16.mxu0 0
      %579 = vmatmul.mubr.bf16.gmra.mrb[0].mxu0 %v420
      %v580 = vpop.f32.mrb[0].mxu0
      %v581 = vadd.f32 0.0, %v580
      %v582 = vpop.f32.mrb[0].mxu0
      %v583 = vpop.f32.mrb[0].mxu0
      %v584 = vadd.f32 0.0, %v583
      %v585 = vpop.f32.mrb[0].mxu0
      %586 = vdwg.mxu0
      %v619 = vunpack.c.l.b16 %v219
      %v620 = vunpack.c.l.b16 %v220
      %v621 = vunpack.c.l.b16 %v221
      %v622 = vunpack.c.l.b16 %v222
      %v623 = vunpack.c.l.b16 %v223
      %v624 = vunpack.c.l.b16 %v224
      %v625 = vunpack.c.l.b16 %v225
      %v626 = vunpack.c.l.b16 %v226
      %v627 = vunpack.c.l.b16 %v227
      %v628 = vunpack.c.l.b16 %v228
      %v629 = vunpack.c.l.b16 %v229
      %v630 = vunpack.c.l.b16 %v230
      %v631 = vunpack.c.l.b16 %v231
      %v632 = vunpack.c.l.b16 %v232
      %v633 = vunpack.c.l.b16 %v233
      %v634 = vunpack.c.l.b16 %v234
      %v635 = vunpack.c.l.b16 %v235
      %v636 = vunpack.c.l.b16 %v236
      %v637 = vunpack.c.l.b16 %v237
      %v638 = vunpack.c.l.b16 %v238
      %v639 = vunpack.c.l.b16 %v239
      %v640 = vunpack.c.l.b16 %v240
      %v641 = vunpack.c.l.b16 %v241
      %v642 = vunpack.c.l.b16 %v242
      %v643 = vunpack.c.l.b16 %v243
      %v644 = vunpack.c.l.b16 %v244
      %v645 = vunpack.c.l.b16 %v245
      %v646 = vunpack.c.l.b16 %v246
      %v647 = vunpack.c.l.b16 %v247
      %v648 = vunpack.c.l.b16 %v248
      %v649 = vunpack.c.l.b16 %v249
      %v650 = vunpack.c.l.b16 %v250
      %v651 = vpack.c.b16 %v620, %v619
      %v652 = vpack.c.b16 %v622, %v621
      %v653 = vpack.c.b16 %v624, %v623
      %v654 = vpack.c.b16 %v626, %v625
      %v655 = vpack.c.b16 %v628, %v627
      %v656 = vpack.c.b16 %v630, %v629
      %v657 = vpack.c.b16 %v632, %v631
      %v658 = vpack.c.b16 %v634, %v633
      %v659 = vpack.c.b16 %v636, %v635
      %v660 = vpack.c.b16 %v638, %v637
      %v661 = vpack.c.b16 %v640, %v639
      %v662 = vpack.c.b16 %v642, %v641
      %v663 = vpack.c.b16 %v644, %v643
      %v664 = vpack.c.b16 %v646, %v645
      %v665 = vpack.c.b16 %v648, %v647
      %v666 = vpack.c.b16 %v650, %v649
      %v669 = vunpack.c.l.b16 %v251
      %v670 = vunpack.c.l.b16 %v252
      %v671 = vpack.c.b16 %v670, %v669
      %v673 = vsel %vm373, %v651, 0
      %v676 = vsel %vm373, %v652, 0
      %v679 = vsel %vm373, %v653, 0
      %v682 = vsel %vm373, %v654, 0
      %v685 = vsel %vm373, %v655, 0
      %v688 = vsel %vm373, %v656, 0
      %v691 = vsel %vm373, %v657, 0
      %v694 = vsel %vm373, %v658, 0
      %v697 = vsel %vm373, %v659, 0
      %v700 = vsel %vm373, %v660, 0
      %v703 = vsel %vm373, %v661, 0
      %v706 = vsel %vm373, %v662, 0
      %v709 = vsel %vm373, %v663, 0
      %v712 = vsel %vm373, %v664, 0
      %v715 = vsel %vm373, %v665, 0
      %v718 = vsel %vm373, %v666, 0
      %v721 = vsel %vm422, %v671, 0
      %723 = vmatprep.subr.bf16.mxu0 0
      %724 = vmatpush1.bf16.msra.mxu0 %v721
      %725 = vmatprep.subr.bf16.mxu0 0
      %726 = vmatpush1.bf16.msra.mxu0 0
      %727 = vmatprep.subr.bf16.mxu0 0
      %728 = vmatpush1.bf16.msra.mxu0 0
      %729 = vmatprep.subr.bf16.mxu0 0
      %730 = vmatpush1.bf16.msra.mxu0 0
      %731 = vmatprep.subr.bf16.mxu0 0
      %732 = vmatpush1.bf16.msra.mxu0 0
      %733 = vmatprep.subr.bf16.mxu0 0
      %734 = vmatpush1.bf16.msra.mxu0 0
      %735 = vmatprep.subr.bf16.mxu0 0
      %736 = vmatpush1.bf16.msra.mxu0 0
      %737 = vmatprep.subr.bf16.mxu0 0
      %738 = vmatpush1.bf16.msra.mxu0 0
      %739 = vmatprep.subr.bf16.mxu0 0
      %740 = vmatpush1.bf16.msra.mxu0 0
      %741 = vmatprep.subr.bf16.mxu0 0
      %742 = vmatpush1.bf16.msra.mxu0 0
      %743 = vmatprep.subr.bf16.mxu0 0
      %744 = vmatpush1.bf16.msra.mxu0 0
      %745 = vmatprep.subr.bf16.mxu0 0
      %746 = vmatpush1.bf16.msra.mxu0 0
      %747 = vmatprep.subr.bf16.mxu0 0
      %748 = vmatpush1.bf16.msra.mxu0 0
      %749 = vmatprep.subr.bf16.mxu0 0
      %750 = vmatpush1.bf16.msra.mxu0 0
      %751 = vmatprep.subr.bf16.mxu0 0
      %752 = vmatpush1.bf16.msra.mxu0 0
      %753 = vmatprep.subr.bf16.mxu0 0
      %754 = vmatpush1.bf16.msra.mxu0 0
      %755 = vmatprep.mubr.bf16.mxu0 0
      %756 = vmatmul.mubr.bf16.gmra.mrb[0].mxu0 %v673
      %v757 = vpop.f32.mrb[0].mxu0
      %v758 = vadd.f32 %v461, %v757
      %v759 = vpop.f32.mrb[0].mxu0
      %v760 = vpop.f32.mrb[0].mxu0
      %v761 = vadd.f32 %v464, %v760
      %v762 = vpop.f32.mrb[0].mxu0
      %763 = vmatprep.mubr.bf16.mxu0 0
      %764 = vmatmul.mubr.bf16.gmra.mrb[0].mxu0 %v676
      %v765 = vpop.f32.mrb[0].mxu0
      %v766 = vadd.f32 %v469, %v765
      %v767 = vpop.f32.mrb[0].mxu0
      %v768 = vpop.f32.mrb[0].mxu0
      %v769 = vadd.f32 %v472, %v768
      %v770 = vpop.f32.mrb[0].mxu0
      %771 = vmatprep.mubr.bf16.mxu0 0
      %772 = vmatmul.mubr.bf16.gmra.mrb[0].mxu0 %v679
      %v773 = vpop.f32.mrb[0].mxu0
      %v774 = vadd.f32 %v477, %v773
      %v775 = vpop.f32.mrb[0].mxu0
      %v776 = vpop.f32.mrb[0].mxu0
      %v777 = vadd.f32 %v480, %v776
      %v778 = vpop.f32.mrb[0].mxu0
      %779 = vmatprep.mubr.bf16.mxu0 0
      %780 = vmatmul.mubr.bf16.gmra.mrb[0].mxu0 %v682
      %v781 = vpop.f32.mrb[0].mxu0
      %v782 = vadd.f32 %v485, %v781
      %v783 = vpop.f32.mrb[0].mxu0
      %v784 = vpop.f32.mrb[0].mxu0
      %v785 = vadd.f32 %v488, %v784
      %v786 = vpop.f32.mrb[0].mxu0
      %787 = vmatprep.mubr.bf16.mxu0 0
      %788 = vmatmul.mubr.bf16.gmra.mrb[0].mxu0 %v685
      %v789 = vpop.f32.mrb[0].mxu0
      %v790 = vadd.f32 %v493, %v789
      %v791 = vpop.f32.mrb[0].mxu0
      %v792 = vpop.f32.mrb[0].mxu0
      %v793 = vadd.f32 %v496, %v792
      %v794 = vpop.f32.mrb[0].mxu0
      %795 = vmatprep.mubr.bf16.mxu0 0
      %796 = vmatmul.mubr.bf16.gmra.mrb[0].mxu0 %v688
      %v797 = vpop.f32.mrb[0].mxu0
      %v798 = vadd.f32 %v501, %v797
      %v799 = vpop.f32.mrb[0].mxu0
      %v800 = vpop.f32.mrb[0].mxu0
      %v801 = vadd.f32 %v504, %v800
      %v802 = vpop.f32.mrb[0].mxu0
      %803 = vmatprep.mubr.bf16.mxu0 0
      %804 = vmatmul.mubr.bf16.gmra.mrb[0].mxu0 %v691
      %v805 = vpop.f32.mrb[0].mxu0
      %v806 = vadd.f32 %v509, %v805
      %v807 = vpop.f32.mrb[0].mxu0
      %v808 = vpop.f32.mrb[0].mxu0
      %v809 = vadd.f32 %v512, %v808
      %v810 = vpop.f32.mrb[0].mxu0
      %811 = vmatprep.mubr.bf16.mxu0 0
      %812 = vmatmul.mubr.bf16.gmra.mrb[0].mxu0 %v694
      %v813 = vpop.f32.mrb[0].mxu0
      %v814 = vadd.f32 %v517, %v813
      %v815 = vpop.f32.mrb[0].mxu0
      %v816 = vpop.f32.mrb[0].mxu0
      %v817 = vadd.f32 %v520, %v816
      %v818 = vpop.f32.mrb[0].mxu0
      %819 = vmatprep.mubr.bf16.mxu0 0
      %820 = vmatmul.mubr.bf16.gmra.mrb[0].mxu0 %v697
      %v821 = vpop.f32.mrb[0].mxu0
      %v822 = vadd.f32 %v525, %v821
      %v823 = vpop.f32.mrb[0].mxu0
      %v824 = vpop.f32.mrb[0].mxu0
      %v825 = vadd.f32 %v528, %v824
      %v826 = vpop.f32.mrb[0].mxu0
      %827 = vmatprep.mubr.bf16.mxu0 0
      %828 = vmatmul.mubr.bf16.gmra.mrb[0].mxu0 %v700
      %v829 = vpop.f32.mrb[0].mxu0
      %v830 = vadd.f32 %v533, %v829
      %v831 = vpop.f32.mrb[0].mxu0
      %v832 = vpop.f32.mrb[0].mxu0
      %v833 = vadd.f32 %v536, %v832
      %v834 = vpop.f32.mrb[0].mxu0
      %835 = vmatprep.mubr.bf16.mxu0 0
      %836 = vmatmul.mubr.bf16.gmra.mrb[0].mxu0 %v703
      %v837 = vpop.f32.mrb[0].mxu0
      %v838 = vadd.f32 %v541, %v837
      %v839 = vpop.f32.mrb[0].mxu0
      %v840 = vpop.f32.mrb[0].mxu0
      %v841 = vadd.f32 %v544, %v840
      %v842 = vpop.f32.mrb[0].mxu0
      %843 = vmatprep.mubr.bf16.mxu0 0
      %844 = vmatmul.mubr.bf16.gmra.mrb[0].mxu0 %v706
      %v845 = vpop.f32.mrb[0].mxu0
      %v846 = vadd.f32 %v549, %v845
      %v847 = vpop.f32.mrb[0].mxu0
      %v848 = vpop.f32.mrb[0].mxu0
      %v849 = vadd.f32 %v552, %v848
      %v850 = vpop.f32.mrb[0].mxu0
      %851 = vmatprep.mubr.bf16.mxu0 0
      %852 = vmatmul.mubr.bf16.gmra.mrb[0].mxu0 %v709
      %v853 = vpop.f32.mrb[0].mxu0
      %v854 = vadd.f32 %v557, %v853
      %v855 = vpop.f32.mrb[0].mxu0
      %v856 = vpop.f32.mrb[0].mxu0
      %v857 = vadd.f32 %v560, %v856
      %v858 = vpop.f32.mrb[0].mxu0
      %859 = vmatprep.mubr.bf16.mxu0 0
      %860 = vmatmul.mubr.bf16.gmra.mrb[0].mxu0 %v712
      %v861 = vpop.f32.mrb[0].mxu0
      %v862 = vadd.f32 %v565, %v861
      %v863 = vpop.f32.mrb[0].mxu0
      %v864 = vpop.f32.mrb[0].mxu0
      %v865 = vadd.f32 %v568, %v864
      %v866 = vpop.f32.mrb[0].mxu0
      %867 = vmatprep.mubr.bf16.mxu0 0
      %868 = vmatmul.mubr.bf16.gmra.mrb[0].mxu0 %v715
      %v869 = vpop.f32.mrb[0].mxu0
      %v870 = vadd.f32 %v573, %v869
      %v871 = vpop.f32.mrb[0].mxu0
      %v872 = vpop.f32.mrb[0].mxu0
      %v873 = vadd.f32 %v576, %v872
      %v874 = vpop.f32.mrb[0].mxu0
      %875 = vmatprep.mubr.bf16.mxu0 0
      %876 = vmatmul.mubr.bf16.gmra.mrb[0].mxu0 %v718
      %v877 = vpop.f32.mrb[0].mxu0
      %v878 = vadd.f32 %v581, %v877
      %v879 = vpop.f32.mrb[0].mxu0
      %v880 = vpop.f32.mrb[0].mxu0
      %v881 = vadd.f32 %v584, %v880
      %v882 = vpop.f32.mrb[0].mxu0
      %883 = vdwg.mxu0
      %v884 = vld [vmem:[%s207 + $0x20] sm:$0xf]
      %v885 = vld [vmem:[%s207 + $0x24] sm:$0xf]
      %v886 = vld [vmem:[%s207 + $0x28] sm:$0xf]
      %v887 = vld [vmem:[%s207 + $0x2c] sm:$0xf]
      %v888 = vld [vmem:[%s207 + $0x30] sm:$0xf]
      %v889 = vld [vmem:[%s207 + $0x34] sm:$0xf]
      %v890 = vld [vmem:[%s207 + $0x38] sm:$0xf]
      %v891 = vld [vmem:[%s207 + $0x3c] sm:$0xf]
      %v892 = vld [vmem:[%s207 + $0x40] sm:$0xf]
      %v893 = vld [vmem:[%s207 + $0x44] sm:$0xf]
      %v894 = vld [vmem:[%s207 + $0x48] sm:$0xf]
      %v895 = vld [vmem:[%s207 + $0x4c] sm:$0xf]
      %v896 = vld [vmem:[%s207 + $0x50] sm:$0xf]
      %v897 = vld [vmem:[%s207 + $0x54] sm:$0xf]
      %v898 = vld [vmem:[%s207 + $0x58] sm:$0xf]
      %v899 = vld [vmem:[%s207 + $0x5c] sm:$0xf]
      %v900 = vld [vmem:[%s207 + $0x60] sm:$0xf]
      %v901 = vld [vmem:[%s207 + $0x64] sm:$0xf]
      %v902 = vld [vmem:[%s207 + $0x68] sm:$0xf]
      %v903 = vld [vmem:[%s207 + $0x6c] sm:$0xf]
      %v904 = vld [vmem:[%s207 + $0x70] sm:$0xf]
      %v905 = vld [vmem:[%s207 + $0x74] sm:$0xf]
      %v906 = vld [vmem:[%s207 + $0x78] sm:$0xf]
      %v907 = vld [vmem:[%s207 + $0x7c] sm:$0xf]
      %v908 = vld [vmem:[%s207 + $0x80] sm:$0xf]
      %v909 = vld [vmem:[%s207 + $0x84] sm:$0xf]
      %v910 = vld [vmem:[%s207 + $0x88] sm:$0xf]
      %v911 = vld [vmem:[%s207 + $0x8c] sm:$0xf]
      %v912 = vld [vmem:[%s207 + $0x90] sm:$0xf]
      %v913 = vld [vmem:[%s207 + $0x94] sm:$0xf]
      %v914 = vld [vmem:[%s207 + $0x98] sm:$0xf]
      %v915 = vld [vmem:[%s207 + $0x9c] sm:$0xf]
      %s916 = scalar_lea.vmem %s2, 16
      %v917 = vld [vmem:[%s916] sm:$0xf]
      %v918 = vld [vmem:[%s916 + $0x4] sm:$0x7]
      %v951 = vunpack.c.l.b16 %v884
      %v952 = vunpack.c.l.b16 %v885
      %v953 = vunpack.c.l.b16 %v886
      %v954 = vunpack.c.l.b16 %v887
      %v955 = vunpack.c.l.b16 %v888
      %v956 = vunpack.c.l.b16 %v889
      %v957 = vunpack.c.l.b16 %v890
      %v958 = vunpack.c.l.b16 %v891
      %v959 = vunpack.c.l.b16 %v892
      %v960 = vunpack.c.l.b16 %v893
      %v961 = vunpack.c.l.b16 %v894
      %v962 = vunpack.c.l.b16 %v895
      %v963 = vunpack.c.l.b16 %v896
      %v964 = vunpack.c.l.b16 %v897
      %v965 = vunpack.c.l.b16 %v898
      %v966 = vunpack.c.l.b16 %v899
      %v967 = vunpack.c.l.b16 %v900
      %v968 = vunpack.c.l.b16 %v901
      %v969 = vunpack.c.l.b16 %v902
      %v970 = vunpack.c.l.b16 %v903
      %v971 = vunpack.c.l.b16 %v904
      %v972 = vunpack.c.l.b16 %v905
      %v973 = vunpack.c.l.b16 %v906
      %v974 = vunpack.c.l.b16 %v907
      %v975 = vunpack.c.l.b16 %v908
      %v976 = vunpack.c.l.b16 %v909
      %v977 = vunpack.c.l.b16 %v910
      %v978 = vunpack.c.l.b16 %v911
      %v979 = vunpack.c.l.b16 %v912
      %v980 = vunpack.c.l.b16 %v913
      %v981 = vunpack.c.l.b16 %v914
      %v982 = vunpack.c.l.b16 %v915
      %v983 = vpack.c.b16 %v952, %v951
      %v984 = vpack.c.b16 %v954, %v953
      %v985 = vpack.c.b16 %v956, %v955
      %v986 = vpack.c.b16 %v958, %v957
      %v987 = vpack.c.b16 %v960, %v959
      %v988 = vpack.c.b16 %v962, %v961
      %v989 = vpack.c.b16 %v964, %v963
      %v990 = vpack.c.b16 %v966, %v965
      %v991 = vpack.c.b16 %v968, %v967
      %v992 = vpack.c.b16 %v970, %v969
      %v993 = vpack.c.b16 %v972, %v971
      %v994 = vpack.c.b16 %v974, %v973
      %v995 = vpack.c.b16 %v976, %v975
      %v996 = vpack.c.b16 %v978, %v977
      %v997 = vpack.c.b16 %v980, %v979
      %v998 = vpack.c.b16 %v982, %v981
      %v1001 = vunpack.c.l.b16 %v917
      %v1002 = vunpack.c.l.b16 %v918
      %v1003 = vpack.c.b16 %v1002, %v1001
      %v1005 = vsel %vm373, %v983, 0
      %v1008 = vsel %vm373, %v984, 0
      %v1011 = vsel %vm373, %v985, 0
      %v1014 = vsel %vm373, %v986, 0
      %v1017 = vsel %vm373, %v987, 0
      %v1020 = vsel %vm373, %v988, 0
      %v1023 = vsel %vm373, %v989, 0
      %v1026 = vsel %vm373, %v990, 0
      %v1029 = vsel %vm373, %v991, 0
      %v1032 = vsel %vm373, %v992, 0
      %v1035 = vsel %vm373, %v993, 0
      %v1038 = vsel %vm373, %v994, 0
      %v1041 = vsel %vm373, %v995, 0
      %v1044 = vsel %vm373, %v996, 0
      %v1047 = vsel %vm373, %v997, 0
      %v1050 = vsel %vm373, %v998, 0
      %v1053 = vsel %vm422, %v1003, 0
      %1055 = vmatprep.subr.bf16.mxu0 0
      %1056 = vmatpush1.bf16.msra.mxu0 %v1053
      %1057 = vmatprep.subr.bf16.mxu0 0
      %1058 = vmatpush1.bf16.msra.mxu0 0
      %1059 = vmatprep.subr.bf16.mxu0 0
      %1060 = vmatpush1.bf16.msra.mxu0 0
      %1061 = vmatprep.subr.bf16.mxu0 0
      %1062 = vmatpush1.bf16.msra.mxu0 0
      %1063 = vmatprep.subr.bf16.mxu0 0
      %1064 = vmatpush1.bf16.msra.mxu0 0
      %1065 = vmatprep.subr.bf16.mxu0 0
      %1066 = vmatpush1.bf16.msra.mxu0 0
      %1067 = vmatprep.subr.bf16.mxu0 0
      %1068 = vmatpush1.bf16.msra.mxu0 0
      %1069 = vmatprep.subr.bf16.mxu0 0
      %1070 = vmatpush1.bf16.msra.mxu0 0
      %1071 = vmatprep.subr.bf16.mxu0 0
      %1072 = vmatpush1.bf16.msra.mxu0 0
      %1073 = vmatprep.subr.bf16.mxu0 0
      %1074 = vmatpush1.bf16.msra.mxu0 0
      %1075 = vmatprep.subr.bf16.mxu0 0
      %1076 = vmatpush1.bf16.msra.mxu0 0
      %1077 = vmatprep.subr.bf16.mxu0 0
      %1078 = vmatpush1.bf16.msra.mxu0 0
      %1079 = vmatprep.subr.bf16.mxu0 0
      %1080 = vmatpush1.bf16.msra.mxu0 0
      %1081 = vmatprep.subr.bf16.mxu0 0
      %1082 = vmatpush1.bf16.msra.mxu0 0
      %1083 = vmatprep.subr.bf16.mxu0 0
      %1084 = vmatpush1.bf16.msra.mxu0 0
      %1085 = vmatprep.subr.bf16.mxu0 0
      %1086 = vmatpush1.bf16.msra.mxu0 0
      %1087 = vmatprep.mubr.bf16.mxu0 0
      %1088 = vmatmul.mubr.bf16.gmra.mrb[0].mxu0 %v1005
      %v1089 = vpop.f32.mrb[0].mxu0
      %v1090 = vadd.f32 0.0, %v1089
      %v1091 = vpop.f32.mrb[0].mxu0
      %v1092 = vpop.f32.mrb[0].mxu0
      %v1093 = vadd.f32 0.0, %v1092
      %v1094 = vpop.f32.mrb[0].mxu0
      %1095 = vmatprep.mubr.bf16.mxu0 0
      %1096 = vmatmul.mubr.bf16.gmra.mrb[0].mxu0 %v1008
      %v1097 = vpop.f32.mrb[0].mxu0
      %v1098 = vadd.f32 0.0, %v1097
      %v1099 = vpop.f32.mrb[0].mxu0
      %v1100 = vpop.f32.mrb[0].mxu0
      %v1101 = vadd.f32 0.0, %v1100
      %v1102 = vpop.f32.mrb[0].mxu0
      %1103 = vmatprep.mubr.bf16.mxu0 0
      %1104 = vmatmul.mubr.bf16.gmra.mrb[0].mxu0 %v1011
      %v1105 = vpop.f32.mrb[0].mxu0
      %v1106 = vadd.f32 0.0, %v1105
      %v1107 = vpop.f32.mrb[0].mxu0
      %v1108 = vpop.f32.mrb[0].mxu0
      %v1109 = vadd.f32 0.0, %v1108
      %v1110 = vpop.f32.mrb[0].mxu0
      %1111 = vmatprep.mubr.bf16.mxu0 0
      %1112 = vmatmul.mubr.bf16.gmra.mrb[0].mxu0 %v1014
      %v1113 = vpop.f32.mrb[0].mxu0
      %v1114 = vadd.f32 0.0, %v1113
      %v1115 = vpop.f32.mrb[0].mxu0
      %v1116 = vpop.f32.mrb[0].mxu0
      %v1117 = vadd.f32 0.0, %v1116
      %v1118 = vpop.f32.mrb[0].mxu0
      %1119 = vmatprep.mubr.bf16.mxu0 0
      %1120 = vmatmul.mubr.bf16.gmra.mrb[0].mxu0 %v1017
      %v1121 = vpop.f32.mrb[0].mxu0
      %v1122 = vadd.f32 0.0, %v1121
      %v1123 = vpop.f32.mrb[0].mxu0
      %v1124 = vpop.f32.mrb[0].mxu0
      %v1125 = vadd.f32 0.0, %v1124
      %v1126 = vpop.f32.mrb[0].mxu0
      %1127 = vmatprep.mubr.bf16.mxu0 0
      %1128 = vmatmul.mubr.bf16.gmra.mrb[0].mxu0 %v1020
      %v1129 = vpop.f32.mrb[0].mxu0
      %v1130 = vadd.f32 0.0, %v1129
      %v1131 = vpop.f32.mrb[0].mxu0
      %v1132 = vpop.f32.mrb[0].mxu0
      %v1133 = vadd.f32 0.0, %v1132
      %v1134 = vpop.f32.mrb[0].mxu0
      %1135 = vmatprep.mubr.bf16.mxu0 0
      %1136 = vmatmul.mubr.bf16.gmra.mrb[0].mxu0 %v1023
      %v1137 = vpop.f32.mrb[0].mxu0
      %v1138 = vadd.f32 0.0, %v1137
      %v1139 = vpop.f32.mrb[0].mxu0
      %v1140 = vpop.f32.mrb[0].mxu0
      %v1141 = vadd.f32 0.0, %v1140
      %v1142 = vpop.f32.mrb[0].mxu0
      %1143 = vmatprep.mubr.bf16.mxu0 0
      %1144 = vmatmul.mubr.bf16.gmra.mrb[0].mxu0 %v1026
      %v1145 = vpop.f32.mrb[0].mxu0
      %v1146 = vadd.f32 0.0, %v1145
      %v1147 = vpop.f32.mrb[0].mxu0
      %v1148 = vpop.f32.mrb[0].mxu0
      %v1149 = vadd.f32 0.0, %v1148
      %v1150 = vpop.f32.mrb[0].mxu0
      %1151 = vmatprep.mubr.bf16.mxu0 0
      %1152 = vmatmul.mubr.bf16.gmra.mrb[0].mxu0 %v1029
      %v1153 = vpop.f32.mrb[0].mxu0
      %v1154 = vadd.f32 0.0, %v1153
      %v1155 = vpop.f32.mrb[0].mxu0
      %v1156 = vpop.f32.mrb[0].mxu0
      %v1157 = vadd.f32 0.0, %v1156
      %v1158 = vpop.f32.mrb[0].mxu0
      %1159 = vmatprep.mubr.bf16.mxu0 0
      %1160 = vmatmul.mubr.bf16.gmra.mrb[0].mxu0 %v1032
      %v1161 = vpop.f32.mrb[0].mxu0
      %v1162 = vadd.f32 0.0, %v1161
      %v1163 = vpop.f32.mrb[0].mxu0
      %v1164 = vpop.f32.mrb[0].mxu0
      %v1165 = vadd.f32 0.0, %v1164
      %v1166 = vpop.f32.mrb[0].mxu0
      %1167 = vmatprep.mubr.bf16.mxu0 0
      %1168 = vmatmul.mubr.bf16.gmra.mrb[0].mxu0 %v1035
      %v1169 = vpop.f32.mrb[0].mxu0
      %v1170 = vadd.f32 0.0, %v1169
      %v1171 = vpop.f32.mrb[0].mxu0
      %v1172 = vpop.f32.mrb[0].mxu0
      %v1173 = vadd.f32 0.0, %v1172
      %v1174 = vpop.f32.mrb[0].mxu0
      %1175 = vmatprep.mubr.bf16.mxu0 0
      %1176 = vmatmul.mubr.bf16.gmra.mrb[0].mxu0 %v1038
      %v1177 = vpop.f32.mrb[0].mxu0
      %v1178 = vadd.f32 0.0, %v1177
      %v1179 = vpop.f32.mrb[0].mxu0
      %v1180 = vpop.f32.mrb[0].mxu0
      %v1181 = vadd.f32 0.0, %v1180
      %v1182 = vpop.f32.mrb[0].mxu0
      %1183 = vmatprep.mubr.bf16.mxu0 0
      %1184 = vmatmul.mubr.bf16.gmra.mrb[0].mxu0 %v1041
      %v1185 = vpop.f32.mrb[0].mxu0
      %v1186 = vadd.f32 0.0, %v1185
      %v1187 = vpop.f32.mrb[0].mxu0
      %v1188 = vpop.f32.mrb[0].mxu0
      %v1189 = vadd.f32 0.0, %v1188
      %v1190 = vpop.f32.mrb[0].mxu0
      %1191 = vmatprep.mubr.bf16.mxu0 0
      %1192 = vmatmul.mubr.bf16.gmra.mrb[0].mxu0 %v1044
      %v1193 = vpop.f32.mrb[0].mxu0
      %v1194 = vadd.f32 0.0, %v1193
      %v1195 = vpop.f32.mrb[0].mxu0
      %v1196 = vpop.f32.mrb[0].mxu0
      %v1197 = vadd.f32 0.0, %v1196
      %v1198 = vpop.f32.mrb[0].mxu0
      %1199 = vmatprep.mubr.bf16.mxu0 0
      %1200 = vmatmul.mubr.bf16.gmra.mrb[0].mxu0 %v1047
      %v1201 = vpop.f32.mrb[0].mxu0
      %v1202 = vadd.f32 0.0, %v1201
      %v1203 = vpop.f32.mrb[0].mxu0
      %v1204 = vpop.f32.mrb[0].mxu0
      %v1205 = vadd.f32 0.0, %v1204
      %v1206 = vpop.f32.mrb[0].mxu0
      %1207 = vmatprep.mubr.bf16.mxu0 0
      %1208 = vmatmul.mubr.bf16.gmra.mrb[0].mxu0 %v1050
      %v1209 = vpop.f32.mrb[0].mxu0
      %v1210 = vadd.f32 0.0, %v1209
      %v1211 = vpop.f32.mrb[0].mxu0
      %v1212 = vpop.f32.mrb[0].mxu0
      %v1213 = vadd.f32 0.0, %v1212
      %v1214 = vpop.f32.mrb[0].mxu0
      %1215 = vdwg.mxu0
      %v1216 = vadd.f32 %v758, %v1090
      %v1217 = vadd.f32 %v761, %v1093
      %v1218 = vadd.f32 %v766, %v1098
      %v1219 = vadd.f32 %v769, %v1101
      %v1220 = vadd.f32 %v774, %v1106
      %v1221 = vadd.f32 %v777, %v1109
      %v1222 = vadd.f32 %v782, %v1114
      %v1223 = vadd.f32 %v785, %v1117
      %v1224 = vadd.f32 %v790, %v1122
      %v1225 = vadd.f32 %v793, %v1125
      %v1226 = vadd.f32 %v798, %v1130
      %v1227 = vadd.f32 %v801, %v1133
      %v1228 = vadd.f32 %v806, %v1138
      %v1229 = vadd.f32 %v809, %v1141
      %v1230 = vadd.f32 %v814, %v1146
      %v1231 = vadd.f32 %v817, %v1149
      %v1232 = vadd.f32 %v822, %v1154
      %v1233 = vadd.f32 %v825, %v1157
      %v1234 = vadd.f32 %v830, %v1162
      %v1235 = vadd.f32 %v833, %v1165
      %v1236 = vadd.f32 %v838, %v1170
      %v1237 = vadd.f32 %v841, %v1173
      %v1238 = vadd.f32 %v846, %v1178
      %v1239 = vadd.f32 %v849, %v1181
      %v1240 = vadd.f32 %v854, %v1186
      %v1241 = vadd.f32 %v857, %v1189
      %v1242 = vadd.f32 %v862, %v1194
      %v1243 = vadd.f32 %v865, %v1197
      %v1244 = vadd.f32 %v870, %v1202
      %v1245 = vadd.f32 %v873, %v1205
      %v1246 = vadd.f32 %v878, %v1210
      %v1247 = vadd.f32 %v881, %v1213
      %v1248 = vld [vmem:[%s3] sm:$0x1]
      %v1250 = vlaneseq
      %v1251 = vshrl.u32 %v1250, 7
      %v1252 = vsub.s32 0, %v1251
      %v1253 = vrot.slane %v1248, %v1252
      %v1255 = vadd.f32 %v1216, %v1253
      %v1256 = vadd.f32 %v1217, %v1253
      %v1257 = vadd.f32 %v1218, %v1253
      %v1258 = vadd.f32 %v1219, %v1253
      %v1259 = vadd.f32 %v1220, %v1253
      %v1260 = vadd.f32 %v1221, %v1253
      %v1261 = vadd.f32 %v1222, %v1253
      %v1262 = vadd.f32 %v1223, %v1253
      %v1263 = vadd.f32 %v1224, %v1253
      %v1264 = vadd.f32 %v1225, %v1253
      %v1265 = vadd.f32 %v1226, %v1253
      %v1266 = vadd.f32 %v1227, %v1253
      %v1267 = vadd.f32 %v1228, %v1253
      %v1268 = vadd.f32 %v1229, %v1253
      %v1269 = vadd.f32 %v1230, %v1253
      %v1270 = vadd.f32 %v1231, %v1253
      %v1271 = vadd.f32 %v1232, %v1253
      %v1272 = vadd.f32 %v1233, %v1253
      %v1273 = vadd.f32 %v1234, %v1253
      %v1274 = vadd.f32 %v1235, %v1253
      %v1275 = vadd.f32 %v1236, %v1253
      %v1276 = vadd.f32 %v1237, %v1253
      %v1277 = vadd.f32 %v1238, %v1253
      %v1278 = vadd.f32 %v1239, %v1253
      %v1279 = vadd.f32 %v1240, %v1253
      %v1280 = vadd.f32 %v1241, %v1253
      %v1281 = vadd.f32 %v1242, %v1253
      %v1282 = vadd.f32 %v1243, %v1253
      %v1283 = vadd.f32 %v1244, %v1253
      %v1284 = vadd.f32 %v1245, %v1253
      %v1285 = vadd.f32 %v1246, %v1253
      %v1286 = vadd.f32 %v1247, %v1253
      %v1287 = vmax.f32 %v1255, 0.0
      %v1288 = vmax.f32 %v1256, 0.0
      %v1289 = vmax.f32 %v1257, 0.0
      %v1290 = vmax.f32 %v1258, 0.0
      %v1291 = vmax.f32 %v1259, 0.0
      %v1292 = vmax.f32 %v1260, 0.0
      %v1293 = vmax.f32 %v1261, 0.0
      %v1294 = vmax.f32 %v1262, 0.0
      %v1295 = vmax.f32 %v1263, 0.0
      %v1296 = vmax.f32 %v1264, 0.0
      %v1297 = vmax.f32 %v1265, 0.0
      %v1298 = vmax.f32 %v1266, 0.0
      %v1299 = vmax.f32 %v1267, 0.0
      %v1300 = vmax.f32 %v1268, 0.0
      %v1301 = vmax.f32 %v1269, 0.0
      %v1302 = vmax.f32 %v1270, 0.0
      %v1303 = vmax.f32 %v1271, 0.0
      %v1304 = vmax.f32 %v1272, 0.0
      %v1305 = vmax.f32 %v1273, 0.0
      %v1306 = vmax.f32 %v1274, 0.0
      %v1307 = vmax.f32 %v1275, 0.0
      %v1308 = vmax.f32 %v1276, 0.0
      %v1309 = vmax.f32 %v1277, 0.0
      %v1310 = vmax.f32 %v1278, 0.0
      %v1311 = vmax.f32 %v1279, 0.0
      %v1312 = vmax.f32 %v1280, 0.0
      %v1313 = vmax.f32 %v1281, 0.0
      %v1314 = vmax.f32 %v1282, 0.0
      %v1315 = vmax.f32 %v1283, 0.0
      %v1316 = vmax.f32 %v1284, 0.0
      %v1317 = vmax.f32 %v1285, 0.0
      %v1318 = vmax.f32 %v1286, 0.0
      %v1319 = vpack.c.bf16 %v1288, %v1287
      %v1320 = vpack.c.bf16 %v1290, %v1289
      %v1321 = vpack.c.bf16 %v1292, %v1291
      %v1322 = vpack.c.bf16 %v1294, %v1293
      %v1323 = vpack.c.bf16 %v1296, %v1295
      %v1324 = vpack.c.bf16 %v1298, %v1297
      %v1325 = vpack.c.bf16 %v1300, %v1299
      %v1326 = vpack.c.bf16 %v1302, %v1301
      %v1327 = vpack.c.bf16 %v1304, %v1303
      %v1328 = vpack.c.bf16 %v1306, %v1305
      %v1329 = vpack.c.bf16 %v1308, %v1307
      %v1330 = vpack.c.bf16 %v1310, %v1309
      %v1331 = vpack.c.bf16 %v1312, %v1311
      %v1332 = vpack.c.bf16 %v1314, %v1313
      %v1333 = vpack.c.bf16 %v1316, %v1315
      %v1334 = vpack.c.bf16 %v1318, %v1317
      %v1351 = vunpack.c.l.b16 %v1319
      %v1352 = vunpack.c.h.b16 %v1319
      %v1353 = vunpack.c.l.b16 %v1320
      %v1354 = vunpack.c.h.b16 %v1320
      %v1355 = vunpack.c.l.b16 %v1321
      %v1356 = vunpack.c.h.b16 %v1321
      %v1357 = vunpack.c.l.b16 %v1322
      %v1358 = vunpack.c.h.b16 %v1322
      %v1359 = vunpack.c.l.b16 %v1323
      %v1360 = vunpack.c.h.b16 %v1323
      %v1361 = vunpack.c.l.b16 %v1324
      %v1362 = vunpack.c.h.b16 %v1324
      %v1363 = vunpack.c.l.b16 %v1325
      %v1364 = vunpack.c.h.b16 %v1325
      %v1365 = vunpack.c.l.b16 %v1326
      %v1366 = vunpack.c.h.b16 %v1326
      %v1367 = vunpack.c.l.b16 %v1327
      %v1368 = vunpack.c.h.b16 %v1327
      %v1369 = vunpack.c.l.b16 %v1328
      %v1370 = vunpack.c.h.b16 %v1328
      %v1371 = vunpack.c.l.b16 %v1329
      %v1372 = vunpack.c.h.b16 %v1329
      %v1373 = vunpack.c.l.b16 %v1330
      %v1374 = vunpack.c.h.b16 %v1330
      %v1375 = vunpack.c.l.b16 %v1331
      %v1376 = vunpack.c.h.b16 %v1331
      %v1377 = vunpack.c.l.b16 %v1332
      %v1378 = vunpack.c.h.b16 %v1332
      %v1379 = vunpack.c.l.b16 %v1333
      %v1380 = vunpack.c.h.b16 %v1333
      %v1381 = vunpack.c.l.b16 %v1334
      %v1382 = vunpack.c.h.b16 %v1334
      %v1383 = vpack.c.b16 %v1351, %v1351
      %v1384 = vpack.c.b16 %v1352, %v1352
      %v1385 = vpack.c.b16 %v1353, %v1353
      %v1386 = vpack.c.b16 %v1354, %v1354
      %v1387 = vpack.c.b16 %v1355, %v1355
      %v1388 = vpack.c.b16 %v1356, %v1356
      %v1389 = vpack.c.b16 %v1357, %v1357
      %v1390 = vpack.c.b16 %v1358, %v1358
      %v1391 = vpack.c.b16 %v1359, %v1359
      %v1392 = vpack.c.b16 %v1360, %v1360
      %v1393 = vpack.c.b16 %v1361, %v1361
      %v1394 = vpack.c.b16 %v1362, %v1362
      %v1395 = vpack.c.b16 %v1363, %v1363
      %v1396 = vpack.c.b16 %v1364, %v1364
      %v1397 = vpack.c.b16 %v1365, %v1365
      %v1398 = vpack.c.b16 %v1366, %v1366
      %v1399 = vpack.c.b16 %v1367, %v1367
      %v1400 = vpack.c.b16 %v1368, %v1368
      %v1401 = vpack.c.b16 %v1369, %v1369
      %v1402 = vpack.c.b16 %v1370, %v1370
      %v1403 = vpack.c.b16 %v1371, %v1371
      %v1404 = vpack.c.b16 %v1372, %v1372
      %v1405 = vpack.c.b16 %v1373, %v1373
      %v1406 = vpack.c.b16 %v1374, %v1374
      %v1407 = vpack.c.b16 %v1375, %v1375
      %v1408 = vpack.c.b16 %v1376, %v1376
      %v1409 = vpack.c.b16 %v1377, %v1377
      %v1410 = vpack.c.b16 %v1378, %v1378
      %v1411 = vpack.c.b16 %v1379, %v1379
      %v1412 = vpack.c.b16 %v1380, %v1380
      %v1413 = vpack.c.b16 %v1381, %v1381
      %v1414 = vpack.c.b16 %v1382, %v1382
      %vm1447 = vcmask 60416
      %1448 = vst.msk [vmem:[%s217] sm:$0xf] %vm1447, %v1383
      %1449 = vst.msk [vmem:[%s217 + $0x4] sm:$0xf] %vm1447, %v1384
      %1450 = vst.msk [vmem:[%s217 + $0x8] sm:$0xf] %vm1447, %v1385
      %1451 = vst.msk [vmem:[%s217 + $0xc] sm:$0xf] %vm1447, %v1386
      %1452 = vst.msk [vmem:[%s217 + $0x10] sm:$0xf] %vm1447, %v1387
      %1453 = vst.msk [vmem:[%s217 + $0x14] sm:$0xf] %vm1447, %v1388
      %1454 = vst.msk [vmem:[%s217 + $0x18] sm:$0xf] %vm1447, %v1389
      %1455 = vst.msk [vmem:[%s217 + $0x1c] sm:$0xf] %vm1447, %v1390
      %1456 = vst.msk [vmem:[%s217 + $0x20] sm:$0xf] %vm1447, %v1391
      %1457 = vst.msk [vmem:[%s217 + $0x24] sm:$0xf] %vm1447, %v1392
      %1458 = vst.msk [vmem:[%s217 + $0x28] sm:$0xf] %vm1447, %v1393
      %1459 = vst.msk [vmem:[%s217 + $0x2c] sm:$0xf] %vm1447, %v1394
      %1460 = vst.msk [vmem:[%s217 + $0x30] sm:$0xf] %vm1447, %v1395
      %1461 = vst.msk [vmem:[%s217 + $0x34] sm:$0xf] %vm1447, %v1396
      %1462 = vst.msk [vmem:[%s217 + $0x38] sm:$0xf] %vm1447, %v1397
      %1463 = vst.msk [vmem:[%s217 + $0x3c] sm:$0xf] %vm1447, %v1398
      %1464 = vst.msk [vmem:[%s217 + $0x40] sm:$0xf] %vm1447, %v1399
      %1465 = vst.msk [vmem:[%s217 + $0x44] sm:$0xf] %vm1447, %v1400
      %1466 = vst.msk [vmem:[%s217 + $0x48] sm:$0xf] %vm1447, %v1401
      %1467 = vst.msk [vmem:[%s217 + $0x4c] sm:$0xf] %vm1447, %v1402
      %1468 = vst.msk [vmem:[%s217 + $0x50] sm:$0xf] %vm1447, %v1403
      %1469 = vst.msk [vmem:[%s217 + $0x54] sm:$0xf] %vm1447, %v1404
      %1470 = vst.msk [vmem:[%s217 + $0x58] sm:$0xf] %vm1447, %v1405
      %1471 = vst.msk [vmem:[%s217 + $0x5c] sm:$0xf] %vm1447, %v1406
      %1472 = vst.msk [vmem:[%s217 + $0x60] sm:$0xf] %vm1447, %v1407
      %1473 = vst.msk [vmem:[%s217 + $0x64] sm:$0xf] %vm1447, %v1408
      %1474 = vst.msk [vmem:[%s217 + $0x68] sm:$0xf] %vm1447, %v1409
      %1475 = vst.msk [vmem:[%s217 + $0x6c] sm:$0xf] %vm1447, %v1410
      %1476 = vst.msk [vmem:[%s217 + $0x70] sm:$0xf] %vm1447, %v1411
      %1477 = vst.msk [vmem:[%s217 + $0x74] sm:$0xf] %vm1447, %v1412
      %1478 = vst.msk [vmem:[%s217 + $0x78] sm:$0xf] %vm1447, %v1413
      %1479 = vst.msk [vmem:[%s217 + $0x7c] sm:$0xf] %vm1447, %v1414
      %p1480 = scmp.lt.s32.totalorder %s15, 1
      %s1481 = scalar_select %p1480, %s15, 1
      %s1482 = smul.addr %s1481, 32
      %s1483 = smul.addr %s1482, 4
      %s1484 = scalar_lea.vmem %s4, %s1483
      // Predicated region
      $region37: #{_lambda_.11} parent=35 // pred_check
        %p1485 = pneg %p127
      $region38: #{_lambda_.11} parent=35 // pred_check_branch
        %1487 = sbr.rel (%p1485) target = $region40
      $region39: #{_lambda_.11} parent=35 // pred_region
        _
      $region40: #{_lambda_.11} parent=35 // pred_fallthru
        _
    $region36: #{_lambda_.11} parent=5 // pred_fallthru
      _
    %p1488 = scmp.le.s32.totalorder 2, %s10
    // Predicated region
    $region41: #{_lambda_.11} parent=5 // pred_check
      %p1489 = pneg %p1488
    $region42: #{_lambda_.11} parent=5 // pred_check_branch
      %1491 = sbr.rel (%p1489) target = $region44
    $region43: #{_lambda_.11} parent=5 // pred_region
      %s1492 = ssub.s32 %s10, 2
      // Predicated region
      $region45: #{_lambda_.11} parent=43 // pred_check
        %p1493 = pneg %p133
      $region46: #{_lambda_.11} parent=43 // pred_check_branch
        %1495 = sbr.rel (%p1493) target = $region48
      $region47: #{_lambda_.11} parent=43 // pred_region
        %p1496 = scmp.lt.s32.totalorder %s16, 1
        %s1497 = scalar_select %p1496, %s16, 1
        %s1498 = smul.addr %s1497, 32
        %s1499 = smul.addr %s1498, 4
        %s1500 = scalar_lea.vmem %s4, %s1499
      $region48: #{_lambda_.11} parent=43 // pred_fallthru
        _
    $region44: #{_lambda_.11} parent=5 // pred_fallthru
      _
  $region6: #{_lambda_.11} parent=0 // loop_footer
    %s14 = sadd.s32 1, %s10
  $region7: #{_lambda_.11} parent=0 // loop_footer_branch
    %9 = sbr.rel target = $region3
  $region8: #{_lambda_.11} parent=0 // loop_exit
    _

// kernel: _lambda_.17
$region0: #{_lambda_.17}
  #allocation0 [shape = 'u32[]', space=smem, size = 0x4, offset = 0x4, fixed_abs, tag = 'smem constant byte address 0x4 - core index']
  #allocation1 [shape = 'u32[144,128]{1,0:T(1,128)}', space=vmem, size = 0x12000, scoped, tag = 'internal scratch']
  %s0 = inlined_call_operand.vmem [shape: bf16[2,384,18], index: 0, kind: input, shape index: {}]
  %s1 = inlined_call_operand.vmem [shape: bf16[3,18,8], index: 1, kind: input, shape index: {}]
  %s2 = inlined_call_operand.vmem [shape: f32[1,8], index: 2, kind: input, shape index: {}]
  %s3 = inlined_call_operand.vmem [shape: bf16[2,256,8], index: 3, kind: output, shape index: {}]
  %s4 = sld [smem:[#allocation0]]
  $region45: #{_lambda_.17} parent=0
    _
  %s6 = ssub.s32 1, %s4
  %s7 = scalar_select 0, %s6, %s4
  loop: start=0, step=1, limit=4
  $region2: #{_lambda_.17} parent=0 // loop_pre_header
    _
  $region3: #{_lambda_.17} parent=0 // loop_header
    %s9 = sphi 0, %s13
    %p10 = scmp.ge.s32.totalorder %s9, 4
    %s19 = sphi 0, %s21
    %s22 = sphi 0, %s19
    %s23 = sphi 0, %s22
    %s39 = sphi 0, %s23
    %s43 = sphi 0, %s43
    %s45 = sphi 0, %s43
    %s46 = sphi 0, %s45
    %s60 = sphi 0, %s46
    %s64 = sphi 0, %s64
    %s66 = sphi 0, %s64
    %s67 = sphi 0, %s66
    %s81 = sphi 0, %s67
    %s87 = sphi 0, %s89
    %s90 = sphi 0, %s87
    %s91 = sphi 0, %s90
    %s107 = sphi 0, %s91
  $region4: #{_lambda_.17} parent=0 // loop_header_branch
    %12 = sbr.rel (%p10) target = $region8
  $region5: #{_lambda_.17} parent=0 // loop_body
    %s14 = ssub.s32 %s9, 1
    %s15 = ssub.s32 %s9, 2
    %s16 = sadd.s32 %s9, 1
    %s17 = ssub.s32 %s9, %s16
    %p18 = scmp.eq.s32.totalorder %s17, 0
    %s20 = sadd.s32 %s19, 1
    %s21 = scalar_select %p18, %s19, %s20
    %p24 = pneg %p18
    %p25 = scmp.eq.s32.totalorder %s9, 1
    %p26 = por %p24, %p25
    %p27 = scmp.ne.s32.totalorder %s19, %s22
    %p28 = scmp.eq.s32.totalorder %s9, 0
    %p29 = por %p27, %p28
    %p30 = scmp.ne.s32.totalorder %s19, %s22
    %p31 = scmp.eq.s32.totalorder %s14, 1
    %p32 = por %p30, %p31
    %p33 = scmp.ne.s32.totalorder %s22, %s23
    %p34 = scmp.eq.s32.totalorder %s14, 0
    %p35 = por %p33, %p34
    %p36 = scmp.ne.s32.totalorder %s22, %s23
    %p37 = scmp.eq.s32.totalorder %s15, 1
    %p38 = por %p36, %p37
    %p40 = scmp.ne.s32.totalorder %s23, %s39
    %p41 = scmp.eq.s32.totalorder %s15, 0
    %p42 = por %p40, %p41
    %s44 = sadd.s32 %s43, 1
    %p47 = scmp.eq.s32.totalorder %s9, 1
    %p48 = scmp.ne.s32.totalorder %s43, %s45
    %p49 = scmp.eq.s32.totalorder %s9, 0
    %p50 = por %p48, %p49
    %p51 = scmp.ne.s32.totalorder %s43, %s45
    %p52 = scmp.eq.s32.totalorder %s14, 1
    %p53 = por %p51, %p52
    %p54 = scmp.ne.s32.totalorder %s45, %s46
    %p55 = scmp.eq.s32.totalorder %s14, 0
    %p56 = por %p54, %p55
    %p57 = scmp.ne.s32.totalorder %s45, %s46
    %p58 = scmp.eq.s32.totalorder %s15, 1
    %p59 = por %p57, %p58
    %p61 = scmp.ne.s32.totalorder %s46, %s60
    %p62 = scmp.eq.s32.totalorder %s15, 0
    %p63 = por %p61, %p62
    %s65 = sadd.s32 %s64, 1
    %p68 = scmp.eq.s32.totalorder %s9, 1
    %p69 = scmp.ne.s32.totalorder %s64, %s66
    %p70 = scmp.eq.s32.totalorder %s9, 0
    %p71 = por %p69, %p70
    %p72 = scmp.ne.s32.totalorder %s64, %s66
    %p73 = scmp.eq.s32.totalorder %s14, 1
    %p74 = por %p72, %p73
    %p75 = scmp.ne.s32.totalorder %s66, %s67
    %p76 = scmp.eq.s32.totalorder %s14, 0
    %p77 = por %p75, %p76
    %p78 = scmp.ne.s32.totalorder %s66, %s67
    %p79 = scmp.eq.s32.totalorder %s15, 1
    %p80 = por %p78, %p79
    %p82 = scmp.ne.s32.totalorder %s67, %s81
    %p83 = scmp.eq.s32.totalorder %s15, 0
    %p84 = por %p82, %p83
    %s85 = ssub.s32 %s9, %s16
    %p86 = scmp.eq.s32.totalorder %s85, 0
    %s88 = sadd.s32 %s87, 1
    %s89 = scalar_select %p86, %s87, %s88
    %p92 = pneg %p86
    %p93 = scmp.eq.s32.totalorder %s9, 1
    %p94 = por %p92, %p93
    %p95 = scmp.ne.s32.totalorder %s87, %s90
    %p96 = scmp.eq.s32.totalorder %s9, 0
    %p97 = por %p95, %p96
    %p98 = scmp.ne.s32.totalorder %s87, %s90
    %p99 = scmp.eq.s32.totalorder %s14, 1
    %p100 = por %p98, %p99
    %p101 = scmp.ne.s32.totalorder %s90, %s91
    %p102 = scmp.eq.s32.totalorder %s14, 0
    %p103 = por %p101, %p102
    %p104 = scmp.ne.s32.totalorder %s90, %s91
    %p105 = scmp.eq.s32.totalorder %s15, 1
    %p106 = por %p104, %p105
    %p108 = scmp.ne.s32.totalorder %s91, %s107
    %p109 = scmp.eq.s32.totalorder %s15, 0
    %p110 = por %p108, %p109
    %p111 = scmp.le.s32.totalorder 1, %s9
    %p112 = scmp.lt.s32.totalorder %s9, 3
    %p113 = pnand %p111, %p112
    %p114 = pneg %p113
    // Predicated region
    $region9: #{_lambda_.17} parent=5 // pred_check
      _
    $region10: #{_lambda_.17} parent=5 // pred_check_branch
      %116 = sbr.rel (%p113) target = $region12
    $region11: #{_lambda_.17} parent=5 // pred_region
      %s117 = ssub.s32 %s9, 1
      // Predicated region
      $region13: #{_lambda_.17} parent=11 // pred_check
        %p118 = pneg %p56
      $region14: #{_lambda_.17} parent=11 // pred_check_branch
        %120 = sbr.rel (%p118) target = $region16
      $region15: #{_lambda_.17} parent=11 // pred_region
        _
      $region16: #{_lambda_.17} parent=11 // pred_fallthru
        _
      // Predicated region
      $region17: #{_lambda_.17} parent=11 // pred_check
        %p121 = pneg %p77
      $region18: #{_lambda_.17} parent=11 // pred_check_branch
        %123 = sbr.rel (%p121) target = $region20
      $region19: #{_lambda_.17} parent=11 // pred_region
        _
      $region20: #{_lambda_.17} parent=11 // pred_fallthru
        _
    $region12: #{_lambda_.17} parent=5 // pred_fallthru
      _
    %p124 = scmp.lt.s32.totalorder %s9, 2
    // Predicated region
    $region21: #{_lambda_.17} parent=5 // pred_check
      %p125 = pneg %p124
    $region22: #{_lambda_.17} parent=5 // pred_check_branch
      %127 = sbr.rel (%p125) target = $region24
    $region23: #{_lambda_.17} parent=5 // pred_region
      // Predicated region
      $region25: #{_lambda_.17} parent=23 // pred_check
        %p128 = pneg %p29
      $region26: #{_lambda_.17} parent=23 // pred_check_branch
        %130 = sbr.rel (%p128) target = $region28
      $region27: #{_lambda_.17} parent=23 // pred_region
        %p131 = scmp.lt.s32.totalorder %s9, 1
        %s132 = scalar_select %p131, %s9, 1
        %s133 = smul.addr %s132, 48
        %s134 = smul.addr %s133, 4
        %s135 = scalar_lea.vmem %s0, %s134
      $region28: #{_lambda_.17} parent=23 // pred_fallthru
        _
    $region24: #{_lambda_.17} parent=5 // pred_fallthru
      _
    %p136 = scmp.le.s32.totalorder 1, %s9
    %p137 = scmp.lt.s32.totalorder %s9, 3
    %p138 = pnand %p136, %p137
    %p139 = pneg %p138
    // Predicated region
    $region29: #{_lambda_.17} parent=5 // pred_check
      _
    $region30: #{_lambda_.17} parent=5 // pred_check_branch
      %141 = sbr.rel (%p138) target = $region32
    $region31: #{_lambda_.17} parent=5 // pred_region
      %s142 = ssub.s32 %s9, 1
      %p143 = scmp.lt.s32.totalorder %s14, 1
      %s144 = scalar_select %p143, %s14, 1
      %s145 = smul.addr %s144, 48
      %s146 = smul.addr %s145, 4
      %s147 = scalar_lea.vmem %s0, %s146
      %p148 = pneg %p35
      %p149 = pneg %p32
      %p150 = pneg %p56
      %p151 = pneg %p53
      %p152 = pneg %p77
      %p153 = pneg %p74
      %p154 = pneg %p103
      %p155 = pneg %p100
      %p156 = scmp.lt.s32.totalorder %s14, 1
      %s157 = scalar_select %p156, %s14, 1
      %s158 = smul.addr %s157, 32
      %s159 = smul.addr %s158, 4
      %s160 = scalar_lea.vmem %s3, %s159
      %p161 = scmp.lt.s32.totalorder %s14, 1
      %s162 = scalar_select %p161, %s14, 1
      %s163 = smul.addr %s162, 48
      %s164 = smul.addr %s163, 4
      %s165 = scalar_lea.vmem %s0, %s164
      %p166 = scmp.lt.s32.totalorder %s14, 1
      %s167 = scalar_select %p166, %s14, 1
      %s168 = smul.addr %s167, 32
      %s169 = smul.addr %s168, 4
      %s170 = scalar_lea.vmem %s3, %s169
      %v172 = vld [vmem:[%s165] sm:$0xf]
      %v173 = vld [vmem:[%s165 + $0x4] sm:$0xf]
      %v174 = vld [vmem:[%s165 + $0x8] sm:$0xf]
      %v175 = vld [vmem:[%s165 + $0xc] sm:$0xf]
      %v176 = vld [vmem:[%s165 + $0x10] sm:$0xf]
      %v177 = vld [vmem:[%s165 + $0x14] sm:$0xf]
      %v178 = vld [vmem:[%s165 + $0x18] sm:$0xf]
      %v179 = vld [vmem:[%s165 + $0x1c] sm:$0xf]
      %v180 = vld [vmem:[%s165 + $0x20] sm:$0xf]
      %v181 = vld [vmem:[%s165 + $0x24] sm:$0xf]
      %v182 = vld [vmem:[%s165 + $0x28] sm:$0xf]
      %v183 = vld [vmem:[%s165 + $0x2c] sm:$0xf]
      %v184 = vld [vmem:[%s165 + $0x30] sm:$0xf]
      %v185 = vld [vmem:[%s165 + $0x34] sm:$0xf]
      %v186 = vld [vmem:[%s165 + $0x38] sm:$0xf]
      %v187 = vld [vmem:[%s165 + $0x3c] sm:$0xf]
      %v188 = vld [vmem:[%s165 + $0x40] sm:$0xf]
      %v189 = vld [vmem:[%s165 + $0x44] sm:$0xf]
      %v190 = vld [vmem:[%s165 + $0x48] sm:$0xf]
      %v191 = vld [vmem:[%s165 + $0x4c] sm:$0xf]
      %v192 = vld [vmem:[%s165 + $0x50] sm:$0xf]
      %v193 = vld [vmem:[%s165 + $0x54] sm:$0xf]
      %v194 = vld [vmem:[%s165 + $0x58] sm:$0xf]
      %v195 = vld [vmem:[%s165 + $0x5c] sm:$0xf]
      %v196 = vld [vmem:[%s165 + $0x60] sm:$0xf]
      %v197 = vld [vmem:[%s165 + $0x64] sm:$0xf]
      %v198 = vld [vmem:[%s165 + $0x68] sm:$0xf]
      %v199 = vld [vmem:[%s165 + $0x6c] sm:$0xf]
      %v200 = vld [vmem:[%s165 + $0x70] sm:$0xf]
      %v201 = vld [vmem:[%s165 + $0x74] sm:$0xf]
      %v202 = vld [vmem:[%s165 + $0x78] sm:$0xf]
      %v203 = vld [vmem:[%s165 + $0x7c] sm:$0xf]
      %v204 = vld [vmem:[%s1] sm:$0xf]
      %v205 = vld [vmem:[%s1 + $0x4] sm:$0xf]
      %v206 = vld [vmem:[%s1 + $0x8] sm:$0x1]
      %v207 = vld [vmem:[%s165 + $0x80] sm:$0xf]
      %v208 = vld [vmem:[%s165 + $0x84] sm:$0xf]
      %v209 = vld [vmem:[%s165 + $0x88] sm:$0xf]
      %v210 = vld [vmem:[%s165 + $0x8c] sm:$0xf]
      %v211 = vld [vmem:[%s165 + $0x90] sm:$0xf]
      %v212 = vld [vmem:[%s165 + $0x94] sm:$0xf]
      %v213 = vld [vmem:[%s165 + $0x98] sm:$0xf]
      %v214 = vld [vmem:[%s165 + $0x9c] sm:$0xf]
      %s215 = scalar_lea.vmem %s1, 12
      %v216 = vld [vmem:[%s215] sm:$0xf]
      %v217 = vld [vmem:[%s215 + $0x4] sm:$0xf]
      %v218 = vld [vmem:[%s215 + $0x8] sm:$0x1]
      %v251 = vunpack.c.l.b16 %v180
      %v252 = vunpack.c.l.b16 %v181
      %v253 = vunpack.c.l.b16 %v182
      %v254 = vunpack.c.l.b16 %v183
      %v255 = vunpack.c.l.b16 %v184
      %v256 = vunpack.c.l.b16 %v185
      %v257 = vunpack.c.l.b16 %v186
      %v258 = vunpack.c.l.b16 %v187
      %v259 = vunpack.c.l.b16 %v188
      %v260 = vunpack.c.l.b16 %v189
      %v261 = vunpack.c.l.b16 %v190
      %v262 = vunpack.c.l.b16 %v191
      %v263 = vunpack.c.l.b16 %v192
      %v264 = vunpack.c.l.b16 %v193
      %v265 = vunpack.c.l.b16 %v194
      %v266 = vunpack.c.l.b16 %v195
      %v267 = vunpack.c.l.b16 %v196
      %v268 = vunpack.c.l.b16 %v197
      %v269 = vunpack.c.l.b16 %v198
      %v270 = vunpack.c.l.b16 %v199
      %v271 = vunpack.c.l.b16 %v200
      %v272 = vunpack.c.l.b16 %v201
      %v273 = vunpack.c.l.b16 %v202
      %v274 = vunpack.c.l.b16 %v203
      %v275 = vunpack.c.l.b16 %v207
      %v276 = vunpack.c.l.b16 %v208
      %v277 = vunpack.c.l.b16 %v209
      %v278 = vunpack.c.l.b16 %v210
      %v279 = vunpack.c.l.b16 %v211
      %v280 = vunpack.c.l.b16 %v212
      %v281 = vunpack.c.l.b16 %v213
      %v282 = vunpack.c.l.b16 %v214
      %v283 = vpack.c.b16 %v252, %v251
      %v284 = vpack.c.b16 %v254, %v253
      %v285 = vpack.c.b16 %v256, %v255
      %v286 = vpack.c.b16 %v258, %v257
      %v287 = vpack.c.b16 %v260, %v259
      %v288 = vpack.c.b16 %v262, %v261
      %v289 = vpack.c.b16 %v264, %v263
      %v290 = vpack.c.b16 %v266, %v265
      %v291 = vpack.c.b16 %v268, %v267
      %v292 = vpack.c.b16 %v270, %v269
      %v293 = vpack.c.b16 %v272, %v271
      %v294 = vpack.c.b16 %v274, %v273
      %v295 = vpack.c.b16 %v276, %v275
      %v296 = vpack.c.b16 %v278, %v277
      %v297 = vpack.c.b16 %v280, %v279
      %v298 = vpack.c.b16 %v282, %v281
      %v302 = vunpack.c.l.b16 %v216
      %v303 = vunpack.c.l.b16 %v217
      %v304 = vunpack.c.l.b16 %v218
      %v305 = vpack.c.b16 %v303, %v302
      %v306 = vpack.c.b16 %v304, %v304
      %vm308 = vcmask 146432
      %v310 = vsel %vm308, %v283, 0
      %v313 = vsel %vm308, %v284, 0
      %v316 = vsel %vm308, %v285, 0
      %v319 = vsel %vm308, %v286, 0
      %v322 = vsel %vm308, %v287, 0
      %v325 = vsel %vm308, %v288, 0
      %v328 = vsel %vm308, %v289, 0
      %v331 = vsel %vm308, %v290, 0
      %v334 = vsel %vm308, %v291, 0
      %v337 = vsel %vm308, %v292, 0
      %v340 = vsel %vm308, %v293, 0
      %v343 = vsel %vm308, %v294, 0
      %v346 = vsel %vm308, %v295, 0
      %v349 = vsel %vm308, %v296, 0
      %v352 = vsel %vm308, %v297, 0
      %v355 = vsel %vm308, %v298, 0
      %vm357 = vcmask 1040384
      %v359 = vsel %vm357, %v306, 0
      %361 = vmatprep.subr.bf16.mxu0 0
      %362 = vmatpush1.bf16.msra.mxu0 %v305
      %363 = vmatprep.subr.bf16.mxu0 0
      %364 = vmatpush1.bf16.msra.mxu0 %v359
      %365 = vmatprep.subr.bf16.mxu0 0
      %366 = vmatpush1.bf16.msra.mxu0 0
      %367 = vmatprep.subr.bf16.mxu0 0
      %368 = vmatpush1.bf16.msra.mxu0 0
      %369 = vmatprep.subr.bf16.mxu0 0
      %370 = vmatpush1.bf16.msra.mxu0 0
      %371 = vmatprep.subr.bf16.mxu0 0
      %372 = vmatpush1.bf16.msra.mxu0 0
      %373 = vmatprep.subr.bf16.mxu0 0
      %374 = vmatpush1.bf16.msra.mxu0 0
      %375 = vmatprep.subr.bf16.mxu0 0
      %376 = vmatpush1.bf16.msra.mxu0 0
      %377 = vmatprep.subr.bf16.mxu0 0
      %378 = vmatpush1.bf16.msra.mxu0 0
      %379 = vmatprep.subr.bf16.mxu0 0
      %380 = vmatpush1.bf16.msra.mxu0 0
      %381 = vmatprep.subr.bf16.mxu0 0
      %382 = vmatpush1.bf16.msra.mxu0 0
      %383 = vmatprep.subr.bf16.mxu0 0
      %384 = vmatpush1.bf16.msra.mxu0 0
      %385 = vmatprep.subr.bf16.mxu0 0
      %386 = vmatpush1.bf16.msra.mxu0 0
      %387 = vmatprep.subr.bf16.mxu0 0
      %388 = vmatpush1.bf16.msra.mxu0 0
      %389 = vmatprep.subr.bf16.mxu0 0
      %390 = vmatpush1.bf16.msra.mxu0 0
      %391 = vmatprep.subr.bf16.mxu0 0
      %392 = vmatpush1.bf16.msra.mxu0 0
      %393 = vmatprep.mubr.bf16.mxu0 0
      %394 = vmatmul.mubr.bf16.gmra.mrb[0].mxu0 %v310
      %v395 = vpop.f32.mrb[0].mxu0
      %v396 = vadd.f32 0.0, %v395
      %v397 = vpop.f32.mrb[0].mxu0
      %v398 = vpop.f32.mrb[0].mxu0
      %v399 = vadd.f32 0.0, %v398
      %v400 = vpop.f32.mrb[0].mxu0
      %401 = vmatprep.mubr.bf16.mxu0 0
      %402 = vmatmul.mubr.bf16.gmra.mrb[0].mxu0 %v313
      %v403 = vpop.f32.mrb[0].mxu0
      %v404 = vadd.f32 0.0, %v403
      %v405 = vpop.f32.mrb[0].mxu0
      %v406 = vpop.f32.mrb[0].mxu0
      %v407 = vadd.f32 0.0, %v406
      %v408 = vpop.f32.mrb[0].mxu0
      %409 = vmatprep.mubr.bf16.mxu0 0
      %410 = vmatmul.mubr.bf16.gmra.mrb[0].mxu0 %v316
      %v411 = vpop.f32.mrb[0].mxu0
      %v412 = vadd.f32 0.0, %v411
      %v413 = vpop.f32.mrb[0].mxu0
      %v414 = vpop.f32.mrb[0].mxu0
      %v415 = vadd.f32 0.0, %v414
      %v416 = vpop.f32.mrb[0].mxu0
      %417 = vmatprep.mubr.bf16.mxu0 0
      %418 = vmatmul.mubr.bf16.gmra.mrb[0].mxu0 %v319
      %v419 = vpop.f32.mrb[0].mxu0
      %v420 = vadd.f32 0.0, %v419
      %v421 = vpop.f32.mrb[0].mxu0
      %v422 = vpop.f32.mrb[0].mxu0
      %v423 = vadd.f32 0.0, %v422
      %v424 = vpop.f32.mrb[0].mxu0
      %425 = vmatprep.mubr.bf16.mxu0 0
      %426 = vmatmul.mubr.bf16.gmra.mrb[0].mxu0 %v322
      %v427 = vpop.f32.mrb[0].mxu0
      %v428 = vadd.f32 0.0, %v427
      %v429 = vpop.f32.mrb[0].mxu0
      %v430 = vpop.f32.mrb[0].mxu0
      %v431 = vadd.f32 0.0, %v430
      %v432 = vpop.f32.mrb[0].mxu0
      %433 = vmatprep.mubr.bf16.mxu0 0
      %434 = vmatmul.mubr.bf16.gmra.mrb[0].mxu0 %v325
      %v435 = vpop.f32.mrb[0].mxu0
      %v436 = vadd.f32 0.0, %v435
      %v437 = vpop.f32.mrb[0].mxu0
      %v438 = vpop.f32.mrb[0].mxu0
      %v439 = vadd.f32 0.0, %v438
      %v440 = vpop.f32.mrb[0].mxu0
      %441 = vmatprep.mubr.bf16.mxu0 0
      %442 = vmatmul.mubr.bf16.gmra.mrb[0].mxu0 %v328
      %v443 = vpop.f32.mrb[0].mxu0
      %v444 = vadd.f32 0.0, %v443
      %v445 = vpop.f32.mrb[0].mxu0
      %v446 = vpop.f32.mrb[0].mxu0
      %v447 = vadd.f32 0.0, %v446
      %v448 = vpop.f32.mrb[0].mxu0
      %449 = vmatprep.mubr.bf16.mxu0 0
      %450 = vmatmul.mubr.bf16.gmra.mrb[0].mxu0 %v331
      %v451 = vpop.f32.mrb[0].mxu0
      %v452 = vadd.f32 0.0, %v451
      %v453 = vpop.f32.mrb[0].mxu0
      %v454 = vpop.f32.mrb[0].mxu0
      %v455 = vadd.f32 0.0, %v454
      %v456 = vpop.f32.mrb[0].mxu0
      %457 = vmatprep.mubr.bf16.mxu0 0
      %458 = vmatmul.mubr.bf16.gmra.mrb[0].mxu0 %v334
      %v459 = vpop.f32.mrb[0].mxu0
      %v460 = vadd.f32 0.0, %v459
      %v461 = vpop.f32.mrb[0].mxu0
      %v462 = vpop.f32.mrb[0].mxu0
      %v463 = vadd.f32 0.0, %v462
      %v464 = vpop.f32.mrb[0].mxu0
      %465 = vmatprep.mubr.bf16.mxu0 0
      %466 = vmatmul.mubr.bf16.gmra.mrb[0].mxu0 %v337
      %v467 = vpop.f32.mrb[0].mxu0
      %v468 = vadd.f32 0.0, %v467
      %v469 = vpop.f32.mrb[0].mxu0
      %v470 = vpop.f32.mrb[0].mxu0
      %v471 = vadd.f32 0.0, %v470
      %v472 = vpop.f32.mrb[0].mxu0
      %473 = vmatprep.mubr.bf16.mxu0 0
      %474 = vmatmul.mubr.bf16.gmra.mrb[0].mxu0 %v340
      %v475 = vpop.f32.mrb[0].mxu0
      %v476 = vadd.f32 0.0, %v475
      %v477 = vpop.f32.mrb[0].mxu0
      %v478 = vpop.f32.mrb[0].mxu0
      %v479 = vadd.f32 0.0, %v478
      %v480 = vpop.f32.mrb[0].mxu0
      %481 = vmatprep.mubr.bf16.mxu0 0
      %482 = vmatmul.mubr.bf16.gmra.mrb[0].mxu0 %v343
      %v483 = vpop.f32.mrb[0].mxu0
      %v484 = vadd.f32 0.0, %v483
      %v485 = vpop.f32.mrb[0].mxu0
      %v486 = vpop.f32.mrb[0].mxu0
      %v487 = vadd.f32 0.0, %v486
      %v488 = vpop.f32.mrb[0].mxu0
      %489 = vmatprep.mubr.bf16.mxu0 0
      %490 = vmatmul.mubr.bf16.gmra.mrb[0].mxu0 %v346
      %v491 = vpop.f32.mrb[0].mxu0
      %v492 = vadd.f32 0.0, %v491
      %v493 = vpop.f32.mrb[0].mxu0
      %v494 = vpop.f32.mrb[0].mxu0
      %v495 = vadd.f32 0.0, %v494
      %v496 = vpop.f32.mrb[0].mxu0
      %497 = vmatprep.mubr.bf16.mxu0 0
      %498 = vmatmul.mubr.bf16.gmra.mrb[0].mxu0 %v349
      %v499 = vpop.f32.mrb[0].mxu0
      %v500 = vadd.f32 0.0, %v499
      %v501 = vpop.f32.mrb[0].mxu0
      %v502 = vpop.f32.mrb[0].mxu0
      %v503 = vadd.f32 0.0, %v502
      %v504 = vpop.f32.mrb[0].mxu0
      %505 = vmatprep.mubr.bf16.mxu0 0
      %506 = vmatmul.mubr.bf16.gmra.mrb[0].mxu0 %v352
      %v507 = vpop.f32.mrb[0].mxu0
      %v508 = vadd.f32 0.0, %v507
      %v509 = vpop.f32.mrb[0].mxu0
      %v510 = vpop.f32.mrb[0].mxu0
      %v511 = vadd.f32 0.0, %v510
      %v512 = vpop.f32.mrb[0].mxu0
      %513 = vmatprep.mubr.bf16.mxu0 0
      %514 = vmatmul.mubr.bf16.gmra.mrb[0].mxu0 %v355
      %v515 = vpop.f32.mrb[0].mxu0
      %v516 = vadd.f32 0.0, %v515
      %v517 = vpop.f32.mrb[0].mxu0
      %v518 = vpop.f32.mrb[0].mxu0
      %v519 = vadd.f32 0.0, %v518
      %v520 = vpop.f32.mrb[0].mxu0
      %521 = vdwg.mxu0
      %v530 = vunpack.c.l.b16 %v172
      %v531 = vunpack.c.l.b16 %v173
      %v532 = vunpack.c.l.b16 %v174
      %v533 = vunpack.c.l.b16 %v175
      %v534 = vunpack.c.l.b16 %v176
      %v535 = vunpack.c.l.b16 %v177
      %v536 = vunpack.c.l.b16 %v178
      %v537 = vunpack.c.l.b16 %v179
      %v538 = vpack.c.b16 %v531, %v530
      %v539 = vpack.c.b16 %v533, %v532
      %v540 = vpack.c.b16 %v535, %v534
      %v541 = vpack.c.b16 %v537, %v536
      %v545 = vunpack.c.l.b16 %v204
      %v546 = vunpack.c.l.b16 %v205
      %v547 = vunpack.c.l.b16 %v206
      %v548 = vpack.c.b16 %v546, %v545
      %v549 = vpack.c.b16 %v547, %v547
      %v552 = vsel %vm308, %v538, 0
      %v555 = vsel %vm308, %v539, 0
      %v558 = vsel %vm308, %v540, 0
      %v561 = vsel %vm308, %v541, 0
      %v564 = vsel %vm357, %v549, 0
      %566 = vmatprep.subr.bf16.mxu0 0
      %567 = vmatpush1.bf16.msra.mxu0 %v548
      %568 = vmatprep.subr.bf16.mxu0 0
      %569 = vmatpush1.bf16.msra.mxu0 %v564
      %570 = vmatprep.subr.bf16.mxu0 0
      %571 = vmatpush1.bf16.msra.mxu0 0
      %572 = vmatprep.subr.bf16.mxu0 0
      %573 = vmatpush1.bf16.msra.mxu0 0
      %574 = vmatprep.subr.bf16.mxu0 0
      %575 = vmatpush1.bf16.msra.mxu0 0
      %576 = vmatprep.subr.bf16.mxu0 0
      %577 = vmatpush1.bf16.msra.mxu0 0
      %578 = vmatprep.subr.bf16.mxu0 0
      %579 = vmatpush1.bf16.msra.mxu0 0
      %580 = vmatprep.subr.bf16.mxu0 0
      %581 = vmatpush1.bf16.msra.mxu0 0
      %582 = vmatprep.subr.bf16.mxu0 0
      %583 = vmatpush1.bf16.msra.mxu0 0
      %584 = vmatprep.subr.bf16.mxu0 0
      %585 = vmatpush1.bf16.msra.mxu0 0
      %586 = vmatprep.subr.bf16.mxu0 0
      %587 = vmatpush1.bf16.msra.mxu0 0
      %588 = vmatprep.subr.bf16.mxu0 0
      %589 = vmatpush1.bf16.msra.mxu0 0
      %590 = vmatprep.subr.bf16.mxu0 0
      %591 = vmatpush1.bf16.msra.mxu0 0
      %592 = vmatprep.subr.bf16.mxu0 0
      %593 = vmatpush1.bf16.msra.mxu0 0
      %594 = vmatprep.subr.bf16.mxu0 0
      %595 = vmatpush1.bf16.msra.mxu0 0
      %596 = vmatprep.subr.bf16.mxu0 0
      %597 = vmatpush1.bf16.msra.mxu0 0
      %598 = vmatprep.mubr.bf16.mxu0 0
      %599 = vmatmul.mubr.bf16.gmra.mrb[0].mxu0 %v552
      %v600 = vpop.f32.mrb[0].mxu0
      %v601 = vadd.f32 %v396, %v600
      %v602 = vpop.f32.mrb[0].mxu0
      %v603 = vpop.f32.mrb[0].mxu0
      %v604 = vadd.f32 %v399, %v603
      %v605 = vpop.f32.mrb[0].mxu0
      %606 = vmatprep.mubr.bf16.mxu0 0
      %607 = vmatmul.mubr.bf16.gmra.mrb[0].mxu0 %v555
      %v608 = vpop.f32.mrb[0].mxu0
      %v609 = vadd.f32 %v404, %v608
      %v610 = vpop.f32.mrb[0].mxu0
      %v611 = vpop.f32.mrb[0].mxu0
      %v612 = vadd.f32 %v407, %v611
      %v613 = vpop.f32.mrb[0].mxu0
      %614 = vmatprep.mubr.bf16.mxu0 0
      %615 = vmatmul.mubr.bf16.gmra.mrb[0].mxu0 %v558
      %v616 = vpop.f32.mrb[0].mxu0
      %v617 = vadd.f32 %v412, %v616
      %v618 = vpop.f32.mrb[0].mxu0
      %v619 = vpop.f32.mrb[0].mxu0
      %v620 = vadd.f32 %v415, %v619
      %v621 = vpop.f32.mrb[0].mxu0
      %622 = vmatprep.mubr.bf16.mxu0 0
      %623 = vmatmul.mubr.bf16.gmra.mrb[0].mxu0 %v561
      %v624 = vpop.f32.mrb[0].mxu0
      %v625 = vadd.f32 %v420, %v624
      %v626 = vpop.f32.mrb[0].mxu0
      %v627 = vpop.f32.mrb[0].mxu0
      %v628 = vadd.f32 %v423, %v627
      %v629 = vpop.f32.mrb[0].mxu0
      %630 = vmatprep.mubr.bf16.mxu0 0
      %631 = vmatmul.mubr.bf16.gmra.mrb[0].mxu0 %v310
      %v632 = vpop.f32.mrb[0].mxu0
      %v633 = vadd.f32 %v428, %v632
      %v634 = vpop.f32.mrb[0].mxu0
      %v635 = vpop.f32.mrb[0].mxu0
      %v636 = vadd.f32 %v431, %v635
      %v637 = vpop.f32.mrb[0].mxu0
      %638 = vmatprep.mubr.bf16.mxu0 0
      %639 = vmatmul.mubr.bf16.gmra.mrb[0].mxu0 %v313
      %v640 = vpop.f32.mrb[0].mxu0
      %v641 = vadd.f32 %v436, %v640
      %v642 = vpop.f32.mrb[0].mxu0
      %v643 = vpop.f32.mrb[0].mxu0
      %v644 = vadd.f32 %v439, %v643
      %v645 = vpop.f32.mrb[0].mxu0
      %646 = vmatprep.mubr.bf16.mxu0 0
      %647 = vmatmul.mubr.bf16.gmra.mrb[0].mxu0 %v316
      %v648 = vpop.f32.mrb[0].mxu0
      %v649 = vadd.f32 %v444, %v648
      %v650 = vpop.f32.mrb[0].mxu0
      %v651 = vpop.f32.mrb[0].mxu0
      %v652 = vadd.f32 %v447, %v651
      %v653 = vpop.f32.mrb[0].mxu0
      %654 = vmatprep.mubr.bf16.mxu0 0
      %655 = vmatmul.mubr.bf16.gmra.mrb[0].mxu0 %v319
      %v656 = vpop.f32.mrb[0].mxu0
      %v657 = vadd.f32 %v452, %v656
      %v658 = vpop.f32.mrb[0].mxu0
      %v659 = vpop.f32.mrb[0].mxu0
      %v660 = vadd.f32 %v455, %v659
      %v661 = vpop.f32.mrb[0].mxu0
      %662 = vmatprep.mubr.bf16.mxu0 0
      %663 = vmatmul.mubr.bf16.gmra.mrb[0].mxu0 %v322
      %v664 = vpop.f32.mrb[0].mxu0
      %v665 = vadd.f32 %v460, %v664
      %v666 = vpop.f32.mrb[0].mxu0
      %v667 = vpop.f32.mrb[0].mxu0
      %v668 = vadd.f32 %v463, %v667
      %v669 = vpop.f32.mrb[0].mxu0
      %670 = vmatprep.mubr.bf16.mxu0 0
      %671 = vmatmul.mubr.bf16.gmra.mrb[0].mxu0 %v325
      %v672 = vpop.f32.mrb[0].mxu0
      %v673 = vadd.f32 %v468, %v672
      %v674 = vpop.f32.mrb[0].mxu0
      %v675 = vpop.f32.mrb[0].mxu0
      %v676 = vadd.f32 %v471, %v675
      %v677 = vpop.f32.mrb[0].mxu0
      %678 = vmatprep.mubr.bf16.mxu0 0
      %679 = vmatmul.mubr.bf16.gmra.mrb[0].mxu0 %v328
      %v680 = vpop.f32.mrb[0].mxu0
      %v681 = vadd.f32 %v476, %v680
      %v682 = vpop.f32.mrb[0].mxu0
      %v683 = vpop.f32.mrb[0].mxu0
      %v684 = vadd.f32 %v479, %v683
      %v685 = vpop.f32.mrb[0].mxu0
      %686 = vmatprep.mubr.bf16.mxu0 0
      %687 = vmatmul.mubr.bf16.gmra.mrb[0].mxu0 %v331
      %v688 = vpop.f32.mrb[0].mxu0
      %v689 = vadd.f32 %v484, %v688
      %v690 = vpop.f32.mrb[0].mxu0
      %v691 = vpop.f32.mrb[0].mxu0
      %v692 = vadd.f32 %v487, %v691
      %v693 = vpop.f32.mrb[0].mxu0
      %694 = vmatprep.mubr.bf16.mxu0 0
      %695 = vmatmul.mubr.bf16.gmra.mrb[0].mxu0 %v334
      %v696 = vpop.f32.mrb[0].mxu0
      %v697 = vadd.f32 %v492, %v696
      %v698 = vpop.f32.mrb[0].mxu0
      %v699 = vpop.f32.mrb[0].mxu0
      %v700 = vadd.f32 %v495, %v699
      %v701 = vpop.f32.mrb[0].mxu0
      %702 = vmatprep.mubr.bf16.mxu0 0
      %703 = vmatmul.mubr.bf16.gmra.mrb[0].mxu0 %v337
      %v704 = vpop.f32.mrb[0].mxu0
      %v705 = vadd.f32 %v500, %v704
      %v706 = vpop.f32.mrb[0].mxu0
      %v707 = vpop.f32.mrb[0].mxu0
      %v708 = vadd.f32 %v503, %v707
      %v709 = vpop.f32.mrb[0].mxu0
      %710 = vmatprep.mubr.bf16.mxu0 0
      %711 = vmatmul.mubr.bf16.gmra.mrb[0].mxu0 %v340
      %v712 = vpop.f32.mrb[0].mxu0
      %v713 = vadd.f32 %v508, %v712
      %v714 = vpop.f32.mrb[0].mxu0
      %v715 = vpop.f32.mrb[0].mxu0
      %v716 = vadd.f32 %v511, %v715
      %v717 = vpop.f32.mrb[0].mxu0
      %718 = vmatprep.mubr.bf16.mxu0 0
      %719 = vmatmul.mubr.bf16.gmra.mrb[0].mxu0 %v343
      %v720 = vpop.f32.mrb[0].mxu0
      %v721 = vadd.f32 %v516, %v720
      %v722 = vpop.f32.mrb[0].mxu0
      %v723 = vpop.f32.mrb[0].mxu0
      %v724 = vadd.f32 %v519, %v723
      %v725 = vpop.f32.mrb[0].mxu0
      %726 = vdwg.mxu0
      %v727 = vld [vmem:[%s165 + $0x40] sm:$0xf]
      %v728 = vld [vmem:[%s165 + $0x44] sm:$0xf]
      %v729 = vld [vmem:[%s165 + $0x48] sm:$0xf]
      %v730 = vld [vmem:[%s165 + $0x4c] sm:$0xf]
      %v731 = vld [vmem:[%s165 + $0x50] sm:$0xf]
      %v732 = vld [vmem:[%s165 + $0x54] sm:$0xf]
      %v733 = vld [vmem:[%s165 + $0x58] sm:$0xf]
      %v734 = vld [vmem:[%s165 + $0x5c] sm:$0xf]
      %v735 = vld [vmem:[%s165 + $0x60] sm:$0xf]
      %v736 = vld [vmem:[%s165 + $0x64] sm:$0xf]
      %v737 = vld [vmem:[%s165 + $0x68] sm:$0xf]
      %v738 = vld [vmem:[%s165 + $0x6c] sm:$0xf]
      %v739 = vld [vmem:[%s165 + $0x70] sm:$0xf]
      %v740 = vld [vmem:[%s165 + $0x74] sm:$0xf]
      %v741 = vld [vmem:[%s165 + $0x78] sm:$0xf]
      %v742 = vld [vmem:[%s165 + $0x7c] sm:$0xf]
      %v743 = vld [vmem:[%s165 + $0x80] sm:$0xf]
      %v744 = vld [vmem:[%s165 + $0x84] sm:$0xf]
      %v745 = vld [vmem:[%s165 + $0x88] sm:$0xf]
      %v746 = vld [vmem:[%s165 + $0x8c] sm:$0xf]
      %v747 = vld [vmem:[%s165 + $0x90] sm:$0xf]
      %v748 = vld [vmem:[%s165 + $0x94] sm:$0xf]
      %v749 = vld [vmem:[%s165 + $0x98] sm:$0xf]
      %v750 = vld [vmem:[%s165 + $0x9c] sm:$0xf]
      %v751 = vld [vmem:[%s165 + $0xa0] sm:$0xf]
      %v752 = vld [vmem:[%s165 + $0xa4] sm:$0xf]
      %v753 = vld [vmem:[%s165 + $0xa8] sm:$0xf]
      %v754 = vld [vmem:[%s165 + $0xac] sm:$0xf]
      %v755 = vld [vmem:[%s165 + $0xb0] sm:$0xf]
      %v756 = vld [vmem:[%s165 + $0xb4] sm:$0xf]
      %v757 = vld [vmem:[%s165 + $0xb8] sm:$0xf]
      %v758 = vld [vmem:[%s165 + $0xbc] sm:$0xf]
      %s759 = scalar_lea.vmem %s1, 24
      %v760 = vld [vmem:[%s759] sm:$0xf]
      %v761 = vld [vmem:[%s759 + $0x4] sm:$0xf]
      %v762 = vld [vmem:[%s759 + $0x8] sm:$0x1]
      %v795 = vunpack.c.l.b16 %v727
      %v796 = vunpack.c.l.b16 %v728
      %v797 = vunpack.c.l.b16 %v729
      %v798 = vunpack.c.l.b16 %v730
      %v799 = vunpack.c.l.b16 %v731
      %v800 = vunpack.c.l.b16 %v732
      %v801 = vunpack.c.l.b16 %v733
      %v802 = vunpack.c.l.b16 %v734
      %v803 = vunpack.c.l.b16 %v735
      %v804 = vunpack.c.l.b16 %v736
      %v805 = vunpack.c.l.b16 %v737
      %v806 = vunpack.c.l.b16 %v738
      %v807 = vunpack.c.l.b16 %v739
      %v808 = vunpack.c.l.b16 %v740
      %v809 = vunpack.c.l.b16 %v741
      %v810 = vunpack.c.l.b16 %v742
      %v811 = vunpack.c.l.b16 %v743
      %v812 = vunpack.c.l.b16 %v744
      %v813 = vunpack.c.l.b16 %v745
      %v814 = vunpack.c.l.b16 %v746
      %v815 = vunpack.c.l.b16 %v747
      %v816 = vunpack.c.l.b16 %v748
      %v817 = vunpack.c.l.b16 %v749
      %v818 = vunpack.c.l.b16 %v750
      %v819 = vunpack.c.l.b16 %v751
      %v820 = vunpack.c.l.b16 %v752
      %v821 = vunpack.c.l.b16 %v753
      %v822 = vunpack.c.l.b16 %v754
      %v823 = vunpack.c.l.b16 %v755
      %v824 = vunpack.c.l.b16 %v756
      %v825 = vunpack.c.l.b16 %v757
      %v826 = vunpack.c.l.b16 %v758
      %v827 = vpack.c.b16 %v796, %v795
      %v828 = vpack.c.b16 %v798, %v797
      %v829 = vpack.c.b16 %v800, %v799
      %v830 = vpack.c.b16 %v802, %v801
      %v831 = vpack.c.b16 %v804, %v803
      %v832 = vpack.c.b16 %v806, %v805
      %v833 = vpack.c.b16 %v808, %v807
      %v834 = vpack.c.b16 %v810, %v809
      %v835 = vpack.c.b16 %v812, %v811
      %v836 = vpack.c.b16 %v814, %v813
      %v837 = vpack.c.b16 %v816, %v815
      %v838 = vpack.c.b16 %v818, %v817
      %v839 = vpack.c.b16 %v820, %v819
      %v840 = vpack.c.b16 %v822, %v821
      %v841 = vpack.c.b16 %v824, %v823
      %v842 = vpack.c.b16 %v826, %v825
      %v846 = vunpack.c.l.b16 %v760
      %v847 = vunpack.c.l.b16 %v761
      %v848 = vunpack.c.l.b16 %v762
      %v849 = vpack.c.b16 %v847, %v846
      %v850 = vpack.c.b16 %v848, %v848
      %v853 = vsel %vm308, %v827, 0
      %v856 = vsel %vm308, %v828, 0
      %v859 = vsel %vm308, %v829, 0
      %v862 = vsel %vm308, %v830, 0
      %v865 = vsel %vm308, %v831, 0
      %v868 = vsel %vm308, %v832, 0
      %v871 = vsel %vm308, %v833, 0
      %v874 = vsel %vm308, %v834, 0
      %v877 = vsel %vm308, %v835, 0
      %v880 = vsel %vm308, %v836, 0
      %v883 = vsel %vm308, %v837, 0
      %v886 = vsel %vm308, %v838, 0
      %v889 = vsel %vm308, %v839, 0
      %v892 = vsel %vm308, %v840, 0
      %v895 = vsel %vm308, %v841, 0
      %v898 = vsel %vm308, %v842, 0
      %v901 = vsel %vm357, %v850, 0
      %903 = vmatprep.subr.bf16.mxu0 0
      %904 = vmatpush1.bf16.msra.mxu0 %v849
      %905 = vmatprep.subr.bf16.mxu0 0
      %906 = vmatpush1.bf16.msra.mxu0 %v901
      %907 = vmatprep.subr.bf16.mxu0 0
      %908 = vmatpush1.bf16.msra.mxu0 0
      %909 = vmatprep.subr.bf16.mxu0 0
      %910 = vmatpush1.bf16.msra.mxu0 0
      %911 = vmatprep.subr.bf16.mxu0 0
      %912 = vmatpush1.bf16.msra.mxu0 0
      %913 = vmatprep.subr.bf16.mxu0 0
      %914 = vmatpush1.bf16.msra.mxu0 0
      %915 = vmatprep.subr.bf16.mxu0 0
      %916 = vmatpush1.bf16.msra.mxu0 0
      %917 = vmatprep.subr.bf16.mxu0 0
      %918 = vmatpush1.bf16.msra.mxu0 0
      %919 = vmatprep.subr.bf16.mxu0 0
      %920 = vmatpush1.bf16.msra.mxu0 0
      %921 = vmatprep.subr.bf16.mxu0 0
      %922 = vmatpush1.bf16.msra.mxu0 0
      %923 = vmatprep.subr.bf16.mxu0 0
      %924 = vmatpush1.bf16.msra.mxu0 0
      %925 = vmatprep.subr.bf16.mxu0 0
      %926 = vmatpush1.bf16.msra.mxu0 0
      %927 = vmatprep.subr.bf16.mxu0 0
      %928 = vmatpush1.bf16.msra.mxu0 0
      %929 = vmatprep.subr.bf16.mxu0 0
      %930 = vmatpush1.bf16.msra.mxu0 0
      %931 = vmatprep.subr.bf16.mxu0 0
      %932 = vmatpush1.bf16.msra.mxu0 0
      %933 = vmatprep.subr.bf16.mxu0 0
      %934 = vmatpush1.bf16.msra.mxu0 0
      %935 = vmatprep.mubr.bf16.mxu0 0
      %936 = vmatmul.mubr.bf16.gmra.mrb[0].mxu0 %v853
      %v937 = vpop.f32.mrb[0].mxu0
      %v938 = vadd.f32 0.0, %v937
      %v939 = vpop.f32.mrb[0].mxu0
      %v940 = vpop.f32.mrb[0].mxu0
      %v941 = vadd.f32 0.0, %v940
      %v942 = vpop.f32.mrb[0].mxu0
      %943 = vmatprep.mubr.bf16.mxu0 0
      %944 = vmatmul.mubr.bf16.gmra.mrb[0].mxu0 %v856
      %v945 = vpop.f32.mrb[0].mxu0
      %v946 = vadd.f32 0.0, %v945
      %v947 = vpop.f32.mrb[0].mxu0
      %v948 = vpop.f32.mrb[0].mxu0
      %v949 = vadd.f32 0.0, %v948
      %v950 = vpop.f32.mrb[0].mxu0
      %951 = vmatprep.mubr.bf16.mxu0 0
      %952 = vmatmul.mubr.bf16.gmra.mrb[0].mxu0 %v859
      %v953 = vpop.f32.mrb[0].mxu0
      %v954 = vadd.f32 0.0, %v953
      %v955 = vpop.f32.mrb[0].mxu0
      %v956 = vpop.f32.mrb[0].mxu0
      %v957 = vadd.f32 0.0, %v956
      %v958 = vpop.f32.mrb[0].mxu0
      %959 = vmatprep.mubr.bf16.mxu0 0
      %960 = vmatmul.mubr.bf16.gmra.mrb[0].mxu0 %v862
      %v961 = vpop.f32.mrb[0].mxu0
      %v962 = vadd.f32 0.0, %v961
      %v963 = vpop.f32.mrb[0].mxu0
      %v964 = vpop.f32.mrb[0].mxu0
      %v965 = vadd.f32 0.0, %v964
      %v966 = vpop.f32.mrb[0].mxu0
      %967 = vmatprep.mubr.bf16.mxu0 0
      %968 = vmatmul.mubr.bf16.gmra.mrb[0].mxu0 %v865
      %v969 = vpop.f32.mrb[0].mxu0
      %v970 = vadd.f32 0.0, %v969
      %v971 = vpop.f32.mrb[0].mxu0
      %v972 = vpop.f32.mrb[0].mxu0
      %v973 = vadd.f32 0.0, %v972
      %v974 = vpop.f32.mrb[0].mxu0
      %975 = vmatprep.mubr.bf16.mxu0 0
      %976 = vmatmul.mubr.bf16.gmra.mrb[0].mxu0 %v868
      %v977 = vpop.f32.mrb[0].mxu0
      %v978 = vadd.f32 0.0, %v977
      %v979 = vpop.f32.mrb[0].mxu0
      %v980 = vpop.f32.mrb[0].mxu0
      %v981 = vadd.f32 0.0, %v980
      %v982 = vpop.f32.mrb[0].mxu0
      %983 = vmatprep.mubr.bf16.mxu0 0
      %984 = vmatmul.mubr.bf16.gmra.mrb[0].mxu0 %v871
      %v985 = vpop.f32.mrb[0].mxu0
      %v986 = vadd.f32 0.0, %v985
      %v987 = vpop.f32.mrb[0].mxu0
      %v988 = vpop.f32.mrb[0].mxu0
      %v989 = vadd.f32 0.0, %v988
      %v990 = vpop.f32.mrb[0].mxu0
      %991 = vmatprep.mubr.bf16.mxu0 0
      %992 = vmatmul.mubr.bf16.gmra.mrb[0].mxu0 %v874
      %v993 = vpop.f32.mrb[0].mxu0
      %v994 = vadd.f32 0.0, %v993
      %v995 = vpop.f32.mrb[0].mxu0
      %v996 = vpop.f32.mrb[0].mxu0
      %v997 = vadd.f32 0.0, %v996
      %v998 = vpop.f32.mrb[0].mxu0
      %999 = vmatprep.mubr.bf16.mxu0 0
      %1000 = vmatmul.mubr.bf16.gmra.mrb[0].mxu0 %v877
      %v1001 = vpop.f32.mrb[0].mxu0
      %v1002 = vadd.f32 0.0, %v1001
      %v1003 = vpop.f32.mrb[0].mxu0
      %v1004 = vpop.f32.mrb[0].mxu0
      %v1005 = vadd.f32 0.0, %v1004
      %v1006 = vpop.f32.mrb[0].mxu0
      %1007 = vmatprep.mubr.bf16.mxu0 0
      %1008 = vmatmul.mubr.bf16.gmra.mrb[0].mxu0 %v880
      %v1009 = vpop.f32.mrb[0].mxu0
      %v1010 = vadd.f32 0.0, %v1009
      %v1011 = vpop.f32.mrb[0].mxu0
      %v1012 = vpop.f32.mrb[0].mxu0
      %v1013 = vadd.f32 0.0, %v1012
      %v1014 = vpop.f32.mrb[0].mxu0
      %1015 = vmatprep.mubr.bf16.mxu0 0
      %1016 = vmatmul.mubr.bf16.gmra.mrb[0].mxu0 %v883
      %v1017 = vpop.f32.mrb[0].mxu0
      %v1018 = vadd.f32 0.0, %v1017
      %v1019 = vpop.f32.mrb[0].mxu0
      %v1020 = vpop.f32.mrb[0].mxu0
      %v1021 = vadd.f32 0.0, %v1020
      %v1022 = vpop.f32.mrb[0].mxu0
      %1023 = vmatprep.mubr.bf16.mxu0 0
      %1024 = vmatmul.mubr.bf16.gmra.mrb[0].mxu0 %v886
      %v1025 = vpop.f32.mrb[0].mxu0
      %v1026 = vadd.f32 0.0, %v1025
      %v1027 = vpop.f32.mrb[0].mxu0
      %v1028 = vpop.f32.mrb[0].mxu0
      %v1029 = vadd.f32 0.0, %v1028
      %v1030 = vpop.f32.mrb[0].mxu0
      %1031 = vmatprep.mubr.bf16.mxu0 0
      %1032 = vmatmul.mubr.bf16.gmra.mrb[0].mxu0 %v889
      %v1033 = vpop.f32.mrb[0].mxu0
      %v1034 = vadd.f32 0.0, %v1033
      %v1035 = vpop.f32.mrb[0].mxu0
      %v1036 = vpop.f32.mrb[0].mxu0
      %v1037 = vadd.f32 0.0, %v1036
      %v1038 = vpop.f32.mrb[0].mxu0
      %1039 = vmatprep.mubr.bf16.mxu0 0
      %1040 = vmatmul.mubr.bf16.gmra.mrb[0].mxu0 %v892
      %v1041 = vpop.f32.mrb[0].mxu0
      %v1042 = vadd.f32 0.0, %v1041
      %v1043 = vpop.f32.mrb[0].mxu0
      %v1044 = vpop.f32.mrb[0].mxu0
      %v1045 = vadd.f32 0.0, %v1044
      %v1046 = vpop.f32.mrb[0].mxu0
      %1047 = vmatprep.mubr.bf16.mxu0 0
      %1048 = vmatmul.mubr.bf16.gmra.mrb[0].mxu0 %v895
      %v1049 = vpop.f32.mrb[0].mxu0
      %v1050 = vadd.f32 0.0, %v1049
      %v1051 = vpop.f32.mrb[0].mxu0
      %v1052 = vpop.f32.mrb[0].mxu0
      %v1053 = vadd.f32 0.0, %v1052
      %v1054 = vpop.f32.mrb[0].mxu0
      %1055 = vmatprep.mubr.bf16.mxu0 0
      %1056 = vmatmul.mubr.bf16.gmra.mrb[0].mxu0 %v898
      %v1057 = vpop.f32.mrb[0].mxu0
      %v1058 = vadd.f32 0.0, %v1057
      %v1059 = vpop.f32.mrb[0].mxu0
      %v1060 = vpop.f32.mrb[0].mxu0
      %v1061 = vadd.f32 0.0, %v1060
      %v1062 = vpop.f32.mrb[0].mxu0
      %1063 = vdwg.mxu0
      %v1064 = vadd.f32 %v601, %v938
      %v1065 = vadd.f32 %v604, %v941
      %v1066 = vadd.f32 %v609, %v946
      %v1067 = vadd.f32 %v612, %v949
      %v1068 = vadd.f32 %v617, %v954
      %v1069 = vadd.f32 %v620, %v957
      %v1070 = vadd.f32 %v625, %v962
      %v1071 = vadd.f32 %v628, %v965
      %v1072 = vadd.f32 %v633, %v970
      %v1073 = vadd.f32 %v636, %v973
      %v1074 = vadd.f32 %v641, %v978
      %v1075 = vadd.f32 %v644, %v981
      %v1076 = vadd.f32 %v649, %v986
      %v1077 = vadd.f32 %v652, %v989
      %v1078 = vadd.f32 %v657, %v994
      %v1079 = vadd.f32 %v660, %v997
      %v1080 = vadd.f32 %v665, %v1002
      %v1081 = vadd.f32 %v668, %v1005
      %v1082 = vadd.f32 %v673, %v1010
      %v1083 = vadd.f32 %v676, %v1013
      %v1084 = vadd.f32 %v681, %v1018
      %v1085 = vadd.f32 %v684, %v1021
      %v1086 = vadd.f32 %v689, %v1026
      %v1087 = vadd.f32 %v692, %v1029
      %v1088 = vadd.f32 %v697, %v1034
      %v1089 = vadd.f32 %v700, %v1037
      %v1090 = vadd.f32 %v705, %v1042
      %v1091 = vadd.f32 %v708, %v1045
      %v1092 = vadd.f32 %v713, %v1050
      %v1093 = vadd.f32 %v716, %v1053
      %v1094 = vadd.f32 %v721, %v1058
      %v1095 = vadd.f32 %v724, %v1061
      %v1096 = vld [vmem:[%s2] sm:$0x1]
      %v1098 = vlaneseq
      %v1099 = vshrl.u32 %v1098, 7
      %v1100 = vsub.s32 0, %v1099
      %v1101 = vrot.slane %v1096, %v1100
      %v1103 = vadd.f32 %v1064, %v1101
      %v1104 = vadd.f32 %v1065, %v1101
      %v1105 = vadd.f32 %v1066, %v1101
      %v1106 = vadd.f32 %v1067, %v1101
      %v1107 = vadd.f32 %v1068, %v1101
      %v1108 = vadd.f32 %v1069, %v1101
      %v1109 = vadd.f32 %v1070, %v1101
      %v1110 = vadd.f32 %v1071, %v1101
      %v1111 = vadd.f32 %v1072, %v1101
      %v1112 = vadd.f32 %v1073, %v1101
      %v1113 = vadd.f32 %v1074, %v1101
      %v1114 = vadd.f32 %v1075, %v1101
      %v1115 = vadd.f32 %v1076, %v1101
      %v1116 = vadd.f32 %v1077, %v1101
      %v1117 = vadd.f32 %v1078, %v1101
      %v1118 = vadd.f32 %v1079, %v1101
      %v1119 = vadd.f32 %v1080, %v1101
      %v1120 = vadd.f32 %v1081, %v1101
      %v1121 = vadd.f32 %v1082, %v1101
      %v1122 = vadd.f32 %v1083, %v1101
      %v1123 = vadd.f32 %v1084, %v1101
      %v1124 = vadd.f32 %v1085, %v1101
      %v1125 = vadd.f32 %v1086, %v1101
      %v1126 = vadd.f32 %v1087, %v1101
      %v1127 = vadd.f32 %v1088, %v1101
      %v1128 = vadd.f32 %v1089, %v1101
      %v1129 = vadd.f32 %v1090, %v1101
      %v1130 = vadd.f32 %v1091, %v1101
      %v1131 = vadd.f32 %v1092, %v1101
      %v1132 = vadd.f32 %v1093, %v1101
      %v1133 = vadd.f32 %v1094, %v1101
      %v1134 = vadd.f32 %v1095, %v1101
      %v1135 = vmax.f32 %v1103, 0.0
      %v1136 = vmax.f32 %v1104, 0.0
      %v1137 = vmax.f32 %v1105, 0.0
      %v1138 = vmax.f32 %v1106, 0.0
      %v1139 = vmax.f32 %v1107, 0.0
      %v1140 = vmax.f32 %v1108, 0.0
      %v1141 = vmax.f32 %v1109, 0.0
      %v1142 = vmax.f32 %v1110, 0.0
      %v1143 = vmax.f32 %v1111, 0.0
      %v1144 = vmax.f32 %v1112, 0.0
      %v1145 = vmax.f32 %v1113, 0.0
      %v1146 = vmax.f32 %v1114, 0.0
      %v1147 = vmax.f32 %v1115, 0.0
      %v1148 = vmax.f32 %v1116, 0.0
      %v1149 = vmax.f32 %v1117, 0.0
      %v1150 = vmax.f32 %v1118, 0.0
      %v1151 = vmax.f32 %v1119, 0.0
      %v1152 = vmax.f32 %v1120, 0.0
      %v1153 = vmax.f32 %v1121, 0.0
      %v1154 = vmax.f32 %v1122, 0.0
      %v1155 = vmax.f32 %v1123, 0.0
      %v1156 = vmax.f32 %v1124, 0.0
      %v1157 = vmax.f32 %v1125, 0.0
      %v1158 = vmax.f32 %v1126, 0.0
      %v1159 = vmax.f32 %v1127, 0.0
      %v1160 = vmax.f32 %v1128, 0.0
      %v1161 = vmax.f32 %v1129, 0.0
      %v1162 = vmax.f32 %v1130, 0.0
      %v1163 = vmax.f32 %v1131, 0.0
      %v1164 = vmax.f32 %v1132, 0.0
      %v1165 = vmax.f32 %v1133, 0.0
      %v1166 = vmax.f32 %v1134, 0.0
      %v1167 = vpack.c.bf16 %v1136, %v1135
      %v1168 = vpack.c.bf16 %v1138, %v1137
      %v1169 = vpack.c.bf16 %v1140, %v1139
      %v1170 = vpack.c.bf16 %v1142, %v1141
      %v1171 = vpack.c.bf16 %v1144, %v1143
      %v1172 = vpack.c.bf16 %v1146, %v1145
      %v1173 = vpack.c.bf16 %v1148, %v1147
      %v1174 = vpack.c.bf16 %v1150, %v1149
      %v1175 = vpack.c.bf16 %v1152, %v1151
      %v1176 = vpack.c.bf16 %v1154, %v1153
      %v1177 = vpack.c.bf16 %v1156, %v1155
      %v1178 = vpack.c.bf16 %v1158, %v1157
      %v1179 = vpack.c.bf16 %v1160, %v1159
      %v1180 = vpack.c.bf16 %v1162, %v1161
      %v1181 = vpack.c.bf16 %v1164, %v1163
      %v1182 = vpack.c.bf16 %v1166, %v1165
      %v1199 = vunpack.c.l.b16 %v1167
      %v1200 = vunpack.c.h.b16 %v1167
      %v1201 = vunpack.c.l.b16 %v1168
      %v1202 = vunpack.c.h.b16 %v1168
      %v1203 = vunpack.c.l.b16 %v1169
      %v1204 = vunpack.c.h.b16 %v1169
      %v1205 = vunpack.c.l.b16 %v1170
      %v1206 = vunpack.c.h.b16 %v1170
      %v1207 = vunpack.c.l.b16 %v1171
      %v1208 = vunpack.c.h.b16 %v1171
      %v1209 = vunpack.c.l.b16 %v1172
      %v1210 = vunpack.c.h.b16 %v1172
      %v1211 = vunpack.c.l.b16 %v1173
      %v1212 = vunpack.c.h.b16 %v1173
      %v1213 = vunpack.c.l.b16 %v1174
      %v1214 = vunpack.c.h.b16 %v1174
      %v1215 = vunpack.c.l.b16 %v1175
      %v1216 = vunpack.c.h.b16 %v1175
      %v1217 = vunpack.c.l.b16 %v1176
      %v1218 = vunpack.c.h.b16 %v1176
      %v1219 = vunpack.c.l.b16 %v1177
      %v1220 = vunpack.c.h.b16 %v1177
      %v1221 = vunpack.c.l.b16 %v1178
      %v1222 = vunpack.c.h.b16 %v1178
      %v1223 = vunpack.c.l.b16 %v1179
      %v1224 = vunpack.c.h.b16 %v1179
      %v1225 = vunpack.c.l.b16 %v1180
      %v1226 = vunpack.c.h.b16 %v1180
      %v1227 = vunpack.c.l.b16 %v1181
      %v1228 = vunpack.c.h.b16 %v1181
      %v1229 = vunpack.c.l.b16 %v1182
      %v1230 = vunpack.c.h.b16 %v1182
      %v1231 = vpack.c.b16 %v1199, %v1199
      %v1232 = vpack.c.b16 %v1200, %v1200
      %v1233 = vpack.c.b16 %v1201, %v1201
      %v1234 = vpack.c.b16 %v1202, %v1202
      %v1235 = vpack.c.b16 %v1203, %v1203
      %v1236 = vpack.c.b16 %v1204, %v1204
      %v1237 = vpack.c.b16 %v1205, %v1205
      %v1238 = vpack.c.b16 %v1206, %v1206
      %v1239 = vpack.c.b16 %v1207, %v1207
      %v1240 = vpack.c.b16 %v1208, %v1208
      %v1241 = vpack.c.b16 %v1209, %v1209
      %v1242 = vpack.c.b16 %v1210, %v1210
      %v1243 = vpack.c.b16 %v1211, %v1211
      %v1244 = vpack.c.b16 %v1212, %v1212
      %v1245 = vpack.c.b16 %v1213, %v1213
      %v1246 = vpack.c.b16 %v1214, %v1214
      %v1247 = vpack.c.b16 %v1215, %v1215
      %v1248 = vpack.c.b16 %v1216, %v1216
      %v1249 = vpack.c.b16 %v1217, %v1217
      %v1250 = vpack.c.b16 %v1218, %v1218
      %v1251 = vpack.c.b16 %v1219, %v1219
      %v1252 = vpack.c.b16 %v1220, %v1220
      %v1253 = vpack.c.b16 %v1221, %v1221
      %v1254 = vpack.c.b16 %v1222, %v1222
      %v1255 = vpack.c.b16 %v1223, %v1223
      %v1256 = vpack.c.b16 %v1224, %v1224
      %v1257 = vpack.c.b16 %v1225, %v1225
      %v1258 = vpack.c.b16 %v1226, %v1226
      %v1259 = vpack.c.b16 %v1227, %v1227
      %v1260 = vpack.c.b16 %v1228, %v1228
      %v1261 = vpack.c.b16 %v1229, %v1229
      %v1262 = vpack.c.b16 %v1230, %v1230
      %vm1295 = vcmask 60416
      %1296 = vst.msk [vmem:[%s170] sm:$0xf] %vm1295, %v1231
      %1297 = vst.msk [vmem:[%s170 + $0x4] sm:$0xf] %vm1295, %v1232
      %1298 = vst.msk [vmem:[%s170 + $0x8] sm:$0xf] %vm1295, %v1233
      %1299 = vst.msk [vmem:[%s170 + $0xc] sm:$0xf] %vm1295, %v1234
      %1300 = vst.msk [vmem:[%s170 + $0x10] sm:$0xf] %vm1295, %v1235
      %1301 = vst.msk [vmem:[%s170 + $0x14] sm:$0xf] %vm1295, %v1236
      %1302 = vst.msk [vmem:[%s170 + $0x18] sm:$0xf] %vm1295, %v1237
      %1303 = vst.msk [vmem:[%s170 + $0x1c] sm:$0xf] %vm1295, %v1238
      %1304 = vst.msk [vmem:[%s170 + $0x20] sm:$0xf] %vm1295, %v1239
      %1305 = vst.msk [vmem:[%s170 + $0x24] sm:$0xf] %vm1295, %v1240
      %1306 = vst.msk [vmem:[%s170 + $0x28] sm:$0xf] %vm1295, %v1241
      %1307 = vst.msk [vmem:[%s170 + $0x2c] sm:$0xf] %vm1295, %v1242
      %1308 = vst.msk [vmem:[%s170 + $0x30] sm:$0xf] %vm1295, %v1243
      %1309 = vst.msk [vmem:[%s170 + $0x34] sm:$0xf] %vm1295, %v1244
      %1310 = vst.msk [vmem:[%s170 + $0x38] sm:$0xf] %vm1295, %v1245
      %1311 = vst.msk [vmem:[%s170 + $0x3c] sm:$0xf] %vm1295, %v1246
      %1312 = vst.msk [vmem:[%s170 + $0x40] sm:$0xf] %vm1295, %v1247
      %1313 = vst.msk [vmem:[%s170 + $0x44] sm:$0xf] %vm1295, %v1248
      %1314 = vst.msk [vmem:[%s170 + $0x48] sm:$0xf] %vm1295, %v1249
      %1315 = vst.msk [vmem:[%s170 + $0x4c] sm:$0xf] %vm1295, %v1250
      %1316 = vst.msk [vmem:[%s170 + $0x50] sm:$0xf] %vm1295, %v1251
      %1317 = vst.msk [vmem:[%s170 + $0x54] sm:$0xf] %vm1295, %v1252
      %1318 = vst.msk [vmem:[%s170 + $0x58] sm:$0xf] %vm1295, %v1253
      %1319 = vst.msk [vmem:[%s170 + $0x5c] sm:$0xf] %vm1295, %v1254
      %1320 = vst.msk [vmem:[%s170 + $0x60] sm:$0xf] %vm1295, %v1255
      %1321 = vst.msk [vmem:[%s170 + $0x64] sm:$0xf] %vm1295, %v1256
      %1322 = vst.msk [vmem:[%s170 + $0x68] sm:$0xf] %vm1295, %v1257
      %1323 = vst.msk [vmem:[%s170 + $0x6c] sm:$0xf] %vm1295, %v1258
      %1324 = vst.msk [vmem:[%s170 + $0x70] sm:$0xf] %vm1295, %v1259
      %1325 = vst.msk [vmem:[%s170 + $0x74] sm:$0xf] %vm1295, %v1260
      %1326 = vst.msk [vmem:[%s170 + $0x78] sm:$0xf] %vm1295, %v1261
      %1327 = vst.msk [vmem:[%s170 + $0x7c] sm:$0xf] %vm1295, %v1262
      %p1328 = scmp.lt.s32.totalorder %s14, 1
      %s1329 = scalar_select %p1328, %s14, 1
      %s1330 = smul.addr %s1329, 32
      %s1331 = smul.addr %s1330, 4
      %s1332 = scalar_lea.vmem %s3, %s1331
      // Predicated region
      $region33: #{_lambda_.17} parent=31 // pred_check
        %p1333 = pneg %p100
      $region34: #{_lambda_.17} parent=31 // pred_check_branch
        %1335 = sbr.rel (%p1333) target = $region36
      $region35: #{_lambda_.17} parent=31 // pred_region
        _
      $region36: #{_lambda_.17} parent=31 // pred_fallthru
        _
    $region32: #{_lambda_.17} parent=5 // pred_fallthru
      _
    %p1336 = scmp.le.s32.totalorder 2, %s9
    // Predicated region
    $region37: #{_lambda_.17} parent=5 // pred_check
      %p1337 = pneg %p1336
    $region38: #{_lambda_.17} parent=5 // pred_check_branch
      %1339 = sbr.rel (%p1337) target = $region40
    $region39: #{_lambda_.17} parent=5 // pred_region
      %s1340 = ssub.s32 %s9, 2
      // Predicated region
      $region41: #{_lambda_.17} parent=39 // pred_check
        %p1341 = pneg %p106
      $region42: #{_lambda_.17} parent=39 // pred_check_branch
        %1343 = sbr.rel (%p1341) target = $region44
      $region43: #{_lambda_.17} parent=39 // pred_region
        %p1344 = scmp.lt.s32.totalorder %s15, 1
        %s1345 = scalar_select %p1344, %s15, 1
        %s1346 = smul.addr %s1345, 32
        %s1347 = smul.addr %s1346, 4
        %s1348 = scalar_lea.vmem %s3, %s1347
      $region44: #{_lambda_.17} parent=39 // pred_fallthru
        _
    $region40: #{_lambda_.17} parent=5 // pred_fallthru
      _
  $region6: #{_lambda_.17} parent=0 // loop_footer
    %s13 = sadd.s32 1, %s9
  $region7: #{_lambda_.17} parent=0 // loop_footer_branch
    %8 = sbr.rel target = $region3
  $region8: #{_lambda_.17} parent=0 // loop_exit
    _

// kernel: _lambda_.14
$region0: #{_lambda_.14}
  #allocation0 [shape = 'u32[]', space=smem, size = 0x4, offset = 0x4, fixed_abs, tag = 'smem constant byte address 0x4 - core index']
  #allocation1 [shape = 'u32[144,128]{1,0:T(1,128)}', space=vmem, size = 0x12000, scoped, tag = 'internal scratch']
  %s0 = inlined_call_operand.vmem [shape: bf16[8,120,8], index: 0, kind: input, shape index: {}]
  %s1 = inlined_call_operand.vmem [shape: bf16[9,8,18], index: 1, kind: input, shape index: {}]
  %s2 = inlined_call_operand.vmem [shape: f32[1,18], index: 2, kind: input, shape index: {}]
  %s3 = inlined_call_operand.vmem [shape: bf16[8,80,18], index: 3, kind: output, shape index: {}]
  %s4 = sld [smem:[#allocation0]]
  $region45: #{_lambda_.14} parent=0
    _
  %s6 = ssub.s32 1, %s4
  %s7 = scalar_select 0, %s6, %s4
  loop: start=0, step=1, limit=10
  $region2: #{_lambda_.14} parent=0 // loop_pre_header
    _
  $region3: #{_lambda_.14} parent=0 // loop_header
    %s9 = sphi 0, %s13
    %p10 = scmp.ge.s32.totalorder %s9, 10
    %s19 = sphi 0, %s21
    %s22 = sphi 0, %s19
    %s23 = sphi 0, %s22
    %s39 = sphi 0, %s23
    %s43 = sphi 0, %s43
    %s45 = sphi 0, %s43
    %s46 = sphi 0, %s45
    %s60 = sphi 0, %s46
    %s64 = sphi 0, %s64
    %s66 = sphi 0, %s64
    %s67 = sphi 0, %s66
    %s81 = sphi 0, %s67
    %s87 = sphi 0, %s89
    %s90 = sphi 0, %s87
    %s91 = sphi 0, %s90
    %s107 = sphi 0, %s91
  $region4: #{_lambda_.14} parent=0 // loop_header_branch
    %12 = sbr.rel (%p10) target = $region8
  $region5: #{_lambda_.14} parent=0 // loop_body
    %s14 = ssub.s32 %s9, 1
    %s15 = ssub.s32 %s9, 2
    %s16 = sadd.s32 %s9, 1
    %s17 = ssub.s32 %s9, %s16
    %p18 = scmp.eq.s32.totalorder %s17, 0
    %s20 = sadd.s32 %s19, 1
    %s21 = scalar_select %p18, %s19, %s20
    %p24 = pneg %p18
    %p25 = scmp.eq.s32.totalorder %s9, 7
    %p26 = por %p24, %p25
    %p27 = scmp.ne.s32.totalorder %s19, %s22
    %p28 = scmp.eq.s32.totalorder %s9, 0
    %p29 = por %p27, %p28
    %p30 = scmp.ne.s32.totalorder %s19, %s22
    %p31 = scmp.eq.s32.totalorder %s14, 7
    %p32 = por %p30, %p31
    %p33 = scmp.ne.s32.totalorder %s22, %s23
    %p34 = scmp.eq.s32.totalorder %s14, 0
    %p35 = por %p33, %p34
    %p36 = scmp.ne.s32.totalorder %s22, %s23
    %p37 = scmp.eq.s32.totalorder %s15, 7
    %p38 = por %p36, %p37
    %p40 = scmp.ne.s32.totalorder %s23, %s39
    %p41 = scmp.eq.s32.totalorder %s15, 0
    %p42 = por %p40, %p41
    %s44 = sadd.s32 %s43, 1
    %p47 = scmp.eq.s32.totalorder %s9, 7
    %p48 = scmp.ne.s32.totalorder %s43, %s45
    %p49 = scmp.eq.s32.totalorder %s9, 0
    %p50 = por %p48, %p49
    %p51 = scmp.ne.s32.totalorder %s43, %s45
    %p52 = scmp.eq.s32.totalorder %s14, 7
    %p53 = por %p51, %p52
    %p54 = scmp.ne.s32.totalorder %s45, %s46
    %p55 = scmp.eq.s32.totalorder %s14, 0
    %p56 = por %p54, %p55
    %p57 = scmp.ne.s32.totalorder %s45, %s46
    %p58 = scmp.eq.s32.totalorder %s15, 7
    %p59 = por %p57, %p58
    %p61 = scmp.ne.s32.totalorder %s46, %s60
    %p62 = scmp.eq.s32.totalorder %s15, 0
    %p63 = por %p61, %p62
    %s65 = sadd.s32 %s64, 1
    %p68 = scmp.eq.s32.totalorder %s9, 7
    %p69 = scmp.ne.s32.totalorder %s64, %s66
    %p70 = scmp.eq.s32.totalorder %s9, 0
    %p71 = por %p69, %p70
    %p72 = scmp.ne.s32.totalorder %s64, %s66
    %p73 = scmp.eq.s32.totalorder %s14, 7
    %p74 = por %p72, %p73
    %p75 = scmp.ne.s32.totalorder %s66, %s67
    %p76 = scmp.eq.s32.totalorder %s14, 0
    %p77 = por %p75, %p76
    %p78 = scmp.ne.s32.totalorder %s66, %s67
    %p79 = scmp.eq.s32.totalorder %s15, 7
    %p80 = por %p78, %p79
    %p82 = scmp.ne.s32.totalorder %s67, %s81
    %p83 = scmp.eq.s32.totalorder %s15, 0
    %p84 = por %p82, %p83
    %s85 = ssub.s32 %s9, %s16
    %p86 = scmp.eq.s32.totalorder %s85, 0
    %s88 = sadd.s32 %s87, 1
    %s89 = scalar_select %p86, %s87, %s88
    %p92 = pneg %p86
    %p93 = scmp.eq.s32.totalorder %s9, 7
    %p94 = por %p92, %p93
    %p95 = scmp.ne.s32.totalorder %s87, %s90
    %p96 = scmp.eq.s32.totalorder %s9, 0
    %p97 = por %p95, %p96
    %p98 = scmp.ne.s32.totalorder %s87, %s90
    %p99 = scmp.eq.s32.totalorder %s14, 7
    %p100 = por %p98, %p99
    %p101 = scmp.ne.s32.totalorder %s90, %s91
    %p102 = scmp.eq.s32.totalorder %s14, 0
    %p103 = por %p101, %p102
    %p104 = scmp.ne.s32.totalorder %s90, %s91
    %p105 = scmp.eq.s32.totalorder %s15, 7
    %p106 = por %p104, %p105
    %p108 = scmp.ne.s32.totalorder %s91, %s107
    %p109 = scmp.eq.s32.totalorder %s15, 0
    %p110 = por %p108, %p109
    %p111 = scmp.le.s32.totalorder 1, %s9
    %p112 = scmp.lt.s32.totalorder %s9, 9
    %p113 = pnand %p111, %p112
    %p114 = pneg %p113
    // Predicated region
    $region9: #{_lambda_.14} parent=5 // pred_check
      _
    $region10: #{_lambda_.14} parent=5 // pred_check_branch
      %116 = sbr.rel (%p113) target = $region12
    $region11: #{_lambda_.14} parent=5 // pred_region
      %s117 = ssub.s32 %s9, 1
      // Predicated region
      $region13: #{_lambda_.14} parent=11 // pred_check
        %p118 = pneg %p56
      $region14: #{_lambda_.14} parent=11 // pred_check_branch
        %120 = sbr.rel (%p118) target = $region16
      $region15: #{_lambda_.14} parent=11 // pred_region
        _
      $region16: #{_lambda_.14} parent=11 // pred_fallthru
        _
      // Predicated region
      $region17: #{_lambda_.14} parent=11 // pred_check
        %p121 = pneg %p77
      $region18: #{_lambda_.14} parent=11 // pred_check_branch
        %123 = sbr.rel (%p121) target = $region20
      $region19: #{_lambda_.14} parent=11 // pred_region
        _
      $region20: #{_lambda_.14} parent=11 // pred_fallthru
        _
    $region12: #{_lambda_.14} parent=5 // pred_fallthru
      _
    %p124 = scmp.lt.s32.totalorder %s9, 8
    // Predicated region
    $region21: #{_lambda_.14} parent=5 // pred_check
      %p125 = pneg %p124
    $region22: #{_lambda_.14} parent=5 // pred_check_branch
      %127 = sbr.rel (%p125) target = $region24
    $region23: #{_lambda_.14} parent=5 // pred_region
      // Predicated region
      $region25: #{_lambda_.14} parent=23 // pred_check
        %p128 = pneg %p29
      $region26: #{_lambda_.14} parent=23 // pred_check_branch
        %130 = sbr.rel (%p128) target = $region28
      $region27: #{_lambda_.14} parent=23 // pred_region
        %p131 = scmp.lt.s32.totalorder %s9, 7
        %s132 = scalar_select %p131, %s9, 7
        %s133 = smul.addr %s132, 15
        %s134 = smul.addr %s133, 4
        %s135 = scalar_lea.vmem %s0, %s134
      $region28: #{_lambda_.14} parent=23 // pred_fallthru
        _
    $region24: #{_lambda_.14} parent=5 // pred_fallthru
      _
    %p136 = scmp.le.s32.totalorder 1, %s9
    %p137 = scmp.lt.s32.totalorder %s9, 9
    %p138 = pnand %p136, %p137
    %p139 = pneg %p138
    // Predicated region
    $region29: #{_lambda_.14} parent=5 // pred_check
      _
    $region30: #{_lambda_.14} parent=5 // pred_check_branch
      %141 = sbr.rel (%p138) target = $region32
    $region31: #{_lambda_.14} parent=5 // pred_region
      %s142 = ssub.s32 %s9, 1
      %p143 = scmp.lt.s32.totalorder %s14, 7
      %s144 = scalar_select %p143, %s14, 7
      %s145 = smul.addr %s144, 15
      %s146 = smul.addr %s145, 4
      %s147 = scalar_lea.vmem %s0, %s146
      %p148 = pneg %p35
      %p149 = pneg %p32
      %p150 = pneg %p56
      %p151 = pneg %p53
      %p152 = pneg %p77
      %p153 = pneg %p74
      %p154 = pneg %p103
      %p155 = pneg %p100
      %p156 = scmp.lt.s32.totalorder %s14, 7
      %s157 = scalar_select %p156, %s14, 7
      %s158 = smul.addr %s157, 10
      %s159 = smul.addr %s158, 4
      %s160 = scalar_lea.vmem %s3, %s159
      %p161 = scmp.lt.s32.totalorder %s14, 7
      %s162 = scalar_select %p161, %s14, 7
      %s163 = smul.addr %s162, 15
      %s164 = smul.addr %s163, 4
      %s165 = scalar_lea.vmem %s0, %s164
      %p166 = scmp.lt.s32.totalorder %s14, 7
      %s167 = scalar_select %p166, %s14, 7
      %s168 = smul.addr %s167, 10
      %s169 = smul.addr %s168, 4
      %s170 = scalar_lea.vmem %s3, %s169
      %v172 = vld [vmem:[%s165] sm:$0xf]
      %v173 = vld [vmem:[%s165 + $0x4] sm:$0xf]
      %v174 = vld [vmem:[%s165 + $0x8] sm:$0xf]
      %v175 = vld [vmem:[%s165 + $0xc] sm:$0xf]
      %v176 = vld [vmem:[%s165 + $0x10] sm:$0xf]
      %v177 = vld [vmem:[%s165 + $0x14] sm:$0xf]
      %v178 = vld [vmem:[%s165 + $0x18] sm:$0xf]
      %v179 = vld [vmem:[%s165 + $0x1c] sm:$0xf]
      %v180 = vld [vmem:[%s165 + $0x20] sm:$0xf]
      %v181 = vld [vmem:[%s165 + $0x24] sm:$0xf]
      %v182 = vld [vmem:[%s1] sm:$0xf]
      %v183 = vld [vmem:[%s165 + $0x28] sm:$0x1]
      %s184 = scalar_lea.vmem %s1, 4
      %v185 = vld [vmem:[%s184] sm:$0xf]
      %v197 = vunpack.c.l.b16 %v172
      %v198 = vunpack.c.l.b16 %v173
      %v199 = vunpack.c.l.b16 %v174
      %v200 = vunpack.c.l.b16 %v175
      %v201 = vunpack.c.l.b16 %v176
      %v202 = vunpack.c.l.b16 %v177
      %v203 = vunpack.c.l.b16 %v178
      %v204 = vunpack.c.l.b16 %v179
      %v205 = vunpack.c.l.b16 %v180
      %v206 = vunpack.c.l.b16 %v181
      %v207 = vunpack.c.l.b16 %v183
      %v208 = vpack.c.b16 %v198, %v197
      %v209 = vpack.c.b16 %v200, %v199
      %v210 = vpack.c.b16 %v202, %v201
      %v211 = vpack.c.b16 %v204, %v203
      %v212 = vpack.c.b16 %v206, %v205
      %v213 = vpack.c.b16 %v207, %v207
      %vm214 = vsmask.f32 7424
      %v216 = vshrl.u32 %v208, 16
      %v218 = vshll.u32 %v208, 16
      %v220 = vrot.slane %v218, 1
      %v221 = vor.u32 %v216, %v220
      %v223 = vshll.u32 %v209, 16
      %v225 = vrot.slane %v223, 1
      %v226 = vsel %vm214, %v221, %v225
      %v227 = vshrl.u32 %v209, 16
      %v229 = vor.u32 %v227, %v225
      %v231 = vshll.u32 %v210, 16
      %v233 = vrot.slane %v231, 1
      %v234 = vsel %vm214, %v229, %v233
      %v235 = vshrl.u32 %v210, 16
      %v237 = vor.u32 %v235, %v233
      %v239 = vshll.u32 %v211, 16
      %v241 = vrot.slane %v239, 1
      %v242 = vsel %vm214, %v237, %v241
      %v243 = vshrl.u32 %v211, 16
      %v245 = vor.u32 %v243, %v241
      %v247 = vshll.u32 %v212, 16
      %v249 = vrot.slane %v247, 1
      %v250 = vsel %vm214, %v245, %v249
      %v251 = vshrl.u32 %v212, 16
      %v253 = vor.u32 %v251, %v249
      %v255 = vshll.u32 %v213, 16
      %v257 = vrot.slane %v255, 1
      %v258 = vsel %vm214, %v253, %v257
      %vm259 = vcmask 64512
      %v261 = vsel %vm259, %v226, 0
      %v264 = vsel %vm259, %v234, 0
      %v267 = vsel %vm259, %v242, 0
      %v270 = vsel %vm259, %v250, 0
      %v273 = vsel %vm259, %v258, 0
      %vm275 = vcmask 1043456
      %v277 = vsel %vm275, %v185, 0
      %279 = vmatprep.subr.bf16.mxu0 0
      %280 = vmatpush1.bf16.msra.mxu0 %v277
      %281 = vmatprep.subr.bf16.mxu0 0
      %282 = vmatpush1.bf16.msra.mxu0 0
      %283 = vmatprep.subr.bf16.mxu0 0
      %284 = vmatpush1.bf16.msra.mxu0 0
      %285 = vmatprep.subr.bf16.mxu0 0
      %286 = vmatpush1.bf16.msra.mxu0 0
      %287 = vmatprep.subr.bf16.mxu0 0
      %288 = vmatpush1.bf16.msra.mxu0 0
      %289 = vmatprep.subr.bf16.mxu0 0
      %290 = vmatpush1.bf16.msra.mxu0 0
      %291 = vmatprep.subr.bf16.mxu0 0
      %292 = vmatpush1.bf16.msra.mxu0 0
      %293 = vmatprep.subr.bf16.mxu0 0
      %294 = vmatpush1.bf16.msra.mxu0 0
      %295 = vmatprep.subr.bf16.mxu0 0
      %296 = vmatpush1.bf16.msra.mxu0 0
      %297 = vmatprep.subr.bf16.mxu0 0
      %298 = vmatpush1.bf16.msra.mxu0 0
      %299 = vmatprep.subr.bf16.mxu0 0
      %300 = vmatpush1.bf16.msra.mxu0 0
      %301 = vmatprep.subr.bf16.mxu0 0
      %302 = vmatpush1.bf16.msra.mxu0 0
      %303 = vmatprep.subr.bf16.mxu0 0
      %304 = vmatpush1.bf16.msra.mxu0 0
      %305 = vmatprep.subr.bf16.mxu0 0
      %306 = vmatpush1.bf16.msra.mxu0 0
      %307 = vmatprep.subr.bf16.mxu0 0
      %308 = vmatpush1.bf16.msra.mxu0 0
      %309 = vmatprep.subr.bf16.mxu0 0
      %310 = vmatpush1.bf16.msra.mxu0 0
      %311 = vmatprep.mubr.bf16.mxu0 0
      %312 = vmatmul.mubr.bf16.gmra.mrb[0].mxu0 %v261
      %v313 = vpop.f32.mrb[0].mxu0
      %v314 = vadd.f32 0.0, %v313
      %v315 = vpop.f32.mrb[0].mxu0
      %v316 = vpop.f32.mrb[0].mxu0
      %v317 = vadd.f32 0.0, %v316
      %v318 = vpop.f32.mrb[0].mxu0
      %319 = vmatprep.mubr.bf16.mxu0 0
      %320 = vmatmul.mubr.bf16.gmra.mrb[0].mxu0 %v264
      %v321 = vpop.f32.mrb[0].mxu0
      %v322 = vadd.f32 0.0, %v321
      %v323 = vpop.f32.mrb[0].mxu0
      %v324 = vpop.f32.mrb[0].mxu0
      %v325 = vadd.f32 0.0, %v324
      %v326 = vpop.f32.mrb[0].mxu0
      %327 = vmatprep.mubr.bf16.mxu0 0
      %328 = vmatmul.mubr.bf16.gmra.mrb[0].mxu0 %v267
      %v329 = vpop.f32.mrb[0].mxu0
      %v330 = vadd.f32 0.0, %v329
      %v331 = vpop.f32.mrb[0].mxu0
      %v332 = vpop.f32.mrb[0].mxu0
      %v333 = vadd.f32 0.0, %v332
      %v334 = vpop.f32.mrb[0].mxu0
      %335 = vmatprep.mubr.bf16.mxu0 0
      %336 = vmatmul.mubr.bf16.gmra.mrb[0].mxu0 %v270
      %v337 = vpop.f32.mrb[0].mxu0
      %v338 = vadd.f32 0.0, %v337
      %v339 = vpop.f32.mrb[0].mxu0
      %v340 = vpop.f32.mrb[0].mxu0
      %v341 = vadd.f32 0.0, %v340
      %v342 = vpop.f32.mrb[0].mxu0
      %343 = vmatprep.mubr.bf16.mxu0 0
      %344 = vmatmul.mubr.bf16.gmra.mrb[0].mxu0 %v273
      %v345 = vpop.f32.mrb[0].mxu0
      %v346 = vadd.f32 0.0, %v345
      %v347 = vpop.f32.mrb[0].mxu0
      %v348 = vpop.f32.mrb[0].mxu0
      %v349 = vadd.f32 0.0, %v348
      %v350 = vpop.f32.mrb[0].mxu0
      %351 = vdwg.mxu0
      %v352 = vsel %vm259, %v208, 0
      %v354 = vsel %vm259, %v209, 0
      %v356 = vsel %vm259, %v210, 0
      %v358 = vsel %vm259, %v211, 0
      %v360 = vsel %vm259, %v212, 0
      %v363 = vsel %vm275, %v182, 0
      %365 = vmatprep.subr.bf16.mxu0 0
      %366 = vmatpush1.bf16.msra.mxu0 %v363
      %367 = vmatprep.subr.bf16.mxu0 0
      %368 = vmatpush1.bf16.msra.mxu0 0
      %369 = vmatprep.subr.bf16.mxu0 0
      %370 = vmatpush1.bf16.msra.mxu0 0
      %371 = vmatprep.subr.bf16.mxu0 0
      %372 = vmatpush1.bf16.msra.mxu0 0
      %373 = vmatprep.subr.bf16.mxu0 0
      %374 = vmatpush1.bf16.msra.mxu0 0
      %375 = vmatprep.subr.bf16.mxu0 0
      %376 = vmatpush1.bf16.msra.mxu0 0
      %377 = vmatprep.subr.bf16.mxu0 0
      %378 = vmatpush1.bf16.msra.mxu0 0
      %379 = vmatprep.subr.bf16.mxu0 0
      %380 = vmatpush1.bf16.msra.mxu0 0
      %381 = vmatprep.subr.bf16.mxu0 0
      %382 = vmatpush1.bf16.msra.mxu0 0
      %383 = vmatprep.subr.bf16.mxu0 0
      %384 = vmatpush1.bf16.msra.mxu0 0
      %385 = vmatprep.subr.bf16.mxu0 0
      %386 = vmatpush1.bf16.msra.mxu0 0
      %387 = vmatprep.subr.bf16.mxu0 0
      %388 = vmatpush1.bf16.msra.mxu0 0
      %389 = vmatprep.subr.bf16.mxu0 0
      %390 = vmatpush1.bf16.msra.mxu0 0
      %391 = vmatprep.subr.bf16.mxu0 0
      %392 = vmatpush1.bf16.msra.mxu0 0
      %393 = vmatprep.subr.bf16.mxu0 0
      %394 = vmatpush1.bf16.msra.mxu0 0
      %395 = vmatprep.subr.bf16.mxu0 0
      %396 = vmatpush1.bf16.msra.mxu0 0
      %397 = vmatprep.mubr.bf16.mxu0 0
      %398 = vmatmul.mubr.bf16.gmra.mrb[0].mxu0 %v352
      %v399 = vpop.f32.mrb[0].mxu0
      %v400 = vadd.f32 %v314, %v399
      %v401 = vpop.f32.mrb[0].mxu0
      %v402 = vpop.f32.mrb[0].mxu0
      %v403 = vadd.f32 %v317, %v402
      %v404 = vpop.f32.mrb[0].mxu0
      %405 = vmatprep.mubr.bf16.mxu0 0
      %406 = vmatmul.mubr.bf16.gmra.mrb[0].mxu0 %v354
      %v407 = vpop.f32.mrb[0].mxu0
      %v408 = vadd.f32 %v322, %v407
      %v409 = vpop.f32.mrb[0].mxu0
      %v410 = vpop.f32.mrb[0].mxu0
      %v411 = vadd.f32 %v325, %v410
      %v412 = vpop.f32.mrb[0].mxu0
      %413 = vmatprep.mubr.bf16.mxu0 0
      %414 = vmatmul.mubr.bf16.gmra.mrb[0].mxu0 %v356
      %v415 = vpop.f32.mrb[0].mxu0
      %v416 = vadd.f32 %v330, %v415
      %v417 = vpop.f32.mrb[0].mxu0
      %v418 = vpop.f32.mrb[0].mxu0
      %v419 = vadd.f32 %v333, %v418
      %v420 = vpop.f32.mrb[0].mxu0
      %421 = vmatprep.mubr.bf16.mxu0 0
      %422 = vmatmul.mubr.bf16.gmra.mrb[0].mxu0 %v358
      %v423 = vpop.f32.mrb[0].mxu0
      %v424 = vadd.f32 %v338, %v423
      %v425 = vpop.f32.mrb[0].mxu0
      %v426 = vpop.f32.mrb[0].mxu0
      %v427 = vadd.f32 %v341, %v426
      %v428 = vpop.f32.mrb[0].mxu0
      %429 = vmatprep.mubr.bf16.mxu0 0
      %430 = vmatmul.mubr.bf16.gmra.mrb[0].mxu0 %v360
      %v431 = vpop.f32.mrb[0].mxu0
      %v432 = vadd.f32 %v346, %v431
      %v433 = vpop.f32.mrb[0].mxu0
      %v434 = vpop.f32.mrb[0].mxu0
      %v435 = vadd.f32 %v349, %v434
      %v436 = vpop.f32.mrb[0].mxu0
      %437 = vdwg.mxu0
      %v438 = vld [vmem:[%s165] sm:$0xe]
      %s439 = scalar_lea.vmem %s1, 8
      %v440 = vld [vmem:[%s439] sm:$0xf]
      %v442 = vunpack.c.l.b16 %v438
      %v443 = vpack.c.b16 %v198, %v442
      %vm444 = vcmask 1046528
      %v445 = vrot.slane %v443, 1
      %v446 = vrot.slane %v209, 1
      %v447 = vsel %vm444, %v445, %v446
      %v448 = vrot.slane %v210, 1
      %v449 = vsel %vm444, %v446, %v448
      %v450 = vrot.slane %v211, 1
      %v451 = vsel %vm444, %v448, %v450
      %v452 = vrot.slane %v212, 1
      %v453 = vsel %vm444, %v450, %v452
      %v454 = vrot.slane %v213, 1
      %v455 = vsel %vm444, %v452, %v454
      %v457 = vsel %vm259, %v447, 0
      %v460 = vsel %vm259, %v449, 0
      %v463 = vsel %vm259, %v451, 0
      %v466 = vsel %vm259, %v453, 0
      %v469 = vsel %vm259, %v455, 0
      %v472 = vsel %vm275, %v440, 0
      %474 = vmatprep.subr.bf16.mxu0 0
      %475 = vmatpush1.bf16.msra.mxu0 %v472
      %476 = vmatprep.subr.bf16.mxu0 0
      %477 = vmatpush1.bf16.msra.mxu0 0
      %478 = vmatprep.subr.bf16.mxu0 0
      %479 = vmatpush1.bf16.msra.mxu0 0
      %480 = vmatprep.subr.bf16.mxu0 0
      %481 = vmatpush1.bf16.msra.mxu0 0
      %482 = vmatprep.subr.bf16.mxu0 0
      %483 = vmatpush1.bf16.msra.mxu0 0
      %484 = vmatprep.subr.bf16.mxu0 0
      %485 = vmatpush1.bf16.msra.mxu0 0
      %486 = vmatprep.subr.bf16.mxu0 0
      %487 = vmatpush1.bf16.msra.mxu0 0
      %488 = vmatprep.subr.bf16.mxu0 0
      %489 = vmatpush1.bf16.msra.mxu0 0
      %490 = vmatprep.subr.bf16.mxu0 0
      %491 = vmatpush1.bf16.msra.mxu0 0
      %492 = vmatprep.subr.bf16.mxu0 0
      %493 = vmatpush1.bf16.msra.mxu0 0
      %494 = vmatprep.subr.bf16.mxu0 0
      %495 = vmatpush1.bf16.msra.mxu0 0
      %496 = vmatprep.subr.bf16.mxu0 0
      %497 = vmatpush1.bf16.msra.mxu0 0
      %498 = vmatprep.subr.bf16.mxu0 0
      %499 = vmatpush1.bf16.msra.mxu0 0
      %500 = vmatprep.subr.bf16.mxu0 0
      %501 = vmatpush1.bf16.msra.mxu0 0
      %502 = vmatprep.subr.bf16.mxu0 0
      %503 = vmatpush1.bf16.msra.mxu0 0
      %504 = vmatprep.subr.bf16.mxu0 0
      %505 = vmatpush1.bf16.msra.mxu0 0
      %506 = vmatprep.mubr.bf16.mxu0 0
      %507 = vmatmul.mubr.bf16.gmra.mrb[0].mxu0 %v457
      %v508 = vpop.f32.mrb[0].mxu0
      %v509 = vadd.f32 0.0, %v508
      %v510 = vpop.f32.mrb[0].mxu0
      %v511 = vpop.f32.mrb[0].mxu0
      %v512 = vadd.f32 0.0, %v511
      %v513 = vpop.f32.mrb[0].mxu0
      %514 = vmatprep.mubr.bf16.mxu0 0
      %515 = vmatmul.mubr.bf16.gmra.mrb[0].mxu0 %v460
      %v516 = vpop.f32.mrb[0].mxu0
      %v517 = vadd.f32 0.0, %v516
      %v518 = vpop.f32.mrb[0].mxu0
      %v519 = vpop.f32.mrb[0].mxu0
      %v520 = vadd.f32 0.0, %v519
      %v521 = vpop.f32.mrb[0].mxu0
      %522 = vmatprep.mubr.bf16.mxu0 0
      %523 = vmatmul.mubr.bf16.gmra.mrb[0].mxu0 %v463
      %v524 = vpop.f32.mrb[0].mxu0
      %v525 = vadd.f32 0.0, %v524
      %v526 = vpop.f32.mrb[0].mxu0
      %v527 = vpop.f32.mrb[0].mxu0
      %v528 = vadd.f32 0.0, %v527
      %v529 = vpop.f32.mrb[0].mxu0
      %530 = vmatprep.mubr.bf16.mxu0 0
      %531 = vmatmul.mubr.bf16.gmra.mrb[0].mxu0 %v466
      %v532 = vpop.f32.mrb[0].mxu0
      %v533 = vadd.f32 0.0, %v532
      %v534 = vpop.f32.mrb[0].mxu0
      %v535 = vpop.f32.mrb[0].mxu0
      %v536 = vadd.f32 0.0, %v535
      %v537 = vpop.f32.mrb[0].mxu0
      %538 = vmatprep.mubr.bf16.mxu0 0
      %539 = vmatmul.mubr.bf16.gmra.mrb[0].mxu0 %v469
      %v540 = vpop.f32.mrb[0].mxu0
      %v541 = vadd.f32 0.0, %v540
      %v542 = vpop.f32.mrb[0].mxu0
      %v543 = vpop.f32.mrb[0].mxu0
      %v544 = vadd.f32 0.0, %v543
      %v545 = vpop.f32.mrb[0].mxu0
      %546 = vdwg.mxu0
      %v547 = vadd.f32 %v400, %v509
      %v548 = vadd.f32 %v403, %v512
      %v549 = vadd.f32 %v408, %v517
      %v550 = vadd.f32 %v411, %v520
      %v551 = vadd.f32 %v416, %v525
      %v552 = vadd.f32 %v419, %v528
      %v553 = vadd.f32 %v424, %v533
      %v554 = vadd.f32 %v427, %v536
      %v555 = vadd.f32 %v432, %v541
      %v556 = vadd.f32 %v435, %v544
      %v557 = vld [vmem:[%s165 + $0x4] sm:$0xe]
      %v558 = vld [vmem:[%s165 + $0x8] sm:$0xf]
      %v559 = vld [vmem:[%s165 + $0xc] sm:$0xf]
      %v560 = vld [vmem:[%s165 + $0x10] sm:$0xf]
      %v561 = vld [vmem:[%s165 + $0x14] sm:$0xf]
      %v562 = vld [vmem:[%s165 + $0x18] sm:$0xf]
      %v563 = vld [vmem:[%s165 + $0x1c] sm:$0xf]
      %v564 = vld [vmem:[%s165 + $0x20] sm:$0xf]
      %v565 = vld [vmem:[%s165 + $0x24] sm:$0xf]
      %v566 = vld [vmem:[%s165 + $0x28] sm:$0xf]
      %v567 = vld [vmem:[%s165 + $0x2c] sm:$0x1]
      %s568 = scalar_lea.vmem %s1, 12
      %v569 = vld [vmem:[%s568] sm:$0xf]
      %v581 = vunpack.c.l.b16 %v557
      %v582 = vunpack.c.l.b16 %v558
      %v583 = vunpack.c.l.b16 %v559
      %v584 = vunpack.c.l.b16 %v560
      %v585 = vunpack.c.l.b16 %v561
      %v586 = vunpack.c.l.b16 %v562
      %v587 = vunpack.c.l.b16 %v563
      %v588 = vunpack.c.l.b16 %v564
      %v589 = vunpack.c.l.b16 %v565
      %v590 = vunpack.c.l.b16 %v566
      %v591 = vunpack.c.l.b16 %v567
      %v592 = vpack.c.b16 %v582, %v581
      %v593 = vpack.c.b16 %v584, %v583
      %v594 = vpack.c.b16 %v586, %v585
      %v595 = vpack.c.b16 %v588, %v587
      %v596 = vpack.c.b16 %v590, %v589
      %v597 = vpack.c.b16 %v591, %v591
      %v598 = vrot.slane %v592, 1
      %v599 = vrot.slane %v593, 1
      %v600 = vsel %vm444, %v598, %v599
      %v601 = vrot.slane %v594, 1
      %v602 = vsel %vm444, %v599, %v601
      %v603 = vrot.slane %v595, 1
      %v604 = vsel %vm444, %v601, %v603
      %v605 = vrot.slane %v596, 1
      %v606 = vsel %vm444, %v603, %v605
      %v607 = vrot.slane %v597, 1
      %v608 = vsel %vm444, %v605, %v607
      %v610 = vsel %vm259, %v600, 0
      %v613 = vsel %vm259, %v602, 0
      %v616 = vsel %vm259, %v604, 0
      %v619 = vsel %vm259, %v606, 0
      %v622 = vsel %vm259, %v608, 0
      %v625 = vsel %vm275, %v569, 0
      %627 = vmatprep.subr.bf16.mxu0 0
      %628 = vmatpush1.bf16.msra.mxu0 %v625
      %629 = vmatprep.subr.bf16.mxu0 0
      %630 = vmatpush1.bf16.msra.mxu0 0
      %631 = vmatprep.subr.bf16.mxu0 0
      %632 = vmatpush1.bf16.msra.mxu0 0
      %633 = vmatprep.subr.bf16.mxu0 0
      %634 = vmatpush1.bf16.msra.mxu0 0
      %635 = vmatprep.subr.bf16.mxu0 0
      %636 = vmatpush1.bf16.msra.mxu0 0
      %637 = vmatprep.subr.bf16.mxu0 0
      %638 = vmatpush1.bf16.msra.mxu0 0
      %639 = vmatprep.subr.bf16.mxu0 0
      %640 = vmatpush1.bf16.msra.mxu0 0
      %641 = vmatprep.subr.bf16.mxu0 0
      %642 = vmatpush1.bf16.msra.mxu0 0
      %643 = vmatprep.subr.bf16.mxu0 0
      %644 = vmatpush1.bf16.msra.mxu0 0
      %645 = vmatprep.subr.bf16.mxu0 0
      %646 = vmatpush1.bf16.msra.mxu0 0
      %647 = vmatprep.subr.bf16.mxu0 0
      %648 = vmatpush1.bf16.msra.mxu0 0
      %649 = vmatprep.subr.bf16.mxu0 0
      %650 = vmatpush1.bf16.msra.mxu0 0
      %651 = vmatprep.subr.bf16.mxu0 0
      %652 = vmatpush1.bf16.msra.mxu0 0
      %653 = vmatprep.subr.bf16.mxu0 0
      %654 = vmatpush1.bf16.msra.mxu0 0
      %655 = vmatprep.subr.bf16.mxu0 0
      %656 = vmatpush1.bf16.msra.mxu0 0
      %657 = vmatprep.subr.bf16.mxu0 0
      %658 = vmatpush1.bf16.msra.mxu0 0
      %659 = vmatprep.mubr.bf16.mxu0 0
      %660 = vmatmul.mubr.bf16.gmra.mrb[0].mxu0 %v610
      %v661 = vpop.f32.mrb[0].mxu0
      %v662 = vadd.f32 0.0, %v661
      %v663 = vpop.f32.mrb[0].mxu0
      %v664 = vpop.f32.mrb[0].mxu0
      %v665 = vadd.f32 0.0, %v664
      %v666 = vpop.f32.mrb[0].mxu0
      %667 = vmatprep.mubr.bf16.mxu0 0
      %668 = vmatmul.mubr.bf16.gmra.mrb[0].mxu0 %v613
      %v669 = vpop.f32.mrb[0].mxu0
      %v670 = vadd.f32 0.0, %v669
      %v671 = vpop.f32.mrb[0].mxu0
      %v672 = vpop.f32.mrb[0].mxu0
      %v673 = vadd.f32 0.0, %v672
      %v674 = vpop.f32.mrb[0].mxu0
      %675 = vmatprep.mubr.bf16.mxu0 0
      %676 = vmatmul.mubr.bf16.gmra.mrb[0].mxu0 %v616
      %v677 = vpop.f32.mrb[0].mxu0
      %v678 = vadd.f32 0.0, %v677
      %v679 = vpop.f32.mrb[0].mxu0
      %v680 = vpop.f32.mrb[0].mxu0
      %v681 = vadd.f32 0.0, %v680
      %v682 = vpop.f32.mrb[0].mxu0
      %683 = vmatprep.mubr.bf16.mxu0 0
      %684 = vmatmul.mubr.bf16.gmra.mrb[0].mxu0 %v619
      %v685 = vpop.f32.mrb[0].mxu0
      %v686 = vadd.f32 0.0, %v685
      %v687 = vpop.f32.mrb[0].mxu0
      %v688 = vpop.f32.mrb[0].mxu0
      %v689 = vadd.f32 0.0, %v688
      %v690 = vpop.f32.mrb[0].mxu0
      %691 = vmatprep.mubr.bf16.mxu0 0
      %692 = vmatmul.mubr.bf16.gmra.mrb[0].mxu0 %v622
      %v693 = vpop.f32.mrb[0].mxu0
      %v694 = vadd.f32 0.0, %v693
      %v695 = vpop.f32.mrb[0].mxu0
      %v696 = vpop.f32.mrb[0].mxu0
      %v697 = vadd.f32 0.0, %v696
      %v698 = vpop.f32.mrb[0].mxu0
      %699 = vdwg.mxu0
      %v700 = vadd.f32 %v547, %v662
      %v701 = vadd.f32 %v548, %v665
      %v702 = vadd.f32 %v549, %v670
      %v703 = vadd.f32 %v550, %v673
      %v704 = vadd.f32 %v551, %v678
      %v705 = vadd.f32 %v552, %v681
      %v706 = vadd.f32 %v553, %v686
      %v707 = vadd.f32 %v554, %v689
      %v708 = vadd.f32 %v555, %v694
      %v709 = vadd.f32 %v556, %v697
      %v710 = vld [vmem:[%s165 + $0x2c] sm:$0x3]
      %s711 = scalar_lea.vmem %s1, 16
      %v712 = vld [vmem:[%s711] sm:$0xf]
      %v714 = vunpack.c.l.b16 %v710
      %v715 = vpack.c.b16 %v714, %v714
      %vm716 = vsmask.f32 6400
      %v718 = vshrl.u32 %v592, 16
      %v720 = vrot.slane %v718, 1
      %v721 = vshll.u32 %v592, 16
      %v723 = vrot.slane %v721, 2
      %v724 = vor.u32 %v720, %v723
      %v726 = vshrl.u32 %v593, 16
      %v728 = vrot.slane %v726, 1
      %v729 = vshll.u32 %v593, 16
      %v731 = vrot.slane %v729, 2
      %v732 = vor.u32 %v728, %v731
      %v733 = vsel %vm716, %v724, %v732
      %v735 = vshrl.u32 %v594, 16
      %v737 = vrot.slane %v735, 1
      %v738 = vshll.u32 %v594, 16
      %v740 = vrot.slane %v738, 2
      %v741 = vor.u32 %v737, %v740
      %v742 = vsel %vm716, %v732, %v741
      %v744 = vshrl.u32 %v595, 16
      %v746 = vrot.slane %v744, 1
      %v747 = vshll.u32 %v595, 16
      %v749 = vrot.slane %v747, 2
      %v750 = vor.u32 %v746, %v749
      %v751 = vsel %vm716, %v741, %v750
      %v753 = vshrl.u32 %v596, 16
      %v755 = vrot.slane %v753, 1
      %v756 = vshll.u32 %v596, 16
      %v758 = vrot.slane %v756, 2
      %v759 = vor.u32 %v755, %v758
      %v760 = vsel %vm716, %v750, %v759
      %v762 = vshrl.u32 %v715, 16
      %v764 = vrot.slane %v762, 1
      %v765 = vshll.u32 %v715, 16
      %v767 = vrot.slane %v765, 2
      %v768 = vor.u32 %v764, %v767
      %v769 = vsel %vm716, %v759, %v768
      %v771 = vsel %vm259, %v733, 0
      %v774 = vsel %vm259, %v742, 0
      %v777 = vsel %vm259, %v751, 0
      %v780 = vsel %vm259, %v760, 0
      %v783 = vsel %vm259, %v769, 0
      %v786 = vsel %vm275, %v712, 0
      %788 = vmatprep.subr.bf16.mxu0 0
      %789 = vmatpush1.bf16.msra.mxu0 %v786
      %790 = vmatprep.subr.bf16.mxu0 0
      %791 = vmatpush1.bf16.msra.mxu0 0
      %792 = vmatprep.subr.bf16.mxu0 0
      %793 = vmatpush1.bf16.msra.mxu0 0
      %794 = vmatprep.subr.bf16.mxu0 0
      %795 = vmatpush1.bf16.msra.mxu0 0
      %796 = vmatprep.subr.bf16.mxu0 0
      %797 = vmatpush1.bf16.msra.mxu0 0
      %798 = vmatprep.subr.bf16.mxu0 0
      %799 = vmatpush1.bf16.msra.mxu0 0
      %800 = vmatprep.subr.bf16.mxu0 0
      %801 = vmatpush1.bf16.msra.mxu0 0
      %802 = vmatprep.subr.bf16.mxu0 0
      %803 = vmatpush1.bf16.msra.mxu0 0
      %804 = vmatprep.subr.bf16.mxu0 0
      %805 = vmatpush1.bf16.msra.mxu0 0
      %806 = vmatprep.subr.bf16.mxu0 0
      %807 = vmatpush1.bf16.msra.mxu0 0
      %808 = vmatprep.subr.bf16.mxu0 0
      %809 = vmatpush1.bf16.msra.mxu0 0
      %810 = vmatprep.subr.bf16.mxu0 0
      %811 = vmatpush1.bf16.msra.mxu0 0
      %812 = vmatprep.subr.bf16.mxu0 0
      %813 = vmatpush1.bf16.msra.mxu0 0
      %814 = vmatprep.subr.bf16.mxu0 0
      %815 = vmatpush1.bf16.msra.mxu0 0
      %816 = vmatprep.subr.bf16.mxu0 0
      %817 = vmatpush1.bf16.msra.mxu0 0
      %818 = vmatprep.subr.bf16.mxu0 0
      %819 = vmatpush1.bf16.msra.mxu0 0
      %820 = vmatprep.mubr.bf16.mxu0 0
      %821 = vmatmul.mubr.bf16.gmra.mrb[0].mxu0 %v771
      %v822 = vpop.f32.mrb[0].mxu0
      %v823 = vadd.f32 0.0, %v822
      %v824 = vpop.f32.mrb[0].mxu0
      %v825 = vpop.f32.mrb[0].mxu0
      %v826 = vadd.f32 0.0, %v825
      %v827 = vpop.f32.mrb[0].mxu0
      %828 = vmatprep.mubr.bf16.mxu0 0
      %829 = vmatmul.mubr.bf16.gmra.mrb[0].mxu0 %v774
      %v830 = vpop.f32.mrb[0].mxu0
      %v831 = vadd.f32 0.0, %v830
      %v832 = vpop.f32.mrb[0].mxu0
      %v833 = vpop.f32.mrb[0].mxu0
      %v834 = vadd.f32 0.0, %v833
      %v835 = vpop.f32.mrb[0].mxu0
      %836 = vmatprep.mubr.bf16.mxu0 0
      %837 = vmatmul.mubr.bf16.gmra.mrb[0].mxu0 %v777
      %v838 = vpop.f32.mrb[0].mxu0
      %v839 = vadd.f32 0.0, %v838
      %v840 = vpop.f32.mrb[0].mxu0
      %v841 = vpop.f32.mrb[0].mxu0
      %v842 = vadd.f32 0.0, %v841
      %v843 = vpop.f32.mrb[0].mxu0
      %844 = vmatprep.mubr.bf16.mxu0 0
      %845 = vmatmul.mubr.bf16.gmra.mrb[0].mxu0 %v780
      %v846 = vpop.f32.mrb[0].mxu0
      %v847 = vadd.f32 0.0, %v846
      %v848 = vpop.f32.mrb[0].mxu0
      %v849 = vpop.f32.mrb[0].mxu0
      %v850 = vadd.f32 0.0, %v849
      %v851 = vpop.f32.mrb[0].mxu0
      %852 = vmatprep.mubr.bf16.mxu0 0
      %853 = vmatmul.mubr.bf16.gmra.mrb[0].mxu0 %v783
      %v854 = vpop.f32.mrb[0].mxu0
      %v855 = vadd.f32 0.0, %v854
      %v856 = vpop.f32.mrb[0].mxu0
      %v857 = vpop.f32.mrb[0].mxu0
      %v858 = vadd.f32 0.0, %v857
      %v859 = vpop.f32.mrb[0].mxu0
      %860 = vdwg.mxu0
      %v861 = vadd.f32 %v700, %v823
      %v862 = vadd.f32 %v701, %v826
      %v863 = vadd.f32 %v702, %v831
      %v864 = vadd.f32 %v703, %v834
      %v865 = vadd.f32 %v704, %v839
      %v866 = vadd.f32 %v705, %v842
      %v867 = vadd.f32 %v706, %v847
      %v868 = vadd.f32 %v707, %v850
      %v869 = vadd.f32 %v708, %v855
      %v870 = vadd.f32 %v709, %v858
      %v871 = vld [vmem:[%s165 + $0x4] sm:$0xc]
      %s872 = scalar_lea.vmem %s1, 20
      %v873 = vld [vmem:[%s872] sm:$0xf]
      %v875 = vunpack.c.l.b16 %v871
      %v876 = vpack.c.b16 %v582, %v875
      %vm877 = vcmask 1045504
      %v878 = vrot.slane %v876, 2
      %v879 = vrot.slane %v593, 2
      %v880 = vsel %vm877, %v878, %v879
      %v881 = vrot.slane %v594, 2
      %v882 = vsel %vm877, %v879, %v881
      %v883 = vrot.slane %v595, 2
      %v884 = vsel %vm877, %v881, %v883
      %v885 = vrot.slane %v596, 2
      %v886 = vsel %vm877, %v883, %v885
      %v887 = vrot.slane %v715, 2
      %v888 = vsel %vm877, %v885, %v887
      %v890 = vsel %vm259, %v880, 0
      %v893 = vsel %vm259, %v882, 0
      %v896 = vsel %vm259, %v884, 0
      %v899 = vsel %vm259, %v886, 0
      %v902 = vsel %vm259, %v888, 0
      %v905 = vsel %vm275, %v873, 0
      %907 = vmatprep.subr.bf16.mxu0 0
      %908 = vmatpush1.bf16.msra.mxu0 %v905
      %909 = vmatprep.subr.bf16.mxu0 0
      %910 = vmatpush1.bf16.msra.mxu0 0
      %911 = vmatprep.subr.bf16.mxu0 0
      %912 = vmatpush1.bf16.msra.mxu0 0
      %913 = vmatprep.subr.bf16.mxu0 0
      %914 = vmatpush1.bf16.msra.mxu0 0
      %915 = vmatprep.subr.bf16.mxu0 0
      %916 = vmatpush1.bf16.msra.mxu0 0
      %917 = vmatprep.subr.bf16.mxu0 0
      %918 = vmatpush1.bf16.msra.mxu0 0
      %919 = vmatprep.subr.bf16.mxu0 0
      %920 = vmatpush1.bf16.msra.mxu0 0
      %921 = vmatprep.subr.bf16.mxu0 0
      %922 = vmatpush1.bf16.msra.mxu0 0
      %923 = vmatprep.subr.bf16.mxu0 0
      %924 = vmatpush1.bf16.msra.mxu0 0
      %925 = vmatprep.subr.bf16.mxu0 0
      %926 = vmatpush1.bf16.msra.mxu0 0
      %927 = vmatprep.subr.bf16.mxu0 0
      %928 = vmatpush1.bf16.msra.mxu0 0
      %929 = vmatprep.subr.bf16.mxu0 0
      %930 = vmatpush1.bf16.msra.mxu0 0
      %931 = vmatprep.subr.bf16.mxu0 0
      %932 = vmatpush1.bf16.msra.mxu0 0
      %933 = vmatprep.subr.bf16.mxu0 0
      %934 = vmatpush1.bf16.msra.mxu0 0
      %935 = vmatprep.subr.bf16.mxu0 0
      %936 = vmatpush1.bf16.msra.mxu0 0
      %937 = vmatprep.subr.bf16.mxu0 0
      %938 = vmatpush1.bf16.msra.mxu0 0
      %939 = vmatprep.mubr.bf16.mxu0 0
      %940 = vmatmul.mubr.bf16.gmra.mrb[0].mxu0 %v890
      %v941 = vpop.f32.mrb[0].mxu0
      %v942 = vadd.f32 0.0, %v941
      %v943 = vpop.f32.mrb[0].mxu0
      %v944 = vpop.f32.mrb[0].mxu0
      %v945 = vadd.f32 0.0, %v944
      %v946 = vpop.f32.mrb[0].mxu0
      %947 = vmatprep.mubr.bf16.mxu0 0
      %948 = vmatmul.mubr.bf16.gmra.mrb[0].mxu0 %v893
      %v949 = vpop.f32.mrb[0].mxu0
      %v950 = vadd.f32 0.0, %v949
      %v951 = vpop.f32.mrb[0].mxu0
      %v952 = vpop.f32.mrb[0].mxu0
      %v953 = vadd.f32 0.0, %v952
      %v954 = vpop.f32.mrb[0].mxu0
      %955 = vmatprep.mubr.bf16.mxu0 0
      %956 = vmatmul.mubr.bf16.gmra.mrb[0].mxu0 %v896
      %v957 = vpop.f32.mrb[0].mxu0
      %v958 = vadd.f32 0.0, %v957
      %v959 = vpop.f32.mrb[0].mxu0
      %v960 = vpop.f32.mrb[0].mxu0
      %v961 = vadd.f32 0.0, %v960
      %v962 = vpop.f32.mrb[0].mxu0
      %963 = vmatprep.mubr.bf16.mxu0 0
      %964 = vmatmul.mubr.bf16.gmra.mrb[0].mxu0 %v899
      %v965 = vpop.f32.mrb[0].mxu0
      %v966 = vadd.f32 0.0, %v965
      %v967 = vpop.f32.mrb[0].mxu0
      %v968 = vpop.f32.mrb[0].mxu0
      %v969 = vadd.f32 0.0, %v968
      %v970 = vpop.f32.mrb[0].mxu0
      %971 = vmatprep.mubr.bf16.mxu0 0
      %972 = vmatmul.mubr.bf16.gmra.mrb[0].mxu0 %v902
      %v973 = vpop.f32.mrb[0].mxu0
      %v974 = vadd.f32 0.0, %v973
      %v975 = vpop.f32.mrb[0].mxu0
      %v976 = vpop.f32.mrb[0].mxu0
      %v977 = vadd.f32 0.0, %v976
      %v978 = vpop.f32.mrb[0].mxu0
      %979 = vdwg.mxu0
      %v980 = vadd.f32 %v861, %v942
      %v981 = vadd.f32 %v862, %v945
      %v982 = vadd.f32 %v863, %v950
      %v983 = vadd.f32 %v864, %v953
      %v984 = vadd.f32 %v865, %v958
      %v985 = vadd.f32 %v866, %v961
      %v986 = vadd.f32 %v867, %v966
      %v987 = vadd.f32 %v868, %v969
      %v988 = vadd.f32 %v869, %v974
      %v989 = vadd.f32 %v870, %v977
      %v990 = vld [vmem:[%s165 + $0x8] sm:$0xc]
      %v991 = vld [vmem:[%s165 + $0xc] sm:$0xf]
      %v992 = vld [vmem:[%s165 + $0x10] sm:$0xf]
      %v993 = vld [vmem:[%s165 + $0x14] sm:$0xf]
      %v994 = vld [vmem:[%s165 + $0x18] sm:$0xf]
      %v995 = vld [vmem:[%s165 + $0x1c] sm:$0xf]
      %v996 = vld [vmem:[%s165 + $0x20] sm:$0xf]
      %v997 = vld [vmem:[%s165 + $0x24] sm:$0xf]
      %v998 = vld [vmem:[%s165 + $0x28] sm:$0xf]
      %v999 = vld [vmem:[%s165 + $0x2c] sm:$0xf]
      %v1000 = vld [vmem:[%s165 + $0x30] sm:$0x3]
      %s1001 = scalar_lea.vmem %s1, 24
      %v1002 = vld [vmem:[%s1001] sm:$0xf]
      %v1014 = vunpack.c.l.b16 %v990
      %v1015 = vunpack.c.l.b16 %v991
      %v1016 = vunpack.c.l.b16 %v992
      %v1017 = vunpack.c.l.b16 %v993
      %v1018 = vunpack.c.l.b16 %v994
      %v1019 = vunpack.c.l.b16 %v995
      %v1020 = vunpack.c.l.b16 %v996
      %v1021 = vunpack.c.l.b16 %v997
      %v1022 = vunpack.c.l.b16 %v998
      %v1023 = vunpack.c.l.b16 %v999
      %v1024 = vunpack.c.l.b16 %v1000
      %v1025 = vpack.c.b16 %v1015, %v1014
      %v1026 = vpack.c.b16 %v1017, %v1016
      %v1027 = vpack.c.b16 %v1019, %v1018
      %v1028 = vpack.c.b16 %v1021, %v1020
      %v1029 = vpack.c.b16 %v1023, %v1022
      %v1030 = vpack.c.b16 %v1024, %v1024
      %v1031 = vrot.slane %v1025, 2
      %v1032 = vrot.slane %v1026, 2
      %v1033 = vsel %vm877, %v1031, %v1032
      %v1034 = vrot.slane %v1027, 2
      %v1035 = vsel %vm877, %v1032, %v1034
      %v1036 = vrot.slane %v1028, 2
      %v1037 = vsel %vm877, %v1034, %v1036
      %v1038 = vrot.slane %v1029, 2
      %v1039 = vsel %vm877, %v1036, %v1038
      %v1040 = vrot.slane %v1030, 2
      %v1041 = vsel %vm877, %v1038, %v1040
      %v1043 = vsel %vm259, %v1033, 0
      %v1046 = vsel %vm259, %v1035, 0
      %v1049 = vsel %vm259, %v1037, 0
      %v1052 = vsel %vm259, %v1039, 0
      %v1055 = vsel %vm259, %v1041, 0
      %v1058 = vsel %vm275, %v1002, 0
      %1060 = vmatprep.subr.bf16.mxu0 0
      %1061 = vmatpush1.bf16.msra.mxu0 %v1058
      %1062 = vmatprep.subr.bf16.mxu0 0
      %1063 = vmatpush1.bf16.msra.mxu0 0
      %1064 = vmatprep.subr.bf16.mxu0 0
      %1065 = vmatpush1.bf16.msra.mxu0 0
      %1066 = vmatprep.subr.bf16.mxu0 0
      %1067 = vmatpush1.bf16.msra.mxu0 0
      %1068 = vmatprep.subr.bf16.mxu0 0
      %1069 = vmatpush1.bf16.msra.mxu0 0
      %1070 = vmatprep.subr.bf16.mxu0 0
      %1071 = vmatpush1.bf16.msra.mxu0 0
      %1072 = vmatprep.subr.bf16.mxu0 0
      %1073 = vmatpush1.bf16.msra.mxu0 0
      %1074 = vmatprep.subr.bf16.mxu0 0
      %1075 = vmatpush1.bf16.msra.mxu0 0
      %1076 = vmatprep.subr.bf16.mxu0 0
      %1077 = vmatpush1.bf16.msra.mxu0 0
      %1078 = vmatprep.subr.bf16.mxu0 0
      %1079 = vmatpush1.bf16.msra.mxu0 0
      %1080 = vmatprep.subr.bf16.mxu0 0
      %1081 = vmatpush1.bf16.msra.mxu0 0
      %1082 = vmatprep.subr.bf16.mxu0 0
      %1083 = vmatpush1.bf16.msra.mxu0 0
      %1084 = vmatprep.subr.bf16.mxu0 0
      %1085 = vmatpush1.bf16.msra.mxu0 0
      %1086 = vmatprep.subr.bf16.mxu0 0
      %1087 = vmatpush1.bf16.msra.mxu0 0
      %1088 = vmatprep.subr.bf16.mxu0 0
      %1089 = vmatpush1.bf16.msra.mxu0 0
      %1090 = vmatprep.subr.bf16.mxu0 0
      %1091 = vmatpush1.bf16.msra.mxu0 0
      %1092 = vmatprep.mubr.bf16.mxu0 0
      %1093 = vmatmul.mubr.bf16.gmra.mrb[0].mxu0 %v1043
      %v1094 = vpop.f32.mrb[0].mxu0
      %v1095 = vadd.f32 0.0, %v1094
      %v1096 = vpop.f32.mrb[0].mxu0
      %v1097 = vpop.f32.mrb[0].mxu0
      %v1098 = vadd.f32 0.0, %v1097
      %v1099 = vpop.f32.mrb[0].mxu0
      %1100 = vmatprep.mubr.bf16.mxu0 0
      %1101 = vmatmul.mubr.bf16.gmra.mrb[0].mxu0 %v1046
      %v1102 = vpop.f32.mrb[0].mxu0
      %v1103 = vadd.f32 0.0, %v1102
      %v1104 = vpop.f32.mrb[0].mxu0
      %v1105 = vpop.f32.mrb[0].mxu0
      %v1106 = vadd.f32 0.0, %v1105
      %v1107 = vpop.f32.mrb[0].mxu0
      %1108 = vmatprep.mubr.bf16.mxu0 0
      %1109 = vmatmul.mubr.bf16.gmra.mrb[0].mxu0 %v1049
      %v1110 = vpop.f32.mrb[0].mxu0
      %v1111 = vadd.f32 0.0, %v1110
      %v1112 = vpop.f32.mrb[0].mxu0
      %v1113 = vpop.f32.mrb[0].mxu0
      %v1114 = vadd.f32 0.0, %v1113
      %v1115 = vpop.f32.mrb[0].mxu0
      %1116 = vmatprep.mubr.bf16.mxu0 0
      %1117 = vmatmul.mubr.bf16.gmra.mrb[0].mxu0 %v1052
      %v1118 = vpop.f32.mrb[0].mxu0
      %v1119 = vadd.f32 0.0, %v1118
      %v1120 = vpop.f32.mrb[0].mxu0
      %v1121 = vpop.f32.mrb[0].mxu0
      %v1122 = vadd.f32 0.0, %v1121
      %v1123 = vpop.f32.mrb[0].mxu0
      %1124 = vmatprep.mubr.bf16.mxu0 0
      %1125 = vmatmul.mubr.bf16.gmra.mrb[0].mxu0 %v1055
      %v1126 = vpop.f32.mrb[0].mxu0
      %v1127 = vadd.f32 0.0, %v1126
      %v1128 = vpop.f32.mrb[0].mxu0
      %v1129 = vpop.f32.mrb[0].mxu0
      %v1130 = vadd.f32 0.0, %v1129
      %v1131 = vpop.f32.mrb[0].mxu0
      %1132 = vdwg.mxu0
      %v1133 = vadd.f32 %v980, %v1095
      %v1134 = vadd.f32 %v981, %v1098
      %v1135 = vadd.f32 %v982, %v1103
      %v1136 = vadd.f32 %v983, %v1106
      %v1137 = vadd.f32 %v984, %v1111
      %v1138 = vadd.f32 %v985, %v1114
      %v1139 = vadd.f32 %v986, %v1119
      %v1140 = vadd.f32 %v987, %v1122
      %v1141 = vadd.f32 %v988, %v1127
      %v1142 = vadd.f32 %v989, %v1130
      %v1143 = vld [vmem:[%s165 + $0x30] sm:$0x7]
      %s1144 = scalar_lea.vmem %s1, 28
      %v1145 = vld [vmem:[%s1144] sm:$0xf]
      %v1147 = vunpack.c.l.b16 %v1143
      %v1148 = vpack.c.b16 %v1147, %v1147
      %vm1149 = vsmask.f32 5376
      %v1151 = vshrl.u32 %v1025, 16
      %v1153 = vrot.slane %v1151, 2
      %v1154 = vshll.u32 %v1025, 16
      %v1156 = vrot.slane %v1154, 3
      %v1157 = vor.u32 %v1153, %v1156
      %v1159 = vshrl.u32 %v1026, 16
      %v1161 = vrot.slane %v1159, 2
      %v1162 = vshll.u32 %v1026, 16
      %v1164 = vrot.slane %v1162, 3
      %v1165 = vor.u32 %v1161, %v1164
      %v1166 = vsel %vm1149, %v1157, %v1165
      %v1168 = vshrl.u32 %v1027, 16
      %v1170 = vrot.slane %v1168, 2
      %v1171 = vshll.u32 %v1027, 16
      %v1173 = vrot.slane %v1171, 3
      %v1174 = vor.u32 %v1170, %v1173
      %v1175 = vsel %vm1149, %v1165, %v1174
      %v1177 = vshrl.u32 %v1028, 16
      %v1179 = vrot.slane %v1177, 2
      %v1180 = vshll.u32 %v1028, 16
      %v1182 = vrot.slane %v1180, 3
      %v1183 = vor.u32 %v1179, %v1182
      %v1184 = vsel %vm1149, %v1174, %v1183
      %v1186 = vshrl.u32 %v1029, 16
      %v1188 = vrot.slane %v1186, 2
      %v1189 = vshll.u32 %v1029, 16
      %v1191 = vrot.slane %v1189, 3
      %v1192 = vor.u32 %v1188, %v1191
      %v1193 = vsel %vm1149, %v1183, %v1192
      %v1195 = vshrl.u32 %v1148, 16
      %v1197 = vrot.slane %v1195, 2
      %v1198 = vshll.u32 %v1148, 16
      %v1200 = vrot.slane %v1198, 3
      %v1201 = vor.u32 %v1197, %v1200
      %v1202 = vsel %vm1149, %v1192, %v1201
      %v1204 = vsel %vm259, %v1166, 0
      %v1207 = vsel %vm259, %v1175, 0
      %v1210 = vsel %vm259, %v1184, 0
      %v1213 = vsel %vm259, %v1193, 0
      %v1216 = vsel %vm259, %v1202, 0
      %v1219 = vsel %vm275, %v1145, 0
      %1221 = vmatprep.subr.bf16.mxu0 0
      %1222 = vmatpush1.bf16.msra.mxu0 %v1219
      %1223 = vmatprep.subr.bf16.mxu0 0
      %1224 = vmatpush1.bf16.msra.mxu0 0
      %1225 = vmatprep.subr.bf16.mxu0 0
      %1226 = vmatpush1.bf16.msra.mxu0 0
      %1227 = vmatprep.subr.bf16.mxu0 0
      %1228 = vmatpush1.bf16.msra.mxu0 0
      %1229 = vmatprep.subr.bf16.mxu0 0
      %1230 = vmatpush1.bf16.msra.mxu0 0
      %1231 = vmatprep.subr.bf16.mxu0 0
      %1232 = vmatpush1.bf16.msra.mxu0 0
      %1233 = vmatprep.subr.bf16.mxu0 0
      %1234 = vmatpush1.bf16.msra.mxu0 0
      %1235 = vmatprep.subr.bf16.mxu0 0
      %1236 = vmatpush1.bf16.msra.mxu0 0
      %1237 = vmatprep.subr.bf16.mxu0 0
      %1238 = vmatpush1.bf16.msra.mxu0 0
      %1239 = vmatprep.subr.bf16.mxu0 0
      %1240 = vmatpush1.bf16.msra.mxu0 0
      %1241 = vmatprep.subr.bf16.mxu0 0
      %1242 = vmatpush1.bf16.msra.mxu0 0
      %1243 = vmatprep.subr.bf16.mxu0 0
      %1244 = vmatpush1.bf16.msra.mxu0 0
      %1245 = vmatprep.subr.bf16.mxu0 0
      %1246 = vmatpush1.bf16.msra.mxu0 0
      %1247 = vmatprep.subr.bf16.mxu0 0
      %1248 = vmatpush1.bf16.msra.mxu0 0
      %1249 = vmatprep.subr.bf16.mxu0 0
      %1250 = vmatpush1.bf16.msra.mxu0 0
      %1251 = vmatprep.subr.bf16.mxu0 0
      %1252 = vmatpush1.bf16.msra.mxu0 0
      %1253 = vmatprep.mubr.bf16.mxu0 0
      %1254 = vmatmul.mubr.bf16.gmra.mrb[0].mxu0 %v1204
      %v1255 = vpop.f32.mrb[0].mxu0
      %v1256 = vadd.f32 0.0, %v1255
      %v1257 = vpop.f32.mrb[0].mxu0
      %v1258 = vpop.f32.mrb[0].mxu0
      %v1259 = vadd.f32 0.0, %v1258
      %v1260 = vpop.f32.mrb[0].mxu0
      %1261 = vmatprep.mubr.bf16.mxu0 0
      %1262 = vmatmul.mubr.bf16.gmra.mrb[0].mxu0 %v1207
      %v1263 = vpop.f32.mrb[0].mxu0
      %v1264 = vadd.f32 0.0, %v1263
      %v1265 = vpop.f32.mrb[0].mxu0
      %v1266 = vpop.f32.mrb[0].mxu0
      %v1267 = vadd.f32 0.0, %v1266
      %v1268 = vpop.f32.mrb[0].mxu0
      %1269 = vmatprep.mubr.bf16.mxu0 0
      %1270 = vmatmul.mubr.bf16.gmra.mrb[0].mxu0 %v1210
      %v1271 = vpop.f32.mrb[0].mxu0
      %v1272 = vadd.f32 0.0, %v1271
      %v1273 = vpop.f32.mrb[0].mxu0
      %v1274 = vpop.f32.mrb[0].mxu0
      %v1275 = vadd.f32 0.0, %v1274
      %v1276 = vpop.f32.mrb[0].mxu0
      %1277 = vmatprep.mubr.bf16.mxu0 0
      %1278 = vmatmul.mubr.bf16.gmra.mrb[0].mxu0 %v1213
      %v1279 = vpop.f32.mrb[0].mxu0
      %v1280 = vadd.f32 0.0, %v1279
      %v1281 = vpop.f32.mrb[0].mxu0
      %v1282 = vpop.f32.mrb[0].mxu0
      %v1283 = vadd.f32 0.0, %v1282
      %v1284 = vpop.f32.mrb[0].mxu0
      %1285 = vmatprep.mubr.bf16.mxu0 0
      %1286 = vmatmul.mubr.bf16.gmra.mrb[0].mxu0 %v1216
      %v1287 = vpop.f32.mrb[0].mxu0
      %v1288 = vadd.f32 0.0, %v1287
      %v1289 = vpop.f32.mrb[0].mxu0
      %v1290 = vpop.f32.mrb[0].mxu0
      %v1291 = vadd.f32 0.0, %v1290
      %v1292 = vpop.f32.mrb[0].mxu0
      %1293 = vdwg.mxu0
      %v1294 = vadd.f32 %v1133, %v1256
      %v1295 = vadd.f32 %v1134, %v1259
      %v1296 = vadd.f32 %v1135, %v1264
      %v1297 = vadd.f32 %v1136, %v1267
      %v1298 = vadd.f32 %v1137, %v1272
      %v1299 = vadd.f32 %v1138, %v1275
      %v1300 = vadd.f32 %v1139, %v1280
      %v1301 = vadd.f32 %v1140, %v1283
      %v1302 = vadd.f32 %v1141, %v1288
      %v1303 = vadd.f32 %v1142, %v1291
      %v1304 = vld [vmem:[%s165 + $0x8] sm:$0x8]
      %s1305 = scalar_lea.vmem %s1, 32
      %v1306 = vld [vmem:[%s1305] sm:$0xf]
      %v1308 = vunpack.c.l.b16 %v1304
      %v1309 = vpack.c.b16 %v1015, %v1308
      %vm1310 = vcmask 1044480
      %v1311 = vrot.slane %v1309, 3
      %v1312 = vrot.slane %v1026, 3
      %v1313 = vsel %vm1310, %v1311, %v1312
      %v1314 = vrot.slane %v1027, 3
      %v1315 = vsel %vm1310, %v1312, %v1314
      %v1316 = vrot.slane %v1028, 3
      %v1317 = vsel %vm1310, %v1314, %v1316
      %v1318 = vrot.slane %v1029, 3
      %v1319 = vsel %vm1310, %v1316, %v1318
      %v1320 = vrot.slane %v1148, 3
      %v1321 = vsel %vm1310, %v1318, %v1320
      %v1323 = vsel %vm259, %v1313, 0
      %v1326 = vsel %vm259, %v1315, 0
      %v1329 = vsel %vm259, %v1317, 0
      %v1332 = vsel %vm259, %v1319, 0
      %v1335 = vsel %vm259, %v1321, 0
      %v1338 = vsel %vm275, %v1306, 0
      %1340 = vmatprep.subr.bf16.mxu0 0
      %1341 = vmatpush1.bf16.msra.mxu0 %v1338
      %1342 = vmatprep.subr.bf16.mxu0 0
      %1343 = vmatpush1.bf16.msra.mxu0 0
      %1344 = vmatprep.subr.bf16.mxu0 0
      %1345 = vmatpush1.bf16.msra.mxu0 0
      %1346 = vmatprep.subr.bf16.mxu0 0
      %1347 = vmatpush1.bf16.msra.mxu0 0
      %1348 = vmatprep.subr.bf16.mxu0 0
      %1349 = vmatpush1.bf16.msra.mxu0 0
      %1350 = vmatprep.subr.bf16.mxu0 0
      %1351 = vmatpush1.bf16.msra.mxu0 0
      %1352 = vmatprep.subr.bf16.mxu0 0
      %1353 = vmatpush1.bf16.msra.mxu0 0
      %1354 = vmatprep.subr.bf16.mxu0 0
      %1355 = vmatpush1.bf16.msra.mxu0 0
      %1356 = vmatprep.subr.bf16.mxu0 0
      %1357 = vmatpush1.bf16.msra.mxu0 0
      %1358 = vmatprep.subr.bf16.mxu0 0
      %1359 = vmatpush1.bf16.msra.mxu0 0
      %1360 = vmatprep.subr.bf16.mxu0 0
      %1361 = vmatpush1.bf16.msra.mxu0 0
      %1362 = vmatprep.subr.bf16.mxu0 0
      %1363 = vmatpush1.bf16.msra.mxu0 0
      %1364 = vmatprep.subr.bf16.mxu0 0
      %1365 = vmatpush1.bf16.msra.mxu0 0
      %1366 = vmatprep.subr.bf16.mxu0 0
      %1367 = vmatpush1.bf16.msra.mxu0 0
      %1368 = vmatprep.subr.bf16.mxu0 0
      %1369 = vmatpush1.bf16.msra.mxu0 0
      %1370 = vmatprep.subr.bf16.mxu0 0
      %1371 = vmatpush1.bf16.msra.mxu0 0
      %1372 = vmatprep.mubr.bf16.mxu0 0
      %1373 = vmatmul.mubr.bf16.gmra.mrb[0].mxu0 %v1323
      %v1374 = vpop.f32.mrb[0].mxu0
      %v1375 = vadd.f32 0.0, %v1374
      %v1376 = vpop.f32.mrb[0].mxu0
      %v1377 = vpop.f32.mrb[0].mxu0
      %v1378 = vadd.f32 0.0, %v1377
      %v1379 = vpop.f32.mrb[0].mxu0
      %1380 = vmatprep.mubr.bf16.mxu0 0
      %1381 = vmatmul.mubr.bf16.gmra.mrb[0].mxu0 %v1326
      %v1382 = vpop.f32.mrb[0].mxu0
      %v1383 = vadd.f32 0.0, %v1382
      %v1384 = vpop.f32.mrb[0].mxu0
      %v1385 = vpop.f32.mrb[0].mxu0
      %v1386 = vadd.f32 0.0, %v1385
      %v1387 = vpop.f32.mrb[0].mxu0
      %1388 = vmatprep.mubr.bf16.mxu0 0
      %1389 = vmatmul.mubr.bf16.gmra.mrb[0].mxu0 %v1329
      %v1390 = vpop.f32.mrb[0].mxu0
      %v1391 = vadd.f32 0.0, %v1390
      %v1392 = vpop.f32.mrb[0].mxu0
      %v1393 = vpop.f32.mrb[0].mxu0
      %v1394 = vadd.f32 0.0, %v1393
      %v1395 = vpop.f32.mrb[0].mxu0
      %1396 = vmatprep.mubr.bf16.mxu0 0
      %1397 = vmatmul.mubr.bf16.gmra.mrb[0].mxu0 %v1332
      %v1398 = vpop.f32.mrb[0].mxu0
      %v1399 = vadd.f32 0.0, %v1398
      %v1400 = vpop.f32.mrb[0].mxu0
      %v1401 = vpop.f32.mrb[0].mxu0
      %v1402 = vadd.f32 0.0, %v1401
      %v1403 = vpop.f32.mrb[0].mxu0
      %1404 = vmatprep.mubr.bf16.mxu0 0
      %1405 = vmatmul.mubr.bf16.gmra.mrb[0].mxu0 %v1335
      %v1406 = vpop.f32.mrb[0].mxu0
      %v1407 = vadd.f32 0.0, %v1406
      %v1408 = vpop.f32.mrb[0].mxu0
      %v1409 = vpop.f32.mrb[0].mxu0
      %v1410 = vadd.f32 0.0, %v1409
      %v1411 = vpop.f32.mrb[0].mxu0
      %1412 = vdwg.mxu0
      %v1413 = vadd.f32 %v1294, %v1375
      %v1414 = vadd.f32 %v1295, %v1378
      %v1415 = vadd.f32 %v1296, %v1383
      %v1416 = vadd.f32 %v1297, %v1386
      %v1417 = vadd.f32 %v1298, %v1391
      %v1418 = vadd.f32 %v1299, %v1394
      %v1419 = vadd.f32 %v1300, %v1399
      %v1420 = vadd.f32 %v1301, %v1402
      %v1421 = vadd.f32 %v1302, %v1407
      %v1422 = vadd.f32 %v1303, %v1410
      %v1423 = vld [vmem:[%s2] sm:$0x1]
      %v1425 = vlaneseq
      %v1426 = vshrl.u32 %v1425, 7
      %v1427 = vsub.s32 0, %v1426
      %v1428 = vrot.slane %v1423, %v1427
      %v1430 = vadd.f32 %v1413, %v1428
      %v1431 = vadd.f32 %v1414, %v1428
      %v1432 = vadd.f32 %v1415, %v1428
      %v1433 = vadd.f32 %v1416, %v1428
      %v1434 = vadd.f32 %v1417, %v1428
      %v1435 = vadd.f32 %v1418, %v1428
      %v1436 = vadd.f32 %v1419, %v1428
      %v1437 = vadd.f32 %v1420, %v1428
      %v1438 = vadd.f32 %v1421, %v1428
      %v1439 = vadd.f32 %v1422, %v1428
      %v1440 = vmax.f32 %v1430, 0.0
      %v1441 = vmax.f32 %v1431, 0.0
      %v1442 = vmax.f32 %v1432, 0.0
      %v1443 = vmax.f32 %v1433, 0.0
      %v1444 = vmax.f32 %v1434, 0.0
      %v1445 = vmax.f32 %v1435, 0.0
      %v1446 = vmax.f32 %v1436, 0.0
      %v1447 = vmax.f32 %v1437, 0.0
      %v1448 = vmax.f32 %v1438, 0.0
      %v1449 = vmax.f32 %v1439, 0.0
      %v1450 = vpack.c.bf16 %v1441, %v1440
      %v1451 = vpack.c.bf16 %v1443, %v1442
      %v1452 = vpack.c.bf16 %v1445, %v1444
      %v1453 = vpack.c.bf16 %v1447, %v1446
      %v1454 = vpack.c.bf16 %v1449, %v1448
      %v1460 = vunpack.c.l.b16 %v1450
      %v1461 = vunpack.c.h.b16 %v1450
      %v1462 = vunpack.c.l.b16 %v1451
      %v1463 = vunpack.c.h.b16 %v1451
      %v1464 = vunpack.c.l.b16 %v1452
      %v1465 = vunpack.c.h.b16 %v1452
      %v1466 = vunpack.c.l.b16 %v1453
      %v1467 = vunpack.c.h.b16 %v1453
      %v1468 = vunpack.c.l.b16 %v1454
      %v1469 = vunpack.c.h.b16 %v1454
      %v1470 = vpack.c.b16 %v1460, %v1460
      %v1471 = vpack.c.b16 %v1461, %v1461
      %v1472 = vpack.c.b16 %v1462, %v1462
      %v1473 = vpack.c.b16 %v1463, %v1463
      %v1474 = vpack.c.b16 %v1464, %v1464
      %v1475 = vpack.c.b16 %v1465, %v1465
      %v1476 = vpack.c.b16 %v1466, %v1466
      %v1477 = vpack.c.b16 %v1467, %v1467
      %v1478 = vpack.c.b16 %v1468, %v1468
      %v1479 = vpack.c.b16 %v1469, %v1469
      %vm1490 = vcmask 142336
      %1491 = vst.msk [vmem:[%s170] sm:$0xf] %vm1490, %v1470
      %1492 = vst.msk [vmem:[%s170 + $0x4] sm:$0xf] %vm1490, %v1471
      %1493 = vst.msk [vmem:[%s170 + $0x8] sm:$0xf] %vm1490, %v1472
      %1494 = vst.msk [vmem:[%s170 + $0xc] sm:$0xf] %vm1490, %v1473
      %1495 = vst.msk [vmem:[%s170 + $0x10] sm:$0xf] %vm1490, %v1474
      %1496 = vst.msk [vmem:[%s170 + $0x14] sm:$0xf] %vm1490, %v1475
      %1497 = vst.msk [vmem:[%s170 + $0x18] sm:$0xf] %vm1490, %v1476
      %1498 = vst.msk [vmem:[%s170 + $0x1c] sm:$0xf] %vm1490, %v1477
      %1499 = vst.msk [vmem:[%s170 + $0x20] sm:$0xf] %vm1490, %v1478
      %1500 = vst.msk [vmem:[%s170 + $0x24] sm:$0xf] %vm1490, %v1479
      %p1501 = scmp.lt.s32.totalorder %s14, 7
      %s1502 = scalar_select %p1501, %s14, 7
      %s1503 = smul.addr %s1502, 10
      %s1504 = smul.addr %s1503, 4
      %s1505 = scalar_lea.vmem %s3, %s1504
      // Predicated region
      $region33: #{_lambda_.14} parent=31 // pred_check
        %p1506 = pneg %p100
      $region34: #{_lambda_.14} parent=31 // pred_check_branch
        %1508 = sbr.rel (%p1506) target = $region36
      $region35: #{_lambda_.14} parent=31 // pred_region
        _
      $region36: #{_lambda_.14} parent=31 // pred_fallthru
        _
    $region32: #{_lambda_.14} parent=5 // pred_fallthru
      _
    %p1509 = scmp.le.s32.totalorder 2, %s9
    // Predicated region
    $region37: #{_lambda_.14} parent=5 // pred_check
      %p1510 = pneg %p1509
    $region38: #{_lambda_.14} parent=5 // pred_check_branch
      %1512 = sbr.rel (%p1510) target = $region40
    $region39: #{_lambda_.14} parent=5 // pred_region
      %s1513 = ssub.s32 %s9, 2
      // Predicated region
      $region41: #{_lambda_.14} parent=39 // pred_check
        %p1514 = pneg %p106
      $region42: #{_lambda_.14} parent=39 // pred_check_branch
        %1516 = sbr.rel (%p1514) target = $region44
      $region43: #{_lambda_.14} parent=39 // pred_region
        %p1517 = scmp.lt.s32.totalorder %s15, 7
        %s1518 = scalar_select %p1517, %s15, 7
        %s1519 = smul.addr %s1518, 10
        %s1520 = smul.addr %s1519, 4
        %s1521 = scalar_lea.vmem %s3, %s1520
      $region44: #{_lambda_.14} parent=39 // pred_fallthru
        _
    $region40: #{_lambda_.14} parent=5 // pred_fallthru
      _
  $region6: #{_lambda_.14} parent=0 // loop_footer
    %s13 = sadd.s32 1, %s9
  $region7: #{_lambda_.14} parent=0 // loop_footer_branch
    %8 = sbr.rel target = $region3
  $region8: #{_lambda_.14} parent=0 // loop_exit
    _

// kernel: _lambda_.15
$region0: #{_lambda_.15}
  #allocation0 [shape = 'u32[]', space=smem, size = 0x4, offset = 0x4, fixed_abs, tag = 'smem constant byte address 0x4 - core index']
  #allocation1 [shape = 'u32[144,128]{1,0:T(1,128)}', space=vmem, size = 0x12000, scoped, tag = 'internal scratch']
  %s0 = inlined_call_operand.vmem [shape: bf16[2,384,18], index: 0, kind: input, shape index: {}]
  %s1 = inlined_call_operand.vmem [shape: bf16[3,18,8], index: 1, kind: input, shape index: {}]
  %s2 = inlined_call_operand.vmem [shape: f32[1,8], index: 2, kind: input, shape index: {}]
  %s3 = inlined_call_operand.vmem [shape: bf16[2,256,8], index: 3, kind: input, shape index: {}]
  %s4 = inlined_call_operand.vmem [shape: bf16[2,256,8], index: 4, kind: output, shape index: {}]
  %s5 = sld [smem:[#allocation0]]
  $region49: #{_lambda_.15} parent=0
    _
  %s7 = ssub.s32 1, %s5
  %s8 = scalar_select 0, %s7, %s5
  loop: start=0, step=1, limit=4
  $region2: #{_lambda_.15} parent=0 // loop_pre_header
    _
  $region3: #{_lambda_.15} parent=0 // loop_header
    %s10 = sphi 0, %s14
    %p11 = scmp.ge.s32.totalorder %s10, 4
    %s20 = sphi 0, %s22
    %s23 = sphi 0, %s20
    %s24 = sphi 0, %s23
    %s40 = sphi 0, %s24
    %s44 = sphi 0, %s44
    %s46 = sphi 0, %s44
    %s47 = sphi 0, %s46
    %s61 = sphi 0, %s47
    %s65 = sphi 0, %s65
    %s67 = sphi 0, %s65
    %s68 = sphi 0, %s67
    %s82 = sphi 0, %s68
    %s88 = sphi 0, %s90
    %s91 = sphi 0, %s88
    %s92 = sphi 0, %s91
    %s108 = sphi 0, %s92
    %s114 = sphi 0, %s116
    %s117 = sphi 0, %s114
    %s118 = sphi 0, %s117
    %s134 = sphi 0, %s118
  $region4: #{_lambda_.15} parent=0 // loop_header_branch
    %13 = sbr.rel (%p11) target = $region8
  $region5: #{_lambda_.15} parent=0 // loop_body
    %s15 = ssub.s32 %s10, 1
    %s16 = ssub.s32 %s10, 2
    %s17 = sadd.s32 %s10, 1
    %s18 = ssub.s32 %s10, %s17
    %p19 = scmp.eq.s32.totalorder %s18, 0
    %s21 = sadd.s32 %s20, 1
    %s22 = scalar_select %p19, %s20, %s21
    %p25 = pneg %p19
    %p26 = scmp.eq.s32.totalorder %s10, 1
    %p27 = por %p25, %p26
    %p28 = scmp.ne.s32.totalorder %s20, %s23
    %p29 = scmp.eq.s32.totalorder %s10, 0
    %p30 = por %p28, %p29
    %p31 = scmp.ne.s32.totalorder %s20, %s23
    %p32 = scmp.eq.s32.totalorder %s15, 1
    %p33 = por %p31, %p32
    %p34 = scmp.ne.s32.totalorder %s23, %s24
    %p35 = scmp.eq.s32.totalorder %s15, 0
    %p36 = por %p34, %p35
    %p37 = scmp.ne.s32.totalorder %s23, %s24
    %p38 = scmp.eq.s32.totalorder %s16, 1
    %p39 = por %p37, %p38
    %p41 = scmp.ne.s32.totalorder %s24, %s40
    %p42 = scmp.eq.s32.totalorder %s16, 0
    %p43 = por %p41, %p42
    %s45 = sadd.s32 %s44, 1
    %p48 = scmp.eq.s32.totalorder %s10, 1
    %p49 = scmp.ne.s32.totalorder %s44, %s46
    %p50 = scmp.eq.s32.totalorder %s10, 0
    %p51 = por %p49, %p50
    %p52 = scmp.ne.s32.totalorder %s44, %s46
    %p53 = scmp.eq.s32.totalorder %s15, 1
    %p54 = por %p52, %p53
    %p55 = scmp.ne.s32.totalorder %s46, %s47
    %p56 = scmp.eq.s32.totalorder %s15, 0
    %p57 = por %p55, %p56
    %p58 = scmp.ne.s32.totalorder %s46, %s47
    %p59 = scmp.eq.s32.totalorder %s16, 1
    %p60 = por %p58, %p59
    %p62 = scmp.ne.s32.totalorder %s47, %s61
    %p63 = scmp.eq.s32.totalorder %s16, 0
    %p64 = por %p62, %p63
    %s66 = sadd.s32 %s65, 1
    %p69 = scmp.eq.s32.totalorder %s10, 1
    %p70 = scmp.ne.s32.totalorder %s65, %s67
    %p71 = scmp.eq.s32.totalorder %s10, 0
    %p72 = por %p70, %p71
    %p73 = scmp.ne.s32.totalorder %s65, %s67
    %p74 = scmp.eq.s32.totalorder %s15, 1
    %p75 = por %p73, %p74
    %p76 = scmp.ne.s32.totalorder %s67, %s68
    %p77 = scmp.eq.s32.totalorder %s15, 0
    %p78 = por %p76, %p77
    %p79 = scmp.ne.s32.totalorder %s67, %s68
    %p80 = scmp.eq.s32.totalorder %s16, 1
    %p81 = por %p79, %p80
    %p83 = scmp.ne.s32.totalorder %s68, %s82
    %p84 = scmp.eq.s32.totalorder %s16, 0
    %p85 = por %p83, %p84
    %s86 = ssub.s32 %s10, %s17
    %p87 = scmp.eq.s32.totalorder %s86, 0
    %s89 = sadd.s32 %s88, 1
    %s90 = scalar_select %p87, %s88, %s89
    %p93 = pneg %p87
    %p94 = scmp.eq.s32.totalorder %s10, 1
    %p95 = por %p93, %p94
    %p96 = scmp.ne.s32.totalorder %s88, %s91
    %p97 = scmp.eq.s32.totalorder %s10, 0
    %p98 = por %p96, %p97
    %p99 = scmp.ne.s32.totalorder %s88, %s91
    %p100 = scmp.eq.s32.totalorder %s15, 1
    %p101 = por %p99, %p100
    %p102 = scmp.ne.s32.totalorder %s91, %s92
    %p103 = scmp.eq.s32.totalorder %s15, 0
    %p104 = por %p102, %p103
    %p105 = scmp.ne.s32.totalorder %s91, %s92
    %p106 = scmp.eq.s32.totalorder %s16, 1
    %p107 = por %p105, %p106
    %p109 = scmp.ne.s32.totalorder %s92, %s108
    %p110 = scmp.eq.s32.totalorder %s16, 0
    %p111 = por %p109, %p110
    %s112 = ssub.s32 %s10, %s17
    %p113 = scmp.eq.s32.totalorder %s112, 0
    %s115 = sadd.s32 %s114, 1
    %s116 = scalar_select %p113, %s114, %s115
    %p119 = pneg %p113
    %p120 = scmp.eq.s32.totalorder %s10, 1
    %p121 = por %p119, %p120
    %p122 = scmp.ne.s32.totalorder %s114, %s117
    %p123 = scmp.eq.s32.totalorder %s10, 0
    %p124 = por %p122, %p123
    %p125 = scmp.ne.s32.totalorder %s114, %s117
    %p126 = scmp.eq.s32.totalorder %s15, 1
    %p127 = por %p125, %p126
    %p128 = scmp.ne.s32.totalorder %s117, %s118
    %p129 = scmp.eq.s32.totalorder %s15, 0
    %p130 = por %p128, %p129
    %p131 = scmp.ne.s32.totalorder %s117, %s118
    %p132 = scmp.eq.s32.totalorder %s16, 1
    %p133 = por %p131, %p132
    %p135 = scmp.ne.s32.totalorder %s118, %s134
    %p136 = scmp.eq.s32.totalorder %s16, 0
    %p137 = por %p135, %p136
    %p138 = scmp.le.s32.totalorder 1, %s10
    %p139 = scmp.lt.s32.totalorder %s10, 3
    %p140 = pnand %p138, %p139
    %p141 = pneg %p140
    // Predicated region
    $region9: #{_lambda_.15} parent=5 // pred_check
      _
    $region10: #{_lambda_.15} parent=5 // pred_check_branch
      %143 = sbr.rel (%p140) target = $region12
    $region11: #{_lambda_.15} parent=5 // pred_region
      %s144 = ssub.s32 %s10, 1
      // Predicated region
      $region13: #{_lambda_.15} parent=11 // pred_check
        %p145 = pneg %p57
      $region14: #{_lambda_.15} parent=11 // pred_check_branch
        %147 = sbr.rel (%p145) target = $region16
      $region15: #{_lambda_.15} parent=11 // pred_region
        _
      $region16: #{_lambda_.15} parent=11 // pred_fallthru
        _
      // Predicated region
      $region17: #{_lambda_.15} parent=11 // pred_check
        %p148 = pneg %p78
      $region18: #{_lambda_.15} parent=11 // pred_check_branch
        %150 = sbr.rel (%p148) target = $region20
      $region19: #{_lambda_.15} parent=11 // pred_region
        _
      $region20: #{_lambda_.15} parent=11 // pred_fallthru
        _
    $region12: #{_lambda_.15} parent=5 // pred_fallthru
      _
    %p151 = scmp.lt.s32.totalorder %s10, 2
    // Predicated region
    $region21: #{_lambda_.15} parent=5 // pred_check
      %p152 = pneg %p151
    $region22: #{_lambda_.15} parent=5 // pred_check_branch
      %154 = sbr.rel (%p152) target = $region24
    $region23: #{_lambda_.15} parent=5 // pred_region
      // Predicated region
      $region25: #{_lambda_.15} parent=23 // pred_check
        %p155 = pneg %p30
      $region26: #{_lambda_.15} parent=23 // pred_check_branch
        %157 = sbr.rel (%p155) target = $region28
      $region27: #{_lambda_.15} parent=23 // pred_region
        %p158 = scmp.lt.s32.totalorder %s10, 1
        %s159 = scalar_select %p158, %s10, 1
        %s160 = smul.addr %s159, 48
        %s161 = smul.addr %s160, 4
        %s162 = scalar_lea.vmem %s0, %s161
      $region28: #{_lambda_.15} parent=23 // pred_fallthru
        _
      // Predicated region
      $region29: #{_lambda_.15} parent=23 // pred_check
        %p163 = pneg %p98
      $region30: #{_lambda_.15} parent=23 // pred_check_branch
        %165 = sbr.rel (%p163) target = $region32
      $region31: #{_lambda_.15} parent=23 // pred_region
        %p166 = scmp.lt.s32.totalorder %s10, 1
        %s167 = scalar_select %p166, %s10, 1
        %s168 = smul.addr %s167, 32
        %s169 = smul.addr %s168, 4
        %s170 = scalar_lea.vmem %s3, %s169
      $region32: #{_lambda_.15} parent=23 // pred_fallthru
        _
    $region24: #{_lambda_.15} parent=5 // pred_fallthru
      _
    %p171 = scmp.le.s32.totalorder 1, %s10
    %p172 = scmp.lt.s32.totalorder %s10, 3
    %p173 = pnand %p171, %p172
    %p174 = pneg %p173
    // Predicated region
    $region33: #{_lambda_.15} parent=5 // pred_check
      _
    $region34: #{_lambda_.15} parent=5 // pred_check_branch
      %176 = sbr.rel (%p173) target = $region36
    $region35: #{_lambda_.15} parent=5 // pred_region
      %s177 = ssub.s32 %s10, 1
      %p178 = scmp.lt.s32.totalorder %s15, 1
      %s179 = scalar_select %p178, %s15, 1
      %s180 = smul.addr %s179, 48
      %s181 = smul.addr %s180, 4
      %s182 = scalar_lea.vmem %s0, %s181
      %p183 = pneg %p36
      %p184 = pneg %p33
      %p185 = pneg %p57
      %p186 = pneg %p54
      %p187 = pneg %p78
      %p188 = pneg %p75
      %p189 = scmp.lt.s32.totalorder %s15, 1
      %s190 = scalar_select %p189, %s15, 1
      %s191 = smul.addr %s190, 32
      %s192 = smul.addr %s191, 4
      %s193 = scalar_lea.vmem %s3, %s192
      %p194 = pneg %p104
      %p195 = pneg %p101
      %p196 = pneg %p130
      %p197 = pneg %p127
      %p198 = scmp.lt.s32.totalorder %s15, 1
      %s199 = scalar_select %p198, %s15, 1
      %s200 = smul.addr %s199, 32
      %s201 = smul.addr %s200, 4
      %s202 = scalar_lea.vmem %s4, %s201
      %p203 = scmp.lt.s32.totalorder %s15, 1
      %s204 = scalar_select %p203, %s15, 1
      %s205 = smul.addr %s204, 48
      %s206 = smul.addr %s205, 4
      %s207 = scalar_lea.vmem %s0, %s206
      %p208 = scmp.lt.s32.totalorder %s15, 1
      %s209 = scalar_select %p208, %s15, 1
      %s210 = smul.addr %s209, 32
      %s211 = smul.addr %s210, 4
      %s212 = scalar_lea.vmem %s3, %s211
      %p213 = scmp.lt.s32.totalorder %s15, 1
      %s214 = scalar_select %p213, %s15, 1
      %s215 = smul.addr %s214, 32
      %s216 = smul.addr %s215, 4
      %s217 = scalar_lea.vmem %s4, %s216
      %v219 = vld [vmem:[%s207] sm:$0xf]
      %v220 = vld [vmem:[%s207 + $0x4] sm:$0xf]
      %v221 = vld [vmem:[%s207 + $0x8] sm:$0xf]
      %v222 = vld [vmem:[%s207 + $0xc] sm:$0xf]
      %v223 = vld [vmem:[%s207 + $0x10] sm:$0xf]
      %v224 = vld [vmem:[%s207 + $0x14] sm:$0xf]
      %v225 = vld [vmem:[%s207 + $0x18] sm:$0xf]
      %v226 = vld [vmem:[%s207 + $0x1c] sm:$0xf]
      %v227 = vld [vmem:[%s207 + $0x20] sm:$0xf]
      %v228 = vld [vmem:[%s207 + $0x24] sm:$0xf]
      %v229 = vld [vmem:[%s207 + $0x28] sm:$0xf]
      %v230 = vld [vmem:[%s207 + $0x2c] sm:$0xf]
      %v231 = vld [vmem:[%s207 + $0x30] sm:$0xf]
      %v232 = vld [vmem:[%s207 + $0x34] sm:$0xf]
      %v233 = vld [vmem:[%s207 + $0x38] sm:$0xf]
      %v234 = vld [vmem:[%s207 + $0x3c] sm:$0xf]
      %v235 = vld [vmem:[%s207 + $0x40] sm:$0xf]
      %v236 = vld [vmem:[%s207 + $0x44] sm:$0xf]
      %v237 = vld [vmem:[%s207 + $0x48] sm:$0xf]
      %v238 = vld [vmem:[%s207 + $0x4c] sm:$0xf]
      %v239 = vld [vmem:[%s207 + $0x50] sm:$0xf]
      %v240 = vld [vmem:[%s207 + $0x54] sm:$0xf]
      %v241 = vld [vmem:[%s207 + $0x58] sm:$0xf]
      %v242 = vld [vmem:[%s207 + $0x5c] sm:$0xf]
      %v243 = vld [vmem:[%s207 + $0x60] sm:$0xf]
      %v244 = vld [vmem:[%s207 + $0x64] sm:$0xf]
      %v245 = vld [vmem:[%s207 + $0x68] sm:$0xf]
      %v246 = vld [vmem:[%s207 + $0x6c] sm:$0xf]
      %v247 = vld [vmem:[%s207 + $0x70] sm:$0xf]
      %v248 = vld [vmem:[%s207 + $0x74] sm:$0xf]
      %v249 = vld [vmem:[%s207 + $0x78] sm:$0xf]
      %v250 = vld [vmem:[%s207 + $0x7c] sm:$0xf]
      %v251 = vld [vmem:[%s1] sm:$0xf]
      %v252 = vld [vmem:[%s1 + $0x4] sm:$0xf]
      %v253 = vld [vmem:[%s1 + $0x8] sm:$0x1]
      %v254 = vld [vmem:[%s207 + $0x80] sm:$0xf]
      %v255 = vld [vmem:[%s207 + $0x84] sm:$0xf]
      %v256 = vld [vmem:[%s207 + $0x88] sm:$0xf]
      %v257 = vld [vmem:[%s207 + $0x8c] sm:$0xf]
      %v258 = vld [vmem:[%s207 + $0x90] sm:$0xf]
      %v259 = vld [vmem:[%s207 + $0x94] sm:$0xf]
      %v260 = vld [vmem:[%s207 + $0x98] sm:$0xf]
      %v261 = vld [vmem:[%s207 + $0x9c] sm:$0xf]
      %s262 = scalar_lea.vmem %s1, 12
      %v263 = vld [vmem:[%s262] sm:$0xf]
      %v264 = vld [vmem:[%s262 + $0x4] sm:$0xf]
      %v265 = vld [vmem:[%s262 + $0x8] sm:$0x1]
      %v298 = vunpack.c.l.b16 %v227
      %v299 = vunpack.c.l.b16 %v228
      %v300 = vunpack.c.l.b16 %v229
      %v301 = vunpack.c.l.b16 %v230
      %v302 = vunpack.c.l.b16 %v231
      %v303 = vunpack.c.l.b16 %v232
      %v304 = vunpack.c.l.b16 %v233
      %v305 = vunpack.c.l.b16 %v234
      %v306 = vunpack.c.l.b16 %v235
      %v307 = vunpack.c.l.b16 %v236
      %v308 = vunpack.c.l.b16 %v237
      %v309 = vunpack.c.l.b16 %v238
      %v310 = vunpack.c.l.b16 %v239
      %v311 = vunpack.c.l.b16 %v240
      %v312 = vunpack.c.l.b16 %v241
      %v313 = vunpack.c.l.b16 %v242
      %v314 = vunpack.c.l.b16 %v243
      %v315 = vunpack.c.l.b16 %v244
      %v316 = vunpack.c.l.b16 %v245
      %v317 = vunpack.c.l.b16 %v246
      %v318 = vunpack.c.l.b16 %v247
      %v319 = vunpack.c.l.b16 %v248
      %v320 = vunpack.c.l.b16 %v249
      %v321 = vunpack.c.l.b16 %v250
      %v322 = vunpack.c.l.b16 %v254
      %v323 = vunpack.c.l.b16 %v255
      %v324 = vunpack.c.l.b16 %v256
      %v325 = vunpack.c.l.b16 %v257
      %v326 = vunpack.c.l.b16 %v258
      %v327 = vunpack.c.l.b16 %v259
      %v328 = vunpack.c.l.b16 %v260
      %v329 = vunpack.c.l.b16 %v261
      %v330 = vpack.c.b16 %v299, %v298
      %v331 = vpack.c.b16 %v301, %v300
      %v332 = vpack.c.b16 %v303, %v302
      %v333 = vpack.c.b16 %v305, %v304
      %v334 = vpack.c.b16 %v307, %v306
      %v335 = vpack.c.b16 %v309, %v308
      %v336 = vpack.c.b16 %v311, %v310
      %v337 = vpack.c.b16 %v313, %v312
      %v338 = vpack.c.b16 %v315, %v314
      %v339 = vpack.c.b16 %v317, %v316
      %v340 = vpack.c.b16 %v319, %v318
      %v341 = vpack.c.b16 %v321, %v320
      %v342 = vpack.c.b16 %v323, %v322
      %v343 = vpack.c.b16 %v325, %v324
      %v344 = vpack.c.b16 %v327, %v326
      %v345 = vpack.c.b16 %v329, %v328
      %v349 = vunpack.c.l.b16 %v263
      %v350 = vunpack.c.l.b16 %v264
      %v351 = vunpack.c.l.b16 %v265
      %v352 = vpack.c.b16 %v350, %v349
      %v353 = vpack.c.b16 %v351, %v351
      %vm355 = vcmask 146432
      %v357 = vsel %vm355, %v330, 0
      %v360 = vsel %vm355, %v331, 0
      %v363 = vsel %vm355, %v332, 0
      %v366 = vsel %vm355, %v333, 0
      %v369 = vsel %vm355, %v334, 0
      %v372 = vsel %vm355, %v335, 0
      %v375 = vsel %vm355, %v336, 0
      %v378 = vsel %vm355, %v337, 0
      %v381 = vsel %vm355, %v338, 0
      %v384 = vsel %vm355, %v339, 0
      %v387 = vsel %vm355, %v340, 0
      %v390 = vsel %vm355, %v341, 0
      %v393 = vsel %vm355, %v342, 0
      %v396 = vsel %vm355, %v343, 0
      %v399 = vsel %vm355, %v344, 0
      %v402 = vsel %vm355, %v345, 0
      %vm404 = vcmask 1040384
      %v406 = vsel %vm404, %v353, 0
      %408 = vmatprep.subr.bf16.mxu0 0
      %409 = vmatpush1.bf16.msra.mxu0 %v352
      %410 = vmatprep.subr.bf16.mxu0 0
      %411 = vmatpush1.bf16.msra.mxu0 %v406
      %412 = vmatprep.subr.bf16.mxu0 0
      %413 = vmatpush1.bf16.msra.mxu0 0
      %414 = vmatprep.subr.bf16.mxu0 0
      %415 = vmatpush1.bf16.msra.mxu0 0
      %416 = vmatprep.subr.bf16.mxu0 0
      %417 = vmatpush1.bf16.msra.mxu0 0
      %418 = vmatprep.subr.bf16.mxu0 0
      %419 = vmatpush1.bf16.msra.mxu0 0
      %420 = vmatprep.subr.bf16.mxu0 0
      %421 = vmatpush1.bf16.msra.mxu0 0
      %422 = vmatprep.subr.bf16.mxu0 0
      %423 = vmatpush1.bf16.msra.mxu0 0
      %424 = vmatprep.subr.bf16.mxu0 0
      %425 = vmatpush1.bf16.msra.mxu0 0
      %426 = vmatprep.subr.bf16.mxu0 0
      %427 = vmatpush1.bf16.msra.mxu0 0
      %428 = vmatprep.subr.bf16.mxu0 0
      %429 = vmatpush1.bf16.msra.mxu0 0
      %430 = vmatprep.subr.bf16.mxu0 0
      %431 = vmatpush1.bf16.msra.mxu0 0
      %432 = vmatprep.subr.bf16.mxu0 0
      %433 = vmatpush1.bf16.msra.mxu0 0
      %434 = vmatprep.subr.bf16.mxu0 0
      %435 = vmatpush1.bf16.msra.mxu0 0
      %436 = vmatprep.subr.bf16.mxu0 0
      %437 = vmatpush1.bf16.msra.mxu0 0
      %438 = vmatprep.subr.bf16.mxu0 0
      %439 = vmatpush1.bf16.msra.mxu0 0
      %440 = vmatprep.mubr.bf16.mxu0 0
      %441 = vmatmul.mubr.bf16.gmra.mrb[0].mxu0 %v357
      %v442 = vpop.f32.mrb[0].mxu0
      %v443 = vadd.f32 0.0, %v442
      %v444 = vpop.f32.mrb[0].mxu0
      %v445 = vpop.f32.mrb[0].mxu0
      %v446 = vadd.f32 0.0, %v445
      %v447 = vpop.f32.mrb[0].mxu0
      %448 = vmatprep.mubr.bf16.mxu0 0
      %449 = vmatmul.mubr.bf16.gmra.mrb[0].mxu0 %v360
      %v450 = vpop.f32.mrb[0].mxu0
      %v451 = vadd.f32 0.0, %v450
      %v452 = vpop.f32.mrb[0].mxu0
      %v453 = vpop.f32.mrb[0].mxu0
      %v454 = vadd.f32 0.0, %v453
      %v455 = vpop.f32.mrb[0].mxu0
      %456 = vmatprep.mubr.bf16.mxu0 0
      %457 = vmatmul.mubr.bf16.gmra.mrb[0].mxu0 %v363
      %v458 = vpop.f32.mrb[0].mxu0
      %v459 = vadd.f32 0.0, %v458
      %v460 = vpop.f32.mrb[0].mxu0
      %v461 = vpop.f32.mrb[0].mxu0
      %v462 = vadd.f32 0.0, %v461
      %v463 = vpop.f32.mrb[0].mxu0
      %464 = vmatprep.mubr.bf16.mxu0 0
      %465 = vmatmul.mubr.bf16.gmra.mrb[0].mxu0 %v366
      %v466 = vpop.f32.mrb[0].mxu0
      %v467 = vadd.f32 0.0, %v466
      %v468 = vpop.f32.mrb[0].mxu0
      %v469 = vpop.f32.mrb[0].mxu0
      %v470 = vadd.f32 0.0, %v469
      %v471 = vpop.f32.mrb[0].mxu0
      %472 = vmatprep.mubr.bf16.mxu0 0
      %473 = vmatmul.mubr.bf16.gmra.mrb[0].mxu0 %v369
      %v474 = vpop.f32.mrb[0].mxu0
      %v475 = vadd.f32 0.0, %v474
      %v476 = vpop.f32.mrb[0].mxu0
      %v477 = vpop.f32.mrb[0].mxu0
      %v478 = vadd.f32 0.0, %v477
      %v479 = vpop.f32.mrb[0].mxu0
      %480 = vmatprep.mubr.bf16.mxu0 0
      %481 = vmatmul.mubr.bf16.gmra.mrb[0].mxu0 %v372
      %v482 = vpop.f32.mrb[0].mxu0
      %v483 = vadd.f32 0.0, %v482
      %v484 = vpop.f32.mrb[0].mxu0
      %v485 = vpop.f32.mrb[0].mxu0
      %v486 = vadd.f32 0.0, %v485
      %v487 = vpop.f32.mrb[0].mxu0
      %488 = vmatprep.mubr.bf16.mxu0 0
      %489 = vmatmul.mubr.bf16.gmra.mrb[0].mxu0 %v375
      %v490 = vpop.f32.mrb[0].mxu0
      %v491 = vadd.f32 0.0, %v490
      %v492 = vpop.f32.mrb[0].mxu0
      %v493 = vpop.f32.mrb[0].mxu0
      %v494 = vadd.f32 0.0, %v493
      %v495 = vpop.f32.mrb[0].mxu0
      %496 = vmatprep.mubr.bf16.mxu0 0
      %497 = vmatmul.mubr.bf16.gmra.mrb[0].mxu0 %v378
      %v498 = vpop.f32.mrb[0].mxu0
      %v499 = vadd.f32 0.0, %v498
      %v500 = vpop.f32.mrb[0].mxu0
      %v501 = vpop.f32.mrb[0].mxu0
      %v502 = vadd.f32 0.0, %v501
      %v503 = vpop.f32.mrb[0].mxu0
      %504 = vmatprep.mubr.bf16.mxu0 0
      %505 = vmatmul.mubr.bf16.gmra.mrb[0].mxu0 %v381
      %v506 = vpop.f32.mrb[0].mxu0
      %v507 = vadd.f32 0.0, %v506
      %v508 = vpop.f32.mrb[0].mxu0
      %v509 = vpop.f32.mrb[0].mxu0
      %v510 = vadd.f32 0.0, %v509
      %v511 = vpop.f32.mrb[0].mxu0
      %512 = vmatprep.mubr.bf16.mxu0 0
      %513 = vmatmul.mubr.bf16.gmra.mrb[0].mxu0 %v384
      %v514 = vpop.f32.mrb[0].mxu0
      %v515 = vadd.f32 0.0, %v514
      %v516 = vpop.f32.mrb[0].mxu0
      %v517 = vpop.f32.mrb[0].mxu0
      %v518 = vadd.f32 0.0, %v517
      %v519 = vpop.f32.mrb[0].mxu0
      %520 = vmatprep.mubr.bf16.mxu0 0
      %521 = vmatmul.mubr.bf16.gmra.mrb[0].mxu0 %v387
      %v522 = vpop.f32.mrb[0].mxu0
      %v523 = vadd.f32 0.0, %v522
      %v524 = vpop.f32.mrb[0].mxu0
      %v525 = vpop.f32.mrb[0].mxu0
      %v526 = vadd.f32 0.0, %v525
      %v527 = vpop.f32.mrb[0].mxu0
      %528 = vmatprep.mubr.bf16.mxu0 0
      %529 = vmatmul.mubr.bf16.gmra.mrb[0].mxu0 %v390
      %v530 = vpop.f32.mrb[0].mxu0
      %v531 = vadd.f32 0.0, %v530
      %v532 = vpop.f32.mrb[0].mxu0
      %v533 = vpop.f32.mrb[0].mxu0
      %v534 = vadd.f32 0.0, %v533
      %v535 = vpop.f32.mrb[0].mxu0
      %536 = vmatprep.mubr.bf16.mxu0 0
      %537 = vmatmul.mubr.bf16.gmra.mrb[0].mxu0 %v393
      %v538 = vpop.f32.mrb[0].mxu0
      %v539 = vadd.f32 0.0, %v538
      %v540 = vpop.f32.mrb[0].mxu0
      %v541 = vpop.f32.mrb[0].mxu0
      %v542 = vadd.f32 0.0, %v541
      %v543 = vpop.f32.mrb[0].mxu0
      %544 = vmatprep.mubr.bf16.mxu0 0
      %545 = vmatmul.mubr.bf16.gmra.mrb[0].mxu0 %v396
      %v546 = vpop.f32.mrb[0].mxu0
      %v547 = vadd.f32 0.0, %v546
      %v548 = vpop.f32.mrb[0].mxu0
      %v549 = vpop.f32.mrb[0].mxu0
      %v550 = vadd.f32 0.0, %v549
      %v551 = vpop.f32.mrb[0].mxu0
      %552 = vmatprep.mubr.bf16.mxu0 0
      %553 = vmatmul.mubr.bf16.gmra.mrb[0].mxu0 %v399
      %v554 = vpop.f32.mrb[0].mxu0
      %v555 = vadd.f32 0.0, %v554
      %v556 = vpop.f32.mrb[0].mxu0
      %v557 = vpop.f32.mrb[0].mxu0
      %v558 = vadd.f32 0.0, %v557
      %v559 = vpop.f32.mrb[0].mxu0
      %560 = vmatprep.mubr.bf16.mxu0 0
      %561 = vmatmul.mubr.bf16.gmra.mrb[0].mxu0 %v402
      %v562 = vpop.f32.mrb[0].mxu0
      %v563 = vadd.f32 0.0, %v562
      %v564 = vpop.f32.mrb[0].mxu0
      %v565 = vpop.f32.mrb[0].mxu0
      %v566 = vadd.f32 0.0, %v565
      %v567 = vpop.f32.mrb[0].mxu0
      %568 = vdwg.mxu0
      %v577 = vunpack.c.l.b16 %v219
      %v578 = vunpack.c.l.b16 %v220
      %v579 = vunpack.c.l.b16 %v221
      %v580 = vunpack.c.l.b16 %v222
      %v581 = vunpack.c.l.b16 %v223
      %v582 = vunpack.c.l.b16 %v224
      %v583 = vunpack.c.l.b16 %v225
      %v584 = vunpack.c.l.b16 %v226
      %v585 = vpack.c.b16 %v578, %v577
      %v586 = vpack.c.b16 %v580, %v579
      %v587 = vpack.c.b16 %v582, %v581
      %v588 = vpack.c.b16 %v584, %v583
      %v592 = vunpack.c.l.b16 %v251
      %v593 = vunpack.c.l.b16 %v252
      %v594 = vunpack.c.l.b16 %v253
      %v595 = vpack.c.b16 %v593, %v592
      %v596 = vpack.c.b16 %v594, %v594
      %v599 = vsel %vm355, %v585, 0
      %v602 = vsel %vm355, %v586, 0
      %v605 = vsel %vm355, %v587, 0
      %v608 = vsel %vm355, %v588, 0
      %v611 = vsel %vm404, %v596, 0
      %613 = vmatprep.subr.bf16.mxu0 0
      %614 = vmatpush1.bf16.msra.mxu0 %v595
      %615 = vmatprep.subr.bf16.mxu0 0
      %616 = vmatpush1.bf16.msra.mxu0 %v611
      %617 = vmatprep.subr.bf16.mxu0 0
      %618 = vmatpush1.bf16.msra.mxu0 0
      %619 = vmatprep.subr.bf16.mxu0 0
      %620 = vmatpush1.bf16.msra.mxu0 0
      %621 = vmatprep.subr.bf16.mxu0 0
      %622 = vmatpush1.bf16.msra.mxu0 0
      %623 = vmatprep.subr.bf16.mxu0 0
      %624 = vmatpush1.bf16.msra.mxu0 0
      %625 = vmatprep.subr.bf16.mxu0 0
      %626 = vmatpush1.bf16.msra.mxu0 0
      %627 = vmatprep.subr.bf16.mxu0 0
      %628 = vmatpush1.bf16.msra.mxu0 0
      %629 = vmatprep.subr.bf16.mxu0 0
      %630 = vmatpush1.bf16.msra.mxu0 0
      %631 = vmatprep.subr.bf16.mxu0 0
      %632 = vmatpush1.bf16.msra.mxu0 0
      %633 = vmatprep.subr.bf16.mxu0 0
      %634 = vmatpush1.bf16.msra.mxu0 0
      %635 = vmatprep.subr.bf16.mxu0 0
      %636 = vmatpush1.bf16.msra.mxu0 0
      %637 = vmatprep.subr.bf16.mxu0 0
      %638 = vmatpush1.bf16.msra.mxu0 0
      %639 = vmatprep.subr.bf16.mxu0 0
      %640 = vmatpush1.bf16.msra.mxu0 0
      %641 = vmatprep.subr.bf16.mxu0 0
      %642 = vmatpush1.bf16.msra.mxu0 0
      %643 = vmatprep.subr.bf16.mxu0 0
      %644 = vmatpush1.bf16.msra.mxu0 0
      %645 = vmatprep.mubr.bf16.mxu0 0
      %646 = vmatmul.mubr.bf16.gmra.mrb[0].mxu0 %v599
      %v647 = vpop.f32.mrb[0].mxu0
      %v648 = vadd.f32 %v443, %v647
      %v649 = vpop.f32.mrb[0].mxu0
      %v650 = vpop.f32.mrb[0].mxu0
      %v651 = vadd.f32 %v446, %v650
      %v652 = vpop.f32.mrb[0].mxu0
      %653 = vmatprep.mubr.bf16.mxu0 0
      %654 = vmatmul.mubr.bf16.gmra.mrb[0].mxu0 %v602
      %v655 = vpop.f32.mrb[0].mxu0
      %v656 = vadd.f32 %v451, %v655
      %v657 = vpop.f32.mrb[0].mxu0
      %v658 = vpop.f32.mrb[0].mxu0
      %v659 = vadd.f32 %v454, %v658
      %v660 = vpop.f32.mrb[0].mxu0
      %661 = vmatprep.mubr.bf16.mxu0 0
      %662 = vmatmul.mubr.bf16.gmra.mrb[0].mxu0 %v605
      %v663 = vpop.f32.mrb[0].mxu0
      %v664 = vadd.f32 %v459, %v663
      %v665 = vpop.f32.mrb[0].mxu0
      %v666 = vpop.f32.mrb[0].mxu0
      %v667 = vadd.f32 %v462, %v666
      %v668 = vpop.f32.mrb[0].mxu0
      %669 = vmatprep.mubr.bf16.mxu0 0
      %670 = vmatmul.mubr.bf16.gmra.mrb[0].mxu0 %v608
      %v671 = vpop.f32.mrb[0].mxu0
      %v672 = vadd.f32 %v467, %v671
      %v673 = vpop.f32.mrb[0].mxu0
      %v674 = vpop.f32.mrb[0].mxu0
      %v675 = vadd.f32 %v470, %v674
      %v676 = vpop.f32.mrb[0].mxu0
      %677 = vmatprep.mubr.bf16.mxu0 0
      %678 = vmatmul.mubr.bf16.gmra.mrb[0].mxu0 %v357
      %v679 = vpop.f32.mrb[0].mxu0
      %v680 = vadd.f32 %v475, %v679
      %v681 = vpop.f32.mrb[0].mxu0
      %v682 = vpop.f32.mrb[0].mxu0
      %v683 = vadd.f32 %v478, %v682
      %v684 = vpop.f32.mrb[0].mxu0
      %685 = vmatprep.mubr.bf16.mxu0 0
      %686 = vmatmul.mubr.bf16.gmra.mrb[0].mxu0 %v360
      %v687 = vpop.f32.mrb[0].mxu0
      %v688 = vadd.f32 %v483, %v687
      %v689 = vpop.f32.mrb[0].mxu0
      %v690 = vpop.f32.mrb[0].mxu0
      %v691 = vadd.f32 %v486, %v690
      %v692 = vpop.f32.mrb[0].mxu0
      %693 = vmatprep.mubr.bf16.mxu0 0
      %694 = vmatmul.mubr.bf16.gmra.mrb[0].mxu0 %v363
      %v695 = vpop.f32.mrb[0].mxu0
      %v696 = vadd.f32 %v491, %v695
      %v697 = vpop.f32.mrb[0].mxu0
      %v698 = vpop.f32.mrb[0].mxu0
      %v699 = vadd.f32 %v494, %v698
      %v700 = vpop.f32.mrb[0].mxu0
      %701 = vmatprep.mubr.bf16.mxu0 0
      %702 = vmatmul.mubr.bf16.gmra.mrb[0].mxu0 %v366
      %v703 = vpop.f32.mrb[0].mxu0
      %v704 = vadd.f32 %v499, %v703
      %v705 = vpop.f32.mrb[0].mxu0
      %v706 = vpop.f32.mrb[0].mxu0
      %v707 = vadd.f32 %v502, %v706
      %v708 = vpop.f32.mrb[0].mxu0
      %709 = vmatprep.mubr.bf16.mxu0 0
      %710 = vmatmul.mubr.bf16.gmra.mrb[0].mxu0 %v369
      %v711 = vpop.f32.mrb[0].mxu0
      %v712 = vadd.f32 %v507, %v711
      %v713 = vpop.f32.mrb[0].mxu0
      %v714 = vpop.f32.mrb[0].mxu0
      %v715 = vadd.f32 %v510, %v714
      %v716 = vpop.f32.mrb[0].mxu0
      %717 = vmatprep.mubr.bf16.mxu0 0
      %718 = vmatmul.mubr.bf16.gmra.mrb[0].mxu0 %v372
      %v719 = vpop.f32.mrb[0].mxu0
      %v720 = vadd.f32 %v515, %v719
      %v721 = vpop.f32.mrb[0].mxu0
      %v722 = vpop.f32.mrb[0].mxu0
      %v723 = vadd.f32 %v518, %v722
      %v724 = vpop.f32.mrb[0].mxu0
      %725 = vmatprep.mubr.bf16.mxu0 0
      %726 = vmatmul.mubr.bf16.gmra.mrb[0].mxu0 %v375
      %v727 = vpop.f32.mrb[0].mxu0
      %v728 = vadd.f32 %v523, %v727
      %v729 = vpop.f32.mrb[0].mxu0
      %v730 = vpop.f32.mrb[0].mxu0
      %v731 = vadd.f32 %v526, %v730
      %v732 = vpop.f32.mrb[0].mxu0
      %733 = vmatprep.mubr.bf16.mxu0 0
      %734 = vmatmul.mubr.bf16.gmra.mrb[0].mxu0 %v378
      %v735 = vpop.f32.mrb[0].mxu0
      %v736 = vadd.f32 %v531, %v735
      %v737 = vpop.f32.mrb[0].mxu0
      %v738 = vpop.f32.mrb[0].mxu0
      %v739 = vadd.f32 %v534, %v738
      %v740 = vpop.f32.mrb[0].mxu0
      %741 = vmatprep.mubr.bf16.mxu0 0
      %742 = vmatmul.mubr.bf16.gmra.mrb[0].mxu0 %v381
      %v743 = vpop.f32.mrb[0].mxu0
      %v744 = vadd.f32 %v539, %v743
      %v745 = vpop.f32.mrb[0].mxu0
      %v746 = vpop.f32.mrb[0].mxu0
      %v747 = vadd.f32 %v542, %v746
      %v748 = vpop.f32.mrb[0].mxu0
      %749 = vmatprep.mubr.bf16.mxu0 0
      %750 = vmatmul.mubr.bf16.gmra.mrb[0].mxu0 %v384
      %v751 = vpop.f32.mrb[0].mxu0
      %v752 = vadd.f32 %v547, %v751
      %v753 = vpop.f32.mrb[0].mxu0
      %v754 = vpop.f32.mrb[0].mxu0
      %v755 = vadd.f32 %v550, %v754
      %v756 = vpop.f32.mrb[0].mxu0
      %757 = vmatprep.mubr.bf16.mxu0 0
      %758 = vmatmul.mubr.bf16.gmra.mrb[0].mxu0 %v387
      %v759 = vpop.f32.mrb[0].mxu0
      %v760 = vadd.f32 %v555, %v759
      %v761 = vpop.f32.mrb[0].mxu0
      %v762 = vpop.f32.mrb[0].mxu0
      %v763 = vadd.f32 %v558, %v762
      %v764 = vpop.f32.mrb[0].mxu0
      %765 = vmatprep.mubr.bf16.mxu0 0
      %766 = vmatmul.mubr.bf16.gmra.mrb[0].mxu0 %v390
      %v767 = vpop.f32.mrb[0].mxu0
      %v768 = vadd.f32 %v563, %v767
      %v769 = vpop.f32.mrb[0].mxu0
      %v770 = vpop.f32.mrb[0].mxu0
      %v771 = vadd.f32 %v566, %v770
      %v772 = vpop.f32.mrb[0].mxu0
      %773 = vdwg.mxu0
      %v774 = vld [vmem:[%s207 + $0x40] sm:$0xf]
      %v775 = vld [vmem:[%s207 + $0x44] sm:$0xf]
      %v776 = vld [vmem:[%s207 + $0x48] sm:$0xf]
      %v777 = vld [vmem:[%s207 + $0x4c] sm:$0xf]
      %v778 = vld [vmem:[%s207 + $0x50] sm:$0xf]
      %v779 = vld [vmem:[%s207 + $0x54] sm:$0xf]
      %v780 = vld [vmem:[%s207 + $0x58] sm:$0xf]
      %v781 = vld [vmem:[%s207 + $0x5c] sm:$0xf]
      %v782 = vld [vmem:[%s207 + $0x60] sm:$0xf]
      %v783 = vld [vmem:[%s207 + $0x64] sm:$0xf]
      %v784 = vld [vmem:[%s207 + $0x68] sm:$0xf]
      %v785 = vld [vmem:[%s207 + $0x6c] sm:$0xf]
      %v786 = vld [vmem:[%s207 + $0x70] sm:$0xf]
      %v787 = vld [vmem:[%s207 + $0x74] sm:$0xf]
      %v788 = vld [vmem:[%s207 + $0x78] sm:$0xf]
      %v789 = vld [vmem:[%s207 + $0x7c] sm:$0xf]
      %v790 = vld [vmem:[%s207 + $0x80] sm:$0xf]
      %v791 = vld [vmem:[%s207 + $0x84] sm:$0xf]
      %v792 = vld [vmem:[%s207 + $0x88] sm:$0xf]
      %v793 = vld [vmem:[%s207 + $0x8c] sm:$0xf]
      %v794 = vld [vmem:[%s207 + $0x90] sm:$0xf]
      %v795 = vld [vmem:[%s207 + $0x94] sm:$0xf]
      %v796 = vld [vmem:[%s207 + $0x98] sm:$0xf]
      %v797 = vld [vmem:[%s207 + $0x9c] sm:$0xf]
      %v798 = vld [vmem:[%s207 + $0xa0] sm:$0xf]
      %v799 = vld [vmem:[%s207 + $0xa4] sm:$0xf]
      %v800 = vld [vmem:[%s207 + $0xa8] sm:$0xf]
      %v801 = vld [vmem:[%s207 + $0xac] sm:$0xf]
      %v802 = vld [vmem:[%s207 + $0xb0] sm:$0xf]
      %v803 = vld [vmem:[%s207 + $0xb4] sm:$0xf]
      %v804 = vld [vmem:[%s207 + $0xb8] sm:$0xf]
      %v805 = vld [vmem:[%s207 + $0xbc] sm:$0xf]
      %s806 = scalar_lea.vmem %s1, 24
      %v807 = vld [vmem:[%s806] sm:$0xf]
      %v808 = vld [vmem:[%s806 + $0x4] sm:$0xf]
      %v809 = vld [vmem:[%s806 + $0x8] sm:$0x1]
      %v842 = vunpack.c.l.b16 %v774
      %v843 = vunpack.c.l.b16 %v775
      %v844 = vunpack.c.l.b16 %v776
      %v845 = vunpack.c.l.b16 %v777
      %v846 = vunpack.c.l.b16 %v778
      %v847 = vunpack.c.l.b16 %v779
      %v848 = vunpack.c.l.b16 %v780
      %v849 = vunpack.c.l.b16 %v781
      %v850 = vunpack.c.l.b16 %v782
      %v851 = vunpack.c.l.b16 %v783
      %v852 = vunpack.c.l.b16 %v784
      %v853 = vunpack.c.l.b16 %v785
      %v854 = vunpack.c.l.b16 %v786
      %v855 = vunpack.c.l.b16 %v787
      %v856 = vunpack.c.l.b16 %v788
      %v857 = vunpack.c.l.b16 %v789
      %v858 = vunpack.c.l.b16 %v790
      %v859 = vunpack.c.l.b16 %v791
      %v860 = vunpack.c.l.b16 %v792
      %v861 = vunpack.c.l.b16 %v793
      %v862 = vunpack.c.l.b16 %v794
      %v863 = vunpack.c.l.b16 %v795
      %v864 = vunpack.c.l.b16 %v796
      %v865 = vunpack.c.l.b16 %v797
      %v866 = vunpack.c.l.b16 %v798
      %v867 = vunpack.c.l.b16 %v799
      %v868 = vunpack.c.l.b16 %v800
      %v869 = vunpack.c.l.b16 %v801
      %v870 = vunpack.c.l.b16 %v802
      %v871 = vunpack.c.l.b16 %v803
      %v872 = vunpack.c.l.b16 %v804
      %v873 = vunpack.c.l.b16 %v805
      %v874 = vpack.c.b16 %v843, %v842
      %v875 = vpack.c.b16 %v845, %v844
      %v876 = vpack.c.b16 %v847, %v846
      %v877 = vpack.c.b16 %v849, %v848
      %v878 = vpack.c.b16 %v851, %v850
      %v879 = vpack.c.b16 %v853, %v852
      %v880 = vpack.c.b16 %v855, %v854
      %v881 = vpack.c.b16 %v857, %v856
      %v882 = vpack.c.b16 %v859, %v858
      %v883 = vpack.c.b16 %v861, %v860
      %v884 = vpack.c.b16 %v863, %v862
      %v885 = vpack.c.b16 %v865, %v864
      %v886 = vpack.c.b16 %v867, %v866
      %v887 = vpack.c.b16 %v869, %v868
      %v888 = vpack.c.b16 %v871, %v870
      %v889 = vpack.c.b16 %v873, %v872
      %v893 = vunpack.c.l.b16 %v807
      %v894 = vunpack.c.l.b16 %v808
      %v895 = vunpack.c.l.b16 %v809
      %v896 = vpack.c.b16 %v894, %v893
      %v897 = vpack.c.b16 %v895, %v895
      %v900 = vsel %vm355, %v874, 0
      %v903 = vsel %vm355, %v875, 0
      %v906 = vsel %vm355, %v876, 0
      %v909 = vsel %vm355, %v877, 0
      %v912 = vsel %vm355, %v878, 0
      %v915 = vsel %vm355, %v879, 0
      %v918 = vsel %vm355, %v880, 0
      %v921 = vsel %vm355, %v881, 0
      %v924 = vsel %vm355, %v882, 0
      %v927 = vsel %vm355, %v883, 0
      %v930 = vsel %vm355, %v884, 0
      %v933 = vsel %vm355, %v885, 0
      %v936 = vsel %vm355, %v886, 0
      %v939 = vsel %vm355, %v887, 0
      %v942 = vsel %vm355, %v888, 0
      %v945 = vsel %vm355, %v889, 0
      %v948 = vsel %vm404, %v897, 0
      %950 = vmatprep.subr.bf16.mxu0 0
      %951 = vmatpush1.bf16.msra.mxu0 %v896
      %952 = vmatprep.subr.bf16.mxu0 0
      %953 = vmatpush1.bf16.msra.mxu0 %v948
      %954 = vmatprep.subr.bf16.mxu0 0
      %955 = vmatpush1.bf16.msra.mxu0 0
      %956 = vmatprep.subr.bf16.mxu0 0
      %957 = vmatpush1.bf16.msra.mxu0 0
      %958 = vmatprep.subr.bf16.mxu0 0
      %959 = vmatpush1.bf16.msra.mxu0 0
      %960 = vmatprep.subr.bf16.mxu0 0
      %961 = vmatpush1.bf16.msra.mxu0 0
      %962 = vmatprep.subr.bf16.mxu0 0
      %963 = vmatpush1.bf16.msra.mxu0 0
      %964 = vmatprep.subr.bf16.mxu0 0
      %965 = vmatpush1.bf16.msra.mxu0 0
      %966 = vmatprep.subr.bf16.mxu0 0
      %967 = vmatpush1.bf16.msra.mxu0 0
      %968 = vmatprep.subr.bf16.mxu0 0
      %969 = vmatpush1.bf16.msra.mxu0 0
      %970 = vmatprep.subr.bf16.mxu0 0
      %971 = vmatpush1.bf16.msra.mxu0 0
      %972 = vmatprep.subr.bf16.mxu0 0
      %973 = vmatpush1.bf16.msra.mxu0 0
      %974 = vmatprep.subr.bf16.mxu0 0
      %975 = vmatpush1.bf16.msra.mxu0 0
      %976 = vmatprep.subr.bf16.mxu0 0
      %977 = vmatpush1.bf16.msra.mxu0 0
      %978 = vmatprep.subr.bf16.mxu0 0
      %979 = vmatpush1.bf16.msra.mxu0 0
      %980 = vmatprep.subr.bf16.mxu0 0
      %981 = vmatpush1.bf16.msra.mxu0 0
      %982 = vmatprep.mubr.bf16.mxu0 0
      %983 = vmatmul.mubr.bf16.gmra.mrb[0].mxu0 %v900
      %v984 = vpop.f32.mrb[0].mxu0
      %v985 = vadd.f32 0.0, %v984
      %v986 = vpop.f32.mrb[0].mxu0
      %v987 = vpop.f32.mrb[0].mxu0
      %v988 = vadd.f32 0.0, %v987
      %v989 = vpop.f32.mrb[0].mxu0
      %990 = vmatprep.mubr.bf16.mxu0 0
      %991 = vmatmul.mubr.bf16.gmra.mrb[0].mxu0 %v903
      %v992 = vpop.f32.mrb[0].mxu0
      %v993 = vadd.f32 0.0, %v992
      %v994 = vpop.f32.mrb[0].mxu0
      %v995 = vpop.f32.mrb[0].mxu0
      %v996 = vadd.f32 0.0, %v995
      %v997 = vpop.f32.mrb[0].mxu0
      %998 = vmatprep.mubr.bf16.mxu0 0
      %999 = vmatmul.mubr.bf16.gmra.mrb[0].mxu0 %v906
      %v1000 = vpop.f32.mrb[0].mxu0
      %v1001 = vadd.f32 0.0, %v1000
      %v1002 = vpop.f32.mrb[0].mxu0
      %v1003 = vpop.f32.mrb[0].mxu0
      %v1004 = vadd.f32 0.0, %v1003
      %v1005 = vpop.f32.mrb[0].mxu0
      %1006 = vmatprep.mubr.bf16.mxu0 0
      %1007 = vmatmul.mubr.bf16.gmra.mrb[0].mxu0 %v909
      %v1008 = vpop.f32.mrb[0].mxu0
      %v1009 = vadd.f32 0.0, %v1008
      %v1010 = vpop.f32.mrb[0].mxu0
      %v1011 = vpop.f32.mrb[0].mxu0
      %v1012 = vadd.f32 0.0, %v1011
      %v1013 = vpop.f32.mrb[0].mxu0
      %1014 = vmatprep.mubr.bf16.mxu0 0
      %1015 = vmatmul.mubr.bf16.gmra.mrb[0].mxu0 %v912
      %v1016 = vpop.f32.mrb[0].mxu0
      %v1017 = vadd.f32 0.0, %v1016
      %v1018 = vpop.f32.mrb[0].mxu0
      %v1019 = vpop.f32.mrb[0].mxu0
      %v1020 = vadd.f32 0.0, %v1019
      %v1021 = vpop.f32.mrb[0].mxu0
      %1022 = vmatprep.mubr.bf16.mxu0 0
      %1023 = vmatmul.mubr.bf16.gmra.mrb[0].mxu0 %v915
      %v1024 = vpop.f32.mrb[0].mxu0
      %v1025 = vadd.f32 0.0, %v1024
      %v1026 = vpop.f32.mrb[0].mxu0
      %v1027 = vpop.f32.mrb[0].mxu0
      %v1028 = vadd.f32 0.0, %v1027
      %v1029 = vpop.f32.mrb[0].mxu0
      %1030 = vmatprep.mubr.bf16.mxu0 0
      %1031 = vmatmul.mubr.bf16.gmra.mrb[0].mxu0 %v918
      %v1032 = vpop.f32.mrb[0].mxu0
      %v1033 = vadd.f32 0.0, %v1032
      %v1034 = vpop.f32.mrb[0].mxu0
      %v1035 = vpop.f32.mrb[0].mxu0
      %v1036 = vadd.f32 0.0, %v1035
      %v1037 = vpop.f32.mrb[0].mxu0
      %1038 = vmatprep.mubr.bf16.mxu0 0
      %1039 = vmatmul.mubr.bf16.gmra.mrb[0].mxu0 %v921
      %v1040 = vpop.f32.mrb[0].mxu0
      %v1041 = vadd.f32 0.0, %v1040
      %v1042 = vpop.f32.mrb[0].mxu0
      %v1043 = vpop.f32.mrb[0].mxu0
      %v1044 = vadd.f32 0.0, %v1043
      %v1045 = vpop.f32.mrb[0].mxu0
      %1046 = vmatprep.mubr.bf16.mxu0 0
      %1047 = vmatmul.mubr.bf16.gmra.mrb[0].mxu0 %v924
      %v1048 = vpop.f32.mrb[0].mxu0
      %v1049 = vadd.f32 0.0, %v1048
      %v1050 = vpop.f32.mrb[0].mxu0
      %v1051 = vpop.f32.mrb[0].mxu0
      %v1052 = vadd.f32 0.0, %v1051
      %v1053 = vpop.f32.mrb[0].mxu0
      %1054 = vmatprep.mubr.bf16.mxu0 0
      %1055 = vmatmul.mubr.bf16.gmra.mrb[0].mxu0 %v927
      %v1056 = vpop.f32.mrb[0].mxu0
      %v1057 = vadd.f32 0.0, %v1056
      %v1058 = vpop.f32.mrb[0].mxu0
      %v1059 = vpop.f32.mrb[0].mxu0
      %v1060 = vadd.f32 0.0, %v1059
      %v1061 = vpop.f32.mrb[0].mxu0
      %1062 = vmatprep.mubr.bf16.mxu0 0
      %1063 = vmatmul.mubr.bf16.gmra.mrb[0].mxu0 %v930
      %v1064 = vpop.f32.mrb[0].mxu0
      %v1065 = vadd.f32 0.0, %v1064
      %v1066 = vpop.f32.mrb[0].mxu0
      %v1067 = vpop.f32.mrb[0].mxu0
      %v1068 = vadd.f32 0.0, %v1067
      %v1069 = vpop.f32.mrb[0].mxu0
      %1070 = vmatprep.mubr.bf16.mxu0 0
      %1071 = vmatmul.mubr.bf16.gmra.mrb[0].mxu0 %v933
      %v1072 = vpop.f32.mrb[0].mxu0
      %v1073 = vadd.f32 0.0, %v1072
      %v1074 = vpop.f32.mrb[0].mxu0
      %v1075 = vpop.f32.mrb[0].mxu0
      %v1076 = vadd.f32 0.0, %v1075
      %v1077 = vpop.f32.mrb[0].mxu0
      %1078 = vmatprep.mubr.bf16.mxu0 0
      %1079 = vmatmul.mubr.bf16.gmra.mrb[0].mxu0 %v936
      %v1080 = vpop.f32.mrb[0].mxu0
      %v1081 = vadd.f32 0.0, %v1080
      %v1082 = vpop.f32.mrb[0].mxu0
      %v1083 = vpop.f32.mrb[0].mxu0
      %v1084 = vadd.f32 0.0, %v1083
      %v1085 = vpop.f32.mrb[0].mxu0
      %1086 = vmatprep.mubr.bf16.mxu0 0
      %1087 = vmatmul.mubr.bf16.gmra.mrb[0].mxu0 %v939
      %v1088 = vpop.f32.mrb[0].mxu0
      %v1089 = vadd.f32 0.0, %v1088
      %v1090 = vpop.f32.mrb[0].mxu0
      %v1091 = vpop.f32.mrb[0].mxu0
      %v1092 = vadd.f32 0.0, %v1091
      %v1093 = vpop.f32.mrb[0].mxu0
      %1094 = vmatprep.mubr.bf16.mxu0 0
      %1095 = vmatmul.mubr.bf16.gmra.mrb[0].mxu0 %v942
      %v1096 = vpop.f32.mrb[0].mxu0
      %v1097 = vadd.f32 0.0, %v1096
      %v1098 = vpop.f32.mrb[0].mxu0
      %v1099 = vpop.f32.mrb[0].mxu0
      %v1100 = vadd.f32 0.0, %v1099
      %v1101 = vpop.f32.mrb[0].mxu0
      %1102 = vmatprep.mubr.bf16.mxu0 0
      %1103 = vmatmul.mubr.bf16.gmra.mrb[0].mxu0 %v945
      %v1104 = vpop.f32.mrb[0].mxu0
      %v1105 = vadd.f32 0.0, %v1104
      %v1106 = vpop.f32.mrb[0].mxu0
      %v1107 = vpop.f32.mrb[0].mxu0
      %v1108 = vadd.f32 0.0, %v1107
      %v1109 = vpop.f32.mrb[0].mxu0
      %1110 = vdwg.mxu0
      %v1111 = vadd.f32 %v648, %v985
      %v1112 = vadd.f32 %v651, %v988
      %v1113 = vadd.f32 %v656, %v993
      %v1114 = vadd.f32 %v659, %v996
      %v1115 = vadd.f32 %v664, %v1001
      %v1116 = vadd.f32 %v667, %v1004
      %v1117 = vadd.f32 %v672, %v1009
      %v1118 = vadd.f32 %v675, %v1012
      %v1119 = vadd.f32 %v680, %v1017
      %v1120 = vadd.f32 %v683, %v1020
      %v1121 = vadd.f32 %v688, %v1025
      %v1122 = vadd.f32 %v691, %v1028
      %v1123 = vadd.f32 %v696, %v1033
      %v1124 = vadd.f32 %v699, %v1036
      %v1125 = vadd.f32 %v704, %v1041
      %v1126 = vadd.f32 %v707, %v1044
      %v1127 = vadd.f32 %v712, %v1049
      %v1128 = vadd.f32 %v715, %v1052
      %v1129 = vadd.f32 %v720, %v1057
      %v1130 = vadd.f32 %v723, %v1060
      %v1131 = vadd.f32 %v728, %v1065
      %v1132 = vadd.f32 %v731, %v1068
      %v1133 = vadd.f32 %v736, %v1073
      %v1134 = vadd.f32 %v739, %v1076
      %v1135 = vadd.f32 %v744, %v1081
      %v1136 = vadd.f32 %v747, %v1084
      %v1137 = vadd.f32 %v752, %v1089
      %v1138 = vadd.f32 %v755, %v1092
      %v1139 = vadd.f32 %v760, %v1097
      %v1140 = vadd.f32 %v763, %v1100
      %v1141 = vadd.f32 %v768, %v1105
      %v1142 = vadd.f32 %v771, %v1108
      %v1143 = vld [vmem:[%s2] sm:$0x1]
      %v1145 = vlaneseq
      %v1146 = vshrl.u32 %v1145, 7
      %v1147 = vsub.s32 0, %v1146
      %v1148 = vrot.slane %v1143, %v1147
      %v1150 = vadd.f32 %v1111, %v1148
      %v1151 = vadd.f32 %v1112, %v1148
      %v1152 = vadd.f32 %v1113, %v1148
      %v1153 = vadd.f32 %v1114, %v1148
      %v1154 = vadd.f32 %v1115, %v1148
      %v1155 = vadd.f32 %v1116, %v1148
      %v1156 = vadd.f32 %v1117, %v1148
      %v1157 = vadd.f32 %v1118, %v1148
      %v1158 = vadd.f32 %v1119, %v1148
      %v1159 = vadd.f32 %v1120, %v1148
      %v1160 = vadd.f32 %v1121, %v1148
      %v1161 = vadd.f32 %v1122, %v1148
      %v1162 = vadd.f32 %v1123, %v1148
      %v1163 = vadd.f32 %v1124, %v1148
      %v1164 = vadd.f32 %v1125, %v1148
      %v1165 = vadd.f32 %v1126, %v1148
      %v1166 = vadd.f32 %v1127, %v1148
      %v1167 = vadd.f32 %v1128, %v1148
      %v1168 = vadd.f32 %v1129, %v1148
      %v1169 = vadd.f32 %v1130, %v1148
      %v1170 = vadd.f32 %v1131, %v1148
      %v1171 = vadd.f32 %v1132, %v1148
      %v1172 = vadd.f32 %v1133, %v1148
      %v1173 = vadd.f32 %v1134, %v1148
      %v1174 = vadd.f32 %v1135, %v1148
      %v1175 = vadd.f32 %v1136, %v1148
      %v1176 = vadd.f32 %v1137, %v1148
      %v1177 = vadd.f32 %v1138, %v1148
      %v1178 = vadd.f32 %v1139, %v1148
      %v1179 = vadd.f32 %v1140, %v1148
      %v1180 = vadd.f32 %v1141, %v1148
      %v1181 = vadd.f32 %v1142, %v1148
      %v1182 = vld [vmem:[%s212] sm:$0xf]
      %v1183 = vld [vmem:[%s212 + $0x4] sm:$0xf]
      %v1184 = vld [vmem:[%s212 + $0x8] sm:$0xf]
      %v1185 = vld [vmem:[%s212 + $0xc] sm:$0xf]
      %v1186 = vld [vmem:[%s212 + $0x10] sm:$0xf]
      %v1187 = vld [vmem:[%s212 + $0x14] sm:$0xf]
      %v1188 = vld [vmem:[%s212 + $0x18] sm:$0xf]
      %v1189 = vld [vmem:[%s212 + $0x1c] sm:$0xf]
      %v1190 = vld [vmem:[%s212 + $0x20] sm:$0xf]
      %v1191 = vld [vmem:[%s212 + $0x24] sm:$0xf]
      %v1192 = vld [vmem:[%s212 + $0x28] sm:$0xf]
      %v1193 = vld [vmem:[%s212 + $0x2c] sm:$0xf]
      %v1194 = vld [vmem:[%s212 + $0x30] sm:$0xf]
      %v1195 = vld [vmem:[%s212 + $0x34] sm:$0xf]
      %v1196 = vld [vmem:[%s212 + $0x38] sm:$0xf]
      %v1197 = vld [vmem:[%s212 + $0x3c] sm:$0xf]
      %v1198 = vld [vmem:[%s212 + $0x40] sm:$0xf]
      %v1199 = vld [vmem:[%s212 + $0x44] sm:$0xf]
      %v1200 = vld [vmem:[%s212 + $0x48] sm:$0xf]
      %v1201 = vld [vmem:[%s212 + $0x4c] sm:$0xf]
      %v1202 = vld [vmem:[%s212 + $0x50] sm:$0xf]
      %v1203 = vld [vmem:[%s212 + $0x54] sm:$0xf]
      %v1204 = vld [vmem:[%s212 + $0x58] sm:$0xf]
      %v1205 = vld [vmem:[%s212 + $0x5c] sm:$0xf]
      %v1206 = vld [vmem:[%s212 + $0x60] sm:$0xf]
      %v1207 = vld [vmem:[%s212 + $0x64] sm:$0xf]
      %v1208 = vld [vmem:[%s212 + $0x68] sm:$0xf]
      %v1209 = vld [vmem:[%s212 + $0x6c] sm:$0xf]
      %v1210 = vld [vmem:[%s212 + $0x70] sm:$0xf]
      %v1211 = vld [vmem:[%s212 + $0x74] sm:$0xf]
      %v1212 = vld [vmem:[%s212 + $0x78] sm:$0xf]
      %v1213 = vld [vmem:[%s212 + $0x7c] sm:$0xf]
      %v1214 = vunpack.c.l.bf16 %v1182
      %v1215 = vunpack.c.l.bf16 %v1183
      %v1216 = vunpack.c.l.bf16 %v1184
      %v1217 = vunpack.c.l.bf16 %v1185
      %v1218 = vunpack.c.l.bf16 %v1186
      %v1219 = vunpack.c.l.bf16 %v1187
      %v1220 = vunpack.c.l.bf16 %v1188
      %v1221 = vunpack.c.l.bf16 %v1189
      %v1222 = vunpack.c.l.bf16 %v1190
      %v1223 = vunpack.c.l.bf16 %v1191
      %v1224 = vunpack.c.l.bf16 %v1192
      %v1225 = vunpack.c.l.bf16 %v1193
      %v1226 = vunpack.c.l.bf16 %v1194
      %v1227 = vunpack.c.l.bf16 %v1195
      %v1228 = vunpack.c.l.bf16 %v1196
      %v1229 = vunpack.c.l.bf16 %v1197
      %v1230 = vunpack.c.l.bf16 %v1198
      %v1231 = vunpack.c.l.bf16 %v1199
      %v1232 = vunpack.c.l.bf16 %v1200
      %v1233 = vunpack.c.l.bf16 %v1201
      %v1234 = vunpack.c.l.bf16 %v1202
      %v1235 = vunpack.c.l.bf16 %v1203
      %v1236 = vunpack.c.l.bf16 %v1204
      %v1237 = vunpack.c.l.bf16 %v1205
      %v1238 = vunpack.c.l.bf16 %v1206
      %v1239 = vunpack.c.l.bf16 %v1207
      %v1240 = vunpack.c.l.bf16 %v1208
      %v1241 = vunpack.c.l.bf16 %v1209
      %v1242 = vunpack.c.l.bf16 %v1210
      %v1243 = vunpack.c.l.bf16 %v1211
      %v1244 = vunpack.c.l.bf16 %v1212
      %v1245 = vunpack.c.l.bf16 %v1213
      %v1246 = vadd.f32 %v1150, %v1214
      %v1247 = vadd.f32 %v1151, %v1215
      %v1248 = vadd.f32 %v1152, %v1216
      %v1249 = vadd.f32 %v1153, %v1217
      %v1250 = vadd.f32 %v1154, %v1218
      %v1251 = vadd.f32 %v1155, %v1219
      %v1252 = vadd.f32 %v1156, %v1220
      %v1253 = vadd.f32 %v1157, %v1221
      %v1254 = vadd.f32 %v1158, %v1222
      %v1255 = vadd.f32 %v1159, %v1223
      %v1256 = vadd.f32 %v1160, %v1224
      %v1257 = vadd.f32 %v1161, %v1225
      %v1258 = vadd.f32 %v1162, %v1226
      %v1259 = vadd.f32 %v1163, %v1227
      %v1260 = vadd.f32 %v1164, %v1228
      %v1261 = vadd.f32 %v1165, %v1229
      %v1262 = vadd.f32 %v1166, %v1230
      %v1263 = vadd.f32 %v1167, %v1231
      %v1264 = vadd.f32 %v1168, %v1232
      %v1265 = vadd.f32 %v1169, %v1233
      %v1266 = vadd.f32 %v1170, %v1234
      %v1267 = vadd.f32 %v1171, %v1235
      %v1268 = vadd.f32 %v1172, %v1236
      %v1269 = vadd.f32 %v1173, %v1237
      %v1270 = vadd.f32 %v1174, %v1238
      %v1271 = vadd.f32 %v1175, %v1239
      %v1272 = vadd.f32 %v1176, %v1240
      %v1273 = vadd.f32 %v1177, %v1241
      %v1274 = vadd.f32 %v1178, %v1242
      %v1275 = vadd.f32 %v1179, %v1243
      %v1276 = vadd.f32 %v1180, %v1244
      %v1277 = vadd.f32 %v1181, %v1245
      %v1278 = vmax.f32 %v1246, 0.0
      %v1279 = vmax.f32 %v1247, 0.0
      %v1280 = vmax.f32 %v1248, 0.0
      %v1281 = vmax.f32 %v1249, 0.0
      %v1282 = vmax.f32 %v1250, 0.0
      %v1283 = vmax.f32 %v1251, 0.0
      %v1284 = vmax.f32 %v1252, 0.0
      %v1285 = vmax.f32 %v1253, 0.0
      %v1286 = vmax.f32 %v1254, 0.0
      %v1287 = vmax.f32 %v1255, 0.0
      %v1288 = vmax.f32 %v1256, 0.0
      %v1289 = vmax.f32 %v1257, 0.0
      %v1290 = vmax.f32 %v1258, 0.0
      %v1291 = vmax.f32 %v1259, 0.0
      %v1292 = vmax.f32 %v1260, 0.0
      %v1293 = vmax.f32 %v1261, 0.0
      %v1294 = vmax.f32 %v1262, 0.0
      %v1295 = vmax.f32 %v1263, 0.0
      %v1296 = vmax.f32 %v1264, 0.0
      %v1297 = vmax.f32 %v1265, 0.0
      %v1298 = vmax.f32 %v1266, 0.0
      %v1299 = vmax.f32 %v1267, 0.0
      %v1300 = vmax.f32 %v1268, 0.0
      %v1301 = vmax.f32 %v1269, 0.0
      %v1302 = vmax.f32 %v1270, 0.0
      %v1303 = vmax.f32 %v1271, 0.0
      %v1304 = vmax.f32 %v1272, 0.0
      %v1305 = vmax.f32 %v1273, 0.0
      %v1306 = vmax.f32 %v1274, 0.0
      %v1307 = vmax.f32 %v1275, 0.0
      %v1308 = vmax.f32 %v1276, 0.0
      %v1309 = vmax.f32 %v1277, 0.0
      %v1310 = vpack.c.bf16 %v1279, %v1278
      %v1311 = vpack.c.bf16 %v1281, %v1280
      %v1312 = vpack.c.bf16 %v1283, %v1282
      %v1313 = vpack.c.bf16 %v1285, %v1284
      %v1314 = vpack.c.bf16 %v1287, %v1286
      %v1315 = vpack.c.bf16 %v1289, %v1288
      %v1316 = vpack.c.bf16 %v1291, %v1290
      %v1317 = vpack.c.bf16 %v1293, %v1292
      %v1318 = vpack.c.bf16 %v1295, %v1294
      %v1319 = vpack.c.bf16 %v1297, %v1296
      %v1320 = vpack.c.bf16 %v1299, %v1298
      %v1321 = vpack.c.bf16 %v1301, %v1300
      %v1322 = vpack.c.bf16 %v1303, %v1302
      %v1323 = vpack.c.bf16 %v1305, %v1304
      %v1324 = vpack.c.bf16 %v1307, %v1306
      %v1325 = vpack.c.bf16 %v1309, %v1308
      %v1342 = vunpack.c.l.b16 %v1310
      %v1343 = vunpack.c.h.b16 %v1310
      %v1344 = vunpack.c.l.b16 %v1311
      %v1345 = vunpack.c.h.b16 %v1311
      %v1346 = vunpack.c.l.b16 %v1312
      %v1347 = vunpack.c.h.b16 %v1312
      %v1348 = vunpack.c.l.b16 %v1313
      %v1349 = vunpack.c.h.b16 %v1313
      %v1350 = vunpack.c.l.b16 %v1314
      %v1351 = vunpack.c.h.b16 %v1314
      %v1352 = vunpack.c.l.b16 %v1315
      %v1353 = vunpack.c.h.b16 %v1315
      %v1354 = vunpack.c.l.b16 %v1316
      %v1355 = vunpack.c.h.b16 %v1316
      %v1356 = vunpack.c.l.b16 %v1317
      %v1357 = vunpack.c.h.b16 %v1317
      %v1358 = vunpack.c.l.b16 %v1318
      %v1359 = vunpack.c.h.b16 %v1318
      %v1360 = vunpack.c.l.b16 %v1319
      %v1361 = vunpack.c.h.b16 %v1319
      %v1362 = vunpack.c.l.b16 %v1320
      %v1363 = vunpack.c.h.b16 %v1320
      %v1364 = vunpack.c.l.b16 %v1321
      %v1365 = vunpack.c.h.b16 %v1321
      %v1366 = vunpack.c.l.b16 %v1322
      %v1367 = vunpack.c.h.b16 %v1322
      %v1368 = vunpack.c.l.b16 %v1323
      %v1369 = vunpack.c.h.b16 %v1323
      %v1370 = vunpack.c.l.b16 %v1324
      %v1371 = vunpack.c.h.b16 %v1324
      %v1372 = vunpack.c.l.b16 %v1325
      %v1373 = vunpack.c.h.b16 %v1325
      %v1374 = vpack.c.b16 %v1342, %v1342
      %v1375 = vpack.c.b16 %v1343, %v1343
      %v1376 = vpack.c.b16 %v1344, %v1344
      %v1377 = vpack.c.b16 %v1345, %v1345
      %v1378 = vpack.c.b16 %v1346, %v1346
      %v1379 = vpack.c.b16 %v1347, %v1347
      %v1380 = vpack.c.b16 %v1348, %v1348
      %v1381 = vpack.c.b16 %v1349, %v1349
      %v1382 = vpack.c.b16 %v1350, %v1350
      %v1383 = vpack.c.b16 %v1351, %v1351
      %v1384 = vpack.c.b16 %v1352, %v1352
      %v1385 = vpack.c.b16 %v1353, %v1353
      %v1386 = vpack.c.b16 %v1354, %v1354
      %v1387 = vpack.c.b16 %v1355, %v1355
      %v1388 = vpack.c.b16 %v1356, %v1356
      %v1389 = vpack.c.b16 %v1357, %v1357
      %v1390 = vpack.c.b16 %v1358, %v1358
      %v1391 = vpack.c.b16 %v1359, %v1359
      %v1392 = vpack.c.b16 %v1360, %v1360
      %v1393 = vpack.c.b16 %v1361, %v1361
      %v1394 = vpack.c.b16 %v1362, %v1362
      %v1395 = vpack.c.b16 %v1363, %v1363
      %v1396 = vpack.c.b16 %v1364, %v1364
      %v1397 = vpack.c.b16 %v1365, %v1365
      %v1398 = vpack.c.b16 %v1366, %v1366
      %v1399 = vpack.c.b16 %v1367, %v1367
      %v1400 = vpack.c.b16 %v1368, %v1368
      %v1401 = vpack.c.b16 %v1369, %v1369
      %v1402 = vpack.c.b16 %v1370, %v1370
      %v1403 = vpack.c.b16 %v1371, %v1371
      %v1404 = vpack.c.b16 %v1372, %v1372
      %v1405 = vpack.c.b16 %v1373, %v1373
      %vm1438 = vcmask 60416
      %1439 = vst.msk [vmem:[%s217] sm:$0xf] %vm1438, %v1374
      %1440 = vst.msk [vmem:[%s217 + $0x4] sm:$0xf] %vm1438, %v1375
      %1441 = vst.msk [vmem:[%s217 + $0x8] sm:$0xf] %vm1438, %v1376
      %1442 = vst.msk [vmem:[%s217 + $0xc] sm:$0xf] %vm1438, %v1377
      %1443 = vst.msk [vmem:[%s217 + $0x10] sm:$0xf] %vm1438, %v1378
      %1444 = vst.msk [vmem:[%s217 + $0x14] sm:$0xf] %vm1438, %v1379
      %1445 = vst.msk [vmem:[%s217 + $0x18] sm:$0xf] %vm1438, %v1380
      %1446 = vst.msk [vmem:[%s217 + $0x1c] sm:$0xf] %vm1438, %v1381
      %1447 = vst.msk [vmem:[%s217 + $0x20] sm:$0xf] %vm1438, %v1382
      %1448 = vst.msk [vmem:[%s217 + $0x24] sm:$0xf] %vm1438, %v1383
      %1449 = vst.msk [vmem:[%s217 + $0x28] sm:$0xf] %vm1438, %v1384
      %1450 = vst.msk [vmem:[%s217 + $0x2c] sm:$0xf] %vm1438, %v1385
      %1451 = vst.msk [vmem:[%s217 + $0x30] sm:$0xf] %vm1438, %v1386
      %1452 = vst.msk [vmem:[%s217 + $0x34] sm:$0xf] %vm1438, %v1387
      %1453 = vst.msk [vmem:[%s217 + $0x38] sm:$0xf] %vm1438, %v1388
      %1454 = vst.msk [vmem:[%s217 + $0x3c] sm:$0xf] %vm1438, %v1389
      %1455 = vst.msk [vmem:[%s217 + $0x40] sm:$0xf] %vm1438, %v1390
      %1456 = vst.msk [vmem:[%s217 + $0x44] sm:$0xf] %vm1438, %v1391
      %1457 = vst.msk [vmem:[%s217 + $0x48] sm:$0xf] %vm1438, %v1392
      %1458 = vst.msk [vmem:[%s217 + $0x4c] sm:$0xf] %vm1438, %v1393
      %1459 = vst.msk [vmem:[%s217 + $0x50] sm:$0xf] %vm1438, %v1394
      %1460 = vst.msk [vmem:[%s217 + $0x54] sm:$0xf] %vm1438, %v1395
      %1461 = vst.msk [vmem:[%s217 + $0x58] sm:$0xf] %vm1438, %v1396
      %1462 = vst.msk [vmem:[%s217 + $0x5c] sm:$0xf] %vm1438, %v1397
      %1463 = vst.msk [vmem:[%s217 + $0x60] sm:$0xf] %vm1438, %v1398
      %1464 = vst.msk [vmem:[%s217 + $0x64] sm:$0xf] %vm1438, %v1399
      %1465 = vst.msk [vmem:[%s217 + $0x68] sm:$0xf] %vm1438, %v1400
      %1466 = vst.msk [vmem:[%s217 + $0x6c] sm:$0xf] %vm1438, %v1401
      %1467 = vst.msk [vmem:[%s217 + $0x70] sm:$0xf] %vm1438, %v1402
      %1468 = vst.msk [vmem:[%s217 + $0x74] sm:$0xf] %vm1438, %v1403
      %1469 = vst.msk [vmem:[%s217 + $0x78] sm:$0xf] %vm1438, %v1404
      %1470 = vst.msk [vmem:[%s217 + $0x7c] sm:$0xf] %vm1438, %v1405
      %p1471 = scmp.lt.s32.totalorder %s15, 1
      %s1472 = scalar_select %p1471, %s15, 1
      %s1473 = smul.addr %s1472, 32
      %s1474 = smul.addr %s1473, 4
      %s1475 = scalar_lea.vmem %s4, %s1474
      // Predicated region
      $region37: #{_lambda_.15} parent=35 // pred_check
        %p1476 = pneg %p127
      $region38: #{_lambda_.15} parent=35 // pred_check_branch
        %1478 = sbr.rel (%p1476) target = $region40
      $region39: #{_lambda_.15} parent=35 // pred_region
        _
      $region40: #{_lambda_.15} parent=35 // pred_fallthru
        _
    $region36: #{_lambda_.15} parent=5 // pred_fallthru
      _
    %p1479 = scmp.le.s32.totalorder 2, %s10
    // Predicated region
    $region41: #{_lambda_.15} parent=5 // pred_check
      %p1480 = pneg %p1479
    $region42: #{_lambda_.15} parent=5 // pred_check_branch
      %1482 = sbr.rel (%p1480) target = $region44
    $region43: #{_lambda_.15} parent=5 // pred_region
      %s1483 = ssub.s32 %s10, 2
      // Predicated region
      $region45: #{_lambda_.15} parent=43 // pred_check
        %p1484 = pneg %p133
      $region46: #{_lambda_.15} parent=43 // pred_check_branch
        %1486 = sbr.rel (%p1484) target = $region48
      $region47: #{_lambda_.15} parent=43 // pred_region
        %p1487 = scmp.lt.s32.totalorder %s16, 1
        %s1488 = scalar_select %p1487, %s16, 1
        %s1489 = smul.addr %s1488, 32
        %s1490 = smul.addr %s1489, 4
        %s1491 = scalar_lea.vmem %s4, %s1490
      $region48: #{_lambda_.15} parent=43 // pred_fallthru
        _
    $region44: #{_lambda_.15} parent=5 // pred_fallthru
      _
  $region6: #{_lambda_.15} parent=0 // loop_footer
    %s14 = sadd.s32 1, %s10
  $region7: #{_lambda_.15} parent=0 // loop_footer_branch
    %9 = sbr.rel target = $region3
  $region8: #{_lambda_.15} parent=0 // loop_exit
    _

</llo_original>
